<compile_context>
chip_gen: v7x
topology: tpu7x:2x2x1
jax: 0.10.0
libtpu: 0.0.40
codegen_flags: <defaults>
</compile_context>

<pallas_src>
import functools

import jax
import jax.numpy as jnp
from jax.experimental import pallas as pl
from jax.experimental.pallas import tpu as pltpu

IN_DIM = 3 * 32 * 32          # 3072
H1, H2, H3 = 512, 1024, 512
NUM_CLASSES = 10
N_PAD = 128                   # lane-dense padded fc4 output width (safe on v5e/v6e/v7x)


def _round_up(x, m):
    return ((x + m - 1) // m) * m


def _vmem_limit_bytes():
    """Per-generation scoped-VMEM limit: ~3/4 of physical, capped at 64 MiB."""
    try:
        phys = pltpu.get_tpu_info().vmem_capacity_bytes
        return int(min(64 << 20, (phys * 3) // 4))
    except Exception:
        return 32 << 20  # safe lowest-common-denominator


_VMEM_LIMIT = _vmem_limit_bytes()


def mmlp_kernel(x_ref,
                w1_ref, b1_ref,
                w2_ref, b2_ref,
                w3_ref, b3_ref,
                w4_ref, b4_ref,
                out_ref):
    """One batch tile of the fused MLP: 4 bf16 matmuls (f32 accum) + f32 bias/ReLU."""
    x = x_ref[...].astype(jnp.bfloat16)                              # in-kernel cast (VPU)

    h = jnp.dot(x, w1_ref[...], preferred_element_type=jnp.float32)
    h = jnp.maximum(h + b1_ref[...], 0.0)                            # relu(fc1), f32

    h = jnp.dot(h.astype(jnp.bfloat16), w2_ref[...],
                preferred_element_type=jnp.float32)
    h = jnp.maximum(h + b2_ref[...], 0.0)                            # relu(fc2), f32

    h = jnp.dot(h.astype(jnp.bfloat16), w3_ref[...],
                preferred_element_type=jnp.float32)
    h = jnp.maximum(h + b3_ref[...], 0.0)                            # relu(fc3), f32

    out = jnp.dot(h.astype(jnp.bfloat16), w4_ref[...],
                  preferred_element_type=jnp.float32) + b4_ref[...]  # fc4 (no relu)
    out_ref[...] = out.astype(out_ref.dtype)


def prepare_params(params):
    """Pre-convert weights to bf16 (HBM holds half the bytes) and pad fc4 to 128 lanes."""
    (w1, b1), (w2, b2), (w3, b3), (w4, b4) = params
    w1b = w1.astype(jnp.bfloat16)
    w2b = w2.astype(jnp.bfloat16)
    w3b = w3.astype(jnp.bfloat16)
    w4p = jnp.pad(w4, ((0, 0), (0, N_PAD - w4.shape[1]))).astype(jnp.bfloat16)
    b4p = jnp.pad(b4, ((0, 0), (0, N_PAD - b4.shape[1]))).astype(jnp.float32)
    return (w1b, b1.astype(jnp.float32),
            w2b, b2.astype(jnp.float32),
            w3b, b3.astype(jnp.float32),
            w4p, b4p)
    # TODO(synk): for small-batch serving on v7x, store weights as fp8(e4m3) with
    # per-column f32 scales to halve the weight-read bound; not done here.


def _resident(shape):
    """VMEM-resident block: constant index_map + single-buffered (block never changes)."""
    kwargs = {}
    if hasattr(pl, "Buffered"):
        kwargs["pipeline_mode"] = pl.Buffered(1)
    try:
        return pl.BlockSpec(shape, lambda i: (0, 0), **kwargs)
    except TypeError:
        return pl.BlockSpec(shape, lambda i: (0, 0))


def _pick_tm(batch):
    """TM multiple of 16 (bf16 sublanes), <=256, and >=2 grid steps when B >= 32."""
    if batch <= 16:
        return 16
    return min(256, _round_up(pl.cdiv(batch, 2), 16))


@functools.partial(jax.jit, static_argnames=())
def mmlp_forward(x_nchw, prepared):
    """x_nchw: (B, 3, 32, 32) float32 -> (logits, logits) each (B, 10) float32."""
    w1, b1, w2, b2, w3, b3, w4, b4 = prepared

    B = x_nchw.shape[0]
    x_flat = x_nchw.reshape(B, IN_DIM)            # same as torch .view(-1, 3072); stays f32

    TM = _pick_tm(B)
    B_pad = _round_up(B, TM)
    if B_pad != B:
        x_flat = jnp.pad(x_flat, ((0, B_pad - B), (0, 0)))

    grid = (B_pad // TM,)

    logits_pad = pl.pallas_call(
        mmlp_kernel,
        out_shape=jax.ShapeDtypeStruct((B_pad, N_PAD), jnp.float32),
        grid=grid,
        in_specs=[
            pl.BlockSpec((TM, IN_DIM), lambda i: (i, 0)),    # x tile (f32, cast in kernel)
            _resident((IN_DIM, H1)), _resident((1, H1)),     # fc1
            _resident((H1, H2)),     _resident((1, H2)),     # fc2
            _resident((H2, H3)),     _resident((1, H3)),     # fc3
            _resident((H3, N_PAD)),  _resident((1, N_PAD)),  # fc4 (lane-padded)
        ],
        out_specs=pl.BlockSpec((TM, N_PAD), lambda i: (i, 0)),
        compiler_params=pltpu.CompilerParams(
            dimension_semantics=("parallel",),   # shard batch tiles across TCs (v7x)
            vmem_limit_bytes=_VMEM_LIMIT,        # per-generation, <= physical everywhere
        ),
    )(x_flat, w1, b1, w2, b2, w3, b3, w4, b4)

    logits = logits_pad[:B, :NUM_CLASSES]
    # PyTorch forward returns (x, x)
    return logits, logits


def init_params(key):
    """Deterministic init mimicking nn.Linear default: U(-1/sqrt(fan_in), +1/sqrt(fan_in))."""
    dims = [(IN_DIM, H1), (H1, H2), (H2, H3), (H3, NUM_CLASSES)]
    params = []
    for (fan_in, fan_out) in dims:
        key, kw, kb = jax.random.split(key, 3)
        bound = 1.0 / (fan_in ** 0.5)
        w = jax.random.uniform(kw, (fan_in, fan_out), jnp.float32, -bound, bound)
        b = jax.random.uniform(kb, (1, fan_out), jnp.float32, -bound, bound)
        params.append((w, b))
    return params


if __name__ == "__main__":
    key = jax.random.PRNGKey(0)
    key, kx = jax.random.split(key)

    B = 8
    x = jax.random.normal(kx, (B, 3, 32, 32), jnp.float32)  # NCHW, like PyTorch

    params = init_params(key)
    prepared = prepare_params(params)

    out1, out2 = mmlp_forward(x, prepared)
    jax.block_until_ready((out1, out2))

    assert out1.shape == (B, NUM_CLASSES) and out2.shape == (B, NUM_CLASSES)
    assert out1.dtype == jnp.float32

    # Reference: plain-JAX forward with the same bf16 operand casts / f32 accumulation.
    def ref_forward(x_nchw, params):
        h = x_nchw.reshape(x_nchw.shape[0], -1)
        (w1, b1), (w2, b2), (w3, b3), (w4, b4) = params
        h = jnp.dot(h.astype(jnp.bfloat16), w1.astype(jnp.bfloat16),
                    preferred_element_type=jnp.float32) + b1
        h = jnp.maximum(h, 0.0)
        h = jnp.dot(h.astype(jnp.bfloat16), w2.astype(jnp.bfloat16),
                    preferred_element_type=jnp.float32) + b2
        h = jnp.maximum(h, 0.0)
        h = jnp.dot(h.astype(jnp.bfloat16), w3.astype(jnp.bfloat16),
                    preferred_element_type=jnp.float32) + b3
        h = jnp.maximum(h, 0.0)
        return jnp.dot(h.astype(jnp.bfloat16), w4.astype(jnp.bfloat16),
                       preferred_element_type=jnp.float32) + b4

    ref = ref_forward(x, params)
    assert jnp.allclose(out1, ref, atol=2e-2, rtol=2e-2)

    print("KERNEL_OK")
</pallas_src>

<mosaic_0001>
module attributes {stable_mosaic.version = 11 : i64} {
  func.func @mmlp_kernel(%arg0: i32, %arg1: memref<16x3072xf32, #tpu.memory_space<vmem>>, %arg2: memref<3072x512xbf16, #tpu.memory_space<vmem>>, %arg3: memref<1x512xf32, #tpu.memory_space<vmem>>, %arg4: memref<512x1024xbf16, #tpu.memory_space<vmem>>, %arg5: memref<1x1024xf32, #tpu.memory_space<vmem>>, %arg6: memref<1024x512xbf16, #tpu.memory_space<vmem>>, %arg7: memref<1x512xf32, #tpu.memory_space<vmem>>, %arg8: memref<512x128xbf16, #tpu.memory_space<vmem>>, %arg9: memref<1x128xf32, #tpu.memory_space<vmem>>, %arg10: memref<16x128xf32, #tpu.memory_space<vmem>>) attributes {dimension_semantics = [#tpu.dimension_semantics<parallel>], iteration_bounds = array<i64: 1>, scalar_prefetch = 0 : i64, scratch_operands = 0 : i64, tpu.core_type = #tpu.core_type<tc>, window_params = [{transform_indices = @transform_0, window_bounds = array<i64: 16, 3072>}, {pipeline_mode = #tpu.pipeline_mode<synchronous>, transform_indices = @transform_1, window_bounds = array<i64: 3072, 512>}, {pipeline_mode = #tpu.pipeline_mode<synchronous>, transform_indices = @transform_2, window_bounds = array<i64: 1, 512>}, {pipeline_mode = #tpu.pipeline_mode<synchronous>, transform_indices = @transform_3, window_bounds = array<i64: 512, 1024>}, {pipeline_mode = #tpu.pipeline_mode<synchronous>, transform_indices = @transform_4, window_bounds = array<i64: 1, 1024>}, {pipeline_mode = #tpu.pipeline_mode<synchronous>, transform_indices = @transform_5, window_bounds = array<i64: 1024, 512>}, {pipeline_mode = #tpu.pipeline_mode<synchronous>, transform_indices = @transform_6, window_bounds = array<i64: 1, 512>}, {pipeline_mode = #tpu.pipeline_mode<synchronous>, transform_indices = @transform_7, window_bounds = array<i64: 512, 128>}, {pipeline_mode = #tpu.pipeline_mode<synchronous>, transform_indices = @transform_8, window_bounds = array<i64: 1, 128>}, {transform_indices = @transform_9, window_bounds = array<i64: 16, 128>}]} {
    %c0 = arith.constant 0 : index
    %c0_0 = arith.constant 0 : index
    %0 = vector.load %arg1[%c0, %c0_0] : memref<16x3072xf32, #tpu.memory_space<vmem>>, vector<16x3072xf32>
    %1 = arith.truncf %0 : vector<16x3072xf32> to vector<16x3072xbf16>
    %c0_1 = arith.constant 0 : index
    %c0_2 = arith.constant 0 : index
    %2 = vector.load %arg2[%c0_1, %c0_2] : memref<3072x512xbf16, #tpu.memory_space<vmem>>, vector<3072x512xbf16>
    %cst = arith.constant dense<0.000000e+00> : vector<16x512xf32>
    %3 = tpu.matmul %1, %2, %cst {dimension_numbers = #tpu.dot_dimension_numbers<[1], [0], [0], [1], [0, 0, 1, 1], [], []>} : vector<16x3072xbf16>, vector<3072x512xbf16>, vector<16x512xf32> -> vector<16x512xf32>
    %c0_3 = arith.constant 0 : index
    %c0_4 = arith.constant 0 : index
    %4 = vector.load %arg3[%c0_3, %c0_4] : memref<1x512xf32, #tpu.memory_space<vmem>>, vector<1x512xf32>
    %5 = vector.broadcast %4 : vector<1x512xf32> to vector<16x512xf32>
    %6 = arith.addf %3, %5 : vector<16x512xf32>
    %cst_5 = arith.constant 0.000000e+00 : f32
    %7 = vector.broadcast %cst_5 : f32 to vector<16x512xf32>
    %8 = arith.maximumf %6, %7 : vector<16x512xf32>
    %9 = arith.truncf %8 : vector<16x512xf32> to vector<16x512xbf16>
    %c0_6 = arith.constant 0 : index
    %c0_7 = arith.constant 0 : index
    %10 = vector.load %arg4[%c0_6, %c0_7] : memref<512x1024xbf16, #tpu.memory_space<vmem>>, vector<512x1024xbf16>
    %cst_8 = arith.constant dense<0.000000e+00> : vector<16x1024xf32>
    %11 = tpu.matmul %9, %10, %cst_8 {dimension_numbers = #tpu.dot_dimension_numbers<[1], [0], [0], [1], [0, 0, 1, 1], [], []>} : vector<16x512xbf16>, vector<512x1024xbf16>, vector<16x1024xf32> -> vector<16x1024xf32>
    %c0_9 = arith.constant 0 : index
    %c0_10 = arith.constant 0 : index
    %12 = vector.load %arg5[%c0_9, %c0_10] : memref<1x1024xf32, #tpu.memory_space<vmem>>, vector<1x1024xf32>
    %13 = vector.broadcast %12 : vector<1x1024xf32> to vector<16x1024xf32>
    %14 = arith.addf %11, %13 : vector<16x1024xf32>
    %cst_11 = arith.constant 0.000000e+00 : f32
    %15 = vector.broadcast %cst_11 : f32 to vector<16x1024xf32>
    %16 = arith.maximumf %14, %15 : vector<16x1024xf32>
    %17 = arith.truncf %16 : vector<16x1024xf32> to vector<16x1024xbf16>
    %c0_12 = arith.constant 0 : index
    %c0_13 = arith.constant 0 : index
    %18 = vector.load %arg6[%c0_12, %c0_13] : memref<1024x512xbf16, #tpu.memory_space<vmem>>, vector<1024x512xbf16>
    %cst_14 = arith.constant dense<0.000000e+00> : vector<16x512xf32>
    %19 = tpu.matmul %17, %18, %cst_14 {dimension_numbers = #tpu.dot_dimension_numbers<[1], [0], [0], [1], [0, 0, 1, 1], [], []>} : vector<16x1024xbf16>, vector<1024x512xbf16>, vector<16x512xf32> -> vector<16x512xf32>
    %c0_15 = arith.constant 0 : index
    %c0_16 = arith.constant 0 : index
    %20 = vector.load %arg7[%c0_15, %c0_16] : memref<1x512xf32, #tpu.memory_space<vmem>>, vector<1x512xf32>
    %21 = vector.broadcast %20 : vector<1x512xf32> to vector<16x512xf32>
    %22 = arith.addf %19, %21 : vector<16x512xf32>
    %cst_17 = arith.constant 0.000000e+00 : f32
    %23 = vector.broadcast %cst_17 : f32 to vector<16x512xf32>
    %24 = arith.maximumf %22, %23 : vector<16x512xf32>
    %25 = arith.truncf %24 : vector<16x512xf32> to vector<16x512xbf16>
    %c0_18 = arith.constant 0 : index
    %c0_19 = arith.constant 0 : index
    %26 = vector.load %arg8[%c0_18, %c0_19] : memref<512x128xbf16, #tpu.memory_space<vmem>>, vector<512x128xbf16>
    %cst_20 = arith.constant dense<0.000000e+00> : vector<16x128xf32>
    %27 = tpu.matmul %25, %26, %cst_20 {dimension_numbers = #tpu.dot_dimension_numbers<[1], [0], [0], [1], [0, 0, 1, 1], [], []>} : vector<16x512xbf16>, vector<512x128xbf16>, vector<16x128xf32> -> vector<16x128xf32>
    %c0_21 = arith.constant 0 : index
    %c0_22 = arith.constant 0 : index
    %28 = vector.load %arg9[%c0_21, %c0_22] : memref<1x128xf32, #tpu.memory_space<vmem>>, vector<1x128xf32>
    %29 = vector.broadcast %28 : vector<1x128xf32> to vector<16x128xf32>
    %30 = arith.addf %27, %29 : vector<16x128xf32>
    %c0_23 = arith.constant 0 : index
    %c0_24 = arith.constant 0 : index
    %31 = vector.load %arg10[%c0_23, %c0_24] : memref<16x128xf32, #tpu.memory_space<vmem>>, vector<16x128xf32>
    tpu.vector_store %arg10[%c0_23, %c0_24], %30 {strides = array<i32>} : memref<16x128xf32, #tpu.memory_space<vmem>>, vector<16x128xf32>,
    return
  }
  func.func @transform_0(%arg0: i32) -> (i32, i32) {
    %c0_i32 = arith.constant 0 : i32
    %c0_i32_0 = arith.constant 0 : i32
    return %arg0, %c0_i32 : i32, i32
  }
  func.func @transform_1(%arg0: i32) -> (i32, i32) {
    %c0_i32 = arith.constant 0 : i32
    %c0_i32_0 = arith.constant 0 : i32
    %c0_i32_1 = arith.constant 0 : i32
    return %c0_i32, %c0_i32_0 : i32, i32
  }
  func.func @transform_2(%arg0: i32) -> (i32, i32) {
    %c0_i32 = arith.constant 0 : i32
    %c0_i32_0 = arith.constant 0 : i32
    %c0_i32_1 = arith.constant 0 : i32
    return %c0_i32, %c0_i32_0 : i32, i32
  }
  func.func @transform_3(%arg0: i32) -> (i32, i32) {
    %c0_i32 = arith.constant 0 : i32
    %c0_i32_0 = arith.constant 0 : i32
    %c0_i32_1 = arith.constant 0 : i32
    return %c0_i32, %c0_i32_0 : i32, i32
  }
  func.func @transform_4(%arg0: i32) -> (i32, i32) {
    %c0_i32 = arith.constant 0 : i32
    %c0_i32_0 = arith.constant 0 : i32
    %c0_i32_1 = arith.constant 0 : i32
    return %c0_i32, %c0_i32_0 : i32, i32
  }
  func.func @transform_5(%arg0: i32) -> (i32, i32) {
    %c0_i32 = arith.constant 0 : i32
    %c0_i32_0 = arith.constant 0 : i32
    %c0_i32_1 = arith.constant 0 : i32
    return %c0_i32, %c0_i32_0 : i32, i32
  }
  func.func @transform_6(%arg0: i32) -> (i32, i32) {
    %c0_i32 = arith.constant 0 : i32
    %c0_i32_0 = arith.constant 0 : i32
    %c0_i32_1 = arith.constant 0 : i32
    return %c0_i32, %c0_i32_0 : i32, i32
  }
  func.func @transform_7(%arg0: i32) -> (i32, i32) {
    %c0_i32 = arith.constant 0 : i32
    %c0_i32_0 = arith.constant 0 : i32
    %c0_i32_1 = arith.constant 0 : i32
    return %c0_i32, %c0_i32_0 : i32, i32
  }
  func.func @transform_8(%arg0: i32) -> (i32, i32) {
    %c0_i32 = arith.constant 0 : i32
    %c0_i32_0 = arith.constant 0 : i32
    %c0_i32_1 = arith.constant 0 : i32
    return %c0_i32, %c0_i32_0 : i32, i32
  }
  func.func @transform_9(%arg0: i32) -> (i32, i32) {
    %c0_i32 = arith.constant 0 : i32
    %c0_i32_0 = arith.constant 0 : i32
    return %arg0, %c0_i32 : i32, i32
  }
}

</mosaic_0001>

<llo_original>
// kernel: mmlp_forward.1
$region0: #{mmlp_forward.1}
  #allocation0 [shape = 'u32[]', space=smem, size = 0x4, offset = 0x4, fixed_abs, tag = 'smem constant byte address 0x4 - core index']
  #allocation1 [shape = 'u32[144,128]{1,0:T(1,128)}', space=vmem, size = 0x12000, scoped, tag = 'internal scratch']
  %s0 = inlined_call_operand.vmem [shape: f32[16,3072], index: 0, kind: input, shape index: {}]
  %s1 = inlined_call_operand.hbm [shape: bf16[3072,512], index: 1, kind: input, shape index: {}]
  %s2 = inlined_call_operand.hbm [shape: f32[1,512], index: 2, kind: input, shape index: {}]
  %s3 = inlined_call_operand.hbm [shape: bf16[512,1024], index: 3, kind: input, shape index: {}]
  %s4 = inlined_call_operand.hbm [shape: f32[1,1024], index: 4, kind: input, shape index: {}]
  %s5 = inlined_call_operand.hbm [shape: bf16[1024,512], index: 5, kind: input, shape index: {}]
  %s6 = inlined_call_operand.hbm [shape: f32[1,512], index: 6, kind: input, shape index: {}]
  %s7 = inlined_call_operand.hbm [shape: bf16[512,128], index: 7, kind: input, shape index: {}]
  %s8 = inlined_call_operand.hbm [shape: f32[1,128], index: 8, kind: input, shape index: {}]
  %s9 = inlined_call_operand.vmem [shape: f32[16,128], index: 9, kind: output, shape index: {}]
  %s10 = sld [smem:[#allocation0]]
  $region78: #{mmlp_forward.1} parent=0
    _
  %s12 = ssub.s32 1, %s10
  %s13 = scalar_select 0, %s12, %s10
  $region1: #{mmlp_forward.1} parent=0
    #allocation2 [shape = 'u8[3145728]{0}', space=vmem, size = 0x300000, scoped, tag = 'input window, operand 1, single buffered']
    #allocation3 [shape = 's32[1]{0}', space=sflag, size = 0x4, scoped, tag = 'scoped memory for mmlp_forward.1']
    #allocation4 [shape = 'u8[2048]{0}', space=vmem, size = 0x800, scoped, tag = 'input window, operand 2, single buffered']
    #allocation5 [shape = 's32[1]{0}', space=sflag, size = 0x4, scoped, tag = 'scoped memory for mmlp_forward.1']
    #allocation6 [shape = 'u8[1048576]{0}', space=vmem, size = 0x100000, scoped, tag = 'input window, operand 3, single buffered']
    #allocation7 [shape = 'u8[4096]{0}', space=vmem, size = 0x1000, scoped, tag = 'input window, operand 4, single buffered']
    #allocation8 [shape = 's32[1]{0}', space=sflag, size = 0x4, scoped, tag = 'scoped memory for mmlp_forward.1']
    #allocation9 [shape = 'u8[1048576]{0}', space=vmem, size = 0x100000, scoped, tag = 'input window, operand 5, single buffered']
    #allocation10 [shape = 'u8[2048]{0}', space=vmem, size = 0x800, scoped, tag = 'input window, operand 6, single buffered']
    #allocation11 [shape = 's32[1]{0}', space=sflag, size = 0x4, scoped, tag = 'scoped memory for mmlp_forward.1']
    #allocation12 [shape = 'u8[131072]{0}', space=vmem, size = 0x20000, scoped, tag = 'input window, operand 7, single buffered']
    #allocation13 [shape = 'u8[512]{0}', space=vmem, size = 0x400, scoped, tag = 'input window, operand 8, single buffered']
    #allocation14 [shape = 's32[1]{0}', space=sflag, size = 0x4, scoped, tag = 'scoped memory for mmlp_forward.1']
    %14 = vsyncpa [#allocation3], 0
    %15 = vsyncpa [#allocation5], 0
    %16 = vsyncpa [#allocation8], 0
    %17 = vsyncpa [#allocation11], 0
    %18 = vsyncpa [#allocation14], 0
    // Predicated region
    $region2: #{mmlp_forward.1} parent=1 // pred_check
      _
    $region3: #{mmlp_forward.1} parent=1 // pred_check_branch
      %20 = sbr.rel (0) target = $region5
    $region4: #{mmlp_forward.1} parent=1 // pred_region
      _
    $region5: #{mmlp_forward.1} parent=1 // pred_fallthru
      _
    // Predicated region
    $region6: #{mmlp_forward.1} parent=1 // pred_check
      _
    $region7: #{mmlp_forward.1} parent=1 // pred_check_branch
      %22 = sbr.rel (0) target = $region9
    $region8: #{mmlp_forward.1} parent=1 // pred_region
      %s24 = ssub.s32 98304, 98304
      %25 = vsyncadd [#allocation3], %s24
      %s26 = sshll.u32 [#allocation2], 4
      %s27 = int_to_ptr.vmem [resolvable:$true] %s26
      %32 = dma.hbm_to_vmem [thread:$0]  %s1, 98304, %s27, [#allocation3], 256, 256, 16
    $region9: #{mmlp_forward.1} parent=1 // pred_fallthru
      _
    // Predicated region
    $region10: #{mmlp_forward.1} parent=1 // pred_check
      _
    $region11: #{mmlp_forward.1} parent=1 // pred_check_branch
      %34 = sbr.rel (0) target = $region13
    $region12: #{mmlp_forward.1} parent=1 // pred_region
      %s36 = ssub.s32 64, 64
      %37 = vsyncadd [#allocation5], %s36
      %s39 = sshll.u32 [#allocation4], 4
      %s40 = int_to_ptr.vmem [resolvable:$true] %s39
      %42 = dma.hbm_to_vmem [thread:$0]  %s2, 64, %s40, [#allocation5]
    $region13: #{mmlp_forward.1} parent=1 // pred_fallthru
      _
    // Predicated region
    $region14: #{mmlp_forward.1} parent=1 // pred_check
      _
    $region15: #{mmlp_forward.1} parent=1 // pred_check_branch
      %44 = sbr.rel (0) target = $region17
    $region16: #{mmlp_forward.1} parent=1 // pred_region
      %s46 = ssub.s32 32768, 32768
      %47 = vsyncadd [#allocation5], %s46
      %s48 = sshll.u32 [#allocation6], 4
      %s49 = int_to_ptr.vmem [resolvable:$true] %s48
      %54 = dma.hbm_to_vmem [thread:$0]  %s3, 32768, %s49, [#allocation5], 512, 512, 32
    $region17: #{mmlp_forward.1} parent=1 // pred_fallthru
      _
    // Predicated region
    $region18: #{mmlp_forward.1} parent=1 // pred_check
      _
    $region19: #{mmlp_forward.1} parent=1 // pred_check_branch
      %56 = sbr.rel (0) target = $region21
    $region20: #{mmlp_forward.1} parent=1 // pred_region
      %s58 = ssub.s32 128, 128
      %59 = vsyncadd [#allocation8], %s58
      %s61 = sshll.u32 [#allocation7], 4
      %s62 = int_to_ptr.vmem [resolvable:$true] %s61
      %64 = dma.hbm_to_vmem [thread:$0]  %s4, 128, %s62, [#allocation8]
    $region21: #{mmlp_forward.1} parent=1 // pred_fallthru
      _
    // Predicated region
    $region22: #{mmlp_forward.1} parent=1 // pred_check
      _
    $region23: #{mmlp_forward.1} parent=1 // pred_check_branch
      %66 = sbr.rel (0) target = $region25
    $region24: #{mmlp_forward.1} parent=1 // pred_region
      %s68 = ssub.s32 32768, 32768
      %69 = vsyncadd [#allocation8], %s68
      %s70 = sshll.u32 [#allocation9], 4
      %s71 = int_to_ptr.vmem [resolvable:$true] %s70
      %76 = dma.hbm_to_vmem [thread:$0]  %s5, 32768, %s71, [#allocation8], 256, 256, 16
    $region25: #{mmlp_forward.1} parent=1 // pred_fallthru
      _
    // Predicated region
    $region26: #{mmlp_forward.1} parent=1 // pred_check
      _
    $region27: #{mmlp_forward.1} parent=1 // pred_check_branch
      %78 = sbr.rel (0) target = $region29
    $region28: #{mmlp_forward.1} parent=1 // pred_region
      %s80 = ssub.s32 64, 64
      %81 = vsyncadd [#allocation11], %s80
      %s83 = sshll.u32 [#allocation10], 4
      %s84 = int_to_ptr.vmem [resolvable:$true] %s83
      %86 = dma.hbm_to_vmem [thread:$0]  %s6, 64, %s84, [#allocation11]
    $region29: #{mmlp_forward.1} parent=1 // pred_fallthru
      _
    // Predicated region
    $region30: #{mmlp_forward.1} parent=1 // pred_check
      _
    $region31: #{mmlp_forward.1} parent=1 // pred_check_branch
      %88 = sbr.rel (0) target = $region33
    $region32: #{mmlp_forward.1} parent=1 // pred_region
      %s90 = ssub.s32 4096, 4096
      %91 = vsyncadd [#allocation11], %s90
      %s92 = sshll.u32 [#allocation12], 4
      %s93 = int_to_ptr.vmem [resolvable:$true] %s92
      %98 = dma.hbm_to_vmem [thread:$0]  %s7, 4096, %s93, [#allocation11], 64, 64, 4
    $region33: #{mmlp_forward.1} parent=1 // pred_fallthru
      _
    // Predicated region
    $region34: #{mmlp_forward.1} parent=1 // pred_check
      _
    $region35: #{mmlp_forward.1} parent=1 // pred_check_branch
      %100 = sbr.rel (0) target = $region37
    $region36: #{mmlp_forward.1} parent=1 // pred_region
      %s102 = ssub.s32 16, 16
      %103 = vsyncadd [#allocation14], %s102
      %s105 = sshll.u32 [#allocation13], 4
      %s106 = int_to_ptr.vmem [resolvable:$true] %s105
      %108 = dma.hbm_to_vmem [thread:$0]  %s8, 16, %s106, [#allocation14]
    $region37: #{mmlp_forward.1} parent=1 // pred_fallthru
      _
    // Predicated region
    $region38: #{mmlp_forward.1} parent=1 // pred_check
      _
    $region39: #{mmlp_forward.1} parent=1 // pred_check_branch
      %110 = sbr.rel (0) target = $region41
    $region40: #{mmlp_forward.1} parent=1 // pred_region
      %111 = dma.done [#allocation3], 98304
    $region41: #{mmlp_forward.1} parent=1 // pred_fallthru
      _
    // Predicated region
    $region42: #{mmlp_forward.1} parent=1 // pred_check
      _
    $region43: #{mmlp_forward.1} parent=1 // pred_check_branch
      %113 = sbr.rel (0) target = $region45
    $region44: #{mmlp_forward.1} parent=1 // pred_region
      %114 = dma.done [#allocation5], 64
    $region45: #{mmlp_forward.1} parent=1 // pred_fallthru
      _
    // Predicated region
    $region46: #{mmlp_forward.1} parent=1 // pred_check
      _
    $region47: #{mmlp_forward.1} parent=1 // pred_check_branch
      %116 = sbr.rel (0) target = $region49
    $region48: #{mmlp_forward.1} parent=1 // pred_region
      %117 = dma.done [#allocation5], 32768
    $region49: #{mmlp_forward.1} parent=1 // pred_fallthru
      _
    // Predicated region
    $region50: #{mmlp_forward.1} parent=1 // pred_check
      _
    $region51: #{mmlp_forward.1} parent=1 // pred_check_branch
      %119 = sbr.rel (0) target = $region53
    $region52: #{mmlp_forward.1} parent=1 // pred_region
      %120 = dma.done [#allocation8], 128
    $region53: #{mmlp_forward.1} parent=1 // pred_fallthru
      _
    // Predicated region
    $region54: #{mmlp_forward.1} parent=1 // pred_check
      _
    $region55: #{mmlp_forward.1} parent=1 // pred_check_branch
      %122 = sbr.rel (0) target = $region57
    $region56: #{mmlp_forward.1} parent=1 // pred_region
      %123 = dma.done [#allocation8], 32768
    $region57: #{mmlp_forward.1} parent=1 // pred_fallthru
      _
    // Predicated region
    $region58: #{mmlp_forward.1} parent=1 // pred_check
      _
    $region59: #{mmlp_forward.1} parent=1 // pred_check_branch
      %125 = sbr.rel (0) target = $region61
    $region60: #{mmlp_forward.1} parent=1 // pred_region
      %126 = dma.done [#allocation11], 64
    $region61: #{mmlp_forward.1} parent=1 // pred_fallthru
      _
    // Predicated region
    $region62: #{mmlp_forward.1} parent=1 // pred_check
      _
    $region63: #{mmlp_forward.1} parent=1 // pred_check_branch
      %128 = sbr.rel (0) target = $region65
    $region64: #{mmlp_forward.1} parent=1 // pred_region
      %129 = dma.done [#allocation11], 4096
    $region65: #{mmlp_forward.1} parent=1 // pred_fallthru
      _
    // Predicated region
    $region66: #{mmlp_forward.1} parent=1 // pred_check
      _
    $region67: #{mmlp_forward.1} parent=1 // pred_check_branch
      %131 = sbr.rel (0) target = $region69
    $region68: #{mmlp_forward.1} parent=1 // pred_region
      %132 = dma.done [#allocation14], 16
    $region69: #{mmlp_forward.1} parent=1 // pred_fallthru
      _
    %v134 = vld [vmem:[%s0] sm:$0xff]
    %v135 = vld [vmem:[%s0 + $0x8] sm:$0xff]
    %v136 = vld [vmem:[%s0 + $0x10] sm:$0xff]
    %v137 = vld [vmem:[%s0 + $0x18] sm:$0xff]
    %v138 = vld [vmem:[%s0 + $0x20] sm:$0xff]
    %v139 = vld [vmem:[%s0 + $0x28] sm:$0xff]
    %v140 = vld [vmem:[%s0 + $0x30] sm:$0xff]
    %v141 = vld [vmem:[%s0 + $0x38] sm:$0xff]
    %v142 = vld [vmem:[%s0 + $0x40] sm:$0xff]
    %v143 = vld [vmem:[%s0 + $0x48] sm:$0xff]
    %v144 = vld [vmem:[%s0 + $0x50] sm:$0xff]
    %v145 = vld [vmem:[%s0 + $0x58] sm:$0xff]
    %v146 = vld [vmem:[%s0 + $0x60] sm:$0xff]
    %v147 = vld [vmem:[%s0 + $0x68] sm:$0xff]
    %v148 = vld [vmem:[%s0 + $0x70] sm:$0xff]
    %v149 = vld [vmem:[%s0 + $0x78] sm:$0xff]
    %v150 = vld [vmem:[%s0 + $0x80] sm:$0xff]
    %v151 = vld [vmem:[%s0 + $0x88] sm:$0xff]
    %v152 = vld [vmem:[%s0 + $0x90] sm:$0xff]
    %v153 = vld [vmem:[%s0 + $0x98] sm:$0xff]
    %v154 = vld [vmem:[%s0 + $0xa0] sm:$0xff]
    %v155 = vld [vmem:[%s0 + $0xa8] sm:$0xff]
    %v156 = vld [vmem:[%s0 + $0xb0] sm:$0xff]
    %v157 = vld [vmem:[%s0 + $0xb8] sm:$0xff]
    %v158 = vld [vmem:[%s0 + $0xc0] sm:$0xff]
    %v159 = vld [vmem:[%s0 + $0xc8] sm:$0xff]
    %v160 = vld [vmem:[%s0 + $0xd0] sm:$0xff]
    %v161 = vld [vmem:[%s0 + $0xd8] sm:$0xff]
    %v162 = vld [vmem:[%s0 + $0xe0] sm:$0xff]
    %v163 = vld [vmem:[%s0 + $0xe8] sm:$0xff]
    %v164 = vld [vmem:[%s0 + $0xf0] sm:$0xff]
    %v165 = vld [vmem:[%s0 + $0xf8] sm:$0xff]
    %v166 = vld [vmem:[%s0 + $0x100] sm:$0xff]
    %v167 = vld [vmem:[%s0 + $0x108] sm:$0xff]
    %v168 = vld [vmem:[%s0 + $0x110] sm:$0xff]
    %v169 = vld [vmem:[%s0 + $0x118] sm:$0xff]
    %v170 = vld [vmem:[%s0 + $0x120] sm:$0xff]
    %v171 = vld [vmem:[%s0 + $0x128] sm:$0xff]
    %v172 = vld [vmem:[%s0 + $0x130] sm:$0xff]
    %v173 = vld [vmem:[%s0 + $0x138] sm:$0xff]
    %v174 = vld [vmem:[%s0 + $0x140] sm:$0xff]
    %v175 = vld [vmem:[%s0 + $0x148] sm:$0xff]
    %v176 = vld [vmem:[%s0 + $0x150] sm:$0xff]
    %v177 = vld [vmem:[%s0 + $0x158] sm:$0xff]
    %v178 = vld [vmem:[%s0 + $0x160] sm:$0xff]
    %v179 = vld [vmem:[%s0 + $0x168] sm:$0xff]
    %v180 = vld [vmem:[%s0 + $0x170] sm:$0xff]
    %v181 = vld [vmem:[%s0 + $0x178] sm:$0xff]
    %v182 = vpack.c.bf16 %v158, %v134
    %v183 = vpack.c.bf16 %v159, %v135
    %v184 = vpack.c.bf16 %v160, %v136
    %v185 = vpack.c.bf16 %v161, %v137
    %v186 = vpack.c.bf16 %v162, %v138
    %v187 = vpack.c.bf16 %v163, %v139
    %v188 = vpack.c.bf16 %v164, %v140
    %v189 = vpack.c.bf16 %v165, %v141
    %v190 = vpack.c.bf16 %v166, %v142
    %v191 = vpack.c.bf16 %v167, %v143
    %v192 = vpack.c.bf16 %v168, %v144
    %v193 = vpack.c.bf16 %v169, %v145
    %v194 = vpack.c.bf16 %v170, %v146
    %v195 = vpack.c.bf16 %v171, %v147
    %v196 = vpack.c.bf16 %v172, %v148
    %v197 = vpack.c.bf16 %v173, %v149
    %v198 = vpack.c.bf16 %v174, %v150
    %v199 = vpack.c.bf16 %v175, %v151
    %v200 = vpack.c.bf16 %v176, %v152
    %v201 = vpack.c.bf16 %v177, %v153
    %v202 = vpack.c.bf16 %v178, %v154
    %v203 = vpack.c.bf16 %v179, %v155
    %v204 = vpack.c.bf16 %v180, %v156
    %v205 = vpack.c.bf16 %v181, %v157
    %v206 = vld [vmem:[#allocation2] sm:$0xff]
    %v207 = vld [vmem:[#allocation2 + $0x8] sm:$0xff]
    %v208 = vld [vmem:[#allocation2 + $0x10] sm:$0xff]
    %v209 = vld [vmem:[#allocation2 + $0x18] sm:$0xff]
    %v210 = vld [vmem:[#allocation2 + $0x20] sm:$0xff]
    %v211 = vld [vmem:[#allocation2 + $0x28] sm:$0xff]
    %v212 = vld [vmem:[#allocation2 + $0x30] sm:$0xff]
    %v213 = vld [vmem:[#allocation2 + $0x38] sm:$0xff]
    %v214 = vld [vmem:[#allocation2 + $0x40] sm:$0xff]
    %v215 = vld [vmem:[#allocation2 + $0x48] sm:$0xff]
    %v216 = vld [vmem:[#allocation2 + $0x50] sm:$0xff]
    %v217 = vld [vmem:[#allocation2 + $0x58] sm:$0xff]
    %v218 = vld [vmem:[#allocation2 + $0x60] sm:$0xff]
    %v219 = vld [vmem:[#allocation2 + $0x68] sm:$0xff]
    %v220 = vld [vmem:[#allocation2 + $0x70] sm:$0xff]
    %v221 = vld [vmem:[#allocation2 + $0x78] sm:$0xff]
    %v222 = vld [vmem:[#allocation2 + $0x80] sm:$0xff]
    %v223 = vld [vmem:[#allocation2 + $0x88] sm:$0xff]
    %v224 = vld [vmem:[#allocation2 + $0x90] sm:$0xff]
    %v225 = vld [vmem:[#allocation2 + $0x98] sm:$0xff]
    %v226 = vld [vmem:[#allocation2 + $0xa0] sm:$0xff]
    %v227 = vld [vmem:[#allocation2 + $0xa8] sm:$0xff]
    %v228 = vld [vmem:[#allocation2 + $0xb0] sm:$0xff]
    %v229 = vld [vmem:[#allocation2 + $0xb8] sm:$0xff]
    %v230 = vld [vmem:[#allocation2 + $0xc0] sm:$0xff]
    %v231 = vld [vmem:[#allocation2 + $0xc8] sm:$0xff]
    %v232 = vld [vmem:[#allocation2 + $0xd0] sm:$0xff]
    %v233 = vld [vmem:[#allocation2 + $0xd8] sm:$0xff]
    %v234 = vld [vmem:[#allocation2 + $0xe0] sm:$0xff]
    %v235 = vld [vmem:[#allocation2 + $0xe8] sm:$0xff]
    %v236 = vld [vmem:[#allocation2 + $0xf0] sm:$0xff]
    %v237 = vld [vmem:[#allocation2 + $0xf8] sm:$0xff]
    %v238 = vld [vmem:[#allocation2 + $0x100] sm:$0xff]
    %v239 = vld [vmem:[#allocation2 + $0x108] sm:$0xff]
    %v240 = vld [vmem:[#allocation2 + $0x110] sm:$0xff]
    %v241 = vld [vmem:[#allocation2 + $0x118] sm:$0xff]
    %v242 = vld [vmem:[#allocation2 + $0x120] sm:$0xff]
    %v243 = vld [vmem:[#allocation2 + $0x128] sm:$0xff]
    %v244 = vld [vmem:[#allocation2 + $0x130] sm:$0xff]
    %v245 = vld [vmem:[#allocation2 + $0x138] sm:$0xff]
    %v246 = vld [vmem:[#allocation2 + $0x140] sm:$0xff]
    %v247 = vld [vmem:[#allocation2 + $0x148] sm:$0xff]
    %v248 = vld [vmem:[#allocation2 + $0x150] sm:$0xff]
    %v249 = vld [vmem:[#allocation2 + $0x158] sm:$0xff]
    %v250 = vld [vmem:[#allocation2 + $0x160] sm:$0xff]
    %v251 = vld [vmem:[#allocation2 + $0x168] sm:$0xff]
    %v252 = vld [vmem:[#allocation2 + $0x170] sm:$0xff]
    %v253 = vld [vmem:[#allocation2 + $0x178] sm:$0xff]
    %v254 = vld [vmem:[#allocation2 + $0x180] sm:$0xff]
    %v255 = vld [vmem:[#allocation2 + $0x188] sm:$0xff]
    %v256 = vld [vmem:[#allocation2 + $0x190] sm:$0xff]
    %v257 = vld [vmem:[#allocation2 + $0x198] sm:$0xff]
    %v258 = vld [vmem:[#allocation2 + $0x1a0] sm:$0xff]
    %v259 = vld [vmem:[#allocation2 + $0x1a8] sm:$0xff]
    %v260 = vld [vmem:[#allocation2 + $0x1b0] sm:$0xff]
    %v261 = vld [vmem:[#allocation2 + $0x1b8] sm:$0xff]
    %v262 = vld [vmem:[#allocation2 + $0x1c0] sm:$0xff]
    %v263 = vld [vmem:[#allocation2 + $0x1c8] sm:$0xff]
    %v264 = vld [vmem:[#allocation2 + $0x1d0] sm:$0xff]
    %v265 = vld [vmem:[#allocation2 + $0x1d8] sm:$0xff]
    %v266 = vld [vmem:[#allocation2 + $0x1e0] sm:$0xff]
    %v267 = vld [vmem:[#allocation2 + $0x1e8] sm:$0xff]
    %v268 = vld [vmem:[#allocation2 + $0x1f0] sm:$0xff]
    %v269 = vld [vmem:[#allocation2 + $0x1f8] sm:$0xff]
    %v270 = vld [vmem:[#allocation2 + $0x200] sm:$0xff]
    %v271 = vld [vmem:[#allocation2 + $0x208] sm:$0xff]
    %v272 = vld [vmem:[#allocation2 + $0x210] sm:$0xff]
    %v273 = vld [vmem:[#allocation2 + $0x218] sm:$0xff]
    %v274 = vld [vmem:[#allocation2 + $0x220] sm:$0xff]
    %v275 = vld [vmem:[#allocation2 + $0x228] sm:$0xff]
    %v276 = vld [vmem:[#allocation2 + $0x230] sm:$0xff]
    %v277 = vld [vmem:[#allocation2 + $0x238] sm:$0xff]
    %v278 = vld [vmem:[#allocation2 + $0x240] sm:$0xff]
    %v279 = vld [vmem:[#allocation2 + $0x248] sm:$0xff]
    %v280 = vld [vmem:[#allocation2 + $0x250] sm:$0xff]
    %v281 = vld [vmem:[#allocation2 + $0x258] sm:$0xff]
    %v282 = vld [vmem:[#allocation2 + $0x260] sm:$0xff]
    %v283 = vld [vmem:[#allocation2 + $0x268] sm:$0xff]
    %v284 = vld [vmem:[#allocation2 + $0x270] sm:$0xff]
    %v285 = vld [vmem:[#allocation2 + $0x278] sm:$0xff]
    %v286 = vld [vmem:[#allocation2 + $0x280] sm:$0xff]
    %v287 = vld [vmem:[#allocation2 + $0x288] sm:$0xff]
    %v288 = vld [vmem:[#allocation2 + $0x290] sm:$0xff]
    %v289 = vld [vmem:[#allocation2 + $0x298] sm:$0xff]
    %v290 = vld [vmem:[#allocation2 + $0x2a0] sm:$0xff]
    %v291 = vld [vmem:[#allocation2 + $0x2a8] sm:$0xff]
    %v292 = vld [vmem:[#allocation2 + $0x2b0] sm:$0xff]
    %v293 = vld [vmem:[#allocation2 + $0x2b8] sm:$0xff]
    %v294 = vld [vmem:[#allocation2 + $0x2c0] sm:$0xff]
    %v295 = vld [vmem:[#allocation2 + $0x2c8] sm:$0xff]
    %v296 = vld [vmem:[#allocation2 + $0x2d0] sm:$0xff]
    %v297 = vld [vmem:[#allocation2 + $0x2d8] sm:$0xff]
    %v298 = vld [vmem:[#allocation2 + $0x2e0] sm:$0xff]
    %v299 = vld [vmem:[#allocation2 + $0x2e8] sm:$0xff]
    %v300 = vld [vmem:[#allocation2 + $0x2f0] sm:$0xff]
    %v301 = vld [vmem:[#allocation2 + $0x2f8] sm:$0xff]
    %v302 = vld [vmem:[#allocation2 + $0x300] sm:$0xff]
    %v303 = vld [vmem:[#allocation2 + $0x308] sm:$0xff]
    %v304 = vld [vmem:[#allocation2 + $0x310] sm:$0xff]
    %v305 = vld [vmem:[#allocation2 + $0x318] sm:$0xff]
    %v306 = vld [vmem:[#allocation2 + $0x320] sm:$0xff]
    %v307 = vld [vmem:[#allocation2 + $0x328] sm:$0xff]
    %v308 = vld [vmem:[#allocation2 + $0x330] sm:$0xff]
    %v309 = vld [vmem:[#allocation2 + $0x338] sm:$0xff]
    %v310 = vld [vmem:[#allocation2 + $0x340] sm:$0xff]
    %v311 = vld [vmem:[#allocation2 + $0x348] sm:$0xff]
    %v312 = vld [vmem:[#allocation2 + $0x350] sm:$0xff]
    %v313 = vld [vmem:[#allocation2 + $0x358] sm:$0xff]
    %v314 = vld [vmem:[#allocation2 + $0x360] sm:$0xff]
    %v315 = vld [vmem:[#allocation2 + $0x368] sm:$0xff]
    %v316 = vld [vmem:[#allocation2 + $0x370] sm:$0xff]
    %v317 = vld [vmem:[#allocation2 + $0x378] sm:$0xff]
    %v318 = vld [vmem:[#allocation2 + $0x380] sm:$0xff]
    %v319 = vld [vmem:[#allocation2 + $0x388] sm:$0xff]
    %v320 = vld [vmem:[#allocation2 + $0x390] sm:$0xff]
    %v321 = vld [vmem:[#allocation2 + $0x398] sm:$0xff]
    %v322 = vld [vmem:[#allocation2 + $0x3a0] sm:$0xff]
    %v323 = vld [vmem:[#allocation2 + $0x3a8] sm:$0xff]
    %v324 = vld [vmem:[#allocation2 + $0x3b0] sm:$0xff]
    %v325 = vld [vmem:[#allocation2 + $0x3b8] sm:$0xff]
    %v326 = vld [vmem:[#allocation2 + $0x3c0] sm:$0xff]
    %v327 = vld [vmem:[#allocation2 + $0x3c8] sm:$0xff]
    %v328 = vld [vmem:[#allocation2 + $0x3d0] sm:$0xff]
    %v329 = vld [vmem:[#allocation2 + $0x3d8] sm:$0xff]
    %v330 = vld [vmem:[#allocation2 + $0x3e0] sm:$0xff]
    %v331 = vld [vmem:[#allocation2 + $0x3e8] sm:$0xff]
    %v332 = vld [vmem:[#allocation2 + $0x3f0] sm:$0xff]
    %v333 = vld [vmem:[#allocation2 + $0x3f8] sm:$0xff]
    %v334 = vld [vmem:[#allocation2 + $0x400] sm:$0xff]
    %v335 = vld [vmem:[#allocation2 + $0x408] sm:$0xff]
    %v336 = vld [vmem:[#allocation2 + $0x410] sm:$0xff]
    %v337 = vld [vmem:[#allocation2 + $0x418] sm:$0xff]
    %v338 = vld [vmem:[#allocation2 + $0x420] sm:$0xff]
    %v339 = vld [vmem:[#allocation2 + $0x428] sm:$0xff]
    %v340 = vld [vmem:[#allocation2 + $0x430] sm:$0xff]
    %v341 = vld [vmem:[#allocation2 + $0x438] sm:$0xff]
    %v342 = vld [vmem:[#allocation2 + $0x440] sm:$0xff]
    %v343 = vld [vmem:[#allocation2 + $0x448] sm:$0xff]
    %v344 = vld [vmem:[#allocation2 + $0x450] sm:$0xff]
    %v345 = vld [vmem:[#allocation2 + $0x458] sm:$0xff]
    %v346 = vld [vmem:[#allocation2 + $0x460] sm:$0xff]
    %v347 = vld [vmem:[#allocation2 + $0x468] sm:$0xff]
    %v348 = vld [vmem:[#allocation2 + $0x470] sm:$0xff]
    %v349 = vld [vmem:[#allocation2 + $0x478] sm:$0xff]
    %v350 = vld [vmem:[#allocation2 + $0x480] sm:$0xff]
    %v351 = vld [vmem:[#allocation2 + $0x488] sm:$0xff]
    %v352 = vld [vmem:[#allocation2 + $0x490] sm:$0xff]
    %v353 = vld [vmem:[#allocation2 + $0x498] sm:$0xff]
    %v354 = vld [vmem:[#allocation2 + $0x4a0] sm:$0xff]
    %v355 = vld [vmem:[#allocation2 + $0x4a8] sm:$0xff]
    %v356 = vld [vmem:[#allocation2 + $0x4b0] sm:$0xff]
    %v357 = vld [vmem:[#allocation2 + $0x4b8] sm:$0xff]
    %v358 = vld [vmem:[#allocation2 + $0x4c0] sm:$0xff]
    %v359 = vld [vmem:[#allocation2 + $0x4c8] sm:$0xff]
    %v360 = vld [vmem:[#allocation2 + $0x4d0] sm:$0xff]
    %v361 = vld [vmem:[#allocation2 + $0x4d8] sm:$0xff]
    %v362 = vld [vmem:[#allocation2 + $0x4e0] sm:$0xff]
    %v363 = vld [vmem:[#allocation2 + $0x4e8] sm:$0xff]
    %v364 = vld [vmem:[#allocation2 + $0x4f0] sm:$0xff]
    %v365 = vld [vmem:[#allocation2 + $0x4f8] sm:$0xff]
    %v366 = vld [vmem:[#allocation2 + $0x500] sm:$0xff]
    %v367 = vld [vmem:[#allocation2 + $0x508] sm:$0xff]
    %v368 = vld [vmem:[#allocation2 + $0x510] sm:$0xff]
    %v369 = vld [vmem:[#allocation2 + $0x518] sm:$0xff]
    %v370 = vld [vmem:[#allocation2 + $0x520] sm:$0xff]
    %v371 = vld [vmem:[#allocation2 + $0x528] sm:$0xff]
    %v372 = vld [vmem:[#allocation2 + $0x530] sm:$0xff]
    %v373 = vld [vmem:[#allocation2 + $0x538] sm:$0xff]
    %v374 = vld [vmem:[#allocation2 + $0x540] sm:$0xff]
    %v375 = vld [vmem:[#allocation2 + $0x548] sm:$0xff]
    %v376 = vld [vmem:[#allocation2 + $0x550] sm:$0xff]
    %v377 = vld [vmem:[#allocation2 + $0x558] sm:$0xff]
    %v378 = vld [vmem:[#allocation2 + $0x560] sm:$0xff]
    %v379 = vld [vmem:[#allocation2 + $0x568] sm:$0xff]
    %v380 = vld [vmem:[#allocation2 + $0x570] sm:$0xff]
    %v381 = vld [vmem:[#allocation2 + $0x578] sm:$0xff]
    %v382 = vld [vmem:[#allocation2 + $0x580] sm:$0xff]
    %v383 = vld [vmem:[#allocation2 + $0x588] sm:$0xff]
    %v384 = vld [vmem:[#allocation2 + $0x590] sm:$0xff]
    %v385 = vld [vmem:[#allocation2 + $0x598] sm:$0xff]
    %v386 = vld [vmem:[#allocation2 + $0x5a0] sm:$0xff]
    %v387 = vld [vmem:[#allocation2 + $0x5a8] sm:$0xff]
    %v388 = vld [vmem:[#allocation2 + $0x5b0] sm:$0xff]
    %v389 = vld [vmem:[#allocation2 + $0x5b8] sm:$0xff]
    %v390 = vld [vmem:[#allocation2 + $0x5c0] sm:$0xff]
    %v391 = vld [vmem:[#allocation2 + $0x5c8] sm:$0xff]
    %v392 = vld [vmem:[#allocation2 + $0x5d0] sm:$0xff]
    %v393 = vld [vmem:[#allocation2 + $0x5d8] sm:$0xff]
    %v394 = vld [vmem:[#allocation2 + $0x5e0] sm:$0xff]
    %v395 = vld [vmem:[#allocation2 + $0x5e8] sm:$0xff]
    %v396 = vld [vmem:[#allocation2 + $0x5f0] sm:$0xff]
    %v397 = vld [vmem:[#allocation2 + $0x5f8] sm:$0xff]
    %v398 = vld [vmem:[#allocation2 + $0x600] sm:$0xff]
    %v399 = vld [vmem:[#allocation2 + $0x608] sm:$0xff]
    %v400 = vld [vmem:[#allocation2 + $0x610] sm:$0xff]
    %v401 = vld [vmem:[#allocation2 + $0x618] sm:$0xff]
    %v402 = vld [vmem:[#allocation2 + $0x620] sm:$0xff]
    %v403 = vld [vmem:[#allocation2 + $0x628] sm:$0xff]
    %v404 = vld [vmem:[#allocation2 + $0x630] sm:$0xff]
    %v405 = vld [vmem:[#allocation2 + $0x638] sm:$0xff]
    %v406 = vld [vmem:[#allocation2 + $0x640] sm:$0xff]
    %v407 = vld [vmem:[#allocation2 + $0x648] sm:$0xff]
    %v408 = vld [vmem:[#allocation2 + $0x650] sm:$0xff]
    %v409 = vld [vmem:[#allocation2 + $0x658] sm:$0xff]
    %v410 = vld [vmem:[#allocation2 + $0x660] sm:$0xff]
    %v411 = vld [vmem:[#allocation2 + $0x668] sm:$0xff]
    %v412 = vld [vmem:[#allocation2 + $0x670] sm:$0xff]
    %v413 = vld [vmem:[#allocation2 + $0x678] sm:$0xff]
    %v414 = vld [vmem:[#allocation2 + $0x680] sm:$0xff]
    %v415 = vld [vmem:[#allocation2 + $0x688] sm:$0xff]
    %v416 = vld [vmem:[#allocation2 + $0x690] sm:$0xff]
    %v417 = vld [vmem:[#allocation2 + $0x698] sm:$0xff]
    %v418 = vld [vmem:[#allocation2 + $0x6a0] sm:$0xff]
    %v419 = vld [vmem:[#allocation2 + $0x6a8] sm:$0xff]
    %v420 = vld [vmem:[#allocation2 + $0x6b0] sm:$0xff]
    %v421 = vld [vmem:[#allocation2 + $0x6b8] sm:$0xff]
    %v422 = vld [vmem:[#allocation2 + $0x6c0] sm:$0xff]
    %v423 = vld [vmem:[#allocation2 + $0x6c8] sm:$0xff]
    %v424 = vld [vmem:[#allocation2 + $0x6d0] sm:$0xff]
    %v425 = vld [vmem:[#allocation2 + $0x6d8] sm:$0xff]
    %v426 = vld [vmem:[#allocation2 + $0x6e0] sm:$0xff]
    %v427 = vld [vmem:[#allocation2 + $0x6e8] sm:$0xff]
    %v428 = vld [vmem:[#allocation2 + $0x6f0] sm:$0xff]
    %v429 = vld [vmem:[#allocation2 + $0x6f8] sm:$0xff]
    %v430 = vld [vmem:[#allocation2 + $0x700] sm:$0xff]
    %v431 = vld [vmem:[#allocation2 + $0x708] sm:$0xff]
    %v432 = vld [vmem:[#allocation2 + $0x710] sm:$0xff]
    %v433 = vld [vmem:[#allocation2 + $0x718] sm:$0xff]
    %v434 = vld [vmem:[#allocation2 + $0x720] sm:$0xff]
    %v435 = vld [vmem:[#allocation2 + $0x728] sm:$0xff]
    %v436 = vld [vmem:[#allocation2 + $0x730] sm:$0xff]
    %v437 = vld [vmem:[#allocation2 + $0x738] sm:$0xff]
    %v438 = vld [vmem:[#allocation2 + $0x740] sm:$0xff]
    %v439 = vld [vmem:[#allocation2 + $0x748] sm:$0xff]
    %v440 = vld [vmem:[#allocation2 + $0x750] sm:$0xff]
    %v441 = vld [vmem:[#allocation2 + $0x758] sm:$0xff]
    %v442 = vld [vmem:[#allocation2 + $0x760] sm:$0xff]
    %v443 = vld [vmem:[#allocation2 + $0x768] sm:$0xff]
    %v444 = vld [vmem:[#allocation2 + $0x770] sm:$0xff]
    %v445 = vld [vmem:[#allocation2 + $0x778] sm:$0xff]
    %v446 = vld [vmem:[#allocation2 + $0x780] sm:$0xff]
    %v447 = vld [vmem:[#allocation2 + $0x788] sm:$0xff]
    %v448 = vld [vmem:[#allocation2 + $0x790] sm:$0xff]
    %v449 = vld [vmem:[#allocation2 + $0x798] sm:$0xff]
    %v450 = vld [vmem:[#allocation2 + $0x7a0] sm:$0xff]
    %v451 = vld [vmem:[#allocation2 + $0x7a8] sm:$0xff]
    %v452 = vld [vmem:[#allocation2 + $0x7b0] sm:$0xff]
    %v453 = vld [vmem:[#allocation2 + $0x7b8] sm:$0xff]
    %v454 = vld [vmem:[#allocation2 + $0x7c0] sm:$0xff]
    %v455 = vld [vmem:[#allocation2 + $0x7c8] sm:$0xff]
    %v456 = vld [vmem:[#allocation2 + $0x7d0] sm:$0xff]
    %v457 = vld [vmem:[#allocation2 + $0x7d8] sm:$0xff]
    %v458 = vld [vmem:[#allocation2 + $0x7e0] sm:$0xff]
    %v459 = vld [vmem:[#allocation2 + $0x7e8] sm:$0xff]
    %v460 = vld [vmem:[#allocation2 + $0x7f0] sm:$0xff]
    %v461 = vld [vmem:[#allocation2 + $0x7f8] sm:$0xff]
    %v462 = vld [vmem:[#allocation2 + $0x800] sm:$0xff]
    %v463 = vld [vmem:[#allocation2 + $0x808] sm:$0xff]
    %v464 = vld [vmem:[#allocation2 + $0x810] sm:$0xff]
    %v465 = vld [vmem:[#allocation2 + $0x818] sm:$0xff]
    %v466 = vld [vmem:[#allocation2 + $0x820] sm:$0xff]
    %v467 = vld [vmem:[#allocation2 + $0x828] sm:$0xff]
    %v468 = vld [vmem:[#allocation2 + $0x830] sm:$0xff]
    %v469 = vld [vmem:[#allocation2 + $0x838] sm:$0xff]
    %v470 = vld [vmem:[#allocation2 + $0x840] sm:$0xff]
    %v471 = vld [vmem:[#allocation2 + $0x848] sm:$0xff]
    %v472 = vld [vmem:[#allocation2 + $0x850] sm:$0xff]
    %v473 = vld [vmem:[#allocation2 + $0x858] sm:$0xff]
    %v474 = vld [vmem:[#allocation2 + $0x860] sm:$0xff]
    %v475 = vld [vmem:[#allocation2 + $0x868] sm:$0xff]
    %v476 = vld [vmem:[#allocation2 + $0x870] sm:$0xff]
    %v477 = vld [vmem:[#allocation2 + $0x878] sm:$0xff]
    %v478 = vld [vmem:[#allocation2 + $0x880] sm:$0xff]
    %v479 = vld [vmem:[#allocation2 + $0x888] sm:$0xff]
    %v480 = vld [vmem:[#allocation2 + $0x890] sm:$0xff]
    %v481 = vld [vmem:[#allocation2 + $0x898] sm:$0xff]
    %v482 = vld [vmem:[#allocation2 + $0x8a0] sm:$0xff]
    %v483 = vld [vmem:[#allocation2 + $0x8a8] sm:$0xff]
    %v484 = vld [vmem:[#allocation2 + $0x8b0] sm:$0xff]
    %v485 = vld [vmem:[#allocation2 + $0x8b8] sm:$0xff]
    %v486 = vld [vmem:[#allocation2 + $0x8c0] sm:$0xff]
    %v487 = vld [vmem:[#allocation2 + $0x8c8] sm:$0xff]
    %v488 = vld [vmem:[#allocation2 + $0x8d0] sm:$0xff]
    %v489 = vld [vmem:[#allocation2 + $0x8d8] sm:$0xff]
    %v490 = vld [vmem:[#allocation2 + $0x8e0] sm:$0xff]
    %v491 = vld [vmem:[#allocation2 + $0x8e8] sm:$0xff]
    %v492 = vld [vmem:[#allocation2 + $0x8f0] sm:$0xff]
    %v493 = vld [vmem:[#allocation2 + $0x8f8] sm:$0xff]
    %v494 = vld [vmem:[#allocation2 + $0x900] sm:$0xff]
    %v495 = vld [vmem:[#allocation2 + $0x908] sm:$0xff]
    %v496 = vld [vmem:[#allocation2 + $0x910] sm:$0xff]
    %v497 = vld [vmem:[#allocation2 + $0x918] sm:$0xff]
    %v498 = vld [vmem:[#allocation2 + $0x920] sm:$0xff]
    %v499 = vld [vmem:[#allocation2 + $0x928] sm:$0xff]
    %v500 = vld [vmem:[#allocation2 + $0x930] sm:$0xff]
    %v501 = vld [vmem:[#allocation2 + $0x938] sm:$0xff]
    %v502 = vld [vmem:[#allocation2 + $0x940] sm:$0xff]
    %v503 = vld [vmem:[#allocation2 + $0x948] sm:$0xff]
    %v504 = vld [vmem:[#allocation2 + $0x950] sm:$0xff]
    %v505 = vld [vmem:[#allocation2 + $0x958] sm:$0xff]
    %v506 = vld [vmem:[#allocation2 + $0x960] sm:$0xff]
    %v507 = vld [vmem:[#allocation2 + $0x968] sm:$0xff]
    %v508 = vld [vmem:[#allocation2 + $0x970] sm:$0xff]
    %v509 = vld [vmem:[#allocation2 + $0x978] sm:$0xff]
    %v510 = vld [vmem:[#allocation2 + $0x980] sm:$0xff]
    %v511 = vld [vmem:[#allocation2 + $0x988] sm:$0xff]
    %v512 = vld [vmem:[#allocation2 + $0x990] sm:$0xff]
    %v513 = vld [vmem:[#allocation2 + $0x998] sm:$0xff]
    %v514 = vld [vmem:[#allocation2 + $0x9a0] sm:$0xff]
    %v515 = vld [vmem:[#allocation2 + $0x9a8] sm:$0xff]
    %v516 = vld [vmem:[#allocation2 + $0x9b0] sm:$0xff]
    %v517 = vld [vmem:[#allocation2 + $0x9b8] sm:$0xff]
    %v518 = vld [vmem:[#allocation2 + $0x9c0] sm:$0xff]
    %v519 = vld [vmem:[#allocation2 + $0x9c8] sm:$0xff]
    %v520 = vld [vmem:[#allocation2 + $0x9d0] sm:$0xff]
    %v521 = vld [vmem:[#allocation2 + $0x9d8] sm:$0xff]
    %v522 = vld [vmem:[#allocation2 + $0x9e0] sm:$0xff]
    %v523 = vld [vmem:[#allocation2 + $0x9e8] sm:$0xff]
    %v524 = vld [vmem:[#allocation2 + $0x9f0] sm:$0xff]
    %v525 = vld [vmem:[#allocation2 + $0x9f8] sm:$0xff]
    %v526 = vld [vmem:[#allocation2 + $0xa00] sm:$0xff]
    %v527 = vld [vmem:[#allocation2 + $0xa08] sm:$0xff]
    %v528 = vld [vmem:[#allocation2 + $0xa10] sm:$0xff]
    %v529 = vld [vmem:[#allocation2 + $0xa18] sm:$0xff]
    %v530 = vld [vmem:[#allocation2 + $0xa20] sm:$0xff]
    %v531 = vld [vmem:[#allocation2 + $0xa28] sm:$0xff]
    %v532 = vld [vmem:[#allocation2 + $0xa30] sm:$0xff]
    %v533 = vld [vmem:[#allocation2 + $0xa38] sm:$0xff]
    %v534 = vld [vmem:[#allocation2 + $0xa40] sm:$0xff]
    %v535 = vld [vmem:[#allocation2 + $0xa48] sm:$0xff]
    %v536 = vld [vmem:[#allocation2 + $0xa50] sm:$0xff]
    %v537 = vld [vmem:[#allocation2 + $0xa58] sm:$0xff]
    %v538 = vld [vmem:[#allocation2 + $0xa60] sm:$0xff]
    %v539 = vld [vmem:[#allocation2 + $0xa68] sm:$0xff]
    %v540 = vld [vmem:[#allocation2 + $0xa70] sm:$0xff]
    %v541 = vld [vmem:[#allocation2 + $0xa78] sm:$0xff]
    %v542 = vld [vmem:[#allocation2 + $0xa80] sm:$0xff]
    %v543 = vld [vmem:[#allocation2 + $0xa88] sm:$0xff]
    %v544 = vld [vmem:[#allocation2 + $0xa90] sm:$0xff]
    %v545 = vld [vmem:[#allocation2 + $0xa98] sm:$0xff]
    %v546 = vld [vmem:[#allocation2 + $0xaa0] sm:$0xff]
    %v547 = vld [vmem:[#allocation2 + $0xaa8] sm:$0xff]
    %v548 = vld [vmem:[#allocation2 + $0xab0] sm:$0xff]
    %v549 = vld [vmem:[#allocation2 + $0xab8] sm:$0xff]
    %v550 = vld [vmem:[#allocation2 + $0xac0] sm:$0xff]
    %v551 = vld [vmem:[#allocation2 + $0xac8] sm:$0xff]
    %v552 = vld [vmem:[#allocation2 + $0xad0] sm:$0xff]
    %v553 = vld [vmem:[#allocation2 + $0xad8] sm:$0xff]
    %v554 = vld [vmem:[#allocation2 + $0xae0] sm:$0xff]
    %v555 = vld [vmem:[#allocation2 + $0xae8] sm:$0xff]
    %v556 = vld [vmem:[#allocation2 + $0xaf0] sm:$0xff]
    %v557 = vld [vmem:[#allocation2 + $0xaf8] sm:$0xff]
    %v558 = vld [vmem:[#allocation2 + $0xb00] sm:$0xff]
    %v559 = vld [vmem:[#allocation2 + $0xb08] sm:$0xff]
    %v560 = vld [vmem:[#allocation2 + $0xb10] sm:$0xff]
    %v561 = vld [vmem:[#allocation2 + $0xb18] sm:$0xff]
    %v562 = vld [vmem:[#allocation2 + $0xb20] sm:$0xff]
    %v563 = vld [vmem:[#allocation2 + $0xb28] sm:$0xff]
    %v564 = vld [vmem:[#allocation2 + $0xb30] sm:$0xff]
    %v565 = vld [vmem:[#allocation2 + $0xb38] sm:$0xff]
    %v566 = vld [vmem:[#allocation2 + $0xb40] sm:$0xff]
    %v567 = vld [vmem:[#allocation2 + $0xb48] sm:$0xff]
    %v568 = vld [vmem:[#allocation2 + $0xb50] sm:$0xff]
    %v569 = vld [vmem:[#allocation2 + $0xb58] sm:$0xff]
    %v570 = vld [vmem:[#allocation2 + $0xb60] sm:$0xff]
    %v571 = vld [vmem:[#allocation2 + $0xb68] sm:$0xff]
    %v572 = vld [vmem:[#allocation2 + $0xb70] sm:$0xff]
    %v573 = vld [vmem:[#allocation2 + $0xb78] sm:$0xff]
    %v574 = vld [vmem:[#allocation2 + $0xb80] sm:$0xff]
    %v575 = vld [vmem:[#allocation2 + $0xb88] sm:$0xff]
    %v576 = vld [vmem:[#allocation2 + $0xb90] sm:$0xff]
    %v577 = vld [vmem:[#allocation2 + $0xb98] sm:$0xff]
    %v578 = vld [vmem:[#allocation2 + $0xba0] sm:$0xff]
    %v579 = vld [vmem:[#allocation2 + $0xba8] sm:$0xff]
    %v580 = vld [vmem:[#allocation2 + $0xbb0] sm:$0xff]
    %v581 = vld [vmem:[#allocation2 + $0xbb8] sm:$0xff]
    %v582 = vld [vmem:[#allocation2 + $0xbc0] sm:$0xff]
    %v583 = vld [vmem:[#allocation2 + $0xbc8] sm:$0xff]
    %v584 = vld [vmem:[#allocation2 + $0xbd0] sm:$0xff]
    %v585 = vld [vmem:[#allocation2 + $0xbd8] sm:$0xff]
    %v586 = vld [vmem:[#allocation2 + $0xbe0] sm:$0xff]
    %v587 = vld [vmem:[#allocation2 + $0xbe8] sm:$0xff]
    %v588 = vld [vmem:[#allocation2 + $0xbf0] sm:$0xff]
    %v589 = vld [vmem:[#allocation2 + $0xbf8] sm:$0xff]
    %v590 = vld [vmem:[#allocation2 + $0xc00] sm:$0xff]
    %v591 = vld [vmem:[#allocation2 + $0xc08] sm:$0xff]
    %v592 = vld [vmem:[#allocation2 + $0xc10] sm:$0xff]
    %v593 = vld [vmem:[#allocation2 + $0xc18] sm:$0xff]
    %v594 = vld [vmem:[#allocation2 + $0xc20] sm:$0xff]
    %v595 = vld [vmem:[#allocation2 + $0xc28] sm:$0xff]
    %v596 = vld [vmem:[#allocation2 + $0xc30] sm:$0xff]
    %v597 = vld [vmem:[#allocation2 + $0xc38] sm:$0xff]
    %v598 = vld [vmem:[#allocation2 + $0xc40] sm:$0xff]
    %v599 = vld [vmem:[#allocation2 + $0xc48] sm:$0xff]
    %v600 = vld [vmem:[#allocation2 + $0xc50] sm:$0xff]
    %v601 = vld [vmem:[#allocation2 + $0xc58] sm:$0xff]
    %v602 = vld [vmem:[#allocation2 + $0xc60] sm:$0xff]
    %v603 = vld [vmem:[#allocation2 + $0xc68] sm:$0xff]
    %v604 = vld [vmem:[#allocation2 + $0xc70] sm:$0xff]
    %v605 = vld [vmem:[#allocation2 + $0xc78] sm:$0xff]
    %v606 = vld [vmem:[#allocation2 + $0xc80] sm:$0xff]
    %v607 = vld [vmem:[#allocation2 + $0xc88] sm:$0xff]
    %v608 = vld [vmem:[#allocation2 + $0xc90] sm:$0xff]
    %v609 = vld [vmem:[#allocation2 + $0xc98] sm:$0xff]
    %v610 = vld [vmem:[#allocation2 + $0xca0] sm:$0xff]
    %v611 = vld [vmem:[#allocation2 + $0xca8] sm:$0xff]
    %v612 = vld [vmem:[#allocation2 + $0xcb0] sm:$0xff]
    %v613 = vld [vmem:[#allocation2 + $0xcb8] sm:$0xff]
    %v614 = vld [vmem:[#allocation2 + $0xcc0] sm:$0xff]
    %v615 = vld [vmem:[#allocation2 + $0xcc8] sm:$0xff]
    %v616 = vld [vmem:[#allocation2 + $0xcd0] sm:$0xff]
    %v617 = vld [vmem:[#allocation2 + $0xcd8] sm:$0xff]
    %v618 = vld [vmem:[#allocation2 + $0xce0] sm:$0xff]
    %v619 = vld [vmem:[#allocation2 + $0xce8] sm:$0xff]
    %v620 = vld [vmem:[#allocation2 + $0xcf0] sm:$0xff]
    %v621 = vld [vmem:[#allocation2 + $0xcf8] sm:$0xff]
    %v622 = vld [vmem:[#allocation2 + $0xd00] sm:$0xff]
    %v623 = vld [vmem:[#allocation2 + $0xd08] sm:$0xff]
    %v624 = vld [vmem:[#allocation2 + $0xd10] sm:$0xff]
    %v625 = vld [vmem:[#allocation2 + $0xd18] sm:$0xff]
    %v626 = vld [vmem:[#allocation2 + $0xd20] sm:$0xff]
    %v627 = vld [vmem:[#allocation2 + $0xd28] sm:$0xff]
    %v628 = vld [vmem:[#allocation2 + $0xd30] sm:$0xff]
    %v629 = vld [vmem:[#allocation2 + $0xd38] sm:$0xff]
    %v630 = vld [vmem:[#allocation2 + $0xd40] sm:$0xff]
    %v631 = vld [vmem:[#allocation2 + $0xd48] sm:$0xff]
    %v632 = vld [vmem:[#allocation2 + $0xd50] sm:$0xff]
    %v633 = vld [vmem:[#allocation2 + $0xd58] sm:$0xff]
    %v634 = vld [vmem:[#allocation2 + $0xd60] sm:$0xff]
    %v635 = vld [vmem:[#allocation2 + $0xd68] sm:$0xff]
    %v636 = vld [vmem:[#allocation2 + $0xd70] sm:$0xff]
    %v637 = vld [vmem:[#allocation2 + $0xd78] sm:$0xff]
    %v638 = vld [vmem:[#allocation2 + $0xd80] sm:$0xff]
    %v639 = vld [vmem:[#allocation2 + $0xd88] sm:$0xff]
    %v640 = vld [vmem:[#allocation2 + $0xd90] sm:$0xff]
    %v641 = vld [vmem:[#allocation2 + $0xd98] sm:$0xff]
    %v642 = vld [vmem:[#allocation2 + $0xda0] sm:$0xff]
    %v643 = vld [vmem:[#allocation2 + $0xda8] sm:$0xff]
    %v644 = vld [vmem:[#allocation2 + $0xdb0] sm:$0xff]
    %v645 = vld [vmem:[#allocation2 + $0xdb8] sm:$0xff]
    %v646 = vld [vmem:[#allocation2 + $0xdc0] sm:$0xff]
    %v647 = vld [vmem:[#allocation2 + $0xdc8] sm:$0xff]
    %v648 = vld [vmem:[#allocation2 + $0xdd0] sm:$0xff]
    %v649 = vld [vmem:[#allocation2 + $0xdd8] sm:$0xff]
    %v650 = vld [vmem:[#allocation2 + $0xde0] sm:$0xff]
    %v651 = vld [vmem:[#allocation2 + $0xde8] sm:$0xff]
    %v652 = vld [vmem:[#allocation2 + $0xdf0] sm:$0xff]
    %v653 = vld [vmem:[#allocation2 + $0xdf8] sm:$0xff]
    %v654 = vld [vmem:[#allocation2 + $0xe00] sm:$0xff]
    %v655 = vld [vmem:[#allocation2 + $0xe08] sm:$0xff]
    %v656 = vld [vmem:[#allocation2 + $0xe10] sm:$0xff]
    %v657 = vld [vmem:[#allocation2 + $0xe18] sm:$0xff]
    %v658 = vld [vmem:[#allocation2 + $0xe20] sm:$0xff]
    %v659 = vld [vmem:[#allocation2 + $0xe28] sm:$0xff]
    %v660 = vld [vmem:[#allocation2 + $0xe30] sm:$0xff]
    %v661 = vld [vmem:[#allocation2 + $0xe38] sm:$0xff]
    %v662 = vld [vmem:[#allocation2 + $0xe40] sm:$0xff]
    %v663 = vld [vmem:[#allocation2 + $0xe48] sm:$0xff]
    %v664 = vld [vmem:[#allocation2 + $0xe50] sm:$0xff]
    %v665 = vld [vmem:[#allocation2 + $0xe58] sm:$0xff]
    %v666 = vld [vmem:[#allocation2 + $0xe60] sm:$0xff]
    %v667 = vld [vmem:[#allocation2 + $0xe68] sm:$0xff]
    %v668 = vld [vmem:[#allocation2 + $0xe70] sm:$0xff]
    %v669 = vld [vmem:[#allocation2 + $0xe78] sm:$0xff]
    %v670 = vld [vmem:[#allocation2 + $0xe80] sm:$0xff]
    %v671 = vld [vmem:[#allocation2 + $0xe88] sm:$0xff]
    %v672 = vld [vmem:[#allocation2 + $0xe90] sm:$0xff]
    %v673 = vld [vmem:[#allocation2 + $0xe98] sm:$0xff]
    %v674 = vld [vmem:[#allocation2 + $0xea0] sm:$0xff]
    %v675 = vld [vmem:[#allocation2 + $0xea8] sm:$0xff]
    %v676 = vld [vmem:[#allocation2 + $0xeb0] sm:$0xff]
    %v677 = vld [vmem:[#allocation2 + $0xeb8] sm:$0xff]
    %v678 = vld [vmem:[#allocation2 + $0xec0] sm:$0xff]
    %v679 = vld [vmem:[#allocation2 + $0xec8] sm:$0xff]
    %v680 = vld [vmem:[#allocation2 + $0xed0] sm:$0xff]
    %v681 = vld [vmem:[#allocation2 + $0xed8] sm:$0xff]
    %v682 = vld [vmem:[#allocation2 + $0xee0] sm:$0xff]
    %v683 = vld [vmem:[#allocation2 + $0xee8] sm:$0xff]
    %v684 = vld [vmem:[#allocation2 + $0xef0] sm:$0xff]
    %v685 = vld [vmem:[#allocation2 + $0xef8] sm:$0xff]
    %v686 = vld [vmem:[#allocation2 + $0xf00] sm:$0xff]
    %v687 = vld [vmem:[#allocation2 + $0xf08] sm:$0xff]
    %v688 = vld [vmem:[#allocation2 + $0xf10] sm:$0xff]
    %v689 = vld [vmem:[#allocation2 + $0xf18] sm:$0xff]
    %v690 = vld [vmem:[#allocation2 + $0xf20] sm:$0xff]
    %v691 = vld [vmem:[#allocation2 + $0xf28] sm:$0xff]
    %v692 = vld [vmem:[#allocation2 + $0xf30] sm:$0xff]
    %v693 = vld [vmem:[#allocation2 + $0xf38] sm:$0xff]
    %v694 = vld [vmem:[#allocation2 + $0xf40] sm:$0xff]
    %v695 = vld [vmem:[#allocation2 + $0xf48] sm:$0xff]
    %v696 = vld [vmem:[#allocation2 + $0xf50] sm:$0xff]
    %v697 = vld [vmem:[#allocation2 + $0xf58] sm:$0xff]
    %v698 = vld [vmem:[#allocation2 + $0xf60] sm:$0xff]
    %v699 = vld [vmem:[#allocation2 + $0xf68] sm:$0xff]
    %v700 = vld [vmem:[#allocation2 + $0xf70] sm:$0xff]
    %v701 = vld [vmem:[#allocation2 + $0xf78] sm:$0xff]
    %v702 = vld [vmem:[#allocation2 + $0xf80] sm:$0xff]
    %v703 = vld [vmem:[#allocation2 + $0xf88] sm:$0xff]
    %v704 = vld [vmem:[#allocation2 + $0xf90] sm:$0xff]
    %v705 = vld [vmem:[#allocation2 + $0xf98] sm:$0xff]
    %v706 = vld [vmem:[#allocation2 + $0xfa0] sm:$0xff]
    %v707 = vld [vmem:[#allocation2 + $0xfa8] sm:$0xff]
    %v708 = vld [vmem:[#allocation2 + $0xfb0] sm:$0xff]
    %v709 = vld [vmem:[#allocation2 + $0xfb8] sm:$0xff]
    %v710 = vld [vmem:[#allocation2 + $0xfc0] sm:$0xff]
    %v711 = vld [vmem:[#allocation2 + $0xfc8] sm:$0xff]
    %v712 = vld [vmem:[#allocation2 + $0xfd0] sm:$0xff]
    %v713 = vld [vmem:[#allocation2 + $0xfd8] sm:$0xff]
    %v714 = vld [vmem:[#allocation2 + $0xfe0] sm:$0xff]
    %v715 = vld [vmem:[#allocation2 + $0xfe8] sm:$0xff]
    %v716 = vld [vmem:[#allocation2 + $0xff0] sm:$0xff]
    %v717 = vld [vmem:[#allocation2 + $0xff8] sm:$0xff]
    %v718 = vld [vmem:[#allocation2 + $0x1000] sm:$0xff]
    %v719 = vld [vmem:[#allocation2 + $0x1008] sm:$0xff]
    %v720 = vld [vmem:[#allocation2 + $0x1010] sm:$0xff]
    %v721 = vld [vmem:[#allocation2 + $0x1018] sm:$0xff]
    %v722 = vld [vmem:[#allocation2 + $0x1020] sm:$0xff]
    %v723 = vld [vmem:[#allocation2 + $0x1028] sm:$0xff]
    %v724 = vld [vmem:[#allocation2 + $0x1030] sm:$0xff]
    %v725 = vld [vmem:[#allocation2 + $0x1038] sm:$0xff]
    %v726 = vld [vmem:[#allocation2 + $0x1040] sm:$0xff]
    %v727 = vld [vmem:[#allocation2 + $0x1048] sm:$0xff]
    %v728 = vld [vmem:[#allocation2 + $0x1050] sm:$0xff]
    %v729 = vld [vmem:[#allocation2 + $0x1058] sm:$0xff]
    %v730 = vld [vmem:[#allocation2 + $0x1060] sm:$0xff]
    %v731 = vld [vmem:[#allocation2 + $0x1068] sm:$0xff]
    %v732 = vld [vmem:[#allocation2 + $0x1070] sm:$0xff]
    %v733 = vld [vmem:[#allocation2 + $0x1078] sm:$0xff]
    %v734 = vld [vmem:[#allocation2 + $0x1080] sm:$0xff]
    %v735 = vld [vmem:[#allocation2 + $0x1088] sm:$0xff]
    %v736 = vld [vmem:[#allocation2 + $0x1090] sm:$0xff]
    %v737 = vld [vmem:[#allocation2 + $0x1098] sm:$0xff]
    %v738 = vld [vmem:[#allocation2 + $0x10a0] sm:$0xff]
    %v739 = vld [vmem:[#allocation2 + $0x10a8] sm:$0xff]
    %v740 = vld [vmem:[#allocation2 + $0x10b0] sm:$0xff]
    %v741 = vld [vmem:[#allocation2 + $0x10b8] sm:$0xff]
    %v742 = vld [vmem:[#allocation2 + $0x10c0] sm:$0xff]
    %v743 = vld [vmem:[#allocation2 + $0x10c8] sm:$0xff]
    %v744 = vld [vmem:[#allocation2 + $0x10d0] sm:$0xff]
    %v745 = vld [vmem:[#allocation2 + $0x10d8] sm:$0xff]
    %v746 = vld [vmem:[#allocation2 + $0x10e0] sm:$0xff]
    %v747 = vld [vmem:[#allocation2 + $0x10e8] sm:$0xff]
    %v748 = vld [vmem:[#allocation2 + $0x10f0] sm:$0xff]
    %v749 = vld [vmem:[#allocation2 + $0x10f8] sm:$0xff]
    %v750 = vld [vmem:[#allocation2 + $0x1100] sm:$0xff]
    %v751 = vld [vmem:[#allocation2 + $0x1108] sm:$0xff]
    %v752 = vld [vmem:[#allocation2 + $0x1110] sm:$0xff]
    %v753 = vld [vmem:[#allocation2 + $0x1118] sm:$0xff]
    %v754 = vld [vmem:[#allocation2 + $0x1120] sm:$0xff]
    %v755 = vld [vmem:[#allocation2 + $0x1128] sm:$0xff]
    %v756 = vld [vmem:[#allocation2 + $0x1130] sm:$0xff]
    %v757 = vld [vmem:[#allocation2 + $0x1138] sm:$0xff]
    %v758 = vld [vmem:[#allocation2 + $0x1140] sm:$0xff]
    %v759 = vld [vmem:[#allocation2 + $0x1148] sm:$0xff]
    %v760 = vld [vmem:[#allocation2 + $0x1150] sm:$0xff]
    %v761 = vld [vmem:[#allocation2 + $0x1158] sm:$0xff]
    %v762 = vld [vmem:[#allocation2 + $0x1160] sm:$0xff]
    %v763 = vld [vmem:[#allocation2 + $0x1168] sm:$0xff]
    %v764 = vld [vmem:[#allocation2 + $0x1170] sm:$0xff]
    %v765 = vld [vmem:[#allocation2 + $0x1178] sm:$0xff]
    %v766 = vld [vmem:[#allocation2 + $0x1180] sm:$0xff]
    %v767 = vld [vmem:[#allocation2 + $0x1188] sm:$0xff]
    %v768 = vld [vmem:[#allocation2 + $0x1190] sm:$0xff]
    %v769 = vld [vmem:[#allocation2 + $0x1198] sm:$0xff]
    %v770 = vld [vmem:[#allocation2 + $0x11a0] sm:$0xff]
    %v771 = vld [vmem:[#allocation2 + $0x11a8] sm:$0xff]
    %v772 = vld [vmem:[#allocation2 + $0x11b0] sm:$0xff]
    %v773 = vld [vmem:[#allocation2 + $0x11b8] sm:$0xff]
    %v774 = vld [vmem:[#allocation2 + $0x11c0] sm:$0xff]
    %v775 = vld [vmem:[#allocation2 + $0x11c8] sm:$0xff]
    %v776 = vld [vmem:[#allocation2 + $0x11d0] sm:$0xff]
    %v777 = vld [vmem:[#allocation2 + $0x11d8] sm:$0xff]
    %v778 = vld [vmem:[#allocation2 + $0x11e0] sm:$0xff]
    %v779 = vld [vmem:[#allocation2 + $0x11e8] sm:$0xff]
    %v780 = vld [vmem:[#allocation2 + $0x11f0] sm:$0xff]
    %v781 = vld [vmem:[#allocation2 + $0x11f8] sm:$0xff]
    %v782 = vld [vmem:[#allocation2 + $0x1200] sm:$0xff]
    %v783 = vld [vmem:[#allocation2 + $0x1208] sm:$0xff]
    %v784 = vld [vmem:[#allocation2 + $0x1210] sm:$0xff]
    %v785 = vld [vmem:[#allocation2 + $0x1218] sm:$0xff]
    %v786 = vld [vmem:[#allocation2 + $0x1220] sm:$0xff]
    %v787 = vld [vmem:[#allocation2 + $0x1228] sm:$0xff]
    %v788 = vld [vmem:[#allocation2 + $0x1230] sm:$0xff]
    %v789 = vld [vmem:[#allocation2 + $0x1238] sm:$0xff]
    %v790 = vld [vmem:[#allocation2 + $0x1240] sm:$0xff]
    %v791 = vld [vmem:[#allocation2 + $0x1248] sm:$0xff]
    %v792 = vld [vmem:[#allocation2 + $0x1250] sm:$0xff]
    %v793 = vld [vmem:[#allocation2 + $0x1258] sm:$0xff]
    %v794 = vld [vmem:[#allocation2 + $0x1260] sm:$0xff]
    %v795 = vld [vmem:[#allocation2 + $0x1268] sm:$0xff]
    %v796 = vld [vmem:[#allocation2 + $0x1270] sm:$0xff]
    %v797 = vld [vmem:[#allocation2 + $0x1278] sm:$0xff]
    %v798 = vld [vmem:[#allocation2 + $0x1280] sm:$0xff]
    %v799 = vld [vmem:[#allocation2 + $0x1288] sm:$0xff]
    %v800 = vld [vmem:[#allocation2 + $0x1290] sm:$0xff]
    %v801 = vld [vmem:[#allocation2 + $0x1298] sm:$0xff]
    %v802 = vld [vmem:[#allocation2 + $0x12a0] sm:$0xff]
    %v803 = vld [vmem:[#allocation2 + $0x12a8] sm:$0xff]
    %v804 = vld [vmem:[#allocation2 + $0x12b0] sm:$0xff]
    %v805 = vld [vmem:[#allocation2 + $0x12b8] sm:$0xff]
    %v806 = vld [vmem:[#allocation2 + $0x12c0] sm:$0xff]
    %v807 = vld [vmem:[#allocation2 + $0x12c8] sm:$0xff]
    %v808 = vld [vmem:[#allocation2 + $0x12d0] sm:$0xff]
    %v809 = vld [vmem:[#allocation2 + $0x12d8] sm:$0xff]
    %v810 = vld [vmem:[#allocation2 + $0x12e0] sm:$0xff]
    %v811 = vld [vmem:[#allocation2 + $0x12e8] sm:$0xff]
    %v812 = vld [vmem:[#allocation2 + $0x12f0] sm:$0xff]
    %v813 = vld [vmem:[#allocation2 + $0x12f8] sm:$0xff]
    %v814 = vld [vmem:[#allocation2 + $0x1300] sm:$0xff]
    %v815 = vld [vmem:[#allocation2 + $0x1308] sm:$0xff]
    %v816 = vld [vmem:[#allocation2 + $0x1310] sm:$0xff]
    %v817 = vld [vmem:[#allocation2 + $0x1318] sm:$0xff]
    %v818 = vld [vmem:[#allocation2 + $0x1320] sm:$0xff]
    %v819 = vld [vmem:[#allocation2 + $0x1328] sm:$0xff]
    %v820 = vld [vmem:[#allocation2 + $0x1330] sm:$0xff]
    %v821 = vld [vmem:[#allocation2 + $0x1338] sm:$0xff]
    %v822 = vld [vmem:[#allocation2 + $0x1340] sm:$0xff]
    %v823 = vld [vmem:[#allocation2 + $0x1348] sm:$0xff]
    %v824 = vld [vmem:[#allocation2 + $0x1350] sm:$0xff]
    %v825 = vld [vmem:[#allocation2 + $0x1358] sm:$0xff]
    %v826 = vld [vmem:[#allocation2 + $0x1360] sm:$0xff]
    %v827 = vld [vmem:[#allocation2 + $0x1368] sm:$0xff]
    %v828 = vld [vmem:[#allocation2 + $0x1370] sm:$0xff]
    %v829 = vld [vmem:[#allocation2 + $0x1378] sm:$0xff]
    %v830 = vld [vmem:[#allocation2 + $0x1380] sm:$0xff]
    %v831 = vld [vmem:[#allocation2 + $0x1388] sm:$0xff]
    %v832 = vld [vmem:[#allocation2 + $0x1390] sm:$0xff]
    %v833 = vld [vmem:[#allocation2 + $0x1398] sm:$0xff]
    %v834 = vld [vmem:[#allocation2 + $0x13a0] sm:$0xff]
    %v835 = vld [vmem:[#allocation2 + $0x13a8] sm:$0xff]
    %v836 = vld [vmem:[#allocation2 + $0x13b0] sm:$0xff]
    %v837 = vld [vmem:[#allocation2 + $0x13b8] sm:$0xff]
    %v838 = vld [vmem:[#allocation2 + $0x13c0] sm:$0xff]
    %v839 = vld [vmem:[#allocation2 + $0x13c8] sm:$0xff]
    %v840 = vld [vmem:[#allocation2 + $0x13d0] sm:$0xff]
    %v841 = vld [vmem:[#allocation2 + $0x13d8] sm:$0xff]
    %v842 = vld [vmem:[#allocation2 + $0x13e0] sm:$0xff]
    %v843 = vld [vmem:[#allocation2 + $0x13e8] sm:$0xff]
    %v844 = vld [vmem:[#allocation2 + $0x13f0] sm:$0xff]
    %v845 = vld [vmem:[#allocation2 + $0x13f8] sm:$0xff]
    %v846 = vld [vmem:[#allocation2 + $0x1400] sm:$0xff]
    %v847 = vld [vmem:[#allocation2 + $0x1408] sm:$0xff]
    %v848 = vld [vmem:[#allocation2 + $0x1410] sm:$0xff]
    %v849 = vld [vmem:[#allocation2 + $0x1418] sm:$0xff]
    %v850 = vld [vmem:[#allocation2 + $0x1420] sm:$0xff]
    %v851 = vld [vmem:[#allocation2 + $0x1428] sm:$0xff]
    %v852 = vld [vmem:[#allocation2 + $0x1430] sm:$0xff]
    %v853 = vld [vmem:[#allocation2 + $0x1438] sm:$0xff]
    %v854 = vld [vmem:[#allocation2 + $0x1440] sm:$0xff]
    %v855 = vld [vmem:[#allocation2 + $0x1448] sm:$0xff]
    %v856 = vld [vmem:[#allocation2 + $0x1450] sm:$0xff]
    %v857 = vld [vmem:[#allocation2 + $0x1458] sm:$0xff]
    %v858 = vld [vmem:[#allocation2 + $0x1460] sm:$0xff]
    %v859 = vld [vmem:[#allocation2 + $0x1468] sm:$0xff]
    %v860 = vld [vmem:[#allocation2 + $0x1470] sm:$0xff]
    %v861 = vld [vmem:[#allocation2 + $0x1478] sm:$0xff]
    %v862 = vld [vmem:[#allocation2 + $0x1480] sm:$0xff]
    %v863 = vld [vmem:[#allocation2 + $0x1488] sm:$0xff]
    %v864 = vld [vmem:[#allocation2 + $0x1490] sm:$0xff]
    %v865 = vld [vmem:[#allocation2 + $0x1498] sm:$0xff]
    %v866 = vld [vmem:[#allocation2 + $0x14a0] sm:$0xff]
    %v867 = vld [vmem:[#allocation2 + $0x14a8] sm:$0xff]
    %v868 = vld [vmem:[#allocation2 + $0x14b0] sm:$0xff]
    %v869 = vld [vmem:[#allocation2 + $0x14b8] sm:$0xff]
    %v870 = vld [vmem:[#allocation2 + $0x14c0] sm:$0xff]
    %v871 = vld [vmem:[#allocation2 + $0x14c8] sm:$0xff]
    %v872 = vld [vmem:[#allocation2 + $0x14d0] sm:$0xff]
    %v873 = vld [vmem:[#allocation2 + $0x14d8] sm:$0xff]
    %v874 = vld [vmem:[#allocation2 + $0x14e0] sm:$0xff]
    %v875 = vld [vmem:[#allocation2 + $0x14e8] sm:$0xff]
    %v876 = vld [vmem:[#allocation2 + $0x14f0] sm:$0xff]
    %v877 = vld [vmem:[#allocation2 + $0x14f8] sm:$0xff]
    %v878 = vld [vmem:[#allocation2 + $0x1500] sm:$0xff]
    %v879 = vld [vmem:[#allocation2 + $0x1508] sm:$0xff]
    %v880 = vld [vmem:[#allocation2 + $0x1510] sm:$0xff]
    %v881 = vld [vmem:[#allocation2 + $0x1518] sm:$0xff]
    %v882 = vld [vmem:[#allocation2 + $0x1520] sm:$0xff]
    %v883 = vld [vmem:[#allocation2 + $0x1528] sm:$0xff]
    %v884 = vld [vmem:[#allocation2 + $0x1530] sm:$0xff]
    %v885 = vld [vmem:[#allocation2 + $0x1538] sm:$0xff]
    %v886 = vld [vmem:[#allocation2 + $0x1540] sm:$0xff]
    %v887 = vld [vmem:[#allocation2 + $0x1548] sm:$0xff]
    %v888 = vld [vmem:[#allocation2 + $0x1550] sm:$0xff]
    %v889 = vld [vmem:[#allocation2 + $0x1558] sm:$0xff]
    %v890 = vld [vmem:[#allocation2 + $0x1560] sm:$0xff]
    %v891 = vld [vmem:[#allocation2 + $0x1568] sm:$0xff]
    %v892 = vld [vmem:[#allocation2 + $0x1570] sm:$0xff]
    %v893 = vld [vmem:[#allocation2 + $0x1578] sm:$0xff]
    %v894 = vld [vmem:[#allocation2 + $0x1580] sm:$0xff]
    %v895 = vld [vmem:[#allocation2 + $0x1588] sm:$0xff]
    %v896 = vld [vmem:[#allocation2 + $0x1590] sm:$0xff]
    %v897 = vld [vmem:[#allocation2 + $0x1598] sm:$0xff]
    %v898 = vld [vmem:[#allocation2 + $0x15a0] sm:$0xff]
    %v899 = vld [vmem:[#allocation2 + $0x15a8] sm:$0xff]
    %v900 = vld [vmem:[#allocation2 + $0x15b0] sm:$0xff]
    %v901 = vld [vmem:[#allocation2 + $0x15b8] sm:$0xff]
    %v902 = vld [vmem:[#allocation2 + $0x15c0] sm:$0xff]
    %v903 = vld [vmem:[#allocation2 + $0x15c8] sm:$0xff]
    %v904 = vld [vmem:[#allocation2 + $0x15d0] sm:$0xff]
    %v905 = vld [vmem:[#allocation2 + $0x15d8] sm:$0xff]
    %v906 = vld [vmem:[#allocation2 + $0x15e0] sm:$0xff]
    %v907 = vld [vmem:[#allocation2 + $0x15e8] sm:$0xff]
    %v908 = vld [vmem:[#allocation2 + $0x15f0] sm:$0xff]
    %v909 = vld [vmem:[#allocation2 + $0x15f8] sm:$0xff]
    %v910 = vld [vmem:[#allocation2 + $0x1600] sm:$0xff]
    %v911 = vld [vmem:[#allocation2 + $0x1608] sm:$0xff]
    %v912 = vld [vmem:[#allocation2 + $0x1610] sm:$0xff]
    %v913 = vld [vmem:[#allocation2 + $0x1618] sm:$0xff]
    %v914 = vld [vmem:[#allocation2 + $0x1620] sm:$0xff]
    %v915 = vld [vmem:[#allocation2 + $0x1628] sm:$0xff]
    %v916 = vld [vmem:[#allocation2 + $0x1630] sm:$0xff]
    %v917 = vld [vmem:[#allocation2 + $0x1638] sm:$0xff]
    %v918 = vld [vmem:[#allocation2 + $0x1640] sm:$0xff]
    %v919 = vld [vmem:[#allocation2 + $0x1648] sm:$0xff]
    %v920 = vld [vmem:[#allocation2 + $0x1650] sm:$0xff]
    %v921 = vld [vmem:[#allocation2 + $0x1658] sm:$0xff]
    %v922 = vld [vmem:[#allocation2 + $0x1660] sm:$0xff]
    %v923 = vld [vmem:[#allocation2 + $0x1668] sm:$0xff]
    %v924 = vld [vmem:[#allocation2 + $0x1670] sm:$0xff]
    %v925 = vld [vmem:[#allocation2 + $0x1678] sm:$0xff]
    %v926 = vld [vmem:[#allocation2 + $0x1680] sm:$0xff]
    %v927 = vld [vmem:[#allocation2 + $0x1688] sm:$0xff]
    %v928 = vld [vmem:[#allocation2 + $0x1690] sm:$0xff]
    %v929 = vld [vmem:[#allocation2 + $0x1698] sm:$0xff]
    %v930 = vld [vmem:[#allocation2 + $0x16a0] sm:$0xff]
    %v931 = vld [vmem:[#allocation2 + $0x16a8] sm:$0xff]
    %v932 = vld [vmem:[#allocation2 + $0x16b0] sm:$0xff]
    %v933 = vld [vmem:[#allocation2 + $0x16b8] sm:$0xff]
    %v934 = vld [vmem:[#allocation2 + $0x16c0] sm:$0xff]
    %v935 = vld [vmem:[#allocation2 + $0x16c8] sm:$0xff]
    %v936 = vld [vmem:[#allocation2 + $0x16d0] sm:$0xff]
    %v937 = vld [vmem:[#allocation2 + $0x16d8] sm:$0xff]
    %v938 = vld [vmem:[#allocation2 + $0x16e0] sm:$0xff]
    %v939 = vld [vmem:[#allocation2 + $0x16e8] sm:$0xff]
    %v940 = vld [vmem:[#allocation2 + $0x16f0] sm:$0xff]
    %v941 = vld [vmem:[#allocation2 + $0x16f8] sm:$0xff]
    %v942 = vld [vmem:[#allocation2 + $0x1700] sm:$0xff]
    %v943 = vld [vmem:[#allocation2 + $0x1708] sm:$0xff]
    %v944 = vld [vmem:[#allocation2 + $0x1710] sm:$0xff]
    %v945 = vld [vmem:[#allocation2 + $0x1718] sm:$0xff]
    %v946 = vld [vmem:[#allocation2 + $0x1720] sm:$0xff]
    %v947 = vld [vmem:[#allocation2 + $0x1728] sm:$0xff]
    %v948 = vld [vmem:[#allocation2 + $0x1730] sm:$0xff]
    %v949 = vld [vmem:[#allocation2 + $0x1738] sm:$0xff]
    %v950 = vld [vmem:[#allocation2 + $0x1740] sm:$0xff]
    %v951 = vld [vmem:[#allocation2 + $0x1748] sm:$0xff]
    %v952 = vld [vmem:[#allocation2 + $0x1750] sm:$0xff]
    %v953 = vld [vmem:[#allocation2 + $0x1758] sm:$0xff]
    %v954 = vld [vmem:[#allocation2 + $0x1760] sm:$0xff]
    %v955 = vld [vmem:[#allocation2 + $0x1768] sm:$0xff]
    %v956 = vld [vmem:[#allocation2 + $0x1770] sm:$0xff]
    %v957 = vld [vmem:[#allocation2 + $0x1778] sm:$0xff]
    %v958 = vld [vmem:[#allocation2 + $0x1780] sm:$0xff]
    %v959 = vld [vmem:[#allocation2 + $0x1788] sm:$0xff]
    %v960 = vld [vmem:[#allocation2 + $0x1790] sm:$0xff]
    %v961 = vld [vmem:[#allocation2 + $0x1798] sm:$0xff]
    %v962 = vld [vmem:[#allocation2 + $0x17a0] sm:$0xff]
    %v963 = vld [vmem:[#allocation2 + $0x17a8] sm:$0xff]
    %v964 = vld [vmem:[#allocation2 + $0x17b0] sm:$0xff]
    %v965 = vld [vmem:[#allocation2 + $0x17b8] sm:$0xff]
    %v966 = vld [vmem:[#allocation2 + $0x17c0] sm:$0xff]
    %v967 = vld [vmem:[#allocation2 + $0x17c8] sm:$0xff]
    %v968 = vld [vmem:[#allocation2 + $0x17d0] sm:$0xff]
    %v969 = vld [vmem:[#allocation2 + $0x17d8] sm:$0xff]
    %v970 = vld [vmem:[#allocation2 + $0x17e0] sm:$0xff]
    %v971 = vld [vmem:[#allocation2 + $0x17e8] sm:$0xff]
    %v972 = vld [vmem:[#allocation2 + $0x17f0] sm:$0xff]
    %v973 = vld [vmem:[#allocation2 + $0x17f8] sm:$0xff]
    %v974 = vld [vmem:[#allocation4] sm:$0xf]
    %v976 = vlaneseq
    %v977 = vshrl.u32 %v976, 7
    %v978 = vsub.s32 0, %v977
    %v979 = vrot.slane %v974, %v978
    %v980 = vlaneseq
    %v981 = vshrl.u32 %v980, 7
    %v982 = vsub.s32 1, %v981
    %v983 = vrot.slane %v974, %v982
    %v984 = vlaneseq
    %v985 = vshrl.u32 %v984, 7
    %v986 = vsub.s32 2, %v985
    %v987 = vrot.slane %v974, %v986
    %v988 = vlaneseq
    %v989 = vshrl.u32 %v988, 7
    %v990 = vsub.s32 3, %v989
    %v991 = vrot.slane %v974, %v990
    %v1764 = vunpack.c.l.b16 %v206
    %v1765 = vunpack.c.h.b16 %v206
    %v1766 = vunpack.c.l.b16 %v207
    %v1767 = vunpack.c.h.b16 %v207
    %v1768 = vunpack.c.l.b16 %v208
    %v1769 = vunpack.c.h.b16 %v208
    %v1770 = vunpack.c.l.b16 %v209
    %v1771 = vunpack.c.h.b16 %v209
    %v1772 = vunpack.c.l.b16 %v210
    %v1773 = vunpack.c.h.b16 %v210
    %v1774 = vunpack.c.l.b16 %v211
    %v1775 = vunpack.c.h.b16 %v211
    %v1776 = vunpack.c.l.b16 %v212
    %v1777 = vunpack.c.h.b16 %v212
    %v1778 = vunpack.c.l.b16 %v213
    %v1779 = vunpack.c.h.b16 %v213
    %v1780 = vunpack.c.l.b16 %v214
    %v1781 = vunpack.c.h.b16 %v214
    %v1782 = vunpack.c.l.b16 %v215
    %v1783 = vunpack.c.h.b16 %v215
    %v1784 = vunpack.c.l.b16 %v216
    %v1785 = vunpack.c.h.b16 %v216
    %v1786 = vunpack.c.l.b16 %v217
    %v1787 = vunpack.c.h.b16 %v217
    %v1788 = vunpack.c.l.b16 %v218
    %v1789 = vunpack.c.h.b16 %v218
    %v1790 = vunpack.c.l.b16 %v219
    %v1791 = vunpack.c.h.b16 %v219
    %v1792 = vunpack.c.l.b16 %v220
    %v1793 = vunpack.c.h.b16 %v220
    %v1794 = vunpack.c.l.b16 %v221
    %v1795 = vunpack.c.h.b16 %v221
    %v1796 = vunpack.c.l.b16 %v222
    %v1797 = vunpack.c.h.b16 %v222
    %v1798 = vunpack.c.l.b16 %v223
    %v1799 = vunpack.c.h.b16 %v223
    %v1800 = vunpack.c.l.b16 %v224
    %v1801 = vunpack.c.h.b16 %v224
    %v1802 = vunpack.c.l.b16 %v225
    %v1803 = vunpack.c.h.b16 %v225
    %v1804 = vunpack.c.l.b16 %v226
    %v1805 = vunpack.c.h.b16 %v226
    %v1806 = vunpack.c.l.b16 %v227
    %v1807 = vunpack.c.h.b16 %v227
    %v1808 = vunpack.c.l.b16 %v228
    %v1809 = vunpack.c.h.b16 %v228
    %v1810 = vunpack.c.l.b16 %v229
    %v1811 = vunpack.c.h.b16 %v229
    %v1812 = vunpack.c.l.b16 %v230
    %v1813 = vunpack.c.h.b16 %v230
    %v1814 = vunpack.c.l.b16 %v231
    %v1815 = vunpack.c.h.b16 %v231
    %v1816 = vunpack.c.l.b16 %v232
    %v1817 = vunpack.c.h.b16 %v232
    %v1818 = vunpack.c.l.b16 %v233
    %v1819 = vunpack.c.h.b16 %v233
    %v1820 = vunpack.c.l.b16 %v234
    %v1821 = vunpack.c.h.b16 %v234
    %v1822 = vunpack.c.l.b16 %v235
    %v1823 = vunpack.c.h.b16 %v235
    %v1824 = vunpack.c.l.b16 %v236
    %v1825 = vunpack.c.h.b16 %v236
    %v1826 = vunpack.c.l.b16 %v237
    %v1827 = vunpack.c.h.b16 %v237
    %v1828 = vunpack.c.l.b16 %v238
    %v1829 = vunpack.c.h.b16 %v238
    %v1830 = vunpack.c.l.b16 %v239
    %v1831 = vunpack.c.h.b16 %v239
    %v1832 = vunpack.c.l.b16 %v240
    %v1833 = vunpack.c.h.b16 %v240
    %v1834 = vunpack.c.l.b16 %v241
    %v1835 = vunpack.c.h.b16 %v241
    %v1836 = vunpack.c.l.b16 %v242
    %v1837 = vunpack.c.h.b16 %v242
    %v1838 = vunpack.c.l.b16 %v243
    %v1839 = vunpack.c.h.b16 %v243
    %v1840 = vunpack.c.l.b16 %v244
    %v1841 = vunpack.c.h.b16 %v244
    %v1842 = vunpack.c.l.b16 %v245
    %v1843 = vunpack.c.h.b16 %v245
    %v1844 = vunpack.c.l.b16 %v246
    %v1845 = vunpack.c.h.b16 %v246
    %v1846 = vunpack.c.l.b16 %v247
    %v1847 = vunpack.c.h.b16 %v247
    %v1848 = vunpack.c.l.b16 %v248
    %v1849 = vunpack.c.h.b16 %v248
    %v1850 = vunpack.c.l.b16 %v249
    %v1851 = vunpack.c.h.b16 %v249
    %v1852 = vunpack.c.l.b16 %v250
    %v1853 = vunpack.c.h.b16 %v250
    %v1854 = vunpack.c.l.b16 %v251
    %v1855 = vunpack.c.h.b16 %v251
    %v1856 = vunpack.c.l.b16 %v252
    %v1857 = vunpack.c.h.b16 %v252
    %v1858 = vunpack.c.l.b16 %v253
    %v1859 = vunpack.c.h.b16 %v253
    %v1860 = vunpack.c.l.b16 %v254
    %v1861 = vunpack.c.h.b16 %v254
    %v1862 = vunpack.c.l.b16 %v255
    %v1863 = vunpack.c.h.b16 %v255
    %v1864 = vunpack.c.l.b16 %v256
    %v1865 = vunpack.c.h.b16 %v256
    %v1866 = vunpack.c.l.b16 %v257
    %v1867 = vunpack.c.h.b16 %v257
    %v1868 = vunpack.c.l.b16 %v258
    %v1869 = vunpack.c.h.b16 %v258
    %v1870 = vunpack.c.l.b16 %v259
    %v1871 = vunpack.c.h.b16 %v259
    %v1872 = vunpack.c.l.b16 %v260
    %v1873 = vunpack.c.h.b16 %v260
    %v1874 = vunpack.c.l.b16 %v261
    %v1875 = vunpack.c.h.b16 %v261
    %v1876 = vunpack.c.l.b16 %v262
    %v1877 = vunpack.c.h.b16 %v262
    %v1878 = vunpack.c.l.b16 %v263
    %v1879 = vunpack.c.h.b16 %v263
    %v1880 = vunpack.c.l.b16 %v264
    %v1881 = vunpack.c.h.b16 %v264
    %v1882 = vunpack.c.l.b16 %v265
    %v1883 = vunpack.c.h.b16 %v265
    %v1884 = vunpack.c.l.b16 %v266
    %v1885 = vunpack.c.h.b16 %v266
    %v1886 = vunpack.c.l.b16 %v267
    %v1887 = vunpack.c.h.b16 %v267
    %v1888 = vunpack.c.l.b16 %v268
    %v1889 = vunpack.c.h.b16 %v268
    %v1890 = vunpack.c.l.b16 %v269
    %v1891 = vunpack.c.h.b16 %v269
    %v1892 = vunpack.c.l.b16 %v270
    %v1893 = vunpack.c.h.b16 %v270
    %v1894 = vunpack.c.l.b16 %v271
    %v1895 = vunpack.c.h.b16 %v271
    %v1896 = vunpack.c.l.b16 %v272
    %v1897 = vunpack.c.h.b16 %v272
    %v1898 = vunpack.c.l.b16 %v273
    %v1899 = vunpack.c.h.b16 %v273
    %v1900 = vunpack.c.l.b16 %v274
    %v1901 = vunpack.c.h.b16 %v274
    %v1902 = vunpack.c.l.b16 %v275
    %v1903 = vunpack.c.h.b16 %v275
    %v1904 = vunpack.c.l.b16 %v276
    %v1905 = vunpack.c.h.b16 %v276
    %v1906 = vunpack.c.l.b16 %v277
    %v1907 = vunpack.c.h.b16 %v277
    %v1908 = vunpack.c.l.b16 %v278
    %v1909 = vunpack.c.h.b16 %v278
    %v1910 = vunpack.c.l.b16 %v279
    %v1911 = vunpack.c.h.b16 %v279
    %v1912 = vunpack.c.l.b16 %v280
    %v1913 = vunpack.c.h.b16 %v280
    %v1914 = vunpack.c.l.b16 %v281
    %v1915 = vunpack.c.h.b16 %v281
    %v1916 = vunpack.c.l.b16 %v282
    %v1917 = vunpack.c.h.b16 %v282
    %v1918 = vunpack.c.l.b16 %v283
    %v1919 = vunpack.c.h.b16 %v283
    %v1920 = vunpack.c.l.b16 %v284
    %v1921 = vunpack.c.h.b16 %v284
    %v1922 = vunpack.c.l.b16 %v285
    %v1923 = vunpack.c.h.b16 %v285
    %v1924 = vunpack.c.l.b16 %v286
    %v1925 = vunpack.c.h.b16 %v286
    %v1926 = vunpack.c.l.b16 %v287
    %v1927 = vunpack.c.h.b16 %v287
    %v1928 = vunpack.c.l.b16 %v288
    %v1929 = vunpack.c.h.b16 %v288
    %v1930 = vunpack.c.l.b16 %v289
    %v1931 = vunpack.c.h.b16 %v289
    %v1932 = vunpack.c.l.b16 %v290
    %v1933 = vunpack.c.h.b16 %v290
    %v1934 = vunpack.c.l.b16 %v291
    %v1935 = vunpack.c.h.b16 %v291
    %v1936 = vunpack.c.l.b16 %v292
    %v1937 = vunpack.c.h.b16 %v292
    %v1938 = vunpack.c.l.b16 %v293
    %v1939 = vunpack.c.h.b16 %v293
    %v1940 = vunpack.c.l.b16 %v294
    %v1941 = vunpack.c.h.b16 %v294
    %v1942 = vunpack.c.l.b16 %v295
    %v1943 = vunpack.c.h.b16 %v295
    %v1944 = vunpack.c.l.b16 %v296
    %v1945 = vunpack.c.h.b16 %v296
    %v1946 = vunpack.c.l.b16 %v297
    %v1947 = vunpack.c.h.b16 %v297
    %v1948 = vunpack.c.l.b16 %v298
    %v1949 = vunpack.c.h.b16 %v298
    %v1950 = vunpack.c.l.b16 %v299
    %v1951 = vunpack.c.h.b16 %v299
    %v1952 = vunpack.c.l.b16 %v300
    %v1953 = vunpack.c.h.b16 %v300
    %v1954 = vunpack.c.l.b16 %v301
    %v1955 = vunpack.c.h.b16 %v301
    %v1956 = vunpack.c.l.b16 %v302
    %v1957 = vunpack.c.h.b16 %v302
    %v1958 = vunpack.c.l.b16 %v303
    %v1959 = vunpack.c.h.b16 %v303
    %v1960 = vunpack.c.l.b16 %v304
    %v1961 = vunpack.c.h.b16 %v304
    %v1962 = vunpack.c.l.b16 %v305
    %v1963 = vunpack.c.h.b16 %v305
    %v1964 = vunpack.c.l.b16 %v306
    %v1965 = vunpack.c.h.b16 %v306
    %v1966 = vunpack.c.l.b16 %v307
    %v1967 = vunpack.c.h.b16 %v307
    %v1968 = vunpack.c.l.b16 %v308
    %v1969 = vunpack.c.h.b16 %v308
    %v1970 = vunpack.c.l.b16 %v309
    %v1971 = vunpack.c.h.b16 %v309
    %v1972 = vunpack.c.l.b16 %v310
    %v1973 = vunpack.c.h.b16 %v310
    %v1974 = vunpack.c.l.b16 %v311
    %v1975 = vunpack.c.h.b16 %v311
    %v1976 = vunpack.c.l.b16 %v312
    %v1977 = vunpack.c.h.b16 %v312
    %v1978 = vunpack.c.l.b16 %v313
    %v1979 = vunpack.c.h.b16 %v313
    %v1980 = vunpack.c.l.b16 %v314
    %v1981 = vunpack.c.h.b16 %v314
    %v1982 = vunpack.c.l.b16 %v315
    %v1983 = vunpack.c.h.b16 %v315
    %v1984 = vunpack.c.l.b16 %v316
    %v1985 = vunpack.c.h.b16 %v316
    %v1986 = vunpack.c.l.b16 %v317
    %v1987 = vunpack.c.h.b16 %v317
    %v1988 = vunpack.c.l.b16 %v318
    %v1989 = vunpack.c.h.b16 %v318
    %v1990 = vunpack.c.l.b16 %v319
    %v1991 = vunpack.c.h.b16 %v319
    %v1992 = vunpack.c.l.b16 %v320
    %v1993 = vunpack.c.h.b16 %v320
    %v1994 = vunpack.c.l.b16 %v321
    %v1995 = vunpack.c.h.b16 %v321
    %v1996 = vunpack.c.l.b16 %v322
    %v1997 = vunpack.c.h.b16 %v322
    %v1998 = vunpack.c.l.b16 %v323
    %v1999 = vunpack.c.h.b16 %v323
    %v2000 = vunpack.c.l.b16 %v324
    %v2001 = vunpack.c.h.b16 %v324
    %v2002 = vunpack.c.l.b16 %v325
    %v2003 = vunpack.c.h.b16 %v325
    %v2004 = vunpack.c.l.b16 %v326
    %v2005 = vunpack.c.h.b16 %v326
    %v2006 = vunpack.c.l.b16 %v327
    %v2007 = vunpack.c.h.b16 %v327
    %v2008 = vunpack.c.l.b16 %v328
    %v2009 = vunpack.c.h.b16 %v328
    %v2010 = vunpack.c.l.b16 %v329
    %v2011 = vunpack.c.h.b16 %v329
    %v2012 = vunpack.c.l.b16 %v330
    %v2013 = vunpack.c.h.b16 %v330
    %v2014 = vunpack.c.l.b16 %v331
    %v2015 = vunpack.c.h.b16 %v331
    %v2016 = vunpack.c.l.b16 %v332
    %v2017 = vunpack.c.h.b16 %v332
    %v2018 = vunpack.c.l.b16 %v333
    %v2019 = vunpack.c.h.b16 %v333
    %v2020 = vunpack.c.l.b16 %v334
    %v2021 = vunpack.c.h.b16 %v334
    %v2022 = vunpack.c.l.b16 %v335
    %v2023 = vunpack.c.h.b16 %v335
    %v2024 = vunpack.c.l.b16 %v336
    %v2025 = vunpack.c.h.b16 %v336
    %v2026 = vunpack.c.l.b16 %v337
    %v2027 = vunpack.c.h.b16 %v337
    %v2028 = vunpack.c.l.b16 %v338
    %v2029 = vunpack.c.h.b16 %v338
    %v2030 = vunpack.c.l.b16 %v339
    %v2031 = vunpack.c.h.b16 %v339
    %v2032 = vunpack.c.l.b16 %v340
    %v2033 = vunpack.c.h.b16 %v340
    %v2034 = vunpack.c.l.b16 %v341
    %v2035 = vunpack.c.h.b16 %v341
    %v2036 = vunpack.c.l.b16 %v342
    %v2037 = vunpack.c.h.b16 %v342
    %v2038 = vunpack.c.l.b16 %v343
    %v2039 = vunpack.c.h.b16 %v343
    %v2040 = vunpack.c.l.b16 %v344
    %v2041 = vunpack.c.h.b16 %v344
    %v2042 = vunpack.c.l.b16 %v345
    %v2043 = vunpack.c.h.b16 %v345
    %v2044 = vunpack.c.l.b16 %v346
    %v2045 = vunpack.c.h.b16 %v346
    %v2046 = vunpack.c.l.b16 %v347
    %v2047 = vunpack.c.h.b16 %v347
    %v2048 = vunpack.c.l.b16 %v348
    %v2049 = vunpack.c.h.b16 %v348
    %v2050 = vunpack.c.l.b16 %v349
    %v2051 = vunpack.c.h.b16 %v349
    %v2052 = vunpack.c.l.b16 %v350
    %v2053 = vunpack.c.h.b16 %v350
    %v2054 = vunpack.c.l.b16 %v351
    %v2055 = vunpack.c.h.b16 %v351
    %v2056 = vunpack.c.l.b16 %v352
    %v2057 = vunpack.c.h.b16 %v352
    %v2058 = vunpack.c.l.b16 %v353
    %v2059 = vunpack.c.h.b16 %v353
    %v2060 = vunpack.c.l.b16 %v354
    %v2061 = vunpack.c.h.b16 %v354
    %v2062 = vunpack.c.l.b16 %v355
    %v2063 = vunpack.c.h.b16 %v355
    %v2064 = vunpack.c.l.b16 %v356
    %v2065 = vunpack.c.h.b16 %v356
    %v2066 = vunpack.c.l.b16 %v357
    %v2067 = vunpack.c.h.b16 %v357
    %v2068 = vunpack.c.l.b16 %v358
    %v2069 = vunpack.c.h.b16 %v358
    %v2070 = vunpack.c.l.b16 %v359
    %v2071 = vunpack.c.h.b16 %v359
    %v2072 = vunpack.c.l.b16 %v360
    %v2073 = vunpack.c.h.b16 %v360
    %v2074 = vunpack.c.l.b16 %v361
    %v2075 = vunpack.c.h.b16 %v361
    %v2076 = vunpack.c.l.b16 %v362
    %v2077 = vunpack.c.h.b16 %v362
    %v2078 = vunpack.c.l.b16 %v363
    %v2079 = vunpack.c.h.b16 %v363
    %v2080 = vunpack.c.l.b16 %v364
    %v2081 = vunpack.c.h.b16 %v364
    %v2082 = vunpack.c.l.b16 %v365
    %v2083 = vunpack.c.h.b16 %v365
    %v2084 = vunpack.c.l.b16 %v366
    %v2085 = vunpack.c.h.b16 %v366
    %v2086 = vunpack.c.l.b16 %v367
    %v2087 = vunpack.c.h.b16 %v367
    %v2088 = vunpack.c.l.b16 %v368
    %v2089 = vunpack.c.h.b16 %v368
    %v2090 = vunpack.c.l.b16 %v369
    %v2091 = vunpack.c.h.b16 %v369
    %v2092 = vunpack.c.l.b16 %v370
    %v2093 = vunpack.c.h.b16 %v370
    %v2094 = vunpack.c.l.b16 %v371
    %v2095 = vunpack.c.h.b16 %v371
    %v2096 = vunpack.c.l.b16 %v372
    %v2097 = vunpack.c.h.b16 %v372
    %v2098 = vunpack.c.l.b16 %v373
    %v2099 = vunpack.c.h.b16 %v373
    %v2100 = vunpack.c.l.b16 %v374
    %v2101 = vunpack.c.h.b16 %v374
    %v2102 = vunpack.c.l.b16 %v375
    %v2103 = vunpack.c.h.b16 %v375
    %v2104 = vunpack.c.l.b16 %v376
    %v2105 = vunpack.c.h.b16 %v376
    %v2106 = vunpack.c.l.b16 %v377
    %v2107 = vunpack.c.h.b16 %v377
    %v2108 = vunpack.c.l.b16 %v378
    %v2109 = vunpack.c.h.b16 %v378
    %v2110 = vunpack.c.l.b16 %v379
    %v2111 = vunpack.c.h.b16 %v379
    %v2112 = vunpack.c.l.b16 %v380
    %v2113 = vunpack.c.h.b16 %v380
    %v2114 = vunpack.c.l.b16 %v381
    %v2115 = vunpack.c.h.b16 %v381
    %v2116 = vunpack.c.l.b16 %v382
    %v2117 = vunpack.c.h.b16 %v382
    %v2118 = vunpack.c.l.b16 %v383
    %v2119 = vunpack.c.h.b16 %v383
    %v2120 = vunpack.c.l.b16 %v384
    %v2121 = vunpack.c.h.b16 %v384
    %v2122 = vunpack.c.l.b16 %v385
    %v2123 = vunpack.c.h.b16 %v385
    %v2124 = vunpack.c.l.b16 %v386
    %v2125 = vunpack.c.h.b16 %v386
    %v2126 = vunpack.c.l.b16 %v387
    %v2127 = vunpack.c.h.b16 %v387
    %v2128 = vunpack.c.l.b16 %v388
    %v2129 = vunpack.c.h.b16 %v388
    %v2130 = vunpack.c.l.b16 %v389
    %v2131 = vunpack.c.h.b16 %v389
    %v2132 = vunpack.c.l.b16 %v390
    %v2133 = vunpack.c.h.b16 %v390
    %v2134 = vunpack.c.l.b16 %v391
    %v2135 = vunpack.c.h.b16 %v391
    %v2136 = vunpack.c.l.b16 %v392
    %v2137 = vunpack.c.h.b16 %v392
    %v2138 = vunpack.c.l.b16 %v393
    %v2139 = vunpack.c.h.b16 %v393
    %v2140 = vunpack.c.l.b16 %v394
    %v2141 = vunpack.c.h.b16 %v394
    %v2142 = vunpack.c.l.b16 %v395
    %v2143 = vunpack.c.h.b16 %v395
    %v2144 = vunpack.c.l.b16 %v396
    %v2145 = vunpack.c.h.b16 %v396
    %v2146 = vunpack.c.l.b16 %v397
    %v2147 = vunpack.c.h.b16 %v397
    %v2148 = vunpack.c.l.b16 %v398
    %v2149 = vunpack.c.h.b16 %v398
    %v2150 = vunpack.c.l.b16 %v399
    %v2151 = vunpack.c.h.b16 %v399
    %v2152 = vunpack.c.l.b16 %v400
    %v2153 = vunpack.c.h.b16 %v400
    %v2154 = vunpack.c.l.b16 %v401
    %v2155 = vunpack.c.h.b16 %v401
    %v2156 = vunpack.c.l.b16 %v402
    %v2157 = vunpack.c.h.b16 %v402
    %v2158 = vunpack.c.l.b16 %v403
    %v2159 = vunpack.c.h.b16 %v403
    %v2160 = vunpack.c.l.b16 %v404
    %v2161 = vunpack.c.h.b16 %v404
    %v2162 = vunpack.c.l.b16 %v405
    %v2163 = vunpack.c.h.b16 %v405
    %v2164 = vunpack.c.l.b16 %v406
    %v2165 = vunpack.c.h.b16 %v406
    %v2166 = vunpack.c.l.b16 %v407
    %v2167 = vunpack.c.h.b16 %v407
    %v2168 = vunpack.c.l.b16 %v408
    %v2169 = vunpack.c.h.b16 %v408
    %v2170 = vunpack.c.l.b16 %v409
    %v2171 = vunpack.c.h.b16 %v409
    %v2172 = vunpack.c.l.b16 %v410
    %v2173 = vunpack.c.h.b16 %v410
    %v2174 = vunpack.c.l.b16 %v411
    %v2175 = vunpack.c.h.b16 %v411
    %v2176 = vunpack.c.l.b16 %v412
    %v2177 = vunpack.c.h.b16 %v412
    %v2178 = vunpack.c.l.b16 %v413
    %v2179 = vunpack.c.h.b16 %v413
    %v2180 = vunpack.c.l.b16 %v414
    %v2181 = vunpack.c.h.b16 %v414
    %v2182 = vunpack.c.l.b16 %v415
    %v2183 = vunpack.c.h.b16 %v415
    %v2184 = vunpack.c.l.b16 %v416
    %v2185 = vunpack.c.h.b16 %v416
    %v2186 = vunpack.c.l.b16 %v417
    %v2187 = vunpack.c.h.b16 %v417
    %v2188 = vunpack.c.l.b16 %v418
    %v2189 = vunpack.c.h.b16 %v418
    %v2190 = vunpack.c.l.b16 %v419
    %v2191 = vunpack.c.h.b16 %v419
    %v2192 = vunpack.c.l.b16 %v420
    %v2193 = vunpack.c.h.b16 %v420
    %v2194 = vunpack.c.l.b16 %v421
    %v2195 = vunpack.c.h.b16 %v421
    %v2196 = vunpack.c.l.b16 %v422
    %v2197 = vunpack.c.h.b16 %v422
    %v2198 = vunpack.c.l.b16 %v423
    %v2199 = vunpack.c.h.b16 %v423
    %v2200 = vunpack.c.l.b16 %v424
    %v2201 = vunpack.c.h.b16 %v424
    %v2202 = vunpack.c.l.b16 %v425
    %v2203 = vunpack.c.h.b16 %v425
    %v2204 = vunpack.c.l.b16 %v426
    %v2205 = vunpack.c.h.b16 %v426
    %v2206 = vunpack.c.l.b16 %v427
    %v2207 = vunpack.c.h.b16 %v427
    %v2208 = vunpack.c.l.b16 %v428
    %v2209 = vunpack.c.h.b16 %v428
    %v2210 = vunpack.c.l.b16 %v429
    %v2211 = vunpack.c.h.b16 %v429
    %v2212 = vunpack.c.l.b16 %v430
    %v2213 = vunpack.c.h.b16 %v430
    %v2214 = vunpack.c.l.b16 %v431
    %v2215 = vunpack.c.h.b16 %v431
    %v2216 = vunpack.c.l.b16 %v432
    %v2217 = vunpack.c.h.b16 %v432
    %v2218 = vunpack.c.l.b16 %v433
    %v2219 = vunpack.c.h.b16 %v433
    %v2220 = vunpack.c.l.b16 %v434
    %v2221 = vunpack.c.h.b16 %v434
    %v2222 = vunpack.c.l.b16 %v435
    %v2223 = vunpack.c.h.b16 %v435
    %v2224 = vunpack.c.l.b16 %v436
    %v2225 = vunpack.c.h.b16 %v436
    %v2226 = vunpack.c.l.b16 %v437
    %v2227 = vunpack.c.h.b16 %v437
    %v2228 = vunpack.c.l.b16 %v438
    %v2229 = vunpack.c.h.b16 %v438
    %v2230 = vunpack.c.l.b16 %v439
    %v2231 = vunpack.c.h.b16 %v439
    %v2232 = vunpack.c.l.b16 %v440
    %v2233 = vunpack.c.h.b16 %v440
    %v2234 = vunpack.c.l.b16 %v441
    %v2235 = vunpack.c.h.b16 %v441
    %v2236 = vunpack.c.l.b16 %v442
    %v2237 = vunpack.c.h.b16 %v442
    %v2238 = vunpack.c.l.b16 %v443
    %v2239 = vunpack.c.h.b16 %v443
    %v2240 = vunpack.c.l.b16 %v444
    %v2241 = vunpack.c.h.b16 %v444
    %v2242 = vunpack.c.l.b16 %v445
    %v2243 = vunpack.c.h.b16 %v445
    %v2244 = vunpack.c.l.b16 %v446
    %v2245 = vunpack.c.h.b16 %v446
    %v2246 = vunpack.c.l.b16 %v447
    %v2247 = vunpack.c.h.b16 %v447
    %v2248 = vunpack.c.l.b16 %v448
    %v2249 = vunpack.c.h.b16 %v448
    %v2250 = vunpack.c.l.b16 %v449
    %v2251 = vunpack.c.h.b16 %v449
    %v2252 = vunpack.c.l.b16 %v450
    %v2253 = vunpack.c.h.b16 %v450
    %v2254 = vunpack.c.l.b16 %v451
    %v2255 = vunpack.c.h.b16 %v451
    %v2256 = vunpack.c.l.b16 %v452
    %v2257 = vunpack.c.h.b16 %v452
    %v2258 = vunpack.c.l.b16 %v453
    %v2259 = vunpack.c.h.b16 %v453
    %v2260 = vunpack.c.l.b16 %v454
    %v2261 = vunpack.c.h.b16 %v454
    %v2262 = vunpack.c.l.b16 %v455
    %v2263 = vunpack.c.h.b16 %v455
    %v2264 = vunpack.c.l.b16 %v456
    %v2265 = vunpack.c.h.b16 %v456
    %v2266 = vunpack.c.l.b16 %v457
    %v2267 = vunpack.c.h.b16 %v457
    %v2268 = vunpack.c.l.b16 %v458
    %v2269 = vunpack.c.h.b16 %v458
    %v2270 = vunpack.c.l.b16 %v459
    %v2271 = vunpack.c.h.b16 %v459
    %v2272 = vunpack.c.l.b16 %v460
    %v2273 = vunpack.c.h.b16 %v460
    %v2274 = vunpack.c.l.b16 %v461
    %v2275 = vunpack.c.h.b16 %v461
    %v2276 = vunpack.c.l.b16 %v462
    %v2277 = vunpack.c.h.b16 %v462
    %v2278 = vunpack.c.l.b16 %v463
    %v2279 = vunpack.c.h.b16 %v463
    %v2280 = vunpack.c.l.b16 %v464
    %v2281 = vunpack.c.h.b16 %v464
    %v2282 = vunpack.c.l.b16 %v465
    %v2283 = vunpack.c.h.b16 %v465
    %v2284 = vunpack.c.l.b16 %v466
    %v2285 = vunpack.c.h.b16 %v466
    %v2286 = vunpack.c.l.b16 %v467
    %v2287 = vunpack.c.h.b16 %v467
    %v2288 = vunpack.c.l.b16 %v468
    %v2289 = vunpack.c.h.b16 %v468
    %v2290 = vunpack.c.l.b16 %v469
    %v2291 = vunpack.c.h.b16 %v469
    %v2292 = vunpack.c.l.b16 %v470
    %v2293 = vunpack.c.h.b16 %v470
    %v2294 = vunpack.c.l.b16 %v471
    %v2295 = vunpack.c.h.b16 %v471
    %v2296 = vunpack.c.l.b16 %v472
    %v2297 = vunpack.c.h.b16 %v472
    %v2298 = vunpack.c.l.b16 %v473
    %v2299 = vunpack.c.h.b16 %v473
    %v2300 = vunpack.c.l.b16 %v474
    %v2301 = vunpack.c.h.b16 %v474
    %v2302 = vunpack.c.l.b16 %v475
    %v2303 = vunpack.c.h.b16 %v475
    %v2304 = vunpack.c.l.b16 %v476
    %v2305 = vunpack.c.h.b16 %v476
    %v2306 = vunpack.c.l.b16 %v477
    %v2307 = vunpack.c.h.b16 %v477
    %v2308 = vunpack.c.l.b16 %v478
    %v2309 = vunpack.c.h.b16 %v478
    %v2310 = vunpack.c.l.b16 %v479
    %v2311 = vunpack.c.h.b16 %v479
    %v2312 = vunpack.c.l.b16 %v480
    %v2313 = vunpack.c.h.b16 %v480
    %v2314 = vunpack.c.l.b16 %v481
    %v2315 = vunpack.c.h.b16 %v481
    %v2316 = vunpack.c.l.b16 %v482
    %v2317 = vunpack.c.h.b16 %v482
    %v2318 = vunpack.c.l.b16 %v483
    %v2319 = vunpack.c.h.b16 %v483
    %v2320 = vunpack.c.l.b16 %v484
    %v2321 = vunpack.c.h.b16 %v484
    %v2322 = vunpack.c.l.b16 %v485
    %v2323 = vunpack.c.h.b16 %v485
    %v2324 = vunpack.c.l.b16 %v486
    %v2325 = vunpack.c.h.b16 %v486
    %v2326 = vunpack.c.l.b16 %v487
    %v2327 = vunpack.c.h.b16 %v487
    %v2328 = vunpack.c.l.b16 %v488
    %v2329 = vunpack.c.h.b16 %v488
    %v2330 = vunpack.c.l.b16 %v489
    %v2331 = vunpack.c.h.b16 %v489
    %v2332 = vunpack.c.l.b16 %v490
    %v2333 = vunpack.c.h.b16 %v490
    %v2334 = vunpack.c.l.b16 %v491
    %v2335 = vunpack.c.h.b16 %v491
    %v2336 = vunpack.c.l.b16 %v492
    %v2337 = vunpack.c.h.b16 %v492
    %v2338 = vunpack.c.l.b16 %v493
    %v2339 = vunpack.c.h.b16 %v493
    %v2340 = vunpack.c.l.b16 %v494
    %v2341 = vunpack.c.h.b16 %v494
    %v2342 = vunpack.c.l.b16 %v495
    %v2343 = vunpack.c.h.b16 %v495
    %v2344 = vunpack.c.l.b16 %v496
    %v2345 = vunpack.c.h.b16 %v496
    %v2346 = vunpack.c.l.b16 %v497
    %v2347 = vunpack.c.h.b16 %v497
    %v2348 = vunpack.c.l.b16 %v498
    %v2349 = vunpack.c.h.b16 %v498
    %v2350 = vunpack.c.l.b16 %v499
    %v2351 = vunpack.c.h.b16 %v499
    %v2352 = vunpack.c.l.b16 %v500
    %v2353 = vunpack.c.h.b16 %v500
    %v2354 = vunpack.c.l.b16 %v501
    %v2355 = vunpack.c.h.b16 %v501
    %v2356 = vunpack.c.l.b16 %v502
    %v2357 = vunpack.c.h.b16 %v502
    %v2358 = vunpack.c.l.b16 %v503
    %v2359 = vunpack.c.h.b16 %v503
    %v2360 = vunpack.c.l.b16 %v504
    %v2361 = vunpack.c.h.b16 %v504
    %v2362 = vunpack.c.l.b16 %v505
    %v2363 = vunpack.c.h.b16 %v505
    %v2364 = vunpack.c.l.b16 %v506
    %v2365 = vunpack.c.h.b16 %v506
    %v2366 = vunpack.c.l.b16 %v507
    %v2367 = vunpack.c.h.b16 %v507
    %v2368 = vunpack.c.l.b16 %v508
    %v2369 = vunpack.c.h.b16 %v508
    %v2370 = vunpack.c.l.b16 %v509
    %v2371 = vunpack.c.h.b16 %v509
    %v2372 = vunpack.c.l.b16 %v510
    %v2373 = vunpack.c.h.b16 %v510
    %v2374 = vunpack.c.l.b16 %v511
    %v2375 = vunpack.c.h.b16 %v511
    %v2376 = vunpack.c.l.b16 %v512
    %v2377 = vunpack.c.h.b16 %v512
    %v2378 = vunpack.c.l.b16 %v513
    %v2379 = vunpack.c.h.b16 %v513
    %v2380 = vunpack.c.l.b16 %v514
    %v2381 = vunpack.c.h.b16 %v514
    %v2382 = vunpack.c.l.b16 %v515
    %v2383 = vunpack.c.h.b16 %v515
    %v2384 = vunpack.c.l.b16 %v516
    %v2385 = vunpack.c.h.b16 %v516
    %v2386 = vunpack.c.l.b16 %v517
    %v2387 = vunpack.c.h.b16 %v517
    %v2388 = vunpack.c.l.b16 %v518
    %v2389 = vunpack.c.h.b16 %v518
    %v2390 = vunpack.c.l.b16 %v519
    %v2391 = vunpack.c.h.b16 %v519
    %v2392 = vunpack.c.l.b16 %v520
    %v2393 = vunpack.c.h.b16 %v520
    %v2394 = vunpack.c.l.b16 %v521
    %v2395 = vunpack.c.h.b16 %v521
    %v2396 = vunpack.c.l.b16 %v522
    %v2397 = vunpack.c.h.b16 %v522
    %v2398 = vunpack.c.l.b16 %v523
    %v2399 = vunpack.c.h.b16 %v523
    %v2400 = vunpack.c.l.b16 %v524
    %v2401 = vunpack.c.h.b16 %v524
    %v2402 = vunpack.c.l.b16 %v525
    %v2403 = vunpack.c.h.b16 %v525
    %v2404 = vunpack.c.l.b16 %v526
    %v2405 = vunpack.c.h.b16 %v526
    %v2406 = vunpack.c.l.b16 %v527
    %v2407 = vunpack.c.h.b16 %v527
    %v2408 = vunpack.c.l.b16 %v528
    %v2409 = vunpack.c.h.b16 %v528
    %v2410 = vunpack.c.l.b16 %v529
    %v2411 = vunpack.c.h.b16 %v529
    %v2412 = vunpack.c.l.b16 %v530
    %v2413 = vunpack.c.h.b16 %v530
    %v2414 = vunpack.c.l.b16 %v531
    %v2415 = vunpack.c.h.b16 %v531
    %v2416 = vunpack.c.l.b16 %v532
    %v2417 = vunpack.c.h.b16 %v532
    %v2418 = vunpack.c.l.b16 %v533
    %v2419 = vunpack.c.h.b16 %v533
    %v2420 = vunpack.c.l.b16 %v534
    %v2421 = vunpack.c.h.b16 %v534
    %v2422 = vunpack.c.l.b16 %v535
    %v2423 = vunpack.c.h.b16 %v535
    %v2424 = vunpack.c.l.b16 %v536
    %v2425 = vunpack.c.h.b16 %v536
    %v2426 = vunpack.c.l.b16 %v537
    %v2427 = vunpack.c.h.b16 %v537
    %v2428 = vunpack.c.l.b16 %v538
    %v2429 = vunpack.c.h.b16 %v538
    %v2430 = vunpack.c.l.b16 %v539
    %v2431 = vunpack.c.h.b16 %v539
    %v2432 = vunpack.c.l.b16 %v540
    %v2433 = vunpack.c.h.b16 %v540
    %v2434 = vunpack.c.l.b16 %v541
    %v2435 = vunpack.c.h.b16 %v541
    %v2436 = vunpack.c.l.b16 %v542
    %v2437 = vunpack.c.h.b16 %v542
    %v2438 = vunpack.c.l.b16 %v543
    %v2439 = vunpack.c.h.b16 %v543
    %v2440 = vunpack.c.l.b16 %v544
    %v2441 = vunpack.c.h.b16 %v544
    %v2442 = vunpack.c.l.b16 %v545
    %v2443 = vunpack.c.h.b16 %v545
    %v2444 = vunpack.c.l.b16 %v546
    %v2445 = vunpack.c.h.b16 %v546
    %v2446 = vunpack.c.l.b16 %v547
    %v2447 = vunpack.c.h.b16 %v547
    %v2448 = vunpack.c.l.b16 %v548
    %v2449 = vunpack.c.h.b16 %v548
    %v2450 = vunpack.c.l.b16 %v549
    %v2451 = vunpack.c.h.b16 %v549
    %v2452 = vunpack.c.l.b16 %v550
    %v2453 = vunpack.c.h.b16 %v550
    %v2454 = vunpack.c.l.b16 %v551
    %v2455 = vunpack.c.h.b16 %v551
    %v2456 = vunpack.c.l.b16 %v552
    %v2457 = vunpack.c.h.b16 %v552
    %v2458 = vunpack.c.l.b16 %v553
    %v2459 = vunpack.c.h.b16 %v553
    %v2460 = vunpack.c.l.b16 %v554
    %v2461 = vunpack.c.h.b16 %v554
    %v2462 = vunpack.c.l.b16 %v555
    %v2463 = vunpack.c.h.b16 %v555
    %v2464 = vunpack.c.l.b16 %v556
    %v2465 = vunpack.c.h.b16 %v556
    %v2466 = vunpack.c.l.b16 %v557
    %v2467 = vunpack.c.h.b16 %v557
    %v2468 = vunpack.c.l.b16 %v558
    %v2469 = vunpack.c.h.b16 %v558
    %v2470 = vunpack.c.l.b16 %v559
    %v2471 = vunpack.c.h.b16 %v559
    %v2472 = vunpack.c.l.b16 %v560
    %v2473 = vunpack.c.h.b16 %v560
    %v2474 = vunpack.c.l.b16 %v561
    %v2475 = vunpack.c.h.b16 %v561
    %v2476 = vunpack.c.l.b16 %v562
    %v2477 = vunpack.c.h.b16 %v562
    %v2478 = vunpack.c.l.b16 %v563
    %v2479 = vunpack.c.h.b16 %v563
    %v2480 = vunpack.c.l.b16 %v564
    %v2481 = vunpack.c.h.b16 %v564
    %v2482 = vunpack.c.l.b16 %v565
    %v2483 = vunpack.c.h.b16 %v565
    %v2484 = vunpack.c.l.b16 %v566
    %v2485 = vunpack.c.h.b16 %v566
    %v2486 = vunpack.c.l.b16 %v567
    %v2487 = vunpack.c.h.b16 %v567
    %v2488 = vunpack.c.l.b16 %v568
    %v2489 = vunpack.c.h.b16 %v568
    %v2490 = vunpack.c.l.b16 %v569
    %v2491 = vunpack.c.h.b16 %v569
    %v2492 = vunpack.c.l.b16 %v570
    %v2493 = vunpack.c.h.b16 %v570
    %v2494 = vunpack.c.l.b16 %v571
    %v2495 = vunpack.c.h.b16 %v571
    %v2496 = vunpack.c.l.b16 %v572
    %v2497 = vunpack.c.h.b16 %v572
    %v2498 = vunpack.c.l.b16 %v573
    %v2499 = vunpack.c.h.b16 %v573
    %v2500 = vunpack.c.l.b16 %v574
    %v2501 = vunpack.c.h.b16 %v574
    %v2502 = vunpack.c.l.b16 %v575
    %v2503 = vunpack.c.h.b16 %v575
    %v2504 = vunpack.c.l.b16 %v576
    %v2505 = vunpack.c.h.b16 %v576
    %v2506 = vunpack.c.l.b16 %v577
    %v2507 = vunpack.c.h.b16 %v577
    %v2508 = vunpack.c.l.b16 %v578
    %v2509 = vunpack.c.h.b16 %v578
    %v2510 = vunpack.c.l.b16 %v579
    %v2511 = vunpack.c.h.b16 %v579
    %v2512 = vunpack.c.l.b16 %v580
    %v2513 = vunpack.c.h.b16 %v580
    %v2514 = vunpack.c.l.b16 %v581
    %v2515 = vunpack.c.h.b16 %v581
    %v2516 = vunpack.c.l.b16 %v582
    %v2517 = vunpack.c.h.b16 %v582
    %v2518 = vunpack.c.l.b16 %v583
    %v2519 = vunpack.c.h.b16 %v583
    %v2520 = vunpack.c.l.b16 %v584
    %v2521 = vunpack.c.h.b16 %v584
    %v2522 = vunpack.c.l.b16 %v585
    %v2523 = vunpack.c.h.b16 %v585
    %v2524 = vunpack.c.l.b16 %v586
    %v2525 = vunpack.c.h.b16 %v586
    %v2526 = vunpack.c.l.b16 %v587
    %v2527 = vunpack.c.h.b16 %v587
    %v2528 = vunpack.c.l.b16 %v588
    %v2529 = vunpack.c.h.b16 %v588
    %v2530 = vunpack.c.l.b16 %v589
    %v2531 = vunpack.c.h.b16 %v589
    %v2532 = vunpack.c.l.b16 %v590
    %v2533 = vunpack.c.h.b16 %v590
    %v2534 = vunpack.c.l.b16 %v591
    %v2535 = vunpack.c.h.b16 %v591
    %v2536 = vunpack.c.l.b16 %v592
    %v2537 = vunpack.c.h.b16 %v592
    %v2538 = vunpack.c.l.b16 %v593
    %v2539 = vunpack.c.h.b16 %v593
    %v2540 = vunpack.c.l.b16 %v594
    %v2541 = vunpack.c.h.b16 %v594
    %v2542 = vunpack.c.l.b16 %v595
    %v2543 = vunpack.c.h.b16 %v595
    %v2544 = vunpack.c.l.b16 %v596
    %v2545 = vunpack.c.h.b16 %v596
    %v2546 = vunpack.c.l.b16 %v597
    %v2547 = vunpack.c.h.b16 %v597
    %v2548 = vunpack.c.l.b16 %v598
    %v2549 = vunpack.c.h.b16 %v598
    %v2550 = vunpack.c.l.b16 %v599
    %v2551 = vunpack.c.h.b16 %v599
    %v2552 = vunpack.c.l.b16 %v600
    %v2553 = vunpack.c.h.b16 %v600
    %v2554 = vunpack.c.l.b16 %v601
    %v2555 = vunpack.c.h.b16 %v601
    %v2556 = vunpack.c.l.b16 %v602
    %v2557 = vunpack.c.h.b16 %v602
    %v2558 = vunpack.c.l.b16 %v603
    %v2559 = vunpack.c.h.b16 %v603
    %v2560 = vunpack.c.l.b16 %v604
    %v2561 = vunpack.c.h.b16 %v604
    %v2562 = vunpack.c.l.b16 %v605
    %v2563 = vunpack.c.h.b16 %v605
    %v2564 = vunpack.c.l.b16 %v606
    %v2565 = vunpack.c.h.b16 %v606
    %v2566 = vunpack.c.l.b16 %v607
    %v2567 = vunpack.c.h.b16 %v607
    %v2568 = vunpack.c.l.b16 %v608
    %v2569 = vunpack.c.h.b16 %v608
    %v2570 = vunpack.c.l.b16 %v609
    %v2571 = vunpack.c.h.b16 %v609
    %v2572 = vunpack.c.l.b16 %v610
    %v2573 = vunpack.c.h.b16 %v610
    %v2574 = vunpack.c.l.b16 %v611
    %v2575 = vunpack.c.h.b16 %v611
    %v2576 = vunpack.c.l.b16 %v612
    %v2577 = vunpack.c.h.b16 %v612
    %v2578 = vunpack.c.l.b16 %v613
    %v2579 = vunpack.c.h.b16 %v613
    %v2580 = vunpack.c.l.b16 %v614
    %v2581 = vunpack.c.h.b16 %v614
    %v2582 = vunpack.c.l.b16 %v615
    %v2583 = vunpack.c.h.b16 %v615
    %v2584 = vunpack.c.l.b16 %v616
    %v2585 = vunpack.c.h.b16 %v616
    %v2586 = vunpack.c.l.b16 %v617
    %v2587 = vunpack.c.h.b16 %v617
    %v2588 = vunpack.c.l.b16 %v618
    %v2589 = vunpack.c.h.b16 %v618
    %v2590 = vunpack.c.l.b16 %v619
    %v2591 = vunpack.c.h.b16 %v619
    %v2592 = vunpack.c.l.b16 %v620
    %v2593 = vunpack.c.h.b16 %v620
    %v2594 = vunpack.c.l.b16 %v621
    %v2595 = vunpack.c.h.b16 %v621
    %v2596 = vunpack.c.l.b16 %v622
    %v2597 = vunpack.c.h.b16 %v622
    %v2598 = vunpack.c.l.b16 %v623
    %v2599 = vunpack.c.h.b16 %v623
    %v2600 = vunpack.c.l.b16 %v624
    %v2601 = vunpack.c.h.b16 %v624
    %v2602 = vunpack.c.l.b16 %v625
    %v2603 = vunpack.c.h.b16 %v625
    %v2604 = vunpack.c.l.b16 %v626
    %v2605 = vunpack.c.h.b16 %v626
    %v2606 = vunpack.c.l.b16 %v627
    %v2607 = vunpack.c.h.b16 %v627
    %v2608 = vunpack.c.l.b16 %v628
    %v2609 = vunpack.c.h.b16 %v628
    %v2610 = vunpack.c.l.b16 %v629
    %v2611 = vunpack.c.h.b16 %v629
    %v2612 = vunpack.c.l.b16 %v630
    %v2613 = vunpack.c.h.b16 %v630
    %v2614 = vunpack.c.l.b16 %v631
    %v2615 = vunpack.c.h.b16 %v631
    %v2616 = vunpack.c.l.b16 %v632
    %v2617 = vunpack.c.h.b16 %v632
    %v2618 = vunpack.c.l.b16 %v633
    %v2619 = vunpack.c.h.b16 %v633
    %v2620 = vunpack.c.l.b16 %v634
    %v2621 = vunpack.c.h.b16 %v634
    %v2622 = vunpack.c.l.b16 %v635
    %v2623 = vunpack.c.h.b16 %v635
    %v2624 = vunpack.c.l.b16 %v636
    %v2625 = vunpack.c.h.b16 %v636
    %v2626 = vunpack.c.l.b16 %v637
    %v2627 = vunpack.c.h.b16 %v637
    %v2628 = vunpack.c.l.b16 %v638
    %v2629 = vunpack.c.h.b16 %v638
    %v2630 = vunpack.c.l.b16 %v639
    %v2631 = vunpack.c.h.b16 %v639
    %v2632 = vunpack.c.l.b16 %v640
    %v2633 = vunpack.c.h.b16 %v640
    %v2634 = vunpack.c.l.b16 %v641
    %v2635 = vunpack.c.h.b16 %v641
    %v2636 = vunpack.c.l.b16 %v642
    %v2637 = vunpack.c.h.b16 %v642
    %v2638 = vunpack.c.l.b16 %v643
    %v2639 = vunpack.c.h.b16 %v643
    %v2640 = vunpack.c.l.b16 %v644
    %v2641 = vunpack.c.h.b16 %v644
    %v2642 = vunpack.c.l.b16 %v645
    %v2643 = vunpack.c.h.b16 %v645
    %v2644 = vunpack.c.l.b16 %v646
    %v2645 = vunpack.c.h.b16 %v646
    %v2646 = vunpack.c.l.b16 %v647
    %v2647 = vunpack.c.h.b16 %v647
    %v2648 = vunpack.c.l.b16 %v648
    %v2649 = vunpack.c.h.b16 %v648
    %v2650 = vunpack.c.l.b16 %v649
    %v2651 = vunpack.c.h.b16 %v649
    %v2652 = vunpack.c.l.b16 %v650
    %v2653 = vunpack.c.h.b16 %v650
    %v2654 = vunpack.c.l.b16 %v651
    %v2655 = vunpack.c.h.b16 %v651
    %v2656 = vunpack.c.l.b16 %v652
    %v2657 = vunpack.c.h.b16 %v652
    %v2658 = vunpack.c.l.b16 %v653
    %v2659 = vunpack.c.h.b16 %v653
    %v2660 = vunpack.c.l.b16 %v654
    %v2661 = vunpack.c.h.b16 %v654
    %v2662 = vunpack.c.l.b16 %v655
    %v2663 = vunpack.c.h.b16 %v655
    %v2664 = vunpack.c.l.b16 %v656
    %v2665 = vunpack.c.h.b16 %v656
    %v2666 = vunpack.c.l.b16 %v657
    %v2667 = vunpack.c.h.b16 %v657
    %v2668 = vunpack.c.l.b16 %v658
    %v2669 = vunpack.c.h.b16 %v658
    %v2670 = vunpack.c.l.b16 %v659
    %v2671 = vunpack.c.h.b16 %v659
    %v2672 = vunpack.c.l.b16 %v660
    %v2673 = vunpack.c.h.b16 %v660
    %v2674 = vunpack.c.l.b16 %v661
    %v2675 = vunpack.c.h.b16 %v661
    %v2676 = vunpack.c.l.b16 %v662
    %v2677 = vunpack.c.h.b16 %v662
    %v2678 = vunpack.c.l.b16 %v663
    %v2679 = vunpack.c.h.b16 %v663
    %v2680 = vunpack.c.l.b16 %v664
    %v2681 = vunpack.c.h.b16 %v664
    %v2682 = vunpack.c.l.b16 %v665
    %v2683 = vunpack.c.h.b16 %v665
    %v2684 = vunpack.c.l.b16 %v666
    %v2685 = vunpack.c.h.b16 %v666
    %v2686 = vunpack.c.l.b16 %v667
    %v2687 = vunpack.c.h.b16 %v667
    %v2688 = vunpack.c.l.b16 %v668
    %v2689 = vunpack.c.h.b16 %v668
    %v2690 = vunpack.c.l.b16 %v669
    %v2691 = vunpack.c.h.b16 %v669
    %v2692 = vunpack.c.l.b16 %v670
    %v2693 = vunpack.c.h.b16 %v670
    %v2694 = vunpack.c.l.b16 %v671
    %v2695 = vunpack.c.h.b16 %v671
    %v2696 = vunpack.c.l.b16 %v672
    %v2697 = vunpack.c.h.b16 %v672
    %v2698 = vunpack.c.l.b16 %v673
    %v2699 = vunpack.c.h.b16 %v673
    %v2700 = vunpack.c.l.b16 %v674
    %v2701 = vunpack.c.h.b16 %v674
    %v2702 = vunpack.c.l.b16 %v675
    %v2703 = vunpack.c.h.b16 %v675
    %v2704 = vunpack.c.l.b16 %v676
    %v2705 = vunpack.c.h.b16 %v676
    %v2706 = vunpack.c.l.b16 %v677
    %v2707 = vunpack.c.h.b16 %v677
    %v2708 = vunpack.c.l.b16 %v678
    %v2709 = vunpack.c.h.b16 %v678
    %v2710 = vunpack.c.l.b16 %v679
    %v2711 = vunpack.c.h.b16 %v679
    %v2712 = vunpack.c.l.b16 %v680
    %v2713 = vunpack.c.h.b16 %v680
    %v2714 = vunpack.c.l.b16 %v681
    %v2715 = vunpack.c.h.b16 %v681
    %v2716 = vunpack.c.l.b16 %v682
    %v2717 = vunpack.c.h.b16 %v682
    %v2718 = vunpack.c.l.b16 %v683
    %v2719 = vunpack.c.h.b16 %v683
    %v2720 = vunpack.c.l.b16 %v684
    %v2721 = vunpack.c.h.b16 %v684
    %v2722 = vunpack.c.l.b16 %v685
    %v2723 = vunpack.c.h.b16 %v685
    %v2724 = vunpack.c.l.b16 %v686
    %v2725 = vunpack.c.h.b16 %v686
    %v2726 = vunpack.c.l.b16 %v687
    %v2727 = vunpack.c.h.b16 %v687
    %v2728 = vunpack.c.l.b16 %v688
    %v2729 = vunpack.c.h.b16 %v688
    %v2730 = vunpack.c.l.b16 %v689
    %v2731 = vunpack.c.h.b16 %v689
    %v2732 = vunpack.c.l.b16 %v690
    %v2733 = vunpack.c.h.b16 %v690
    %v2734 = vunpack.c.l.b16 %v691
    %v2735 = vunpack.c.h.b16 %v691
    %v2736 = vunpack.c.l.b16 %v692
    %v2737 = vunpack.c.h.b16 %v692
    %v2738 = vunpack.c.l.b16 %v693
    %v2739 = vunpack.c.h.b16 %v693
    %v2740 = vunpack.c.l.b16 %v694
    %v2741 = vunpack.c.h.b16 %v694
    %v2742 = vunpack.c.l.b16 %v695
    %v2743 = vunpack.c.h.b16 %v695
    %v2744 = vunpack.c.l.b16 %v696
    %v2745 = vunpack.c.h.b16 %v696
    %v2746 = vunpack.c.l.b16 %v697
    %v2747 = vunpack.c.h.b16 %v697
    %v2748 = vunpack.c.l.b16 %v698
    %v2749 = vunpack.c.h.b16 %v698
    %v2750 = vunpack.c.l.b16 %v699
    %v2751 = vunpack.c.h.b16 %v699
    %v2752 = vunpack.c.l.b16 %v700
    %v2753 = vunpack.c.h.b16 %v700
    %v2754 = vunpack.c.l.b16 %v701
    %v2755 = vunpack.c.h.b16 %v701
    %v2756 = vunpack.c.l.b16 %v702
    %v2757 = vunpack.c.h.b16 %v702
    %v2758 = vunpack.c.l.b16 %v703
    %v2759 = vunpack.c.h.b16 %v703
    %v2760 = vunpack.c.l.b16 %v704
    %v2761 = vunpack.c.h.b16 %v704
    %v2762 = vunpack.c.l.b16 %v705
    %v2763 = vunpack.c.h.b16 %v705
    %v2764 = vunpack.c.l.b16 %v706
    %v2765 = vunpack.c.h.b16 %v706
    %v2766 = vunpack.c.l.b16 %v707
    %v2767 = vunpack.c.h.b16 %v707
    %v2768 = vunpack.c.l.b16 %v708
    %v2769 = vunpack.c.h.b16 %v708
    %v2770 = vunpack.c.l.b16 %v709
    %v2771 = vunpack.c.h.b16 %v709
    %v2772 = vunpack.c.l.b16 %v710
    %v2773 = vunpack.c.h.b16 %v710
    %v2774 = vunpack.c.l.b16 %v711
    %v2775 = vunpack.c.h.b16 %v711
    %v2776 = vunpack.c.l.b16 %v712
    %v2777 = vunpack.c.h.b16 %v712
    %v2778 = vunpack.c.l.b16 %v713
    %v2779 = vunpack.c.h.b16 %v713
    %v2780 = vunpack.c.l.b16 %v714
    %v2781 = vunpack.c.h.b16 %v714
    %v2782 = vunpack.c.l.b16 %v715
    %v2783 = vunpack.c.h.b16 %v715
    %v2784 = vunpack.c.l.b16 %v716
    %v2785 = vunpack.c.h.b16 %v716
    %v2786 = vunpack.c.l.b16 %v717
    %v2787 = vunpack.c.h.b16 %v717
    %v2788 = vunpack.c.l.b16 %v718
    %v2789 = vunpack.c.h.b16 %v718
    %v2790 = vunpack.c.l.b16 %v719
    %v2791 = vunpack.c.h.b16 %v719
    %v2792 = vunpack.c.l.b16 %v720
    %v2793 = vunpack.c.h.b16 %v720
    %v2794 = vunpack.c.l.b16 %v721
    %v2795 = vunpack.c.h.b16 %v721
    %v2796 = vunpack.c.l.b16 %v722
    %v2797 = vunpack.c.h.b16 %v722
    %v2798 = vunpack.c.l.b16 %v723
    %v2799 = vunpack.c.h.b16 %v723
    %v2800 = vunpack.c.l.b16 %v724
    %v2801 = vunpack.c.h.b16 %v724
    %v2802 = vunpack.c.l.b16 %v725
    %v2803 = vunpack.c.h.b16 %v725
    %v2804 = vunpack.c.l.b16 %v726
    %v2805 = vunpack.c.h.b16 %v726
    %v2806 = vunpack.c.l.b16 %v727
    %v2807 = vunpack.c.h.b16 %v727
    %v2808 = vunpack.c.l.b16 %v728
    %v2809 = vunpack.c.h.b16 %v728
    %v2810 = vunpack.c.l.b16 %v729
    %v2811 = vunpack.c.h.b16 %v729
    %v2812 = vunpack.c.l.b16 %v730
    %v2813 = vunpack.c.h.b16 %v730
    %v2814 = vunpack.c.l.b16 %v731
    %v2815 = vunpack.c.h.b16 %v731
    %v2816 = vunpack.c.l.b16 %v732
    %v2817 = vunpack.c.h.b16 %v732
    %v2818 = vunpack.c.l.b16 %v733
    %v2819 = vunpack.c.h.b16 %v733
    %v2820 = vunpack.c.l.b16 %v734
    %v2821 = vunpack.c.h.b16 %v734
    %v2822 = vunpack.c.l.b16 %v735
    %v2823 = vunpack.c.h.b16 %v735
    %v2824 = vunpack.c.l.b16 %v736
    %v2825 = vunpack.c.h.b16 %v736
    %v2826 = vunpack.c.l.b16 %v737
    %v2827 = vunpack.c.h.b16 %v737
    %v2828 = vunpack.c.l.b16 %v738
    %v2829 = vunpack.c.h.b16 %v738
    %v2830 = vunpack.c.l.b16 %v739
    %v2831 = vunpack.c.h.b16 %v739
    %v2832 = vunpack.c.l.b16 %v740
    %v2833 = vunpack.c.h.b16 %v740
    %v2834 = vunpack.c.l.b16 %v741
    %v2835 = vunpack.c.h.b16 %v741
    %v2836 = vunpack.c.l.b16 %v742
    %v2837 = vunpack.c.h.b16 %v742
    %v2838 = vunpack.c.l.b16 %v743
    %v2839 = vunpack.c.h.b16 %v743
    %v2840 = vunpack.c.l.b16 %v744
    %v2841 = vunpack.c.h.b16 %v744
    %v2842 = vunpack.c.l.b16 %v745
    %v2843 = vunpack.c.h.b16 %v745
    %v2844 = vunpack.c.l.b16 %v746
    %v2845 = vunpack.c.h.b16 %v746
    %v2846 = vunpack.c.l.b16 %v747
    %v2847 = vunpack.c.h.b16 %v747
    %v2848 = vunpack.c.l.b16 %v748
    %v2849 = vunpack.c.h.b16 %v748
    %v2850 = vunpack.c.l.b16 %v749
    %v2851 = vunpack.c.h.b16 %v749
    %v2852 = vunpack.c.l.b16 %v750
    %v2853 = vunpack.c.h.b16 %v750
    %v2854 = vunpack.c.l.b16 %v751
    %v2855 = vunpack.c.h.b16 %v751
    %v2856 = vunpack.c.l.b16 %v752
    %v2857 = vunpack.c.h.b16 %v752
    %v2858 = vunpack.c.l.b16 %v753
    %v2859 = vunpack.c.h.b16 %v753
    %v2860 = vunpack.c.l.b16 %v754
    %v2861 = vunpack.c.h.b16 %v754
    %v2862 = vunpack.c.l.b16 %v755
    %v2863 = vunpack.c.h.b16 %v755
    %v2864 = vunpack.c.l.b16 %v756
    %v2865 = vunpack.c.h.b16 %v756
    %v2866 = vunpack.c.l.b16 %v757
    %v2867 = vunpack.c.h.b16 %v757
    %v2868 = vunpack.c.l.b16 %v758
    %v2869 = vunpack.c.h.b16 %v758
    %v2870 = vunpack.c.l.b16 %v759
    %v2871 = vunpack.c.h.b16 %v759
    %v2872 = vunpack.c.l.b16 %v760
    %v2873 = vunpack.c.h.b16 %v760
    %v2874 = vunpack.c.l.b16 %v761
    %v2875 = vunpack.c.h.b16 %v761
    %v2876 = vunpack.c.l.b16 %v762
    %v2877 = vunpack.c.h.b16 %v762
    %v2878 = vunpack.c.l.b16 %v763
    %v2879 = vunpack.c.h.b16 %v763
    %v2880 = vunpack.c.l.b16 %v764
    %v2881 = vunpack.c.h.b16 %v764
    %v2882 = vunpack.c.l.b16 %v765
    %v2883 = vunpack.c.h.b16 %v765
    %v2884 = vunpack.c.l.b16 %v766
    %v2885 = vunpack.c.h.b16 %v766
    %v2886 = vunpack.c.l.b16 %v767
    %v2887 = vunpack.c.h.b16 %v767
    %v2888 = vunpack.c.l.b16 %v768
    %v2889 = vunpack.c.h.b16 %v768
    %v2890 = vunpack.c.l.b16 %v769
    %v2891 = vunpack.c.h.b16 %v769
    %v2892 = vunpack.c.l.b16 %v770
    %v2893 = vunpack.c.h.b16 %v770
    %v2894 = vunpack.c.l.b16 %v771
    %v2895 = vunpack.c.h.b16 %v771
    %v2896 = vunpack.c.l.b16 %v772
    %v2897 = vunpack.c.h.b16 %v772
    %v2898 = vunpack.c.l.b16 %v773
    %v2899 = vunpack.c.h.b16 %v773
    %v2900 = vunpack.c.l.b16 %v774
    %v2901 = vunpack.c.h.b16 %v774
    %v2902 = vunpack.c.l.b16 %v775
    %v2903 = vunpack.c.h.b16 %v775
    %v2904 = vunpack.c.l.b16 %v776
    %v2905 = vunpack.c.h.b16 %v776
    %v2906 = vunpack.c.l.b16 %v777
    %v2907 = vunpack.c.h.b16 %v777
    %v2908 = vunpack.c.l.b16 %v778
    %v2909 = vunpack.c.h.b16 %v778
    %v2910 = vunpack.c.l.b16 %v779
    %v2911 = vunpack.c.h.b16 %v779
    %v2912 = vunpack.c.l.b16 %v780
    %v2913 = vunpack.c.h.b16 %v780
    %v2914 = vunpack.c.l.b16 %v781
    %v2915 = vunpack.c.h.b16 %v781
    %v2916 = vunpack.c.l.b16 %v782
    %v2917 = vunpack.c.h.b16 %v782
    %v2918 = vunpack.c.l.b16 %v783
    %v2919 = vunpack.c.h.b16 %v783
    %v2920 = vunpack.c.l.b16 %v784
    %v2921 = vunpack.c.h.b16 %v784
    %v2922 = vunpack.c.l.b16 %v785
    %v2923 = vunpack.c.h.b16 %v785
    %v2924 = vunpack.c.l.b16 %v786
    %v2925 = vunpack.c.h.b16 %v786
    %v2926 = vunpack.c.l.b16 %v787
    %v2927 = vunpack.c.h.b16 %v787
    %v2928 = vunpack.c.l.b16 %v788
    %v2929 = vunpack.c.h.b16 %v788
    %v2930 = vunpack.c.l.b16 %v789
    %v2931 = vunpack.c.h.b16 %v789
    %v2932 = vunpack.c.l.b16 %v790
    %v2933 = vunpack.c.h.b16 %v790
    %v2934 = vunpack.c.l.b16 %v791
    %v2935 = vunpack.c.h.b16 %v791
    %v2936 = vunpack.c.l.b16 %v792
    %v2937 = vunpack.c.h.b16 %v792
    %v2938 = vunpack.c.l.b16 %v793
    %v2939 = vunpack.c.h.b16 %v793
    %v2940 = vunpack.c.l.b16 %v794
    %v2941 = vunpack.c.h.b16 %v794
    %v2942 = vunpack.c.l.b16 %v795
    %v2943 = vunpack.c.h.b16 %v795
    %v2944 = vunpack.c.l.b16 %v796
    %v2945 = vunpack.c.h.b16 %v796
    %v2946 = vunpack.c.l.b16 %v797
    %v2947 = vunpack.c.h.b16 %v797
    %v2948 = vunpack.c.l.b16 %v798
    %v2949 = vunpack.c.h.b16 %v798
    %v2950 = vunpack.c.l.b16 %v799
    %v2951 = vunpack.c.h.b16 %v799
    %v2952 = vunpack.c.l.b16 %v800
    %v2953 = vunpack.c.h.b16 %v800
    %v2954 = vunpack.c.l.b16 %v801
    %v2955 = vunpack.c.h.b16 %v801
    %v2956 = vunpack.c.l.b16 %v802
    %v2957 = vunpack.c.h.b16 %v802
    %v2958 = vunpack.c.l.b16 %v803
    %v2959 = vunpack.c.h.b16 %v803
    %v2960 = vunpack.c.l.b16 %v804
    %v2961 = vunpack.c.h.b16 %v804
    %v2962 = vunpack.c.l.b16 %v805
    %v2963 = vunpack.c.h.b16 %v805
    %v2964 = vunpack.c.l.b16 %v806
    %v2965 = vunpack.c.h.b16 %v806
    %v2966 = vunpack.c.l.b16 %v807
    %v2967 = vunpack.c.h.b16 %v807
    %v2968 = vunpack.c.l.b16 %v808
    %v2969 = vunpack.c.h.b16 %v808
    %v2970 = vunpack.c.l.b16 %v809
    %v2971 = vunpack.c.h.b16 %v809
    %v2972 = vunpack.c.l.b16 %v810
    %v2973 = vunpack.c.h.b16 %v810
    %v2974 = vunpack.c.l.b16 %v811
    %v2975 = vunpack.c.h.b16 %v811
    %v2976 = vunpack.c.l.b16 %v812
    %v2977 = vunpack.c.h.b16 %v812
    %v2978 = vunpack.c.l.b16 %v813
    %v2979 = vunpack.c.h.b16 %v813
    %v2980 = vunpack.c.l.b16 %v814
    %v2981 = vunpack.c.h.b16 %v814
    %v2982 = vunpack.c.l.b16 %v815
    %v2983 = vunpack.c.h.b16 %v815
    %v2984 = vunpack.c.l.b16 %v816
    %v2985 = vunpack.c.h.b16 %v816
    %v2986 = vunpack.c.l.b16 %v817
    %v2987 = vunpack.c.h.b16 %v817
    %v2988 = vunpack.c.l.b16 %v818
    %v2989 = vunpack.c.h.b16 %v818
    %v2990 = vunpack.c.l.b16 %v819
    %v2991 = vunpack.c.h.b16 %v819
    %v2992 = vunpack.c.l.b16 %v820
    %v2993 = vunpack.c.h.b16 %v820
    %v2994 = vunpack.c.l.b16 %v821
    %v2995 = vunpack.c.h.b16 %v821
    %v2996 = vunpack.c.l.b16 %v822
    %v2997 = vunpack.c.h.b16 %v822
    %v2998 = vunpack.c.l.b16 %v823
    %v2999 = vunpack.c.h.b16 %v823
    %v3000 = vunpack.c.l.b16 %v824
    %v3001 = vunpack.c.h.b16 %v824
    %v3002 = vunpack.c.l.b16 %v825
    %v3003 = vunpack.c.h.b16 %v825
    %v3004 = vunpack.c.l.b16 %v826
    %v3005 = vunpack.c.h.b16 %v826
    %v3006 = vunpack.c.l.b16 %v827
    %v3007 = vunpack.c.h.b16 %v827
    %v3008 = vunpack.c.l.b16 %v828
    %v3009 = vunpack.c.h.b16 %v828
    %v3010 = vunpack.c.l.b16 %v829
    %v3011 = vunpack.c.h.b16 %v829
    %v3012 = vunpack.c.l.b16 %v830
    %v3013 = vunpack.c.h.b16 %v830
    %v3014 = vunpack.c.l.b16 %v831
    %v3015 = vunpack.c.h.b16 %v831
    %v3016 = vunpack.c.l.b16 %v832
    %v3017 = vunpack.c.h.b16 %v832
    %v3018 = vunpack.c.l.b16 %v833
    %v3019 = vunpack.c.h.b16 %v833
    %v3020 = vunpack.c.l.b16 %v834
    %v3021 = vunpack.c.h.b16 %v834
    %v3022 = vunpack.c.l.b16 %v835
    %v3023 = vunpack.c.h.b16 %v835
    %v3024 = vunpack.c.l.b16 %v836
    %v3025 = vunpack.c.h.b16 %v836
    %v3026 = vunpack.c.l.b16 %v837
    %v3027 = vunpack.c.h.b16 %v837
    %v3028 = vunpack.c.l.b16 %v838
    %v3029 = vunpack.c.h.b16 %v838
    %v3030 = vunpack.c.l.b16 %v839
    %v3031 = vunpack.c.h.b16 %v839
    %v3032 = vunpack.c.l.b16 %v840
    %v3033 = vunpack.c.h.b16 %v840
    %v3034 = vunpack.c.l.b16 %v841
    %v3035 = vunpack.c.h.b16 %v841
    %v3036 = vunpack.c.l.b16 %v842
    %v3037 = vunpack.c.h.b16 %v842
    %v3038 = vunpack.c.l.b16 %v843
    %v3039 = vunpack.c.h.b16 %v843
    %v3040 = vunpack.c.l.b16 %v844
    %v3041 = vunpack.c.h.b16 %v844
    %v3042 = vunpack.c.l.b16 %v845
    %v3043 = vunpack.c.h.b16 %v845
    %v3044 = vunpack.c.l.b16 %v846
    %v3045 = vunpack.c.h.b16 %v846
    %v3046 = vunpack.c.l.b16 %v847
    %v3047 = vunpack.c.h.b16 %v847
    %v3048 = vunpack.c.l.b16 %v848
    %v3049 = vunpack.c.h.b16 %v848
    %v3050 = vunpack.c.l.b16 %v849
    %v3051 = vunpack.c.h.b16 %v849
    %v3052 = vunpack.c.l.b16 %v850
    %v3053 = vunpack.c.h.b16 %v850
    %v3054 = vunpack.c.l.b16 %v851
    %v3055 = vunpack.c.h.b16 %v851
    %v3056 = vunpack.c.l.b16 %v852
    %v3057 = vunpack.c.h.b16 %v852
    %v3058 = vunpack.c.l.b16 %v853
    %v3059 = vunpack.c.h.b16 %v853
    %v3060 = vunpack.c.l.b16 %v854
    %v3061 = vunpack.c.h.b16 %v854
    %v3062 = vunpack.c.l.b16 %v855
    %v3063 = vunpack.c.h.b16 %v855
    %v3064 = vunpack.c.l.b16 %v856
    %v3065 = vunpack.c.h.b16 %v856
    %v3066 = vunpack.c.l.b16 %v857
    %v3067 = vunpack.c.h.b16 %v857
    %v3068 = vunpack.c.l.b16 %v858
    %v3069 = vunpack.c.h.b16 %v858
    %v3070 = vunpack.c.l.b16 %v859
    %v3071 = vunpack.c.h.b16 %v859
    %v3072 = vunpack.c.l.b16 %v860
    %v3073 = vunpack.c.h.b16 %v860
    %v3074 = vunpack.c.l.b16 %v861
    %v3075 = vunpack.c.h.b16 %v861
    %v3076 = vunpack.c.l.b16 %v862
    %v3077 = vunpack.c.h.b16 %v862
    %v3078 = vunpack.c.l.b16 %v863
    %v3079 = vunpack.c.h.b16 %v863
    %v3080 = vunpack.c.l.b16 %v864
    %v3081 = vunpack.c.h.b16 %v864
    %v3082 = vunpack.c.l.b16 %v865
    %v3083 = vunpack.c.h.b16 %v865
    %v3084 = vunpack.c.l.b16 %v866
    %v3085 = vunpack.c.h.b16 %v866
    %v3086 = vunpack.c.l.b16 %v867
    %v3087 = vunpack.c.h.b16 %v867
    %v3088 = vunpack.c.l.b16 %v868
    %v3089 = vunpack.c.h.b16 %v868
    %v3090 = vunpack.c.l.b16 %v869
    %v3091 = vunpack.c.h.b16 %v869
    %v3092 = vunpack.c.l.b16 %v870
    %v3093 = vunpack.c.h.b16 %v870
    %v3094 = vunpack.c.l.b16 %v871
    %v3095 = vunpack.c.h.b16 %v871
    %v3096 = vunpack.c.l.b16 %v872
    %v3097 = vunpack.c.h.b16 %v872
    %v3098 = vunpack.c.l.b16 %v873
    %v3099 = vunpack.c.h.b16 %v873
    %v3100 = vunpack.c.l.b16 %v874
    %v3101 = vunpack.c.h.b16 %v874
    %v3102 = vunpack.c.l.b16 %v875
    %v3103 = vunpack.c.h.b16 %v875
    %v3104 = vunpack.c.l.b16 %v876
    %v3105 = vunpack.c.h.b16 %v876
    %v3106 = vunpack.c.l.b16 %v877
    %v3107 = vunpack.c.h.b16 %v877
    %v3108 = vunpack.c.l.b16 %v878
    %v3109 = vunpack.c.h.b16 %v878
    %v3110 = vunpack.c.l.b16 %v879
    %v3111 = vunpack.c.h.b16 %v879
    %v3112 = vunpack.c.l.b16 %v880
    %v3113 = vunpack.c.h.b16 %v880
    %v3114 = vunpack.c.l.b16 %v881
    %v3115 = vunpack.c.h.b16 %v881
    %v3116 = vunpack.c.l.b16 %v882
    %v3117 = vunpack.c.h.b16 %v882
    %v3118 = vunpack.c.l.b16 %v883
    %v3119 = vunpack.c.h.b16 %v883
    %v3120 = vunpack.c.l.b16 %v884
    %v3121 = vunpack.c.h.b16 %v884
    %v3122 = vunpack.c.l.b16 %v885
    %v3123 = vunpack.c.h.b16 %v885
    %v3124 = vunpack.c.l.b16 %v886
    %v3125 = vunpack.c.h.b16 %v886
    %v3126 = vunpack.c.l.b16 %v887
    %v3127 = vunpack.c.h.b16 %v887
    %v3128 = vunpack.c.l.b16 %v888
    %v3129 = vunpack.c.h.b16 %v888
    %v3130 = vunpack.c.l.b16 %v889
    %v3131 = vunpack.c.h.b16 %v889
    %v3132 = vunpack.c.l.b16 %v890
    %v3133 = vunpack.c.h.b16 %v890
    %v3134 = vunpack.c.l.b16 %v891
    %v3135 = vunpack.c.h.b16 %v891
    %v3136 = vunpack.c.l.b16 %v892
    %v3137 = vunpack.c.h.b16 %v892
    %v3138 = vunpack.c.l.b16 %v893
    %v3139 = vunpack.c.h.b16 %v893
    %v3140 = vunpack.c.l.b16 %v894
    %v3141 = vunpack.c.h.b16 %v894
    %v3142 = vunpack.c.l.b16 %v895
    %v3143 = vunpack.c.h.b16 %v895
    %v3144 = vunpack.c.l.b16 %v896
    %v3145 = vunpack.c.h.b16 %v896
    %v3146 = vunpack.c.l.b16 %v897
    %v3147 = vunpack.c.h.b16 %v897
    %v3148 = vunpack.c.l.b16 %v898
    %v3149 = vunpack.c.h.b16 %v898
    %v3150 = vunpack.c.l.b16 %v899
    %v3151 = vunpack.c.h.b16 %v899
    %v3152 = vunpack.c.l.b16 %v900
    %v3153 = vunpack.c.h.b16 %v900
    %v3154 = vunpack.c.l.b16 %v901
    %v3155 = vunpack.c.h.b16 %v901
    %v3156 = vunpack.c.l.b16 %v902
    %v3157 = vunpack.c.h.b16 %v902
    %v3158 = vunpack.c.l.b16 %v903
    %v3159 = vunpack.c.h.b16 %v903
    %v3160 = vunpack.c.l.b16 %v904
    %v3161 = vunpack.c.h.b16 %v904
    %v3162 = vunpack.c.l.b16 %v905
    %v3163 = vunpack.c.h.b16 %v905
    %v3164 = vunpack.c.l.b16 %v906
    %v3165 = vunpack.c.h.b16 %v906
    %v3166 = vunpack.c.l.b16 %v907
    %v3167 = vunpack.c.h.b16 %v907
    %v3168 = vunpack.c.l.b16 %v908
    %v3169 = vunpack.c.h.b16 %v908
    %v3170 = vunpack.c.l.b16 %v909
    %v3171 = vunpack.c.h.b16 %v909
    %v3172 = vunpack.c.l.b16 %v910
    %v3173 = vunpack.c.h.b16 %v910
    %v3174 = vunpack.c.l.b16 %v911
    %v3175 = vunpack.c.h.b16 %v911
    %v3176 = vunpack.c.l.b16 %v912
    %v3177 = vunpack.c.h.b16 %v912
    %v3178 = vunpack.c.l.b16 %v913
    %v3179 = vunpack.c.h.b16 %v913
    %v3180 = vunpack.c.l.b16 %v914
    %v3181 = vunpack.c.h.b16 %v914
    %v3182 = vunpack.c.l.b16 %v915
    %v3183 = vunpack.c.h.b16 %v915
    %v3184 = vunpack.c.l.b16 %v916
    %v3185 = vunpack.c.h.b16 %v916
    %v3186 = vunpack.c.l.b16 %v917
    %v3187 = vunpack.c.h.b16 %v917
    %v3188 = vunpack.c.l.b16 %v918
    %v3189 = vunpack.c.h.b16 %v918
    %v3190 = vunpack.c.l.b16 %v919
    %v3191 = vunpack.c.h.b16 %v919
    %v3192 = vunpack.c.l.b16 %v920
    %v3193 = vunpack.c.h.b16 %v920
    %v3194 = vunpack.c.l.b16 %v921
    %v3195 = vunpack.c.h.b16 %v921
    %v3196 = vunpack.c.l.b16 %v922
    %v3197 = vunpack.c.h.b16 %v922
    %v3198 = vunpack.c.l.b16 %v923
    %v3199 = vunpack.c.h.b16 %v923
    %v3200 = vunpack.c.l.b16 %v924
    %v3201 = vunpack.c.h.b16 %v924
    %v3202 = vunpack.c.l.b16 %v925
    %v3203 = vunpack.c.h.b16 %v925
    %v3204 = vunpack.c.l.b16 %v926
    %v3205 = vunpack.c.h.b16 %v926
    %v3206 = vunpack.c.l.b16 %v927
    %v3207 = vunpack.c.h.b16 %v927
    %v3208 = vunpack.c.l.b16 %v928
    %v3209 = vunpack.c.h.b16 %v928
    %v3210 = vunpack.c.l.b16 %v929
    %v3211 = vunpack.c.h.b16 %v929
    %v3212 = vunpack.c.l.b16 %v930
    %v3213 = vunpack.c.h.b16 %v930
    %v3214 = vunpack.c.l.b16 %v931
    %v3215 = vunpack.c.h.b16 %v931
    %v3216 = vunpack.c.l.b16 %v932
    %v3217 = vunpack.c.h.b16 %v932
    %v3218 = vunpack.c.l.b16 %v933
    %v3219 = vunpack.c.h.b16 %v933
    %v3220 = vunpack.c.l.b16 %v934
    %v3221 = vunpack.c.h.b16 %v934
    %v3222 = vunpack.c.l.b16 %v935
    %v3223 = vunpack.c.h.b16 %v935
    %v3224 = vunpack.c.l.b16 %v936
    %v3225 = vunpack.c.h.b16 %v936
    %v3226 = vunpack.c.l.b16 %v937
    %v3227 = vunpack.c.h.b16 %v937
    %v3228 = vunpack.c.l.b16 %v938
    %v3229 = vunpack.c.h.b16 %v938
    %v3230 = vunpack.c.l.b16 %v939
    %v3231 = vunpack.c.h.b16 %v939
    %v3232 = vunpack.c.l.b16 %v940
    %v3233 = vunpack.c.h.b16 %v940
    %v3234 = vunpack.c.l.b16 %v941
    %v3235 = vunpack.c.h.b16 %v941
    %v3236 = vunpack.c.l.b16 %v942
    %v3237 = vunpack.c.h.b16 %v942
    %v3238 = vunpack.c.l.b16 %v943
    %v3239 = vunpack.c.h.b16 %v943
    %v3240 = vunpack.c.l.b16 %v944
    %v3241 = vunpack.c.h.b16 %v944
    %v3242 = vunpack.c.l.b16 %v945
    %v3243 = vunpack.c.h.b16 %v945
    %v3244 = vunpack.c.l.b16 %v946
    %v3245 = vunpack.c.h.b16 %v946
    %v3246 = vunpack.c.l.b16 %v947
    %v3247 = vunpack.c.h.b16 %v947
    %v3248 = vunpack.c.l.b16 %v948
    %v3249 = vunpack.c.h.b16 %v948
    %v3250 = vunpack.c.l.b16 %v949
    %v3251 = vunpack.c.h.b16 %v949
    %v3252 = vunpack.c.l.b16 %v950
    %v3253 = vunpack.c.h.b16 %v950
    %v3254 = vunpack.c.l.b16 %v951
    %v3255 = vunpack.c.h.b16 %v951
    %v3256 = vunpack.c.l.b16 %v952
    %v3257 = vunpack.c.h.b16 %v952
    %v3258 = vunpack.c.l.b16 %v953
    %v3259 = vunpack.c.h.b16 %v953
    %v3260 = vunpack.c.l.b16 %v954
    %v3261 = vunpack.c.h.b16 %v954
    %v3262 = vunpack.c.l.b16 %v955
    %v3263 = vunpack.c.h.b16 %v955
    %v3264 = vunpack.c.l.b16 %v956
    %v3265 = vunpack.c.h.b16 %v956
    %v3266 = vunpack.c.l.b16 %v957
    %v3267 = vunpack.c.h.b16 %v957
    %v3268 = vunpack.c.l.b16 %v958
    %v3269 = vunpack.c.h.b16 %v958
    %v3270 = vunpack.c.l.b16 %v959
    %v3271 = vunpack.c.h.b16 %v959
    %v3272 = vunpack.c.l.b16 %v960
    %v3273 = vunpack.c.h.b16 %v960
    %v3274 = vunpack.c.l.b16 %v961
    %v3275 = vunpack.c.h.b16 %v961
    %v3276 = vunpack.c.l.b16 %v962
    %v3277 = vunpack.c.h.b16 %v962
    %v3278 = vunpack.c.l.b16 %v963
    %v3279 = vunpack.c.h.b16 %v963
    %v3280 = vunpack.c.l.b16 %v964
    %v3281 = vunpack.c.h.b16 %v964
    %v3282 = vunpack.c.l.b16 %v965
    %v3283 = vunpack.c.h.b16 %v965
    %v3284 = vunpack.c.l.b16 %v966
    %v3285 = vunpack.c.h.b16 %v966
    %v3286 = vunpack.c.l.b16 %v967
    %v3287 = vunpack.c.h.b16 %v967
    %v3288 = vunpack.c.l.b16 %v968
    %v3289 = vunpack.c.h.b16 %v968
    %v3290 = vunpack.c.l.b16 %v969
    %v3291 = vunpack.c.h.b16 %v969
    %v3292 = vunpack.c.l.b16 %v970
    %v3293 = vunpack.c.h.b16 %v970
    %v3294 = vunpack.c.l.b16 %v971
    %v3295 = vunpack.c.h.b16 %v971
    %v3296 = vunpack.c.l.b16 %v972
    %v3297 = vunpack.c.h.b16 %v972
    %v3298 = vunpack.c.l.b16 %v973
    %v3299 = vunpack.c.h.b16 %v973
    %v3300 = vpack.c.b16 %v1768, %v1764
    %v3301 = vpack.c.b16 %v1769, %v1765
    %v3302 = vpack.c.b16 %v1770, %v1766
    %v3303 = vpack.c.b16 %v1771, %v1767
    %v3304 = vpack.c.b16 %v1776, %v1772
    %v3305 = vpack.c.b16 %v1777, %v1773
    %v3306 = vpack.c.b16 %v1778, %v1774
    %v3307 = vpack.c.b16 %v1779, %v1775
    %v3308 = vpack.c.b16 %v1784, %v1780
    %v3309 = vpack.c.b16 %v1785, %v1781
    %v3310 = vpack.c.b16 %v1786, %v1782
    %v3311 = vpack.c.b16 %v1787, %v1783
    %v3312 = vpack.c.b16 %v1792, %v1788
    %v3313 = vpack.c.b16 %v1793, %v1789
    %v3314 = vpack.c.b16 %v1794, %v1790
    %v3315 = vpack.c.b16 %v1795, %v1791
    %v3316 = vpack.c.b16 %v1800, %v1796
    %v3317 = vpack.c.b16 %v1801, %v1797
    %v3318 = vpack.c.b16 %v1802, %v1798
    %v3319 = vpack.c.b16 %v1803, %v1799
    %v3320 = vpack.c.b16 %v1808, %v1804
    %v3321 = vpack.c.b16 %v1809, %v1805
    %v3322 = vpack.c.b16 %v1810, %v1806
    %v3323 = vpack.c.b16 %v1811, %v1807
    %v3324 = vpack.c.b16 %v1816, %v1812
    %v3325 = vpack.c.b16 %v1817, %v1813
    %v3326 = vpack.c.b16 %v1818, %v1814
    %v3327 = vpack.c.b16 %v1819, %v1815
    %v3328 = vpack.c.b16 %v1824, %v1820
    %v3329 = vpack.c.b16 %v1825, %v1821
    %v3330 = vpack.c.b16 %v1826, %v1822
    %v3331 = vpack.c.b16 %v1827, %v1823
    %v3332 = vpack.c.b16 %v1832, %v1828
    %v3333 = vpack.c.b16 %v1833, %v1829
    %v3334 = vpack.c.b16 %v1834, %v1830
    %v3335 = vpack.c.b16 %v1835, %v1831
    %v3336 = vpack.c.b16 %v1840, %v1836
    %v3337 = vpack.c.b16 %v1841, %v1837
    %v3338 = vpack.c.b16 %v1842, %v1838
    %v3339 = vpack.c.b16 %v1843, %v1839
    %v3340 = vpack.c.b16 %v1848, %v1844
    %v3341 = vpack.c.b16 %v1849, %v1845
    %v3342 = vpack.c.b16 %v1850, %v1846
    %v3343 = vpack.c.b16 %v1851, %v1847
    %v3344 = vpack.c.b16 %v1856, %v1852
    %v3345 = vpack.c.b16 %v1857, %v1853
    %v3346 = vpack.c.b16 %v1858, %v1854
    %v3347 = vpack.c.b16 %v1859, %v1855
    %v3348 = vpack.c.b16 %v1864, %v1860
    %v3349 = vpack.c.b16 %v1865, %v1861
    %v3350 = vpack.c.b16 %v1866, %v1862
    %v3351 = vpack.c.b16 %v1867, %v1863
    %v3352 = vpack.c.b16 %v1872, %v1868
    %v3353 = vpack.c.b16 %v1873, %v1869
    %v3354 = vpack.c.b16 %v1874, %v1870
    %v3355 = vpack.c.b16 %v1875, %v1871
    %v3356 = vpack.c.b16 %v1880, %v1876
    %v3357 = vpack.c.b16 %v1881, %v1877
    %v3358 = vpack.c.b16 %v1882, %v1878
    %v3359 = vpack.c.b16 %v1883, %v1879
    %v3360 = vpack.c.b16 %v1888, %v1884
    %v3361 = vpack.c.b16 %v1889, %v1885
    %v3362 = vpack.c.b16 %v1890, %v1886
    %v3363 = vpack.c.b16 %v1891, %v1887
    %v3364 = vpack.c.b16 %v1896, %v1892
    %v3365 = vpack.c.b16 %v1897, %v1893
    %v3366 = vpack.c.b16 %v1898, %v1894
    %v3367 = vpack.c.b16 %v1899, %v1895
    %v3368 = vpack.c.b16 %v1904, %v1900
    %v3369 = vpack.c.b16 %v1905, %v1901
    %v3370 = vpack.c.b16 %v1906, %v1902
    %v3371 = vpack.c.b16 %v1907, %v1903
    %v3372 = vpack.c.b16 %v1912, %v1908
    %v3373 = vpack.c.b16 %v1913, %v1909
    %v3374 = vpack.c.b16 %v1914, %v1910
    %v3375 = vpack.c.b16 %v1915, %v1911
    %v3376 = vpack.c.b16 %v1920, %v1916
    %v3377 = vpack.c.b16 %v1921, %v1917
    %v3378 = vpack.c.b16 %v1922, %v1918
    %v3379 = vpack.c.b16 %v1923, %v1919
    %v3380 = vpack.c.b16 %v1928, %v1924
    %v3381 = vpack.c.b16 %v1929, %v1925
    %v3382 = vpack.c.b16 %v1930, %v1926
    %v3383 = vpack.c.b16 %v1931, %v1927
    %v3384 = vpack.c.b16 %v1936, %v1932
    %v3385 = vpack.c.b16 %v1937, %v1933
    %v3386 = vpack.c.b16 %v1938, %v1934
    %v3387 = vpack.c.b16 %v1939, %v1935
    %v3388 = vpack.c.b16 %v1944, %v1940
    %v3389 = vpack.c.b16 %v1945, %v1941
    %v3390 = vpack.c.b16 %v1946, %v1942
    %v3391 = vpack.c.b16 %v1947, %v1943
    %v3392 = vpack.c.b16 %v1952, %v1948
    %v3393 = vpack.c.b16 %v1953, %v1949
    %v3394 = vpack.c.b16 %v1954, %v1950
    %v3395 = vpack.c.b16 %v1955, %v1951
    %v3396 = vpack.c.b16 %v1960, %v1956
    %v3397 = vpack.c.b16 %v1961, %v1957
    %v3398 = vpack.c.b16 %v1962, %v1958
    %v3399 = vpack.c.b16 %v1963, %v1959
    %v3400 = vpack.c.b16 %v1968, %v1964
    %v3401 = vpack.c.b16 %v1969, %v1965
    %v3402 = vpack.c.b16 %v1970, %v1966
    %v3403 = vpack.c.b16 %v1971, %v1967
    %v3404 = vpack.c.b16 %v1976, %v1972
    %v3405 = vpack.c.b16 %v1977, %v1973
    %v3406 = vpack.c.b16 %v1978, %v1974
    %v3407 = vpack.c.b16 %v1979, %v1975
    %v3408 = vpack.c.b16 %v1984, %v1980
    %v3409 = vpack.c.b16 %v1985, %v1981
    %v3410 = vpack.c.b16 %v1986, %v1982
    %v3411 = vpack.c.b16 %v1987, %v1983
    %v3412 = vpack.c.b16 %v1992, %v1988
    %v3413 = vpack.c.b16 %v1993, %v1989
    %v3414 = vpack.c.b16 %v1994, %v1990
    %v3415 = vpack.c.b16 %v1995, %v1991
    %v3416 = vpack.c.b16 %v2000, %v1996
    %v3417 = vpack.c.b16 %v2001, %v1997
    %v3418 = vpack.c.b16 %v2002, %v1998
    %v3419 = vpack.c.b16 %v2003, %v1999
    %v3420 = vpack.c.b16 %v2008, %v2004
    %v3421 = vpack.c.b16 %v2009, %v2005
    %v3422 = vpack.c.b16 %v2010, %v2006
    %v3423 = vpack.c.b16 %v2011, %v2007
    %v3424 = vpack.c.b16 %v2016, %v2012
    %v3425 = vpack.c.b16 %v2017, %v2013
    %v3426 = vpack.c.b16 %v2018, %v2014
    %v3427 = vpack.c.b16 %v2019, %v2015
    %v3428 = vpack.c.b16 %v2024, %v2020
    %v3429 = vpack.c.b16 %v2025, %v2021
    %v3430 = vpack.c.b16 %v2026, %v2022
    %v3431 = vpack.c.b16 %v2027, %v2023
    %v3432 = vpack.c.b16 %v2032, %v2028
    %v3433 = vpack.c.b16 %v2033, %v2029
    %v3434 = vpack.c.b16 %v2034, %v2030
    %v3435 = vpack.c.b16 %v2035, %v2031
    %v3436 = vpack.c.b16 %v2040, %v2036
    %v3437 = vpack.c.b16 %v2041, %v2037
    %v3438 = vpack.c.b16 %v2042, %v2038
    %v3439 = vpack.c.b16 %v2043, %v2039
    %v3440 = vpack.c.b16 %v2048, %v2044
    %v3441 = vpack.c.b16 %v2049, %v2045
    %v3442 = vpack.c.b16 %v2050, %v2046
    %v3443 = vpack.c.b16 %v2051, %v2047
    %v3444 = vpack.c.b16 %v2056, %v2052
    %v3445 = vpack.c.b16 %v2057, %v2053
    %v3446 = vpack.c.b16 %v2058, %v2054
    %v3447 = vpack.c.b16 %v2059, %v2055
    %v3448 = vpack.c.b16 %v2064, %v2060
    %v3449 = vpack.c.b16 %v2065, %v2061
    %v3450 = vpack.c.b16 %v2066, %v2062
    %v3451 = vpack.c.b16 %v2067, %v2063
    %v3452 = vpack.c.b16 %v2072, %v2068
    %v3453 = vpack.c.b16 %v2073, %v2069
    %v3454 = vpack.c.b16 %v2074, %v2070
    %v3455 = vpack.c.b16 %v2075, %v2071
    %v3456 = vpack.c.b16 %v2080, %v2076
    %v3457 = vpack.c.b16 %v2081, %v2077
    %v3458 = vpack.c.b16 %v2082, %v2078
    %v3459 = vpack.c.b16 %v2083, %v2079
    %v3460 = vpack.c.b16 %v2088, %v2084
    %v3461 = vpack.c.b16 %v2089, %v2085
    %v3462 = vpack.c.b16 %v2090, %v2086
    %v3463 = vpack.c.b16 %v2091, %v2087
    %v3464 = vpack.c.b16 %v2096, %v2092
    %v3465 = vpack.c.b16 %v2097, %v2093
    %v3466 = vpack.c.b16 %v2098, %v2094
    %v3467 = vpack.c.b16 %v2099, %v2095
    %v3468 = vpack.c.b16 %v2104, %v2100
    %v3469 = vpack.c.b16 %v2105, %v2101
    %v3470 = vpack.c.b16 %v2106, %v2102
    %v3471 = vpack.c.b16 %v2107, %v2103
    %v3472 = vpack.c.b16 %v2112, %v2108
    %v3473 = vpack.c.b16 %v2113, %v2109
    %v3474 = vpack.c.b16 %v2114, %v2110
    %v3475 = vpack.c.b16 %v2115, %v2111
    %v3476 = vpack.c.b16 %v2120, %v2116
    %v3477 = vpack.c.b16 %v2121, %v2117
    %v3478 = vpack.c.b16 %v2122, %v2118
    %v3479 = vpack.c.b16 %v2123, %v2119
    %v3480 = vpack.c.b16 %v2128, %v2124
    %v3481 = vpack.c.b16 %v2129, %v2125
    %v3482 = vpack.c.b16 %v2130, %v2126
    %v3483 = vpack.c.b16 %v2131, %v2127
    %v3484 = vpack.c.b16 %v2136, %v2132
    %v3485 = vpack.c.b16 %v2137, %v2133
    %v3486 = vpack.c.b16 %v2138, %v2134
    %v3487 = vpack.c.b16 %v2139, %v2135
    %v3488 = vpack.c.b16 %v2144, %v2140
    %v3489 = vpack.c.b16 %v2145, %v2141
    %v3490 = vpack.c.b16 %v2146, %v2142
    %v3491 = vpack.c.b16 %v2147, %v2143
    %v3492 = vpack.c.b16 %v2152, %v2148
    %v3493 = vpack.c.b16 %v2153, %v2149
    %v3494 = vpack.c.b16 %v2154, %v2150
    %v3495 = vpack.c.b16 %v2155, %v2151
    %v3496 = vpack.c.b16 %v2160, %v2156
    %v3497 = vpack.c.b16 %v2161, %v2157
    %v3498 = vpack.c.b16 %v2162, %v2158
    %v3499 = vpack.c.b16 %v2163, %v2159
    %v3500 = vpack.c.b16 %v2168, %v2164
    %v3501 = vpack.c.b16 %v2169, %v2165
    %v3502 = vpack.c.b16 %v2170, %v2166
    %v3503 = vpack.c.b16 %v2171, %v2167
    %v3504 = vpack.c.b16 %v2176, %v2172
    %v3505 = vpack.c.b16 %v2177, %v2173
    %v3506 = vpack.c.b16 %v2178, %v2174
    %v3507 = vpack.c.b16 %v2179, %v2175
    %v3508 = vpack.c.b16 %v2184, %v2180
    %v3509 = vpack.c.b16 %v2185, %v2181
    %v3510 = vpack.c.b16 %v2186, %v2182
    %v3511 = vpack.c.b16 %v2187, %v2183
    %v3512 = vpack.c.b16 %v2192, %v2188
    %v3513 = vpack.c.b16 %v2193, %v2189
    %v3514 = vpack.c.b16 %v2194, %v2190
    %v3515 = vpack.c.b16 %v2195, %v2191
    %v3516 = vpack.c.b16 %v2200, %v2196
    %v3517 = vpack.c.b16 %v2201, %v2197
    %v3518 = vpack.c.b16 %v2202, %v2198
    %v3519 = vpack.c.b16 %v2203, %v2199
    %v3520 = vpack.c.b16 %v2208, %v2204
    %v3521 = vpack.c.b16 %v2209, %v2205
    %v3522 = vpack.c.b16 %v2210, %v2206
    %v3523 = vpack.c.b16 %v2211, %v2207
    %v3524 = vpack.c.b16 %v2216, %v2212
    %v3525 = vpack.c.b16 %v2217, %v2213
    %v3526 = vpack.c.b16 %v2218, %v2214
    %v3527 = vpack.c.b16 %v2219, %v2215
    %v3528 = vpack.c.b16 %v2224, %v2220
    %v3529 = vpack.c.b16 %v2225, %v2221
    %v3530 = vpack.c.b16 %v2226, %v2222
    %v3531 = vpack.c.b16 %v2227, %v2223
    %v3532 = vpack.c.b16 %v2232, %v2228
    %v3533 = vpack.c.b16 %v2233, %v2229
    %v3534 = vpack.c.b16 %v2234, %v2230
    %v3535 = vpack.c.b16 %v2235, %v2231
    %v3536 = vpack.c.b16 %v2240, %v2236
    %v3537 = vpack.c.b16 %v2241, %v2237
    %v3538 = vpack.c.b16 %v2242, %v2238
    %v3539 = vpack.c.b16 %v2243, %v2239
    %v3540 = vpack.c.b16 %v2248, %v2244
    %v3541 = vpack.c.b16 %v2249, %v2245
    %v3542 = vpack.c.b16 %v2250, %v2246
    %v3543 = vpack.c.b16 %v2251, %v2247
    %v3544 = vpack.c.b16 %v2256, %v2252
    %v3545 = vpack.c.b16 %v2257, %v2253
    %v3546 = vpack.c.b16 %v2258, %v2254
    %v3547 = vpack.c.b16 %v2259, %v2255
    %v3548 = vpack.c.b16 %v2264, %v2260
    %v3549 = vpack.c.b16 %v2265, %v2261
    %v3550 = vpack.c.b16 %v2266, %v2262
    %v3551 = vpack.c.b16 %v2267, %v2263
    %v3552 = vpack.c.b16 %v2272, %v2268
    %v3553 = vpack.c.b16 %v2273, %v2269
    %v3554 = vpack.c.b16 %v2274, %v2270
    %v3555 = vpack.c.b16 %v2275, %v2271
    %v3556 = vpack.c.b16 %v2280, %v2276
    %v3557 = vpack.c.b16 %v2281, %v2277
    %v3558 = vpack.c.b16 %v2282, %v2278
    %v3559 = vpack.c.b16 %v2283, %v2279
    %v3560 = vpack.c.b16 %v2288, %v2284
    %v3561 = vpack.c.b16 %v2289, %v2285
    %v3562 = vpack.c.b16 %v2290, %v2286
    %v3563 = vpack.c.b16 %v2291, %v2287
    %v3564 = vpack.c.b16 %v2296, %v2292
    %v3565 = vpack.c.b16 %v2297, %v2293
    %v3566 = vpack.c.b16 %v2298, %v2294
    %v3567 = vpack.c.b16 %v2299, %v2295
    %v3568 = vpack.c.b16 %v2304, %v2300
    %v3569 = vpack.c.b16 %v2305, %v2301
    %v3570 = vpack.c.b16 %v2306, %v2302
    %v3571 = vpack.c.b16 %v2307, %v2303
    %v3572 = vpack.c.b16 %v2312, %v2308
    %v3573 = vpack.c.b16 %v2313, %v2309
    %v3574 = vpack.c.b16 %v2314, %v2310
    %v3575 = vpack.c.b16 %v2315, %v2311
    %v3576 = vpack.c.b16 %v2320, %v2316
    %v3577 = vpack.c.b16 %v2321, %v2317
    %v3578 = vpack.c.b16 %v2322, %v2318
    %v3579 = vpack.c.b16 %v2323, %v2319
    %v3580 = vpack.c.b16 %v2328, %v2324
    %v3581 = vpack.c.b16 %v2329, %v2325
    %v3582 = vpack.c.b16 %v2330, %v2326
    %v3583 = vpack.c.b16 %v2331, %v2327
    %v3584 = vpack.c.b16 %v2336, %v2332
    %v3585 = vpack.c.b16 %v2337, %v2333
    %v3586 = vpack.c.b16 %v2338, %v2334
    %v3587 = vpack.c.b16 %v2339, %v2335
    %v3588 = vpack.c.b16 %v2344, %v2340
    %v3589 = vpack.c.b16 %v2345, %v2341
    %v3590 = vpack.c.b16 %v2346, %v2342
    %v3591 = vpack.c.b16 %v2347, %v2343
    %v3592 = vpack.c.b16 %v2352, %v2348
    %v3593 = vpack.c.b16 %v2353, %v2349
    %v3594 = vpack.c.b16 %v2354, %v2350
    %v3595 = vpack.c.b16 %v2355, %v2351
    %v3596 = vpack.c.b16 %v2360, %v2356
    %v3597 = vpack.c.b16 %v2361, %v2357
    %v3598 = vpack.c.b16 %v2362, %v2358
    %v3599 = vpack.c.b16 %v2363, %v2359
    %v3600 = vpack.c.b16 %v2368, %v2364
    %v3601 = vpack.c.b16 %v2369, %v2365
    %v3602 = vpack.c.b16 %v2370, %v2366
    %v3603 = vpack.c.b16 %v2371, %v2367
    %v3604 = vpack.c.b16 %v2376, %v2372
    %v3605 = vpack.c.b16 %v2377, %v2373
    %v3606 = vpack.c.b16 %v2378, %v2374
    %v3607 = vpack.c.b16 %v2379, %v2375
    %v3608 = vpack.c.b16 %v2384, %v2380
    %v3609 = vpack.c.b16 %v2385, %v2381
    %v3610 = vpack.c.b16 %v2386, %v2382
    %v3611 = vpack.c.b16 %v2387, %v2383
    %v3612 = vpack.c.b16 %v2392, %v2388
    %v3613 = vpack.c.b16 %v2393, %v2389
    %v3614 = vpack.c.b16 %v2394, %v2390
    %v3615 = vpack.c.b16 %v2395, %v2391
    %v3616 = vpack.c.b16 %v2400, %v2396
    %v3617 = vpack.c.b16 %v2401, %v2397
    %v3618 = vpack.c.b16 %v2402, %v2398
    %v3619 = vpack.c.b16 %v2403, %v2399
    %v3620 = vpack.c.b16 %v2408, %v2404
    %v3621 = vpack.c.b16 %v2409, %v2405
    %v3622 = vpack.c.b16 %v2410, %v2406
    %v3623 = vpack.c.b16 %v2411, %v2407
    %v3624 = vpack.c.b16 %v2416, %v2412
    %v3625 = vpack.c.b16 %v2417, %v2413
    %v3626 = vpack.c.b16 %v2418, %v2414
    %v3627 = vpack.c.b16 %v2419, %v2415
    %v3628 = vpack.c.b16 %v2424, %v2420
    %v3629 = vpack.c.b16 %v2425, %v2421
    %v3630 = vpack.c.b16 %v2426, %v2422
    %v3631 = vpack.c.b16 %v2427, %v2423
    %v3632 = vpack.c.b16 %v2432, %v2428
    %v3633 = vpack.c.b16 %v2433, %v2429
    %v3634 = vpack.c.b16 %v2434, %v2430
    %v3635 = vpack.c.b16 %v2435, %v2431
    %v3636 = vpack.c.b16 %v2440, %v2436
    %v3637 = vpack.c.b16 %v2441, %v2437
    %v3638 = vpack.c.b16 %v2442, %v2438
    %v3639 = vpack.c.b16 %v2443, %v2439
    %v3640 = vpack.c.b16 %v2448, %v2444
    %v3641 = vpack.c.b16 %v2449, %v2445
    %v3642 = vpack.c.b16 %v2450, %v2446
    %v3643 = vpack.c.b16 %v2451, %v2447
    %v3644 = vpack.c.b16 %v2456, %v2452
    %v3645 = vpack.c.b16 %v2457, %v2453
    %v3646 = vpack.c.b16 %v2458, %v2454
    %v3647 = vpack.c.b16 %v2459, %v2455
    %v3648 = vpack.c.b16 %v2464, %v2460
    %v3649 = vpack.c.b16 %v2465, %v2461
    %v3650 = vpack.c.b16 %v2466, %v2462
    %v3651 = vpack.c.b16 %v2467, %v2463
    %v3652 = vpack.c.b16 %v2472, %v2468
    %v3653 = vpack.c.b16 %v2473, %v2469
    %v3654 = vpack.c.b16 %v2474, %v2470
    %v3655 = vpack.c.b16 %v2475, %v2471
    %v3656 = vpack.c.b16 %v2480, %v2476
    %v3657 = vpack.c.b16 %v2481, %v2477
    %v3658 = vpack.c.b16 %v2482, %v2478
    %v3659 = vpack.c.b16 %v2483, %v2479
    %v3660 = vpack.c.b16 %v2488, %v2484
    %v3661 = vpack.c.b16 %v2489, %v2485
    %v3662 = vpack.c.b16 %v2490, %v2486
    %v3663 = vpack.c.b16 %v2491, %v2487
    %v3664 = vpack.c.b16 %v2496, %v2492
    %v3665 = vpack.c.b16 %v2497, %v2493
    %v3666 = vpack.c.b16 %v2498, %v2494
    %v3667 = vpack.c.b16 %v2499, %v2495
    %v3668 = vpack.c.b16 %v2504, %v2500
    %v3669 = vpack.c.b16 %v2505, %v2501
    %v3670 = vpack.c.b16 %v2506, %v2502
    %v3671 = vpack.c.b16 %v2507, %v2503
    %v3672 = vpack.c.b16 %v2512, %v2508
    %v3673 = vpack.c.b16 %v2513, %v2509
    %v3674 = vpack.c.b16 %v2514, %v2510
    %v3675 = vpack.c.b16 %v2515, %v2511
    %v3676 = vpack.c.b16 %v2520, %v2516
    %v3677 = vpack.c.b16 %v2521, %v2517
    %v3678 = vpack.c.b16 %v2522, %v2518
    %v3679 = vpack.c.b16 %v2523, %v2519
    %v3680 = vpack.c.b16 %v2528, %v2524
    %v3681 = vpack.c.b16 %v2529, %v2525
    %v3682 = vpack.c.b16 %v2530, %v2526
    %v3683 = vpack.c.b16 %v2531, %v2527
    %v3684 = vpack.c.b16 %v2536, %v2532
    %v3685 = vpack.c.b16 %v2537, %v2533
    %v3686 = vpack.c.b16 %v2538, %v2534
    %v3687 = vpack.c.b16 %v2539, %v2535
    %v3688 = vpack.c.b16 %v2544, %v2540
    %v3689 = vpack.c.b16 %v2545, %v2541
    %v3690 = vpack.c.b16 %v2546, %v2542
    %v3691 = vpack.c.b16 %v2547, %v2543
    %v3692 = vpack.c.b16 %v2552, %v2548
    %v3693 = vpack.c.b16 %v2553, %v2549
    %v3694 = vpack.c.b16 %v2554, %v2550
    %v3695 = vpack.c.b16 %v2555, %v2551
    %v3696 = vpack.c.b16 %v2560, %v2556
    %v3697 = vpack.c.b16 %v2561, %v2557
    %v3698 = vpack.c.b16 %v2562, %v2558
    %v3699 = vpack.c.b16 %v2563, %v2559
    %v3700 = vpack.c.b16 %v2568, %v2564
    %v3701 = vpack.c.b16 %v2569, %v2565
    %v3702 = vpack.c.b16 %v2570, %v2566
    %v3703 = vpack.c.b16 %v2571, %v2567
    %v3704 = vpack.c.b16 %v2576, %v2572
    %v3705 = vpack.c.b16 %v2577, %v2573
    %v3706 = vpack.c.b16 %v2578, %v2574
    %v3707 = vpack.c.b16 %v2579, %v2575
    %v3708 = vpack.c.b16 %v2584, %v2580
    %v3709 = vpack.c.b16 %v2585, %v2581
    %v3710 = vpack.c.b16 %v2586, %v2582
    %v3711 = vpack.c.b16 %v2587, %v2583
    %v3712 = vpack.c.b16 %v2592, %v2588
    %v3713 = vpack.c.b16 %v2593, %v2589
    %v3714 = vpack.c.b16 %v2594, %v2590
    %v3715 = vpack.c.b16 %v2595, %v2591
    %v3716 = vpack.c.b16 %v2600, %v2596
    %v3717 = vpack.c.b16 %v2601, %v2597
    %v3718 = vpack.c.b16 %v2602, %v2598
    %v3719 = vpack.c.b16 %v2603, %v2599
    %v3720 = vpack.c.b16 %v2608, %v2604
    %v3721 = vpack.c.b16 %v2609, %v2605
    %v3722 = vpack.c.b16 %v2610, %v2606
    %v3723 = vpack.c.b16 %v2611, %v2607
    %v3724 = vpack.c.b16 %v2616, %v2612
    %v3725 = vpack.c.b16 %v2617, %v2613
    %v3726 = vpack.c.b16 %v2618, %v2614
    %v3727 = vpack.c.b16 %v2619, %v2615
    %v3728 = vpack.c.b16 %v2624, %v2620
    %v3729 = vpack.c.b16 %v2625, %v2621
    %v3730 = vpack.c.b16 %v2626, %v2622
    %v3731 = vpack.c.b16 %v2627, %v2623
    %v3732 = vpack.c.b16 %v2632, %v2628
    %v3733 = vpack.c.b16 %v2633, %v2629
    %v3734 = vpack.c.b16 %v2634, %v2630
    %v3735 = vpack.c.b16 %v2635, %v2631
    %v3736 = vpack.c.b16 %v2640, %v2636
    %v3737 = vpack.c.b16 %v2641, %v2637
    %v3738 = vpack.c.b16 %v2642, %v2638
    %v3739 = vpack.c.b16 %v2643, %v2639
    %v3740 = vpack.c.b16 %v2648, %v2644
    %v3741 = vpack.c.b16 %v2649, %v2645
    %v3742 = vpack.c.b16 %v2650, %v2646
    %v3743 = vpack.c.b16 %v2651, %v2647
    %v3744 = vpack.c.b16 %v2656, %v2652
    %v3745 = vpack.c.b16 %v2657, %v2653
    %v3746 = vpack.c.b16 %v2658, %v2654
    %v3747 = vpack.c.b16 %v2659, %v2655
    %v3748 = vpack.c.b16 %v2664, %v2660
    %v3749 = vpack.c.b16 %v2665, %v2661
    %v3750 = vpack.c.b16 %v2666, %v2662
    %v3751 = vpack.c.b16 %v2667, %v2663
    %v3752 = vpack.c.b16 %v2672, %v2668
    %v3753 = vpack.c.b16 %v2673, %v2669
    %v3754 = vpack.c.b16 %v2674, %v2670
    %v3755 = vpack.c.b16 %v2675, %v2671
    %v3756 = vpack.c.b16 %v2680, %v2676
    %v3757 = vpack.c.b16 %v2681, %v2677
    %v3758 = vpack.c.b16 %v2682, %v2678
    %v3759 = vpack.c.b16 %v2683, %v2679
    %v3760 = vpack.c.b16 %v2688, %v2684
    %v3761 = vpack.c.b16 %v2689, %v2685
    %v3762 = vpack.c.b16 %v2690, %v2686
    %v3763 = vpack.c.b16 %v2691, %v2687
    %v3764 = vpack.c.b16 %v2696, %v2692
    %v3765 = vpack.c.b16 %v2697, %v2693
    %v3766 = vpack.c.b16 %v2698, %v2694
    %v3767 = vpack.c.b16 %v2699, %v2695
    %v3768 = vpack.c.b16 %v2704, %v2700
    %v3769 = vpack.c.b16 %v2705, %v2701
    %v3770 = vpack.c.b16 %v2706, %v2702
    %v3771 = vpack.c.b16 %v2707, %v2703
    %v3772 = vpack.c.b16 %v2712, %v2708
    %v3773 = vpack.c.b16 %v2713, %v2709
    %v3774 = vpack.c.b16 %v2714, %v2710
    %v3775 = vpack.c.b16 %v2715, %v2711
    %v3776 = vpack.c.b16 %v2720, %v2716
    %v3777 = vpack.c.b16 %v2721, %v2717
    %v3778 = vpack.c.b16 %v2722, %v2718
    %v3779 = vpack.c.b16 %v2723, %v2719
    %v3780 = vpack.c.b16 %v2728, %v2724
    %v3781 = vpack.c.b16 %v2729, %v2725
    %v3782 = vpack.c.b16 %v2730, %v2726
    %v3783 = vpack.c.b16 %v2731, %v2727
    %v3784 = vpack.c.b16 %v2736, %v2732
    %v3785 = vpack.c.b16 %v2737, %v2733
    %v3786 = vpack.c.b16 %v2738, %v2734
    %v3787 = vpack.c.b16 %v2739, %v2735
    %v3788 = vpack.c.b16 %v2744, %v2740
    %v3789 = vpack.c.b16 %v2745, %v2741
    %v3790 = vpack.c.b16 %v2746, %v2742
    %v3791 = vpack.c.b16 %v2747, %v2743
    %v3792 = vpack.c.b16 %v2752, %v2748
    %v3793 = vpack.c.b16 %v2753, %v2749
    %v3794 = vpack.c.b16 %v2754, %v2750
    %v3795 = vpack.c.b16 %v2755, %v2751
    %v3796 = vpack.c.b16 %v2760, %v2756
    %v3797 = vpack.c.b16 %v2761, %v2757
    %v3798 = vpack.c.b16 %v2762, %v2758
    %v3799 = vpack.c.b16 %v2763, %v2759
    %v3800 = vpack.c.b16 %v2768, %v2764
    %v3801 = vpack.c.b16 %v2769, %v2765
    %v3802 = vpack.c.b16 %v2770, %v2766
    %v3803 = vpack.c.b16 %v2771, %v2767
    %v3804 = vpack.c.b16 %v2776, %v2772
    %v3805 = vpack.c.b16 %v2777, %v2773
    %v3806 = vpack.c.b16 %v2778, %v2774
    %v3807 = vpack.c.b16 %v2779, %v2775
    %v3808 = vpack.c.b16 %v2784, %v2780
    %v3809 = vpack.c.b16 %v2785, %v2781
    %v3810 = vpack.c.b16 %v2786, %v2782
    %v3811 = vpack.c.b16 %v2787, %v2783
    %v3812 = vpack.c.b16 %v2792, %v2788
    %v3813 = vpack.c.b16 %v2793, %v2789
    %v3814 = vpack.c.b16 %v2794, %v2790
    %v3815 = vpack.c.b16 %v2795, %v2791
    %v3816 = vpack.c.b16 %v2800, %v2796
    %v3817 = vpack.c.b16 %v2801, %v2797
    %v3818 = vpack.c.b16 %v2802, %v2798
    %v3819 = vpack.c.b16 %v2803, %v2799
    %v3820 = vpack.c.b16 %v2808, %v2804
    %v3821 = vpack.c.b16 %v2809, %v2805
    %v3822 = vpack.c.b16 %v2810, %v2806
    %v3823 = vpack.c.b16 %v2811, %v2807
    %v3824 = vpack.c.b16 %v2816, %v2812
    %v3825 = vpack.c.b16 %v2817, %v2813
    %v3826 = vpack.c.b16 %v2818, %v2814
    %v3827 = vpack.c.b16 %v2819, %v2815
    %v3828 = vpack.c.b16 %v2824, %v2820
    %v3829 = vpack.c.b16 %v2825, %v2821
    %v3830 = vpack.c.b16 %v2826, %v2822
    %v3831 = vpack.c.b16 %v2827, %v2823
    %v3832 = vpack.c.b16 %v2832, %v2828
    %v3833 = vpack.c.b16 %v2833, %v2829
    %v3834 = vpack.c.b16 %v2834, %v2830
    %v3835 = vpack.c.b16 %v2835, %v2831
    %v3836 = vpack.c.b16 %v2840, %v2836
    %v3837 = vpack.c.b16 %v2841, %v2837
    %v3838 = vpack.c.b16 %v2842, %v2838
    %v3839 = vpack.c.b16 %v2843, %v2839
    %v3840 = vpack.c.b16 %v2848, %v2844
    %v3841 = vpack.c.b16 %v2849, %v2845
    %v3842 = vpack.c.b16 %v2850, %v2846
    %v3843 = vpack.c.b16 %v2851, %v2847
    %v3844 = vpack.c.b16 %v2856, %v2852
    %v3845 = vpack.c.b16 %v2857, %v2853
    %v3846 = vpack.c.b16 %v2858, %v2854
    %v3847 = vpack.c.b16 %v2859, %v2855
    %v3848 = vpack.c.b16 %v2864, %v2860
    %v3849 = vpack.c.b16 %v2865, %v2861
    %v3850 = vpack.c.b16 %v2866, %v2862
    %v3851 = vpack.c.b16 %v2867, %v2863
    %v3852 = vpack.c.b16 %v2872, %v2868
    %v3853 = vpack.c.b16 %v2873, %v2869
    %v3854 = vpack.c.b16 %v2874, %v2870
    %v3855 = vpack.c.b16 %v2875, %v2871
    %v3856 = vpack.c.b16 %v2880, %v2876
    %v3857 = vpack.c.b16 %v2881, %v2877
    %v3858 = vpack.c.b16 %v2882, %v2878
    %v3859 = vpack.c.b16 %v2883, %v2879
    %v3860 = vpack.c.b16 %v2888, %v2884
    %v3861 = vpack.c.b16 %v2889, %v2885
    %v3862 = vpack.c.b16 %v2890, %v2886
    %v3863 = vpack.c.b16 %v2891, %v2887
    %v3864 = vpack.c.b16 %v2896, %v2892
    %v3865 = vpack.c.b16 %v2897, %v2893
    %v3866 = vpack.c.b16 %v2898, %v2894
    %v3867 = vpack.c.b16 %v2899, %v2895
    %v3868 = vpack.c.b16 %v2904, %v2900
    %v3869 = vpack.c.b16 %v2905, %v2901
    %v3870 = vpack.c.b16 %v2906, %v2902
    %v3871 = vpack.c.b16 %v2907, %v2903
    %v3872 = vpack.c.b16 %v2912, %v2908
    %v3873 = vpack.c.b16 %v2913, %v2909
    %v3874 = vpack.c.b16 %v2914, %v2910
    %v3875 = vpack.c.b16 %v2915, %v2911
    %v3876 = vpack.c.b16 %v2920, %v2916
    %v3877 = vpack.c.b16 %v2921, %v2917
    %v3878 = vpack.c.b16 %v2922, %v2918
    %v3879 = vpack.c.b16 %v2923, %v2919
    %v3880 = vpack.c.b16 %v2928, %v2924
    %v3881 = vpack.c.b16 %v2929, %v2925
    %v3882 = vpack.c.b16 %v2930, %v2926
    %v3883 = vpack.c.b16 %v2931, %v2927
    %v3884 = vpack.c.b16 %v2936, %v2932
    %v3885 = vpack.c.b16 %v2937, %v2933
    %v3886 = vpack.c.b16 %v2938, %v2934
    %v3887 = vpack.c.b16 %v2939, %v2935
    %v3888 = vpack.c.b16 %v2944, %v2940
    %v3889 = vpack.c.b16 %v2945, %v2941
    %v3890 = vpack.c.b16 %v2946, %v2942
    %v3891 = vpack.c.b16 %v2947, %v2943
    %v3892 = vpack.c.b16 %v2952, %v2948
    %v3893 = vpack.c.b16 %v2953, %v2949
    %v3894 = vpack.c.b16 %v2954, %v2950
    %v3895 = vpack.c.b16 %v2955, %v2951
    %v3896 = vpack.c.b16 %v2960, %v2956
    %v3897 = vpack.c.b16 %v2961, %v2957
    %v3898 = vpack.c.b16 %v2962, %v2958
    %v3899 = vpack.c.b16 %v2963, %v2959
    %v3900 = vpack.c.b16 %v2968, %v2964
    %v3901 = vpack.c.b16 %v2969, %v2965
    %v3902 = vpack.c.b16 %v2970, %v2966
    %v3903 = vpack.c.b16 %v2971, %v2967
    %v3904 = vpack.c.b16 %v2976, %v2972
    %v3905 = vpack.c.b16 %v2977, %v2973
    %v3906 = vpack.c.b16 %v2978, %v2974
    %v3907 = vpack.c.b16 %v2979, %v2975
    %v3908 = vpack.c.b16 %v2984, %v2980
    %v3909 = vpack.c.b16 %v2985, %v2981
    %v3910 = vpack.c.b16 %v2986, %v2982
    %v3911 = vpack.c.b16 %v2987, %v2983
    %v3912 = vpack.c.b16 %v2992, %v2988
    %v3913 = vpack.c.b16 %v2993, %v2989
    %v3914 = vpack.c.b16 %v2994, %v2990
    %v3915 = vpack.c.b16 %v2995, %v2991
    %v3916 = vpack.c.b16 %v3000, %v2996
    %v3917 = vpack.c.b16 %v3001, %v2997
    %v3918 = vpack.c.b16 %v3002, %v2998
    %v3919 = vpack.c.b16 %v3003, %v2999
    %v3920 = vpack.c.b16 %v3008, %v3004
    %v3921 = vpack.c.b16 %v3009, %v3005
    %v3922 = vpack.c.b16 %v3010, %v3006
    %v3923 = vpack.c.b16 %v3011, %v3007
    %v3924 = vpack.c.b16 %v3016, %v3012
    %v3925 = vpack.c.b16 %v3017, %v3013
    %v3926 = vpack.c.b16 %v3018, %v3014
    %v3927 = vpack.c.b16 %v3019, %v3015
    %v3928 = vpack.c.b16 %v3024, %v3020
    %v3929 = vpack.c.b16 %v3025, %v3021
    %v3930 = vpack.c.b16 %v3026, %v3022
    %v3931 = vpack.c.b16 %v3027, %v3023
    %v3932 = vpack.c.b16 %v3032, %v3028
    %v3933 = vpack.c.b16 %v3033, %v3029
    %v3934 = vpack.c.b16 %v3034, %v3030
    %v3935 = vpack.c.b16 %v3035, %v3031
    %v3936 = vpack.c.b16 %v3040, %v3036
    %v3937 = vpack.c.b16 %v3041, %v3037
    %v3938 = vpack.c.b16 %v3042, %v3038
    %v3939 = vpack.c.b16 %v3043, %v3039
    %v3940 = vpack.c.b16 %v3048, %v3044
    %v3941 = vpack.c.b16 %v3049, %v3045
    %v3942 = vpack.c.b16 %v3050, %v3046
    %v3943 = vpack.c.b16 %v3051, %v3047
    %v3944 = vpack.c.b16 %v3056, %v3052
    %v3945 = vpack.c.b16 %v3057, %v3053
    %v3946 = vpack.c.b16 %v3058, %v3054
    %v3947 = vpack.c.b16 %v3059, %v3055
    %v3948 = vpack.c.b16 %v3064, %v3060
    %v3949 = vpack.c.b16 %v3065, %v3061
    %v3950 = vpack.c.b16 %v3066, %v3062
    %v3951 = vpack.c.b16 %v3067, %v3063
    %v3952 = vpack.c.b16 %v3072, %v3068
    %v3953 = vpack.c.b16 %v3073, %v3069
    %v3954 = vpack.c.b16 %v3074, %v3070
    %v3955 = vpack.c.b16 %v3075, %v3071
    %v3956 = vpack.c.b16 %v3080, %v3076
    %v3957 = vpack.c.b16 %v3081, %v3077
    %v3958 = vpack.c.b16 %v3082, %v3078
    %v3959 = vpack.c.b16 %v3083, %v3079
    %v3960 = vpack.c.b16 %v3088, %v3084
    %v3961 = vpack.c.b16 %v3089, %v3085
    %v3962 = vpack.c.b16 %v3090, %v3086
    %v3963 = vpack.c.b16 %v3091, %v3087
    %v3964 = vpack.c.b16 %v3096, %v3092
    %v3965 = vpack.c.b16 %v3097, %v3093
    %v3966 = vpack.c.b16 %v3098, %v3094
    %v3967 = vpack.c.b16 %v3099, %v3095
    %v3968 = vpack.c.b16 %v3104, %v3100
    %v3969 = vpack.c.b16 %v3105, %v3101
    %v3970 = vpack.c.b16 %v3106, %v3102
    %v3971 = vpack.c.b16 %v3107, %v3103
    %v3972 = vpack.c.b16 %v3112, %v3108
    %v3973 = vpack.c.b16 %v3113, %v3109
    %v3974 = vpack.c.b16 %v3114, %v3110
    %v3975 = vpack.c.b16 %v3115, %v3111
    %v3976 = vpack.c.b16 %v3120, %v3116
    %v3977 = vpack.c.b16 %v3121, %v3117
    %v3978 = vpack.c.b16 %v3122, %v3118
    %v3979 = vpack.c.b16 %v3123, %v3119
    %v3980 = vpack.c.b16 %v3128, %v3124
    %v3981 = vpack.c.b16 %v3129, %v3125
    %v3982 = vpack.c.b16 %v3130, %v3126
    %v3983 = vpack.c.b16 %v3131, %v3127
    %v3984 = vpack.c.b16 %v3136, %v3132
    %v3985 = vpack.c.b16 %v3137, %v3133
    %v3986 = vpack.c.b16 %v3138, %v3134
    %v3987 = vpack.c.b16 %v3139, %v3135
    %v3988 = vpack.c.b16 %v3144, %v3140
    %v3989 = vpack.c.b16 %v3145, %v3141
    %v3990 = vpack.c.b16 %v3146, %v3142
    %v3991 = vpack.c.b16 %v3147, %v3143
    %v3992 = vpack.c.b16 %v3152, %v3148
    %v3993 = vpack.c.b16 %v3153, %v3149
    %v3994 = vpack.c.b16 %v3154, %v3150
    %v3995 = vpack.c.b16 %v3155, %v3151
    %v3996 = vpack.c.b16 %v3160, %v3156
    %v3997 = vpack.c.b16 %v3161, %v3157
    %v3998 = vpack.c.b16 %v3162, %v3158
    %v3999 = vpack.c.b16 %v3163, %v3159
    %v4000 = vpack.c.b16 %v3168, %v3164
    %v4001 = vpack.c.b16 %v3169, %v3165
    %v4002 = vpack.c.b16 %v3170, %v3166
    %v4003 = vpack.c.b16 %v3171, %v3167
    %v4004 = vpack.c.b16 %v3176, %v3172
    %v4005 = vpack.c.b16 %v3177, %v3173
    %v4006 = vpack.c.b16 %v3178, %v3174
    %v4007 = vpack.c.b16 %v3179, %v3175
    %v4008 = vpack.c.b16 %v3184, %v3180
    %v4009 = vpack.c.b16 %v3185, %v3181
    %v4010 = vpack.c.b16 %v3186, %v3182
    %v4011 = vpack.c.b16 %v3187, %v3183
    %v4012 = vpack.c.b16 %v3192, %v3188
    %v4013 = vpack.c.b16 %v3193, %v3189
    %v4014 = vpack.c.b16 %v3194, %v3190
    %v4015 = vpack.c.b16 %v3195, %v3191
    %v4016 = vpack.c.b16 %v3200, %v3196
    %v4017 = vpack.c.b16 %v3201, %v3197
    %v4018 = vpack.c.b16 %v3202, %v3198
    %v4019 = vpack.c.b16 %v3203, %v3199
    %v4020 = vpack.c.b16 %v3208, %v3204
    %v4021 = vpack.c.b16 %v3209, %v3205
    %v4022 = vpack.c.b16 %v3210, %v3206
    %v4023 = vpack.c.b16 %v3211, %v3207
    %v4024 = vpack.c.b16 %v3216, %v3212
    %v4025 = vpack.c.b16 %v3217, %v3213
    %v4026 = vpack.c.b16 %v3218, %v3214
    %v4027 = vpack.c.b16 %v3219, %v3215
    %v4028 = vpack.c.b16 %v3224, %v3220
    %v4029 = vpack.c.b16 %v3225, %v3221
    %v4030 = vpack.c.b16 %v3226, %v3222
    %v4031 = vpack.c.b16 %v3227, %v3223
    %v4032 = vpack.c.b16 %v3232, %v3228
    %v4033 = vpack.c.b16 %v3233, %v3229
    %v4034 = vpack.c.b16 %v3234, %v3230
    %v4035 = vpack.c.b16 %v3235, %v3231
    %v4036 = vpack.c.b16 %v3240, %v3236
    %v4037 = vpack.c.b16 %v3241, %v3237
    %v4038 = vpack.c.b16 %v3242, %v3238
    %v4039 = vpack.c.b16 %v3243, %v3239
    %v4040 = vpack.c.b16 %v3248, %v3244
    %v4041 = vpack.c.b16 %v3249, %v3245
    %v4042 = vpack.c.b16 %v3250, %v3246
    %v4043 = vpack.c.b16 %v3251, %v3247
    %v4044 = vpack.c.b16 %v3256, %v3252
    %v4045 = vpack.c.b16 %v3257, %v3253
    %v4046 = vpack.c.b16 %v3258, %v3254
    %v4047 = vpack.c.b16 %v3259, %v3255
    %v4048 = vpack.c.b16 %v3264, %v3260
    %v4049 = vpack.c.b16 %v3265, %v3261
    %v4050 = vpack.c.b16 %v3266, %v3262
    %v4051 = vpack.c.b16 %v3267, %v3263
    %v4052 = vpack.c.b16 %v3272, %v3268
    %v4053 = vpack.c.b16 %v3273, %v3269
    %v4054 = vpack.c.b16 %v3274, %v3270
    %v4055 = vpack.c.b16 %v3275, %v3271
    %v4056 = vpack.c.b16 %v3280, %v3276
    %v4057 = vpack.c.b16 %v3281, %v3277
    %v4058 = vpack.c.b16 %v3282, %v3278
    %v4059 = vpack.c.b16 %v3283, %v3279
    %v4060 = vpack.c.b16 %v3288, %v3284
    %v4061 = vpack.c.b16 %v3289, %v3285
    %v4062 = vpack.c.b16 %v3290, %v3286
    %v4063 = vpack.c.b16 %v3291, %v3287
    %v4064 = vpack.c.b16 %v3296, %v3292
    %v4065 = vpack.c.b16 %v3297, %v3293
    %v4066 = vpack.c.b16 %v3298, %v3294
    %v4067 = vpack.c.b16 %v3299, %v3295
    %4836 = vmatprep.subr.bf16.mxu0 %v3301
    %4837 = vmatpush1.bf16.msra.mxu0 %v3300
    %4838 = vmatprep.subr.bf16.mxu0 %v3305
    %4839 = vmatpush1.bf16.msra.mxu0 %v3304
    %4840 = vmatprep.subr.bf16.mxu0 %v3309
    %4841 = vmatpush1.bf16.msra.mxu0 %v3308
    %4842 = vmatprep.subr.bf16.mxu0 %v3313
    %4843 = vmatpush1.bf16.msra.mxu0 %v3312
    %4844 = vmatprep.subr.bf16.mxu0 %v3317
    %4845 = vmatpush1.bf16.msra.mxu0 %v3316
    %4846 = vmatprep.subr.bf16.mxu0 %v3321
    %4847 = vmatpush1.bf16.msra.mxu0 %v3320
    %4848 = vmatprep.subr.bf16.mxu0 %v3325
    %4849 = vmatpush1.bf16.msra.mxu0 %v3324
    %4850 = vmatprep.subr.bf16.mxu0 %v3329
    %4851 = vmatpush1.bf16.msra.mxu0 %v3328
    %4852 = vmatprep.subr.bf16.mxu0 %v3333
    %4853 = vmatpush1.bf16.msra.mxu0 %v3332
    %4854 = vmatprep.subr.bf16.mxu0 %v3337
    %4855 = vmatpush1.bf16.msra.mxu0 %v3336
    %4856 = vmatprep.subr.bf16.mxu0 %v3341
    %4857 = vmatpush1.bf16.msra.mxu0 %v3340
    %4858 = vmatprep.subr.bf16.mxu0 %v3345
    %4859 = vmatpush1.bf16.msra.mxu0 %v3344
    %4860 = vmatprep.subr.bf16.mxu0 %v3349
    %4861 = vmatpush1.bf16.msra.mxu0 %v3348
    %4862 = vmatprep.subr.bf16.mxu0 %v3353
    %4863 = vmatpush1.bf16.msra.mxu0 %v3352
    %4864 = vmatprep.subr.bf16.mxu0 %v3357
    %4865 = vmatpush1.bf16.msra.mxu0 %v3356
    %4866 = vmatprep.subr.bf16.mxu0 %v3361
    %4867 = vmatpush1.bf16.msra.mxu0 %v3360
    %4868 = vmatprep.mubr.bf16.mxu0 %v183
    %4869 = vmatmul.mubr.bf16.gmra.mrb[0].mxu0 %v182
    %v4870 = vpop.f32.mrb[0].mxu0
    %v4871 = vadd.f32 %v979, %v4870
    %v4872 = vpop.f32.mrb[0].mxu0
    %v4873 = vadd.f32 %v983, %v4872
    %v4874 = vpop.f32.mrb[0].mxu0
    %v4875 = vadd.f32 %v979, %v4874
    %v4876 = vpop.f32.mrb[0].mxu0
    %v4877 = vadd.f32 %v983, %v4876
    %4878 = vdwg.mxu0
    %4879 = vmatprep.subr.bf16.mxu0 %v3365
    %4880 = vmatpush1.bf16.msra.mxu0 %v3364
    %4881 = vmatprep.subr.bf16.mxu0 %v3369
    %4882 = vmatpush1.bf16.msra.mxu0 %v3368
    %4883 = vmatprep.subr.bf16.mxu0 %v3373
    %4884 = vmatpush1.bf16.msra.mxu0 %v3372
    %4885 = vmatprep.subr.bf16.mxu0 %v3377
    %4886 = vmatpush1.bf16.msra.mxu0 %v3376
    %4887 = vmatprep.subr.bf16.mxu0 %v3381
    %4888 = vmatpush1.bf16.msra.mxu0 %v3380
    %4889 = vmatprep.subr.bf16.mxu0 %v3385
    %4890 = vmatpush1.bf16.msra.mxu0 %v3384
    %4891 = vmatprep.subr.bf16.mxu0 %v3389
    %4892 = vmatpush1.bf16.msra.mxu0 %v3388
    %4893 = vmatprep.subr.bf16.mxu0 %v3393
    %4894 = vmatpush1.bf16.msra.mxu0 %v3392
    %4895 = vmatprep.subr.bf16.mxu0 %v3397
    %4896 = vmatpush1.bf16.msra.mxu0 %v3396
    %4897 = vmatprep.subr.bf16.mxu0 %v3401
    %4898 = vmatpush1.bf16.msra.mxu0 %v3400
    %4899 = vmatprep.subr.bf16.mxu0 %v3405
    %4900 = vmatpush1.bf16.msra.mxu0 %v3404
    %4901 = vmatprep.subr.bf16.mxu0 %v3409
    %4902 = vmatpush1.bf16.msra.mxu0 %v3408
    %4903 = vmatprep.subr.bf16.mxu0 %v3413
    %4904 = vmatpush1.bf16.msra.mxu0 %v3412
    %4905 = vmatprep.subr.bf16.mxu0 %v3417
    %4906 = vmatpush1.bf16.msra.mxu0 %v3416
    %4907 = vmatprep.subr.bf16.mxu0 %v3421
    %4908 = vmatpush1.bf16.msra.mxu0 %v3420
    %4909 = vmatprep.subr.bf16.mxu0 %v3425
    %4910 = vmatpush1.bf16.msra.mxu0 %v3424
    %4911 = vmatprep.mubr.bf16.mxu0 %v185
    %4912 = vmatmul.mubr.bf16.gmra.mrb[0].mxu0 %v184
    %v4913 = vpop.f32.mrb[0].mxu0
    %v4914 = vadd.f32 %v4871, %v4913
    %v4915 = vpop.f32.mrb[0].mxu0
    %v4916 = vadd.f32 %v4873, %v4915
    %v4917 = vpop.f32.mrb[0].mxu0
    %v4918 = vadd.f32 %v4875, %v4917
    %v4919 = vpop.f32.mrb[0].mxu0
    %v4920 = vadd.f32 %v4877, %v4919
    %4921 = vdwg.mxu0
    %4922 = vmatprep.subr.bf16.mxu0 %v3429
    %4923 = vmatpush1.bf16.msra.mxu0 %v3428
    %4924 = vmatprep.subr.bf16.mxu0 %v3433
    %4925 = vmatpush1.bf16.msra.mxu0 %v3432
    %4926 = vmatprep.subr.bf16.mxu0 %v3437
    %4927 = vmatpush1.bf16.msra.mxu0 %v3436
    %4928 = vmatprep.subr.bf16.mxu0 %v3441
    %4929 = vmatpush1.bf16.msra.mxu0 %v3440
    %4930 = vmatprep.subr.bf16.mxu0 %v3445
    %4931 = vmatpush1.bf16.msra.mxu0 %v3444
    %4932 = vmatprep.subr.bf16.mxu0 %v3449
    %4933 = vmatpush1.bf16.msra.mxu0 %v3448
    %4934 = vmatprep.subr.bf16.mxu0 %v3453
    %4935 = vmatpush1.bf16.msra.mxu0 %v3452
    %4936 = vmatprep.subr.bf16.mxu0 %v3457
    %4937 = vmatpush1.bf16.msra.mxu0 %v3456
    %4938 = vmatprep.subr.bf16.mxu0 %v3461
    %4939 = vmatpush1.bf16.msra.mxu0 %v3460
    %4940 = vmatprep.subr.bf16.mxu0 %v3465
    %4941 = vmatpush1.bf16.msra.mxu0 %v3464
    %4942 = vmatprep.subr.bf16.mxu0 %v3469
    %4943 = vmatpush1.bf16.msra.mxu0 %v3468
    %4944 = vmatprep.subr.bf16.mxu0 %v3473
    %4945 = vmatpush1.bf16.msra.mxu0 %v3472
    %4946 = vmatprep.subr.bf16.mxu0 %v3477
    %4947 = vmatpush1.bf16.msra.mxu0 %v3476
    %4948 = vmatprep.subr.bf16.mxu0 %v3481
    %4949 = vmatpush1.bf16.msra.mxu0 %v3480
    %4950 = vmatprep.subr.bf16.mxu0 %v3485
    %4951 = vmatpush1.bf16.msra.mxu0 %v3484
    %4952 = vmatprep.subr.bf16.mxu0 %v3489
    %4953 = vmatpush1.bf16.msra.mxu0 %v3488
    %4954 = vmatprep.mubr.bf16.mxu0 %v187
    %4955 = vmatmul.mubr.bf16.gmra.mrb[0].mxu0 %v186
    %v4956 = vpop.f32.mrb[0].mxu0
    %v4957 = vadd.f32 %v4914, %v4956
    %v4958 = vpop.f32.mrb[0].mxu0
    %v4959 = vadd.f32 %v4916, %v4958
    %v4960 = vpop.f32.mrb[0].mxu0
    %v4961 = vadd.f32 %v4918, %v4960
    %v4962 = vpop.f32.mrb[0].mxu0
    %v4963 = vadd.f32 %v4920, %v4962
    %4964 = vdwg.mxu0
    %4965 = vmatprep.subr.bf16.mxu0 %v3493
    %4966 = vmatpush1.bf16.msra.mxu0 %v3492
    %4967 = vmatprep.subr.bf16.mxu0 %v3497
    %4968 = vmatpush1.bf16.msra.mxu0 %v3496
    %4969 = vmatprep.subr.bf16.mxu0 %v3501
    %4970 = vmatpush1.bf16.msra.mxu0 %v3500
    %4971 = vmatprep.subr.bf16.mxu0 %v3505
    %4972 = vmatpush1.bf16.msra.mxu0 %v3504
    %4973 = vmatprep.subr.bf16.mxu0 %v3509
    %4974 = vmatpush1.bf16.msra.mxu0 %v3508
    %4975 = vmatprep.subr.bf16.mxu0 %v3513
    %4976 = vmatpush1.bf16.msra.mxu0 %v3512
    %4977 = vmatprep.subr.bf16.mxu0 %v3517
    %4978 = vmatpush1.bf16.msra.mxu0 %v3516
    %4979 = vmatprep.subr.bf16.mxu0 %v3521
    %4980 = vmatpush1.bf16.msra.mxu0 %v3520
    %4981 = vmatprep.subr.bf16.mxu0 %v3525
    %4982 = vmatpush1.bf16.msra.mxu0 %v3524
    %4983 = vmatprep.subr.bf16.mxu0 %v3529
    %4984 = vmatpush1.bf16.msra.mxu0 %v3528
    %4985 = vmatprep.subr.bf16.mxu0 %v3533
    %4986 = vmatpush1.bf16.msra.mxu0 %v3532
    %4987 = vmatprep.subr.bf16.mxu0 %v3537
    %4988 = vmatpush1.bf16.msra.mxu0 %v3536
    %4989 = vmatprep.subr.bf16.mxu0 %v3541
    %4990 = vmatpush1.bf16.msra.mxu0 %v3540
    %4991 = vmatprep.subr.bf16.mxu0 %v3545
    %4992 = vmatpush1.bf16.msra.mxu0 %v3544
    %4993 = vmatprep.subr.bf16.mxu0 %v3549
    %4994 = vmatpush1.bf16.msra.mxu0 %v3548
    %4995 = vmatprep.subr.bf16.mxu0 %v3553
    %4996 = vmatpush1.bf16.msra.mxu0 %v3552
    %4997 = vmatprep.mubr.bf16.mxu0 %v189
    %4998 = vmatmul.mubr.bf16.gmra.mrb[0].mxu0 %v188
    %v4999 = vpop.f32.mrb[0].mxu0
    %v5000 = vadd.f32 %v4957, %v4999
    %v5001 = vpop.f32.mrb[0].mxu0
    %v5002 = vadd.f32 %v4959, %v5001
    %v5003 = vpop.f32.mrb[0].mxu0
    %v5004 = vadd.f32 %v4961, %v5003
    %v5005 = vpop.f32.mrb[0].mxu0
    %v5006 = vadd.f32 %v4963, %v5005
    %5007 = vdwg.mxu0
    %5008 = vmatprep.subr.bf16.mxu0 %v3557
    %5009 = vmatpush1.bf16.msra.mxu0 %v3556
    %5010 = vmatprep.subr.bf16.mxu0 %v3561
    %5011 = vmatpush1.bf16.msra.mxu0 %v3560
    %5012 = vmatprep.subr.bf16.mxu0 %v3565
    %5013 = vmatpush1.bf16.msra.mxu0 %v3564
    %5014 = vmatprep.subr.bf16.mxu0 %v3569
    %5015 = vmatpush1.bf16.msra.mxu0 %v3568
    %5016 = vmatprep.subr.bf16.mxu0 %v3573
    %5017 = vmatpush1.bf16.msra.mxu0 %v3572
    %5018 = vmatprep.subr.bf16.mxu0 %v3577
    %5019 = vmatpush1.bf16.msra.mxu0 %v3576
    %5020 = vmatprep.subr.bf16.mxu0 %v3581
    %5021 = vmatpush1.bf16.msra.mxu0 %v3580
    %5022 = vmatprep.subr.bf16.mxu0 %v3585
    %5023 = vmatpush1.bf16.msra.mxu0 %v3584
    %5024 = vmatprep.subr.bf16.mxu0 %v3589
    %5025 = vmatpush1.bf16.msra.mxu0 %v3588
    %5026 = vmatprep.subr.bf16.mxu0 %v3593
    %5027 = vmatpush1.bf16.msra.mxu0 %v3592
    %5028 = vmatprep.subr.bf16.mxu0 %v3597
    %5029 = vmatpush1.bf16.msra.mxu0 %v3596
    %5030 = vmatprep.subr.bf16.mxu0 %v3601
    %5031 = vmatpush1.bf16.msra.mxu0 %v3600
    %5032 = vmatprep.subr.bf16.mxu0 %v3605
    %5033 = vmatpush1.bf16.msra.mxu0 %v3604
    %5034 = vmatprep.subr.bf16.mxu0 %v3609
    %5035 = vmatpush1.bf16.msra.mxu0 %v3608
    %5036 = vmatprep.subr.bf16.mxu0 %v3613
    %5037 = vmatpush1.bf16.msra.mxu0 %v3612
    %5038 = vmatprep.subr.bf16.mxu0 %v3617
    %5039 = vmatpush1.bf16.msra.mxu0 %v3616
    %5040 = vmatprep.mubr.bf16.mxu0 %v191
    %5041 = vmatmul.mubr.bf16.gmra.mrb[0].mxu0 %v190
    %v5042 = vpop.f32.mrb[0].mxu0
    %v5043 = vadd.f32 %v5000, %v5042
    %v5044 = vpop.f32.mrb[0].mxu0
    %v5045 = vadd.f32 %v5002, %v5044
    %v5046 = vpop.f32.mrb[0].mxu0
    %v5047 = vadd.f32 %v5004, %v5046
    %v5048 = vpop.f32.mrb[0].mxu0
    %v5049 = vadd.f32 %v5006, %v5048
    %5050 = vdwg.mxu0
    %5051 = vmatprep.subr.bf16.mxu0 %v3621
    %5052 = vmatpush1.bf16.msra.mxu0 %v3620
    %5053 = vmatprep.subr.bf16.mxu0 %v3625
    %5054 = vmatpush1.bf16.msra.mxu0 %v3624
    %5055 = vmatprep.subr.bf16.mxu0 %v3629
    %5056 = vmatpush1.bf16.msra.mxu0 %v3628
    %5057 = vmatprep.subr.bf16.mxu0 %v3633
    %5058 = vmatpush1.bf16.msra.mxu0 %v3632
    %5059 = vmatprep.subr.bf16.mxu0 %v3637
    %5060 = vmatpush1.bf16.msra.mxu0 %v3636
    %5061 = vmatprep.subr.bf16.mxu0 %v3641
    %5062 = vmatpush1.bf16.msra.mxu0 %v3640
    %5063 = vmatprep.subr.bf16.mxu0 %v3645
    %5064 = vmatpush1.bf16.msra.mxu0 %v3644
    %5065 = vmatprep.subr.bf16.mxu0 %v3649
    %5066 = vmatpush1.bf16.msra.mxu0 %v3648
    %5067 = vmatprep.subr.bf16.mxu0 %v3653
    %5068 = vmatpush1.bf16.msra.mxu0 %v3652
    %5069 = vmatprep.subr.bf16.mxu0 %v3657
    %5070 = vmatpush1.bf16.msra.mxu0 %v3656
    %5071 = vmatprep.subr.bf16.mxu0 %v3661
    %5072 = vmatpush1.bf16.msra.mxu0 %v3660
    %5073 = vmatprep.subr.bf16.mxu0 %v3665
    %5074 = vmatpush1.bf16.msra.mxu0 %v3664
    %5075 = vmatprep.subr.bf16.mxu0 %v3669
    %5076 = vmatpush1.bf16.msra.mxu0 %v3668
    %5077 = vmatprep.subr.bf16.mxu0 %v3673
    %5078 = vmatpush1.bf16.msra.mxu0 %v3672
    %5079 = vmatprep.subr.bf16.mxu0 %v3677
    %5080 = vmatpush1.bf16.msra.mxu0 %v3676
    %5081 = vmatprep.subr.bf16.mxu0 %v3681
    %5082 = vmatpush1.bf16.msra.mxu0 %v3680
    %5083 = vmatprep.mubr.bf16.mxu0 %v193
    %5084 = vmatmul.mubr.bf16.gmra.mrb[0].mxu0 %v192
    %v5085 = vpop.f32.mrb[0].mxu0
    %v5086 = vadd.f32 %v5043, %v5085
    %v5087 = vpop.f32.mrb[0].mxu0
    %v5088 = vadd.f32 %v5045, %v5087
    %v5089 = vpop.f32.mrb[0].mxu0
    %v5090 = vadd.f32 %v5047, %v5089
    %v5091 = vpop.f32.mrb[0].mxu0
    %v5092 = vadd.f32 %v5049, %v5091
    %5093 = vdwg.mxu0
    %5094 = vmatprep.subr.bf16.mxu0 %v3685
    %5095 = vmatpush1.bf16.msra.mxu0 %v3684
    %5096 = vmatprep.subr.bf16.mxu0 %v3689
    %5097 = vmatpush1.bf16.msra.mxu0 %v3688
    %5098 = vmatprep.subr.bf16.mxu0 %v3693
    %5099 = vmatpush1.bf16.msra.mxu0 %v3692
    %5100 = vmatprep.subr.bf16.mxu0 %v3697
    %5101 = vmatpush1.bf16.msra.mxu0 %v3696
    %5102 = vmatprep.subr.bf16.mxu0 %v3701
    %5103 = vmatpush1.bf16.msra.mxu0 %v3700
    %5104 = vmatprep.subr.bf16.mxu0 %v3705
    %5105 = vmatpush1.bf16.msra.mxu0 %v3704
    %5106 = vmatprep.subr.bf16.mxu0 %v3709
    %5107 = vmatpush1.bf16.msra.mxu0 %v3708
    %5108 = vmatprep.subr.bf16.mxu0 %v3713
    %5109 = vmatpush1.bf16.msra.mxu0 %v3712
    %5110 = vmatprep.subr.bf16.mxu0 %v3717
    %5111 = vmatpush1.bf16.msra.mxu0 %v3716
    %5112 = vmatprep.subr.bf16.mxu0 %v3721
    %5113 = vmatpush1.bf16.msra.mxu0 %v3720
    %5114 = vmatprep.subr.bf16.mxu0 %v3725
    %5115 = vmatpush1.bf16.msra.mxu0 %v3724
    %5116 = vmatprep.subr.bf16.mxu0 %v3729
    %5117 = vmatpush1.bf16.msra.mxu0 %v3728
    %5118 = vmatprep.subr.bf16.mxu0 %v3733
    %5119 = vmatpush1.bf16.msra.mxu0 %v3732
    %5120 = vmatprep.subr.bf16.mxu0 %v3737
    %5121 = vmatpush1.bf16.msra.mxu0 %v3736
    %5122 = vmatprep.subr.bf16.mxu0 %v3741
    %5123 = vmatpush1.bf16.msra.mxu0 %v3740
    %5124 = vmatprep.subr.bf16.mxu0 %v3745
    %5125 = vmatpush1.bf16.msra.mxu0 %v3744
    %5126 = vmatprep.mubr.bf16.mxu0 %v195
    %5127 = vmatmul.mubr.bf16.gmra.mrb[0].mxu0 %v194
    %v5128 = vpop.f32.mrb[0].mxu0
    %v5129 = vadd.f32 %v5086, %v5128
    %v5130 = vpop.f32.mrb[0].mxu0
    %v5131 = vadd.f32 %v5088, %v5130
    %v5132 = vpop.f32.mrb[0].mxu0
    %v5133 = vadd.f32 %v5090, %v5132
    %v5134 = vpop.f32.mrb[0].mxu0
    %v5135 = vadd.f32 %v5092, %v5134
    %5136 = vdwg.mxu0
    %5137 = vmatprep.subr.bf16.mxu0 %v3749
    %5138 = vmatpush1.bf16.msra.mxu0 %v3748
    %5139 = vmatprep.subr.bf16.mxu0 %v3753
    %5140 = vmatpush1.bf16.msra.mxu0 %v3752
    %5141 = vmatprep.subr.bf16.mxu0 %v3757
    %5142 = vmatpush1.bf16.msra.mxu0 %v3756
    %5143 = vmatprep.subr.bf16.mxu0 %v3761
    %5144 = vmatpush1.bf16.msra.mxu0 %v3760
    %5145 = vmatprep.subr.bf16.mxu0 %v3765
    %5146 = vmatpush1.bf16.msra.mxu0 %v3764
    %5147 = vmatprep.subr.bf16.mxu0 %v3769
    %5148 = vmatpush1.bf16.msra.mxu0 %v3768
    %5149 = vmatprep.subr.bf16.mxu0 %v3773
    %5150 = vmatpush1.bf16.msra.mxu0 %v3772
    %5151 = vmatprep.subr.bf16.mxu0 %v3777
    %5152 = vmatpush1.bf16.msra.mxu0 %v3776
    %5153 = vmatprep.subr.bf16.mxu0 %v3781
    %5154 = vmatpush1.bf16.msra.mxu0 %v3780
    %5155 = vmatprep.subr.bf16.mxu0 %v3785
    %5156 = vmatpush1.bf16.msra.mxu0 %v3784
    %5157 = vmatprep.subr.bf16.mxu0 %v3789
    %5158 = vmatpush1.bf16.msra.mxu0 %v3788
    %5159 = vmatprep.subr.bf16.mxu0 %v3793
    %5160 = vmatpush1.bf16.msra.mxu0 %v3792
    %5161 = vmatprep.subr.bf16.mxu0 %v3797
    %5162 = vmatpush1.bf16.msra.mxu0 %v3796
    %5163 = vmatprep.subr.bf16.mxu0 %v3801
    %5164 = vmatpush1.bf16.msra.mxu0 %v3800
    %5165 = vmatprep.subr.bf16.mxu0 %v3805
    %5166 = vmatpush1.bf16.msra.mxu0 %v3804
    %5167 = vmatprep.subr.bf16.mxu0 %v3809
    %5168 = vmatpush1.bf16.msra.mxu0 %v3808
    %5169 = vmatprep.mubr.bf16.mxu0 %v197
    %5170 = vmatmul.mubr.bf16.gmra.mrb[0].mxu0 %v196
    %v5171 = vpop.f32.mrb[0].mxu0
    %v5172 = vadd.f32 %v5129, %v5171
    %v5173 = vpop.f32.mrb[0].mxu0
    %v5174 = vadd.f32 %v5131, %v5173
    %v5175 = vpop.f32.mrb[0].mxu0
    %v5176 = vadd.f32 %v5133, %v5175
    %v5177 = vpop.f32.mrb[0].mxu0
    %v5178 = vadd.f32 %v5135, %v5177
    %5179 = vdwg.mxu0
    %5180 = vmatprep.subr.bf16.mxu0 %v3813
    %5181 = vmatpush1.bf16.msra.mxu0 %v3812
    %5182 = vmatprep.subr.bf16.mxu0 %v3817
    %5183 = vmatpush1.bf16.msra.mxu0 %v3816
    %5184 = vmatprep.subr.bf16.mxu0 %v3821
    %5185 = vmatpush1.bf16.msra.mxu0 %v3820
    %5186 = vmatprep.subr.bf16.mxu0 %v3825
    %5187 = vmatpush1.bf16.msra.mxu0 %v3824
    %5188 = vmatprep.subr.bf16.mxu0 %v3829
    %5189 = vmatpush1.bf16.msra.mxu0 %v3828
    %5190 = vmatprep.subr.bf16.mxu0 %v3833
    %5191 = vmatpush1.bf16.msra.mxu0 %v3832
    %5192 = vmatprep.subr.bf16.mxu0 %v3837
    %5193 = vmatpush1.bf16.msra.mxu0 %v3836
    %5194 = vmatprep.subr.bf16.mxu0 %v3841
    %5195 = vmatpush1.bf16.msra.mxu0 %v3840
    %5196 = vmatprep.subr.bf16.mxu0 %v3845
    %5197 = vmatpush1.bf16.msra.mxu0 %v3844
    %5198 = vmatprep.subr.bf16.mxu0 %v3849
    %5199 = vmatpush1.bf16.msra.mxu0 %v3848
    %5200 = vmatprep.subr.bf16.mxu0 %v3853
    %5201 = vmatpush1.bf16.msra.mxu0 %v3852
    %5202 = vmatprep.subr.bf16.mxu0 %v3857
    %5203 = vmatpush1.bf16.msra.mxu0 %v3856
    %5204 = vmatprep.subr.bf16.mxu0 %v3861
    %5205 = vmatpush1.bf16.msra.mxu0 %v3860
    %5206 = vmatprep.subr.bf16.mxu0 %v3865
    %5207 = vmatpush1.bf16.msra.mxu0 %v3864
    %5208 = vmatprep.subr.bf16.mxu0 %v3869
    %5209 = vmatpush1.bf16.msra.mxu0 %v3868
    %5210 = vmatprep.subr.bf16.mxu0 %v3873
    %5211 = vmatpush1.bf16.msra.mxu0 %v3872
    %5212 = vmatprep.mubr.bf16.mxu0 %v199
    %5213 = vmatmul.mubr.bf16.gmra.mrb[0].mxu0 %v198
    %v5214 = vpop.f32.mrb[0].mxu0
    %v5215 = vadd.f32 %v5172, %v5214
    %v5216 = vpop.f32.mrb[0].mxu0
    %v5217 = vadd.f32 %v5174, %v5216
    %v5218 = vpop.f32.mrb[0].mxu0
    %v5219 = vadd.f32 %v5176, %v5218
    %v5220 = vpop.f32.mrb[0].mxu0
    %v5221 = vadd.f32 %v5178, %v5220
    %5222 = vdwg.mxu0
    %5223 = vmatprep.subr.bf16.mxu0 %v3877
    %5224 = vmatpush1.bf16.msra.mxu0 %v3876
    %5225 = vmatprep.subr.bf16.mxu0 %v3881
    %5226 = vmatpush1.bf16.msra.mxu0 %v3880
    %5227 = vmatprep.subr.bf16.mxu0 %v3885
    %5228 = vmatpush1.bf16.msra.mxu0 %v3884
    %5229 = vmatprep.subr.bf16.mxu0 %v3889
    %5230 = vmatpush1.bf16.msra.mxu0 %v3888
    %5231 = vmatprep.subr.bf16.mxu0 %v3893
    %5232 = vmatpush1.bf16.msra.mxu0 %v3892
    %5233 = vmatprep.subr.bf16.mxu0 %v3897
    %5234 = vmatpush1.bf16.msra.mxu0 %v3896
    %5235 = vmatprep.subr.bf16.mxu0 %v3901
    %5236 = vmatpush1.bf16.msra.mxu0 %v3900
    %5237 = vmatprep.subr.bf16.mxu0 %v3905
    %5238 = vmatpush1.bf16.msra.mxu0 %v3904
    %5239 = vmatprep.subr.bf16.mxu0 %v3909
    %5240 = vmatpush1.bf16.msra.mxu0 %v3908
    %5241 = vmatprep.subr.bf16.mxu0 %v3913
    %5242 = vmatpush1.bf16.msra.mxu0 %v3912
    %5243 = vmatprep.subr.bf16.mxu0 %v3917
    %5244 = vmatpush1.bf16.msra.mxu0 %v3916
    %5245 = vmatprep.subr.bf16.mxu0 %v3921
    %5246 = vmatpush1.bf16.msra.mxu0 %v3920
    %5247 = vmatprep.subr.bf16.mxu0 %v3925
    %5248 = vmatpush1.bf16.msra.mxu0 %v3924
    %5249 = vmatprep.subr.bf16.mxu0 %v3929
    %5250 = vmatpush1.bf16.msra.mxu0 %v3928
    %5251 = vmatprep.subr.bf16.mxu0 %v3933
    %5252 = vmatpush1.bf16.msra.mxu0 %v3932
    %5253 = vmatprep.subr.bf16.mxu0 %v3937
    %5254 = vmatpush1.bf16.msra.mxu0 %v3936
    %5255 = vmatprep.mubr.bf16.mxu0 %v201
    %5256 = vmatmul.mubr.bf16.gmra.mrb[0].mxu0 %v200
    %v5257 = vpop.f32.mrb[0].mxu0
    %v5258 = vadd.f32 %v5215, %v5257
    %v5259 = vpop.f32.mrb[0].mxu0
    %v5260 = vadd.f32 %v5217, %v5259
    %v5261 = vpop.f32.mrb[0].mxu0
    %v5262 = vadd.f32 %v5219, %v5261
    %v5263 = vpop.f32.mrb[0].mxu0
    %v5264 = vadd.f32 %v5221, %v5263
    %5265 = vdwg.mxu0
    %5266 = vmatprep.subr.bf16.mxu0 %v3941
    %5267 = vmatpush1.bf16.msra.mxu0 %v3940
    %5268 = vmatprep.subr.bf16.mxu0 %v3945
    %5269 = vmatpush1.bf16.msra.mxu0 %v3944
    %5270 = vmatprep.subr.bf16.mxu0 %v3949
    %5271 = vmatpush1.bf16.msra.mxu0 %v3948
    %5272 = vmatprep.subr.bf16.mxu0 %v3953
    %5273 = vmatpush1.bf16.msra.mxu0 %v3952
    %5274 = vmatprep.subr.bf16.mxu0 %v3957
    %5275 = vmatpush1.bf16.msra.mxu0 %v3956
    %5276 = vmatprep.subr.bf16.mxu0 %v3961
    %5277 = vmatpush1.bf16.msra.mxu0 %v3960
    %5278 = vmatprep.subr.bf16.mxu0 %v3965
    %5279 = vmatpush1.bf16.msra.mxu0 %v3964
    %5280 = vmatprep.subr.bf16.mxu0 %v3969
    %5281 = vmatpush1.bf16.msra.mxu0 %v3968
    %5282 = vmatprep.subr.bf16.mxu0 %v3973
    %5283 = vmatpush1.bf16.msra.mxu0 %v3972
    %5284 = vmatprep.subr.bf16.mxu0 %v3977
    %5285 = vmatpush1.bf16.msra.mxu0 %v3976
    %5286 = vmatprep.subr.bf16.mxu0 %v3981
    %5287 = vmatpush1.bf16.msra.mxu0 %v3980
    %5288 = vmatprep.subr.bf16.mxu0 %v3985
    %5289 = vmatpush1.bf16.msra.mxu0 %v3984
    %5290 = vmatprep.subr.bf16.mxu0 %v3989
    %5291 = vmatpush1.bf16.msra.mxu0 %v3988
    %5292 = vmatprep.subr.bf16.mxu0 %v3993
    %5293 = vmatpush1.bf16.msra.mxu0 %v3992
    %5294 = vmatprep.subr.bf16.mxu0 %v3997
    %5295 = vmatpush1.bf16.msra.mxu0 %v3996
    %5296 = vmatprep.subr.bf16.mxu0 %v4001
    %5297 = vmatpush1.bf16.msra.mxu0 %v4000
    %5298 = vmatprep.mubr.bf16.mxu0 %v203
    %5299 = vmatmul.mubr.bf16.gmra.mrb[0].mxu0 %v202
    %v5300 = vpop.f32.mrb[0].mxu0
    %v5301 = vadd.f32 %v5258, %v5300
    %v5302 = vpop.f32.mrb[0].mxu0
    %v5303 = vadd.f32 %v5260, %v5302
    %v5304 = vpop.f32.mrb[0].mxu0
    %v5305 = vadd.f32 %v5262, %v5304
    %v5306 = vpop.f32.mrb[0].mxu0
    %v5307 = vadd.f32 %v5264, %v5306
    %5308 = vdwg.mxu0
    %5309 = vmatprep.subr.bf16.mxu0 %v4005
    %5310 = vmatpush1.bf16.msra.mxu0 %v4004
    %5311 = vmatprep.subr.bf16.mxu0 %v4009
    %5312 = vmatpush1.bf16.msra.mxu0 %v4008
    %5313 = vmatprep.subr.bf16.mxu0 %v4013
    %5314 = vmatpush1.bf16.msra.mxu0 %v4012
    %5315 = vmatprep.subr.bf16.mxu0 %v4017
    %5316 = vmatpush1.bf16.msra.mxu0 %v4016
    %5317 = vmatprep.subr.bf16.mxu0 %v4021
    %5318 = vmatpush1.bf16.msra.mxu0 %v4020
    %5319 = vmatprep.subr.bf16.mxu0 %v4025
    %5320 = vmatpush1.bf16.msra.mxu0 %v4024
    %5321 = vmatprep.subr.bf16.mxu0 %v4029
    %5322 = vmatpush1.bf16.msra.mxu0 %v4028
    %5323 = vmatprep.subr.bf16.mxu0 %v4033
    %5324 = vmatpush1.bf16.msra.mxu0 %v4032
    %5325 = vmatprep.subr.bf16.mxu0 %v4037
    %5326 = vmatpush1.bf16.msra.mxu0 %v4036
    %5327 = vmatprep.subr.bf16.mxu0 %v4041
    %5328 = vmatpush1.bf16.msra.mxu0 %v4040
    %5329 = vmatprep.subr.bf16.mxu0 %v4045
    %5330 = vmatpush1.bf16.msra.mxu0 %v4044
    %5331 = vmatprep.subr.bf16.mxu0 %v4049
    %5332 = vmatpush1.bf16.msra.mxu0 %v4048
    %5333 = vmatprep.subr.bf16.mxu0 %v4053
    %5334 = vmatpush1.bf16.msra.mxu0 %v4052
    %5335 = vmatprep.subr.bf16.mxu0 %v4057
    %5336 = vmatpush1.bf16.msra.mxu0 %v4056
    %5337 = vmatprep.subr.bf16.mxu0 %v4061
    %5338 = vmatpush1.bf16.msra.mxu0 %v4060
    %5339 = vmatprep.subr.bf16.mxu0 %v4065
    %5340 = vmatpush1.bf16.msra.mxu0 %v4064
    %5341 = vmatprep.mubr.bf16.mxu0 %v205
    %5342 = vmatmul.mubr.bf16.gmra.mrb[0].mxu0 %v204
    %v5343 = vpop.f32.mrb[0].mxu0
    %v5344 = vadd.f32 %v5301, %v5343
    %v5345 = vpop.f32.mrb[0].mxu0
    %v5346 = vadd.f32 %v5303, %v5345
    %v5347 = vpop.f32.mrb[0].mxu0
    %v5348 = vadd.f32 %v5305, %v5347
    %v5349 = vpop.f32.mrb[0].mxu0
    %v5350 = vadd.f32 %v5307, %v5349
    %5351 = vdwg.mxu0
    %5352 = vmatprep.subr.bf16.mxu0 %v3303
    %5353 = vmatpush1.bf16.msra.mxu0 %v3302
    %5354 = vmatprep.subr.bf16.mxu0 %v3307
    %5355 = vmatpush1.bf16.msra.mxu0 %v3306
    %5356 = vmatprep.subr.bf16.mxu0 %v3311
    %5357 = vmatpush1.bf16.msra.mxu0 %v3310
    %5358 = vmatprep.subr.bf16.mxu0 %v3315
    %5359 = vmatpush1.bf16.msra.mxu0 %v3314
    %5360 = vmatprep.subr.bf16.mxu0 %v3319
    %5361 = vmatpush1.bf16.msra.mxu0 %v3318
    %5362 = vmatprep.subr.bf16.mxu0 %v3323
    %5363 = vmatpush1.bf16.msra.mxu0 %v3322
    %5364 = vmatprep.subr.bf16.mxu0 %v3327
    %5365 = vmatpush1.bf16.msra.mxu0 %v3326
    %5366 = vmatprep.subr.bf16.mxu0 %v3331
    %5367 = vmatpush1.bf16.msra.mxu0 %v3330
    %5368 = vmatprep.subr.bf16.mxu0 %v3335
    %5369 = vmatpush1.bf16.msra.mxu0 %v3334
    %5370 = vmatprep.subr.bf16.mxu0 %v3339
    %5371 = vmatpush1.bf16.msra.mxu0 %v3338
    %5372 = vmatprep.subr.bf16.mxu0 %v3343
    %5373 = vmatpush1.bf16.msra.mxu0 %v3342
    %5374 = vmatprep.subr.bf16.mxu0 %v3347
    %5375 = vmatpush1.bf16.msra.mxu0 %v3346
    %5376 = vmatprep.subr.bf16.mxu0 %v3351
    %5377 = vmatpush1.bf16.msra.mxu0 %v3350
    %5378 = vmatprep.subr.bf16.mxu0 %v3355
    %5379 = vmatpush1.bf16.msra.mxu0 %v3354
    %5380 = vmatprep.subr.bf16.mxu0 %v3359
    %5381 = vmatpush1.bf16.msra.mxu0 %v3358
    %5382 = vmatprep.subr.bf16.mxu0 %v3363
    %5383 = vmatpush1.bf16.msra.mxu0 %v3362
    %5384 = vmatprep.mubr.bf16.mxu0 %v183
    %5385 = vmatmul.mubr.bf16.gmra.mrb[0].mxu0 %v182
    %v5386 = vpop.f32.mrb[0].mxu0
    %v5387 = vadd.f32 %v987, %v5386
    %v5388 = vpop.f32.mrb[0].mxu0
    %v5389 = vadd.f32 %v991, %v5388
    %v5390 = vpop.f32.mrb[0].mxu0
    %v5391 = vadd.f32 %v987, %v5390
    %v5392 = vpop.f32.mrb[0].mxu0
    %v5393 = vadd.f32 %v991, %v5392
    %5394 = vdwg.mxu0
    %5395 = vmatprep.subr.bf16.mxu0 %v3367
    %5396 = vmatpush1.bf16.msra.mxu0 %v3366
    %5397 = vmatprep.subr.bf16.mxu0 %v3371
    %5398 = vmatpush1.bf16.msra.mxu0 %v3370
    %5399 = vmatprep.subr.bf16.mxu0 %v3375
    %5400 = vmatpush1.bf16.msra.mxu0 %v3374
    %5401 = vmatprep.subr.bf16.mxu0 %v3379
    %5402 = vmatpush1.bf16.msra.mxu0 %v3378
    %5403 = vmatprep.subr.bf16.mxu0 %v3383
    %5404 = vmatpush1.bf16.msra.mxu0 %v3382
    %5405 = vmatprep.subr.bf16.mxu0 %v3387
    %5406 = vmatpush1.bf16.msra.mxu0 %v3386
    %5407 = vmatprep.subr.bf16.mxu0 %v3391
    %5408 = vmatpush1.bf16.msra.mxu0 %v3390
    %5409 = vmatprep.subr.bf16.mxu0 %v3395
    %5410 = vmatpush1.bf16.msra.mxu0 %v3394
    %5411 = vmatprep.subr.bf16.mxu0 %v3399
    %5412 = vmatpush1.bf16.msra.mxu0 %v3398
    %5413 = vmatprep.subr.bf16.mxu0 %v3403
    %5414 = vmatpush1.bf16.msra.mxu0 %v3402
    %5415 = vmatprep.subr.bf16.mxu0 %v3407
    %5416 = vmatpush1.bf16.msra.mxu0 %v3406
    %5417 = vmatprep.subr.bf16.mxu0 %v3411
    %5418 = vmatpush1.bf16.msra.mxu0 %v3410
    %5419 = vmatprep.subr.bf16.mxu0 %v3415
    %5420 = vmatpush1.bf16.msra.mxu0 %v3414
    %5421 = vmatprep.subr.bf16.mxu0 %v3419
    %5422 = vmatpush1.bf16.msra.mxu0 %v3418
    %5423 = vmatprep.subr.bf16.mxu0 %v3423
    %5424 = vmatpush1.bf16.msra.mxu0 %v3422
    %5425 = vmatprep.subr.bf16.mxu0 %v3427
    %5426 = vmatpush1.bf16.msra.mxu0 %v3426
    %5427 = vmatprep.mubr.bf16.mxu0 %v185
    %5428 = vmatmul.mubr.bf16.gmra.mrb[0].mxu0 %v184
    %v5429 = vpop.f32.mrb[0].mxu0
    %v5430 = vadd.f32 %v5387, %v5429
    %v5431 = vpop.f32.mrb[0].mxu0
    %v5432 = vadd.f32 %v5389, %v5431
    %v5433 = vpop.f32.mrb[0].mxu0
    %v5434 = vadd.f32 %v5391, %v5433
    %v5435 = vpop.f32.mrb[0].mxu0
    %v5436 = vadd.f32 %v5393, %v5435
    %5437 = vdwg.mxu0
    %5438 = vmatprep.subr.bf16.mxu0 %v3431
    %5439 = vmatpush1.bf16.msra.mxu0 %v3430
    %5440 = vmatprep.subr.bf16.mxu0 %v3435
    %5441 = vmatpush1.bf16.msra.mxu0 %v3434
    %5442 = vmatprep.subr.bf16.mxu0 %v3439
    %5443 = vmatpush1.bf16.msra.mxu0 %v3438
    %5444 = vmatprep.subr.bf16.mxu0 %v3443
    %5445 = vmatpush1.bf16.msra.mxu0 %v3442
    %5446 = vmatprep.subr.bf16.mxu0 %v3447
    %5447 = vmatpush1.bf16.msra.mxu0 %v3446
    %5448 = vmatprep.subr.bf16.mxu0 %v3451
    %5449 = vmatpush1.bf16.msra.mxu0 %v3450
    %5450 = vmatprep.subr.bf16.mxu0 %v3455
    %5451 = vmatpush1.bf16.msra.mxu0 %v3454
    %5452 = vmatprep.subr.bf16.mxu0 %v3459
    %5453 = vmatpush1.bf16.msra.mxu0 %v3458
    %5454 = vmatprep.subr.bf16.mxu0 %v3463
    %5455 = vmatpush1.bf16.msra.mxu0 %v3462
    %5456 = vmatprep.subr.bf16.mxu0 %v3467
    %5457 = vmatpush1.bf16.msra.mxu0 %v3466
    %5458 = vmatprep.subr.bf16.mxu0 %v3471
    %5459 = vmatpush1.bf16.msra.mxu0 %v3470
    %5460 = vmatprep.subr.bf16.mxu0 %v3475
    %5461 = vmatpush1.bf16.msra.mxu0 %v3474
    %5462 = vmatprep.subr.bf16.mxu0 %v3479
    %5463 = vmatpush1.bf16.msra.mxu0 %v3478
    %5464 = vmatprep.subr.bf16.mxu0 %v3483
    %5465 = vmatpush1.bf16.msra.mxu0 %v3482
    %5466 = vmatprep.subr.bf16.mxu0 %v3487
    %5467 = vmatpush1.bf16.msra.mxu0 %v3486
    %5468 = vmatprep.subr.bf16.mxu0 %v3491
    %5469 = vmatpush1.bf16.msra.mxu0 %v3490
    %5470 = vmatprep.mubr.bf16.mxu0 %v187
    %5471 = vmatmul.mubr.bf16.gmra.mrb[0].mxu0 %v186
    %v5472 = vpop.f32.mrb[0].mxu0
    %v5473 = vadd.f32 %v5430, %v5472
    %v5474 = vpop.f32.mrb[0].mxu0
    %v5475 = vadd.f32 %v5432, %v5474
    %v5476 = vpop.f32.mrb[0].mxu0
    %v5477 = vadd.f32 %v5434, %v5476
    %v5478 = vpop.f32.mrb[0].mxu0
    %v5479 = vadd.f32 %v5436, %v5478
    %5480 = vdwg.mxu0
    %5481 = vmatprep.subr.bf16.mxu0 %v3495
    %5482 = vmatpush1.bf16.msra.mxu0 %v3494
    %5483 = vmatprep.subr.bf16.mxu0 %v3499
    %5484 = vmatpush1.bf16.msra.mxu0 %v3498
    %5485 = vmatprep.subr.bf16.mxu0 %v3503
    %5486 = vmatpush1.bf16.msra.mxu0 %v3502
    %5487 = vmatprep.subr.bf16.mxu0 %v3507
    %5488 = vmatpush1.bf16.msra.mxu0 %v3506
    %5489 = vmatprep.subr.bf16.mxu0 %v3511
    %5490 = vmatpush1.bf16.msra.mxu0 %v3510
    %5491 = vmatprep.subr.bf16.mxu0 %v3515
    %5492 = vmatpush1.bf16.msra.mxu0 %v3514
    %5493 = vmatprep.subr.bf16.mxu0 %v3519
    %5494 = vmatpush1.bf16.msra.mxu0 %v3518
    %5495 = vmatprep.subr.bf16.mxu0 %v3523
    %5496 = vmatpush1.bf16.msra.mxu0 %v3522
    %5497 = vmatprep.subr.bf16.mxu0 %v3527
    %5498 = vmatpush1.bf16.msra.mxu0 %v3526
    %5499 = vmatprep.subr.bf16.mxu0 %v3531
    %5500 = vmatpush1.bf16.msra.mxu0 %v3530
    %5501 = vmatprep.subr.bf16.mxu0 %v3535
    %5502 = vmatpush1.bf16.msra.mxu0 %v3534
    %5503 = vmatprep.subr.bf16.mxu0 %v3539
    %5504 = vmatpush1.bf16.msra.mxu0 %v3538
    %5505 = vmatprep.subr.bf16.mxu0 %v3543
    %5506 = vmatpush1.bf16.msra.mxu0 %v3542
    %5507 = vmatprep.subr.bf16.mxu0 %v3547
    %5508 = vmatpush1.bf16.msra.mxu0 %v3546
    %5509 = vmatprep.subr.bf16.mxu0 %v3551
    %5510 = vmatpush1.bf16.msra.mxu0 %v3550
    %5511 = vmatprep.subr.bf16.mxu0 %v3555
    %5512 = vmatpush1.bf16.msra.mxu0 %v3554
    %5513 = vmatprep.mubr.bf16.mxu0 %v189
    %5514 = vmatmul.mubr.bf16.gmra.mrb[0].mxu0 %v188
    %v5515 = vpop.f32.mrb[0].mxu0
    %v5516 = vadd.f32 %v5473, %v5515
    %v5517 = vpop.f32.mrb[0].mxu0
    %v5518 = vadd.f32 %v5475, %v5517
    %v5519 = vpop.f32.mrb[0].mxu0
    %v5520 = vadd.f32 %v5477, %v5519
    %v5521 = vpop.f32.mrb[0].mxu0
    %v5522 = vadd.f32 %v5479, %v5521
    %5523 = vdwg.mxu0
    %5524 = vmatprep.subr.bf16.mxu0 %v3559
    %5525 = vmatpush1.bf16.msra.mxu0 %v3558
    %5526 = vmatprep.subr.bf16.mxu0 %v3563
    %5527 = vmatpush1.bf16.msra.mxu0 %v3562
    %5528 = vmatprep.subr.bf16.mxu0 %v3567
    %5529 = vmatpush1.bf16.msra.mxu0 %v3566
    %5530 = vmatprep.subr.bf16.mxu0 %v3571
    %5531 = vmatpush1.bf16.msra.mxu0 %v3570
    %5532 = vmatprep.subr.bf16.mxu0 %v3575
    %5533 = vmatpush1.bf16.msra.mxu0 %v3574
    %5534 = vmatprep.subr.bf16.mxu0 %v3579
    %5535 = vmatpush1.bf16.msra.mxu0 %v3578
    %5536 = vmatprep.subr.bf16.mxu0 %v3583
    %5537 = vmatpush1.bf16.msra.mxu0 %v3582
    %5538 = vmatprep.subr.bf16.mxu0 %v3587
    %5539 = vmatpush1.bf16.msra.mxu0 %v3586
    %5540 = vmatprep.subr.bf16.mxu0 %v3591
    %5541 = vmatpush1.bf16.msra.mxu0 %v3590
    %5542 = vmatprep.subr.bf16.mxu0 %v3595
    %5543 = vmatpush1.bf16.msra.mxu0 %v3594
    %5544 = vmatprep.subr.bf16.mxu0 %v3599
    %5545 = vmatpush1.bf16.msra.mxu0 %v3598
    %5546 = vmatprep.subr.bf16.mxu0 %v3603
    %5547 = vmatpush1.bf16.msra.mxu0 %v3602
    %5548 = vmatprep.subr.bf16.mxu0 %v3607
    %5549 = vmatpush1.bf16.msra.mxu0 %v3606
    %5550 = vmatprep.subr.bf16.mxu0 %v3611
    %5551 = vmatpush1.bf16.msra.mxu0 %v3610
    %5552 = vmatprep.subr.bf16.mxu0 %v3615
    %5553 = vmatpush1.bf16.msra.mxu0 %v3614
    %5554 = vmatprep.subr.bf16.mxu0 %v3619
    %5555 = vmatpush1.bf16.msra.mxu0 %v3618
    %5556 = vmatprep.mubr.bf16.mxu0 %v191
    %5557 = vmatmul.mubr.bf16.gmra.mrb[0].mxu0 %v190
    %v5558 = vpop.f32.mrb[0].mxu0
    %v5559 = vadd.f32 %v5516, %v5558
    %v5560 = vpop.f32.mrb[0].mxu0
    %v5561 = vadd.f32 %v5518, %v5560
    %v5562 = vpop.f32.mrb[0].mxu0
    %v5563 = vadd.f32 %v5520, %v5562
    %v5564 = vpop.f32.mrb[0].mxu0
    %v5565 = vadd.f32 %v5522, %v5564
    %5566 = vdwg.mxu0
    %5567 = vmatprep.subr.bf16.mxu0 %v3623
    %5568 = vmatpush1.bf16.msra.mxu0 %v3622
    %5569 = vmatprep.subr.bf16.mxu0 %v3627
    %5570 = vmatpush1.bf16.msra.mxu0 %v3626
    %5571 = vmatprep.subr.bf16.mxu0 %v3631
    %5572 = vmatpush1.bf16.msra.mxu0 %v3630
    %5573 = vmatprep.subr.bf16.mxu0 %v3635
    %5574 = vmatpush1.bf16.msra.mxu0 %v3634
    %5575 = vmatprep.subr.bf16.mxu0 %v3639
    %5576 = vmatpush1.bf16.msra.mxu0 %v3638
    %5577 = vmatprep.subr.bf16.mxu0 %v3643
    %5578 = vmatpush1.bf16.msra.mxu0 %v3642
    %5579 = vmatprep.subr.bf16.mxu0 %v3647
    %5580 = vmatpush1.bf16.msra.mxu0 %v3646
    %5581 = vmatprep.subr.bf16.mxu0 %v3651
    %5582 = vmatpush1.bf16.msra.mxu0 %v3650
    %5583 = vmatprep.subr.bf16.mxu0 %v3655
    %5584 = vmatpush1.bf16.msra.mxu0 %v3654
    %5585 = vmatprep.subr.bf16.mxu0 %v3659
    %5586 = vmatpush1.bf16.msra.mxu0 %v3658
    %5587 = vmatprep.subr.bf16.mxu0 %v3663
    %5588 = vmatpush1.bf16.msra.mxu0 %v3662
    %5589 = vmatprep.subr.bf16.mxu0 %v3667
    %5590 = vmatpush1.bf16.msra.mxu0 %v3666
    %5591 = vmatprep.subr.bf16.mxu0 %v3671
    %5592 = vmatpush1.bf16.msra.mxu0 %v3670
    %5593 = vmatprep.subr.bf16.mxu0 %v3675
    %5594 = vmatpush1.bf16.msra.mxu0 %v3674
    %5595 = vmatprep.subr.bf16.mxu0 %v3679
    %5596 = vmatpush1.bf16.msra.mxu0 %v3678
    %5597 = vmatprep.subr.bf16.mxu0 %v3683
    %5598 = vmatpush1.bf16.msra.mxu0 %v3682
    %5599 = vmatprep.mubr.bf16.mxu0 %v193
    %5600 = vmatmul.mubr.bf16.gmra.mrb[0].mxu0 %v192
    %v5601 = vpop.f32.mrb[0].mxu0
    %v5602 = vadd.f32 %v5559, %v5601
    %v5603 = vpop.f32.mrb[0].mxu0
    %v5604 = vadd.f32 %v5561, %v5603
    %v5605 = vpop.f32.mrb[0].mxu0
    %v5606 = vadd.f32 %v5563, %v5605
    %v5607 = vpop.f32.mrb[0].mxu0
    %v5608 = vadd.f32 %v5565, %v5607
    %5609 = vdwg.mxu0
    %5610 = vmatprep.subr.bf16.mxu0 %v3687
    %5611 = vmatpush1.bf16.msra.mxu0 %v3686
    %5612 = vmatprep.subr.bf16.mxu0 %v3691
    %5613 = vmatpush1.bf16.msra.mxu0 %v3690
    %5614 = vmatprep.subr.bf16.mxu0 %v3695
    %5615 = vmatpush1.bf16.msra.mxu0 %v3694
    %5616 = vmatprep.subr.bf16.mxu0 %v3699
    %5617 = vmatpush1.bf16.msra.mxu0 %v3698
    %5618 = vmatprep.subr.bf16.mxu0 %v3703
    %5619 = vmatpush1.bf16.msra.mxu0 %v3702
    %5620 = vmatprep.subr.bf16.mxu0 %v3707
    %5621 = vmatpush1.bf16.msra.mxu0 %v3706
    %5622 = vmatprep.subr.bf16.mxu0 %v3711
    %5623 = vmatpush1.bf16.msra.mxu0 %v3710
    %5624 = vmatprep.subr.bf16.mxu0 %v3715
    %5625 = vmatpush1.bf16.msra.mxu0 %v3714
    %5626 = vmatprep.subr.bf16.mxu0 %v3719
    %5627 = vmatpush1.bf16.msra.mxu0 %v3718
    %5628 = vmatprep.subr.bf16.mxu0 %v3723
    %5629 = vmatpush1.bf16.msra.mxu0 %v3722
    %5630 = vmatprep.subr.bf16.mxu0 %v3727
    %5631 = vmatpush1.bf16.msra.mxu0 %v3726
    %5632 = vmatprep.subr.bf16.mxu0 %v3731
    %5633 = vmatpush1.bf16.msra.mxu0 %v3730
    %5634 = vmatprep.subr.bf16.mxu0 %v3735
    %5635 = vmatpush1.bf16.msra.mxu0 %v3734
    %5636 = vmatprep.subr.bf16.mxu0 %v3739
    %5637 = vmatpush1.bf16.msra.mxu0 %v3738
    %5638 = vmatprep.subr.bf16.mxu0 %v3743
    %5639 = vmatpush1.bf16.msra.mxu0 %v3742
    %5640 = vmatprep.subr.bf16.mxu0 %v3747
    %5641 = vmatpush1.bf16.msra.mxu0 %v3746
    %5642 = vmatprep.mubr.bf16.mxu0 %v195
    %5643 = vmatmul.mubr.bf16.gmra.mrb[0].mxu0 %v194
    %v5644 = vpop.f32.mrb[0].mxu0
    %v5645 = vadd.f32 %v5602, %v5644
    %v5646 = vpop.f32.mrb[0].mxu0
    %v5647 = vadd.f32 %v5604, %v5646
    %v5648 = vpop.f32.mrb[0].mxu0
    %v5649 = vadd.f32 %v5606, %v5648
    %v5650 = vpop.f32.mrb[0].mxu0
    %v5651 = vadd.f32 %v5608, %v5650
    %5652 = vdwg.mxu0
    %5653 = vmatprep.subr.bf16.mxu0 %v3751
    %5654 = vmatpush1.bf16.msra.mxu0 %v3750
    %5655 = vmatprep.subr.bf16.mxu0 %v3755
    %5656 = vmatpush1.bf16.msra.mxu0 %v3754
    %5657 = vmatprep.subr.bf16.mxu0 %v3759
    %5658 = vmatpush1.bf16.msra.mxu0 %v3758
    %5659 = vmatprep.subr.bf16.mxu0 %v3763
    %5660 = vmatpush1.bf16.msra.mxu0 %v3762
    %5661 = vmatprep.subr.bf16.mxu0 %v3767
    %5662 = vmatpush1.bf16.msra.mxu0 %v3766
    %5663 = vmatprep.subr.bf16.mxu0 %v3771
    %5664 = vmatpush1.bf16.msra.mxu0 %v3770
    %5665 = vmatprep.subr.bf16.mxu0 %v3775
    %5666 = vmatpush1.bf16.msra.mxu0 %v3774
    %5667 = vmatprep.subr.bf16.mxu0 %v3779
    %5668 = vmatpush1.bf16.msra.mxu0 %v3778
    %5669 = vmatprep.subr.bf16.mxu0 %v3783
    %5670 = vmatpush1.bf16.msra.mxu0 %v3782
    %5671 = vmatprep.subr.bf16.mxu0 %v3787
    %5672 = vmatpush1.bf16.msra.mxu0 %v3786
    %5673 = vmatprep.subr.bf16.mxu0 %v3791
    %5674 = vmatpush1.bf16.msra.mxu0 %v3790
    %5675 = vmatprep.subr.bf16.mxu0 %v3795
    %5676 = vmatpush1.bf16.msra.mxu0 %v3794
    %5677 = vmatprep.subr.bf16.mxu0 %v3799
    %5678 = vmatpush1.bf16.msra.mxu0 %v3798
    %5679 = vmatprep.subr.bf16.mxu0 %v3803
    %5680 = vmatpush1.bf16.msra.mxu0 %v3802
    %5681 = vmatprep.subr.bf16.mxu0 %v3807
    %5682 = vmatpush1.bf16.msra.mxu0 %v3806
    %5683 = vmatprep.subr.bf16.mxu0 %v3811
    %5684 = vmatpush1.bf16.msra.mxu0 %v3810
    %5685 = vmatprep.mubr.bf16.mxu0 %v197
    %5686 = vmatmul.mubr.bf16.gmra.mrb[0].mxu0 %v196
    %v5687 = vpop.f32.mrb[0].mxu0
    %v5688 = vadd.f32 %v5645, %v5687
    %v5689 = vpop.f32.mrb[0].mxu0
    %v5690 = vadd.f32 %v5647, %v5689
    %v5691 = vpop.f32.mrb[0].mxu0
    %v5692 = vadd.f32 %v5649, %v5691
    %v5693 = vpop.f32.mrb[0].mxu0
    %v5694 = vadd.f32 %v5651, %v5693
    %5695 = vdwg.mxu0
    %5696 = vmatprep.subr.bf16.mxu0 %v3815
    %5697 = vmatpush1.bf16.msra.mxu0 %v3814
    %5698 = vmatprep.subr.bf16.mxu0 %v3819
    %5699 = vmatpush1.bf16.msra.mxu0 %v3818
    %5700 = vmatprep.subr.bf16.mxu0 %v3823
    %5701 = vmatpush1.bf16.msra.mxu0 %v3822
    %5702 = vmatprep.subr.bf16.mxu0 %v3827
    %5703 = vmatpush1.bf16.msra.mxu0 %v3826
    %5704 = vmatprep.subr.bf16.mxu0 %v3831
    %5705 = vmatpush1.bf16.msra.mxu0 %v3830
    %5706 = vmatprep.subr.bf16.mxu0 %v3835
    %5707 = vmatpush1.bf16.msra.mxu0 %v3834
    %5708 = vmatprep.subr.bf16.mxu0 %v3839
    %5709 = vmatpush1.bf16.msra.mxu0 %v3838
    %5710 = vmatprep.subr.bf16.mxu0 %v3843
    %5711 = vmatpush1.bf16.msra.mxu0 %v3842
    %5712 = vmatprep.subr.bf16.mxu0 %v3847
    %5713 = vmatpush1.bf16.msra.mxu0 %v3846
    %5714 = vmatprep.subr.bf16.mxu0 %v3851
    %5715 = vmatpush1.bf16.msra.mxu0 %v3850
    %5716 = vmatprep.subr.bf16.mxu0 %v3855
    %5717 = vmatpush1.bf16.msra.mxu0 %v3854
    %5718 = vmatprep.subr.bf16.mxu0 %v3859
    %5719 = vmatpush1.bf16.msra.mxu0 %v3858
    %5720 = vmatprep.subr.bf16.mxu0 %v3863
    %5721 = vmatpush1.bf16.msra.mxu0 %v3862
    %5722 = vmatprep.subr.bf16.mxu0 %v3867
    %5723 = vmatpush1.bf16.msra.mxu0 %v3866
    %5724 = vmatprep.subr.bf16.mxu0 %v3871
    %5725 = vmatpush1.bf16.msra.mxu0 %v3870
    %5726 = vmatprep.subr.bf16.mxu0 %v3875
    %5727 = vmatpush1.bf16.msra.mxu0 %v3874
    %5728 = vmatprep.mubr.bf16.mxu0 %v199
    %5729 = vmatmul.mubr.bf16.gmra.mrb[0].mxu0 %v198
    %v5730 = vpop.f32.mrb[0].mxu0
    %v5731 = vadd.f32 %v5688, %v5730
    %v5732 = vpop.f32.mrb[0].mxu0
    %v5733 = vadd.f32 %v5690, %v5732
    %v5734 = vpop.f32.mrb[0].mxu0
    %v5735 = vadd.f32 %v5692, %v5734
    %v5736 = vpop.f32.mrb[0].mxu0
    %v5737 = vadd.f32 %v5694, %v5736
    %5738 = vdwg.mxu0
    %5739 = vmatprep.subr.bf16.mxu0 %v3879
    %5740 = vmatpush1.bf16.msra.mxu0 %v3878
    %5741 = vmatprep.subr.bf16.mxu0 %v3883
    %5742 = vmatpush1.bf16.msra.mxu0 %v3882
    %5743 = vmatprep.subr.bf16.mxu0 %v3887
    %5744 = vmatpush1.bf16.msra.mxu0 %v3886
    %5745 = vmatprep.subr.bf16.mxu0 %v3891
    %5746 = vmatpush1.bf16.msra.mxu0 %v3890
    %5747 = vmatprep.subr.bf16.mxu0 %v3895
    %5748 = vmatpush1.bf16.msra.mxu0 %v3894
    %5749 = vmatprep.subr.bf16.mxu0 %v3899
    %5750 = vmatpush1.bf16.msra.mxu0 %v3898
    %5751 = vmatprep.subr.bf16.mxu0 %v3903
    %5752 = vmatpush1.bf16.msra.mxu0 %v3902
    %5753 = vmatprep.subr.bf16.mxu0 %v3907
    %5754 = vmatpush1.bf16.msra.mxu0 %v3906
    %5755 = vmatprep.subr.bf16.mxu0 %v3911
    %5756 = vmatpush1.bf16.msra.mxu0 %v3910
    %5757 = vmatprep.subr.bf16.mxu0 %v3915
    %5758 = vmatpush1.bf16.msra.mxu0 %v3914
    %5759 = vmatprep.subr.bf16.mxu0 %v3919
    %5760 = vmatpush1.bf16.msra.mxu0 %v3918
    %5761 = vmatprep.subr.bf16.mxu0 %v3923
    %5762 = vmatpush1.bf16.msra.mxu0 %v3922
    %5763 = vmatprep.subr.bf16.mxu0 %v3927
    %5764 = vmatpush1.bf16.msra.mxu0 %v3926
    %5765 = vmatprep.subr.bf16.mxu0 %v3931
    %5766 = vmatpush1.bf16.msra.mxu0 %v3930
    %5767 = vmatprep.subr.bf16.mxu0 %v3935
    %5768 = vmatpush1.bf16.msra.mxu0 %v3934
    %5769 = vmatprep.subr.bf16.mxu0 %v3939
    %5770 = vmatpush1.bf16.msra.mxu0 %v3938
    %5771 = vmatprep.mubr.bf16.mxu0 %v201
    %5772 = vmatmul.mubr.bf16.gmra.mrb[0].mxu0 %v200
    %v5773 = vpop.f32.mrb[0].mxu0
    %v5774 = vadd.f32 %v5731, %v5773
    %v5775 = vpop.f32.mrb[0].mxu0
    %v5776 = vadd.f32 %v5733, %v5775
    %v5777 = vpop.f32.mrb[0].mxu0
    %v5778 = vadd.f32 %v5735, %v5777
    %v5779 = vpop.f32.mrb[0].mxu0
    %v5780 = vadd.f32 %v5737, %v5779
    %5781 = vdwg.mxu0
    %5782 = vmatprep.subr.bf16.mxu0 %v3943
    %5783 = vmatpush1.bf16.msra.mxu0 %v3942
    %5784 = vmatprep.subr.bf16.mxu0 %v3947
    %5785 = vmatpush1.bf16.msra.mxu0 %v3946
    %5786 = vmatprep.subr.bf16.mxu0 %v3951
    %5787 = vmatpush1.bf16.msra.mxu0 %v3950
    %5788 = vmatprep.subr.bf16.mxu0 %v3955
    %5789 = vmatpush1.bf16.msra.mxu0 %v3954
    %5790 = vmatprep.subr.bf16.mxu0 %v3959
    %5791 = vmatpush1.bf16.msra.mxu0 %v3958
    %5792 = vmatprep.subr.bf16.mxu0 %v3963
    %5793 = vmatpush1.bf16.msra.mxu0 %v3962
    %5794 = vmatprep.subr.bf16.mxu0 %v3967
    %5795 = vmatpush1.bf16.msra.mxu0 %v3966
    %5796 = vmatprep.subr.bf16.mxu0 %v3971
    %5797 = vmatpush1.bf16.msra.mxu0 %v3970
    %5798 = vmatprep.subr.bf16.mxu0 %v3975
    %5799 = vmatpush1.bf16.msra.mxu0 %v3974
    %5800 = vmatprep.subr.bf16.mxu0 %v3979
    %5801 = vmatpush1.bf16.msra.mxu0 %v3978
    %5802 = vmatprep.subr.bf16.mxu0 %v3983
    %5803 = vmatpush1.bf16.msra.mxu0 %v3982
    %5804 = vmatprep.subr.bf16.mxu0 %v3987
    %5805 = vmatpush1.bf16.msra.mxu0 %v3986
    %5806 = vmatprep.subr.bf16.mxu0 %v3991
    %5807 = vmatpush1.bf16.msra.mxu0 %v3990
    %5808 = vmatprep.subr.bf16.mxu0 %v3995
    %5809 = vmatpush1.bf16.msra.mxu0 %v3994
    %5810 = vmatprep.subr.bf16.mxu0 %v3999
    %5811 = vmatpush1.bf16.msra.mxu0 %v3998
    %5812 = vmatprep.subr.bf16.mxu0 %v4003
    %5813 = vmatpush1.bf16.msra.mxu0 %v4002
    %5814 = vmatprep.mubr.bf16.mxu0 %v203
    %5815 = vmatmul.mubr.bf16.gmra.mrb[0].mxu0 %v202
    %v5816 = vpop.f32.mrb[0].mxu0
    %v5817 = vadd.f32 %v5774, %v5816
    %v5818 = vpop.f32.mrb[0].mxu0
    %v5819 = vadd.f32 %v5776, %v5818
    %v5820 = vpop.f32.mrb[0].mxu0
    %v5821 = vadd.f32 %v5778, %v5820
    %v5822 = vpop.f32.mrb[0].mxu0
    %v5823 = vadd.f32 %v5780, %v5822
    %5824 = vdwg.mxu0
    %5825 = vmatprep.subr.bf16.mxu0 %v4007
    %5826 = vmatpush1.bf16.msra.mxu0 %v4006
    %5827 = vmatprep.subr.bf16.mxu0 %v4011
    %5828 = vmatpush1.bf16.msra.mxu0 %v4010
    %5829 = vmatprep.subr.bf16.mxu0 %v4015
    %5830 = vmatpush1.bf16.msra.mxu0 %v4014
    %5831 = vmatprep.subr.bf16.mxu0 %v4019
    %5832 = vmatpush1.bf16.msra.mxu0 %v4018
    %5833 = vmatprep.subr.bf16.mxu0 %v4023
    %5834 = vmatpush1.bf16.msra.mxu0 %v4022
    %5835 = vmatprep.subr.bf16.mxu0 %v4027
    %5836 = vmatpush1.bf16.msra.mxu0 %v4026
    %5837 = vmatprep.subr.bf16.mxu0 %v4031
    %5838 = vmatpush1.bf16.msra.mxu0 %v4030
    %5839 = vmatprep.subr.bf16.mxu0 %v4035
    %5840 = vmatpush1.bf16.msra.mxu0 %v4034
    %5841 = vmatprep.subr.bf16.mxu0 %v4039
    %5842 = vmatpush1.bf16.msra.mxu0 %v4038
    %5843 = vmatprep.subr.bf16.mxu0 %v4043
    %5844 = vmatpush1.bf16.msra.mxu0 %v4042
    %5845 = vmatprep.subr.bf16.mxu0 %v4047
    %5846 = vmatpush1.bf16.msra.mxu0 %v4046
    %5847 = vmatprep.subr.bf16.mxu0 %v4051
    %5848 = vmatpush1.bf16.msra.mxu0 %v4050
    %5849 = vmatprep.subr.bf16.mxu0 %v4055
    %5850 = vmatpush1.bf16.msra.mxu0 %v4054
    %5851 = vmatprep.subr.bf16.mxu0 %v4059
    %5852 = vmatpush1.bf16.msra.mxu0 %v4058
    %5853 = vmatprep.subr.bf16.mxu0 %v4063
    %5854 = vmatpush1.bf16.msra.mxu0 %v4062
    %5855 = vmatprep.subr.bf16.mxu0 %v4067
    %5856 = vmatpush1.bf16.msra.mxu0 %v4066
    %5857 = vmatprep.mubr.bf16.mxu0 %v205
    %5858 = vmatmul.mubr.bf16.gmra.mrb[0].mxu0 %v204
    %v5859 = vpop.f32.mrb[0].mxu0
    %v5860 = vadd.f32 %v5817, %v5859
    %v5861 = vpop.f32.mrb[0].mxu0
    %v5862 = vadd.f32 %v5819, %v5861
    %v5863 = vpop.f32.mrb[0].mxu0
    %v5864 = vadd.f32 %v5821, %v5863
    %v5865 = vpop.f32.mrb[0].mxu0
    %v5866 = vadd.f32 %v5823, %v5865
    %5867 = vdwg.mxu0
    %v5868 = vmax.f32 %v5344, 0.0
    %v5869 = vmax.f32 %v5346, 0.0
    %v5870 = vmax.f32 %v5860, 0.0
    %v5871 = vmax.f32 %v5862, 0.0
    %v5872 = vmax.f32 %v5348, 0.0
    %v5873 = vmax.f32 %v5350, 0.0
    %v5874 = vmax.f32 %v5864, 0.0
    %v5875 = vmax.f32 %v5866, 0.0
    %v5876 = vpack.c.bf16 %v5872, %v5868
    %v5877 = vpack.c.bf16 %v5873, %v5869
    %v5878 = vpack.c.bf16 %v5874, %v5870
    %v5879 = vpack.c.bf16 %v5875, %v5871
    %v5880 = vld [vmem:[#allocation6] sm:$0xff]
    %v5881 = vld [vmem:[#allocation6 + $0x8] sm:$0xff]
    %v5882 = vld [vmem:[#allocation6 + $0x10] sm:$0xff]
    %v5883 = vld [vmem:[#allocation6 + $0x18] sm:$0xff]
    %v5884 = vld [vmem:[#allocation6 + $0x20] sm:$0xff]
    %v5885 = vld [vmem:[#allocation6 + $0x28] sm:$0xff]
    %v5886 = vld [vmem:[#allocation6 + $0x30] sm:$0xff]
    %v5887 = vld [vmem:[#allocation6 + $0x38] sm:$0xff]
    %v5888 = vld [vmem:[#allocation6 + $0x40] sm:$0xff]
    %v5889 = vld [vmem:[#allocation6 + $0x48] sm:$0xff]
    %v5890 = vld [vmem:[#allocation6 + $0x50] sm:$0xff]
    %v5891 = vld [vmem:[#allocation6 + $0x58] sm:$0xff]
    %v5892 = vld [vmem:[#allocation6 + $0x60] sm:$0xff]
    %v5893 = vld [vmem:[#allocation6 + $0x68] sm:$0xff]
    %v5894 = vld [vmem:[#allocation6 + $0x70] sm:$0xff]
    %v5895 = vld [vmem:[#allocation6 + $0x78] sm:$0xff]
    %v5896 = vld [vmem:[#allocation6 + $0x80] sm:$0xff]
    %v5897 = vld [vmem:[#allocation6 + $0x88] sm:$0xff]
    %v5898 = vld [vmem:[#allocation6 + $0x90] sm:$0xff]
    %v5899 = vld [vmem:[#allocation6 + $0x98] sm:$0xff]
    %v5900 = vld [vmem:[#allocation6 + $0xa0] sm:$0xff]
    %v5901 = vld [vmem:[#allocation6 + $0xa8] sm:$0xff]
    %v5902 = vld [vmem:[#allocation6 + $0xb0] sm:$0xff]
    %v5903 = vld [vmem:[#allocation6 + $0xb8] sm:$0xff]
    %v5904 = vld [vmem:[#allocation6 + $0xc0] sm:$0xff]
    %v5905 = vld [vmem:[#allocation6 + $0xc8] sm:$0xff]
    %v5906 = vld [vmem:[#allocation6 + $0xd0] sm:$0xff]
    %v5907 = vld [vmem:[#allocation6 + $0xd8] sm:$0xff]
    %v5908 = vld [vmem:[#allocation6 + $0xe0] sm:$0xff]
    %v5909 = vld [vmem:[#allocation6 + $0xe8] sm:$0xff]
    %v5910 = vld [vmem:[#allocation6 + $0xf0] sm:$0xff]
    %v5911 = vld [vmem:[#allocation6 + $0xf8] sm:$0xff]
    %v5912 = vld [vmem:[#allocation6 + $0x100] sm:$0xff]
    %v5913 = vld [vmem:[#allocation6 + $0x108] sm:$0xff]
    %v5914 = vld [vmem:[#allocation6 + $0x110] sm:$0xff]
    %v5915 = vld [vmem:[#allocation6 + $0x118] sm:$0xff]
    %v5916 = vld [vmem:[#allocation6 + $0x120] sm:$0xff]
    %v5917 = vld [vmem:[#allocation6 + $0x128] sm:$0xff]
    %v5918 = vld [vmem:[#allocation6 + $0x130] sm:$0xff]
    %v5919 = vld [vmem:[#allocation6 + $0x138] sm:$0xff]
    %v5920 = vld [vmem:[#allocation6 + $0x140] sm:$0xff]
    %v5921 = vld [vmem:[#allocation6 + $0x148] sm:$0xff]
    %v5922 = vld [vmem:[#allocation6 + $0x150] sm:$0xff]
    %v5923 = vld [vmem:[#allocation6 + $0x158] sm:$0xff]
    %v5924 = vld [vmem:[#allocation6 + $0x160] sm:$0xff]
    %v5925 = vld [vmem:[#allocation6 + $0x168] sm:$0xff]
    %v5926 = vld [vmem:[#allocation6 + $0x170] sm:$0xff]
    %v5927 = vld [vmem:[#allocation6 + $0x178] sm:$0xff]
    %v5928 = vld [vmem:[#allocation6 + $0x180] sm:$0xff]
    %v5929 = vld [vmem:[#allocation6 + $0x188] sm:$0xff]
    %v5930 = vld [vmem:[#allocation6 + $0x190] sm:$0xff]
    %v5931 = vld [vmem:[#allocation6 + $0x198] sm:$0xff]
    %v5932 = vld [vmem:[#allocation6 + $0x1a0] sm:$0xff]
    %v5933 = vld [vmem:[#allocation6 + $0x1a8] sm:$0xff]
    %v5934 = vld [vmem:[#allocation6 + $0x1b0] sm:$0xff]
    %v5935 = vld [vmem:[#allocation6 + $0x1b8] sm:$0xff]
    %v5936 = vld [vmem:[#allocation6 + $0x1c0] sm:$0xff]
    %v5937 = vld [vmem:[#allocation6 + $0x1c8] sm:$0xff]
    %v5938 = vld [vmem:[#allocation6 + $0x1d0] sm:$0xff]
    %v5939 = vld [vmem:[#allocation6 + $0x1d8] sm:$0xff]
    %v5940 = vld [vmem:[#allocation6 + $0x1e0] sm:$0xff]
    %v5941 = vld [vmem:[#allocation6 + $0x1e8] sm:$0xff]
    %v5942 = vld [vmem:[#allocation6 + $0x1f0] sm:$0xff]
    %v5943 = vld [vmem:[#allocation6 + $0x1f8] sm:$0xff]
    %v5944 = vld [vmem:[#allocation6 + $0x200] sm:$0xff]
    %v5945 = vld [vmem:[#allocation6 + $0x208] sm:$0xff]
    %v5946 = vld [vmem:[#allocation6 + $0x210] sm:$0xff]
    %v5947 = vld [vmem:[#allocation6 + $0x218] sm:$0xff]
    %v5948 = vld [vmem:[#allocation6 + $0x220] sm:$0xff]
    %v5949 = vld [vmem:[#allocation6 + $0x228] sm:$0xff]
    %v5950 = vld [vmem:[#allocation6 + $0x230] sm:$0xff]
    %v5951 = vld [vmem:[#allocation6 + $0x238] sm:$0xff]
    %v5952 = vld [vmem:[#allocation6 + $0x240] sm:$0xff]
    %v5953 = vld [vmem:[#allocation6 + $0x248] sm:$0xff]
    %v5954 = vld [vmem:[#allocation6 + $0x250] sm:$0xff]
    %v5955 = vld [vmem:[#allocation6 + $0x258] sm:$0xff]
    %v5956 = vld [vmem:[#allocation6 + $0x260] sm:$0xff]
    %v5957 = vld [vmem:[#allocation6 + $0x268] sm:$0xff]
    %v5958 = vld [vmem:[#allocation6 + $0x270] sm:$0xff]
    %v5959 = vld [vmem:[#allocation6 + $0x278] sm:$0xff]
    %v5960 = vld [vmem:[#allocation6 + $0x280] sm:$0xff]
    %v5961 = vld [vmem:[#allocation6 + $0x288] sm:$0xff]
    %v5962 = vld [vmem:[#allocation6 + $0x290] sm:$0xff]
    %v5963 = vld [vmem:[#allocation6 + $0x298] sm:$0xff]
    %v5964 = vld [vmem:[#allocation6 + $0x2a0] sm:$0xff]
    %v5965 = vld [vmem:[#allocation6 + $0x2a8] sm:$0xff]
    %v5966 = vld [vmem:[#allocation6 + $0x2b0] sm:$0xff]
    %v5967 = vld [vmem:[#allocation6 + $0x2b8] sm:$0xff]
    %v5968 = vld [vmem:[#allocation6 + $0x2c0] sm:$0xff]
    %v5969 = vld [vmem:[#allocation6 + $0x2c8] sm:$0xff]
    %v5970 = vld [vmem:[#allocation6 + $0x2d0] sm:$0xff]
    %v5971 = vld [vmem:[#allocation6 + $0x2d8] sm:$0xff]
    %v5972 = vld [vmem:[#allocation6 + $0x2e0] sm:$0xff]
    %v5973 = vld [vmem:[#allocation6 + $0x2e8] sm:$0xff]
    %v5974 = vld [vmem:[#allocation6 + $0x2f0] sm:$0xff]
    %v5975 = vld [vmem:[#allocation6 + $0x2f8] sm:$0xff]
    %v5976 = vld [vmem:[#allocation6 + $0x300] sm:$0xff]
    %v5977 = vld [vmem:[#allocation6 + $0x308] sm:$0xff]
    %v5978 = vld [vmem:[#allocation6 + $0x310] sm:$0xff]
    %v5979 = vld [vmem:[#allocation6 + $0x318] sm:$0xff]
    %v5980 = vld [vmem:[#allocation6 + $0x320] sm:$0xff]
    %v5981 = vld [vmem:[#allocation6 + $0x328] sm:$0xff]
    %v5982 = vld [vmem:[#allocation6 + $0x330] sm:$0xff]
    %v5983 = vld [vmem:[#allocation6 + $0x338] sm:$0xff]
    %v5984 = vld [vmem:[#allocation6 + $0x340] sm:$0xff]
    %v5985 = vld [vmem:[#allocation6 + $0x348] sm:$0xff]
    %v5986 = vld [vmem:[#allocation6 + $0x350] sm:$0xff]
    %v5987 = vld [vmem:[#allocation6 + $0x358] sm:$0xff]
    %v5988 = vld [vmem:[#allocation6 + $0x360] sm:$0xff]
    %v5989 = vld [vmem:[#allocation6 + $0x368] sm:$0xff]
    %v5990 = vld [vmem:[#allocation6 + $0x370] sm:$0xff]
    %v5991 = vld [vmem:[#allocation6 + $0x378] sm:$0xff]
    %v5992 = vld [vmem:[#allocation6 + $0x380] sm:$0xff]
    %v5993 = vld [vmem:[#allocation6 + $0x388] sm:$0xff]
    %v5994 = vld [vmem:[#allocation6 + $0x390] sm:$0xff]
    %v5995 = vld [vmem:[#allocation6 + $0x398] sm:$0xff]
    %v5996 = vld [vmem:[#allocation6 + $0x3a0] sm:$0xff]
    %v5997 = vld [vmem:[#allocation6 + $0x3a8] sm:$0xff]
    %v5998 = vld [vmem:[#allocation6 + $0x3b0] sm:$0xff]
    %v5999 = vld [vmem:[#allocation6 + $0x3b8] sm:$0xff]
    %v6000 = vld [vmem:[#allocation6 + $0x3c0] sm:$0xff]
    %v6001 = vld [vmem:[#allocation6 + $0x3c8] sm:$0xff]
    %v6002 = vld [vmem:[#allocation6 + $0x3d0] sm:$0xff]
    %v6003 = vld [vmem:[#allocation6 + $0x3d8] sm:$0xff]
    %v6004 = vld [vmem:[#allocation6 + $0x3e0] sm:$0xff]
    %v6005 = vld [vmem:[#allocation6 + $0x3e8] sm:$0xff]
    %v6006 = vld [vmem:[#allocation6 + $0x3f0] sm:$0xff]
    %v6007 = vld [vmem:[#allocation6 + $0x3f8] sm:$0xff]
    %v6008 = vld [vmem:[#allocation6 + $0x400] sm:$0xff]
    %v6009 = vld [vmem:[#allocation6 + $0x408] sm:$0xff]
    %v6010 = vld [vmem:[#allocation6 + $0x410] sm:$0xff]
    %v6011 = vld [vmem:[#allocation6 + $0x418] sm:$0xff]
    %v6012 = vld [vmem:[#allocation6 + $0x420] sm:$0xff]
    %v6013 = vld [vmem:[#allocation6 + $0x428] sm:$0xff]
    %v6014 = vld [vmem:[#allocation6 + $0x430] sm:$0xff]
    %v6015 = vld [vmem:[#allocation6 + $0x438] sm:$0xff]
    %v6016 = vld [vmem:[#allocation6 + $0x440] sm:$0xff]
    %v6017 = vld [vmem:[#allocation6 + $0x448] sm:$0xff]
    %v6018 = vld [vmem:[#allocation6 + $0x450] sm:$0xff]
    %v6019 = vld [vmem:[#allocation6 + $0x458] sm:$0xff]
    %v6020 = vld [vmem:[#allocation6 + $0x460] sm:$0xff]
    %v6021 = vld [vmem:[#allocation6 + $0x468] sm:$0xff]
    %v6022 = vld [vmem:[#allocation6 + $0x470] sm:$0xff]
    %v6023 = vld [vmem:[#allocation6 + $0x478] sm:$0xff]
    %v6024 = vld [vmem:[#allocation6 + $0x480] sm:$0xff]
    %v6025 = vld [vmem:[#allocation6 + $0x488] sm:$0xff]
    %v6026 = vld [vmem:[#allocation6 + $0x490] sm:$0xff]
    %v6027 = vld [vmem:[#allocation6 + $0x498] sm:$0xff]
    %v6028 = vld [vmem:[#allocation6 + $0x4a0] sm:$0xff]
    %v6029 = vld [vmem:[#allocation6 + $0x4a8] sm:$0xff]
    %v6030 = vld [vmem:[#allocation6 + $0x4b0] sm:$0xff]
    %v6031 = vld [vmem:[#allocation6 + $0x4b8] sm:$0xff]
    %v6032 = vld [vmem:[#allocation6 + $0x4c0] sm:$0xff]
    %v6033 = vld [vmem:[#allocation6 + $0x4c8] sm:$0xff]
    %v6034 = vld [vmem:[#allocation6 + $0x4d0] sm:$0xff]
    %v6035 = vld [vmem:[#allocation6 + $0x4d8] sm:$0xff]
    %v6036 = vld [vmem:[#allocation6 + $0x4e0] sm:$0xff]
    %v6037 = vld [vmem:[#allocation6 + $0x4e8] sm:$0xff]
    %v6038 = vld [vmem:[#allocation6 + $0x4f0] sm:$0xff]
    %v6039 = vld [vmem:[#allocation6 + $0x4f8] sm:$0xff]
    %v6040 = vld [vmem:[#allocation6 + $0x500] sm:$0xff]
    %v6041 = vld [vmem:[#allocation6 + $0x508] sm:$0xff]
    %v6042 = vld [vmem:[#allocation6 + $0x510] sm:$0xff]
    %v6043 = vld [vmem:[#allocation6 + $0x518] sm:$0xff]
    %v6044 = vld [vmem:[#allocation6 + $0x520] sm:$0xff]
    %v6045 = vld [vmem:[#allocation6 + $0x528] sm:$0xff]
    %v6046 = vld [vmem:[#allocation6 + $0x530] sm:$0xff]
    %v6047 = vld [vmem:[#allocation6 + $0x538] sm:$0xff]
    %v6048 = vld [vmem:[#allocation6 + $0x540] sm:$0xff]
    %v6049 = vld [vmem:[#allocation6 + $0x548] sm:$0xff]
    %v6050 = vld [vmem:[#allocation6 + $0x550] sm:$0xff]
    %v6051 = vld [vmem:[#allocation6 + $0x558] sm:$0xff]
    %v6052 = vld [vmem:[#allocation6 + $0x560] sm:$0xff]
    %v6053 = vld [vmem:[#allocation6 + $0x568] sm:$0xff]
    %v6054 = vld [vmem:[#allocation6 + $0x570] sm:$0xff]
    %v6055 = vld [vmem:[#allocation6 + $0x578] sm:$0xff]
    %v6056 = vld [vmem:[#allocation6 + $0x580] sm:$0xff]
    %v6057 = vld [vmem:[#allocation6 + $0x588] sm:$0xff]
    %v6058 = vld [vmem:[#allocation6 + $0x590] sm:$0xff]
    %v6059 = vld [vmem:[#allocation6 + $0x598] sm:$0xff]
    %v6060 = vld [vmem:[#allocation6 + $0x5a0] sm:$0xff]
    %v6061 = vld [vmem:[#allocation6 + $0x5a8] sm:$0xff]
    %v6062 = vld [vmem:[#allocation6 + $0x5b0] sm:$0xff]
    %v6063 = vld [vmem:[#allocation6 + $0x5b8] sm:$0xff]
    %v6064 = vld [vmem:[#allocation6 + $0x5c0] sm:$0xff]
    %v6065 = vld [vmem:[#allocation6 + $0x5c8] sm:$0xff]
    %v6066 = vld [vmem:[#allocation6 + $0x5d0] sm:$0xff]
    %v6067 = vld [vmem:[#allocation6 + $0x5d8] sm:$0xff]
    %v6068 = vld [vmem:[#allocation6 + $0x5e0] sm:$0xff]
    %v6069 = vld [vmem:[#allocation6 + $0x5e8] sm:$0xff]
    %v6070 = vld [vmem:[#allocation6 + $0x5f0] sm:$0xff]
    %v6071 = vld [vmem:[#allocation6 + $0x5f8] sm:$0xff]
    %v6072 = vld [vmem:[#allocation6 + $0x600] sm:$0xff]
    %v6073 = vld [vmem:[#allocation6 + $0x608] sm:$0xff]
    %v6074 = vld [vmem:[#allocation6 + $0x610] sm:$0xff]
    %v6075 = vld [vmem:[#allocation6 + $0x618] sm:$0xff]
    %v6076 = vld [vmem:[#allocation6 + $0x620] sm:$0xff]
    %v6077 = vld [vmem:[#allocation6 + $0x628] sm:$0xff]
    %v6078 = vld [vmem:[#allocation6 + $0x630] sm:$0xff]
    %v6079 = vld [vmem:[#allocation6 + $0x638] sm:$0xff]
    %v6080 = vld [vmem:[#allocation6 + $0x640] sm:$0xff]
    %v6081 = vld [vmem:[#allocation6 + $0x648] sm:$0xff]
    %v6082 = vld [vmem:[#allocation6 + $0x650] sm:$0xff]
    %v6083 = vld [vmem:[#allocation6 + $0x658] sm:$0xff]
    %v6084 = vld [vmem:[#allocation6 + $0x660] sm:$0xff]
    %v6085 = vld [vmem:[#allocation6 + $0x668] sm:$0xff]
    %v6086 = vld [vmem:[#allocation6 + $0x670] sm:$0xff]
    %v6087 = vld [vmem:[#allocation6 + $0x678] sm:$0xff]
    %v6088 = vld [vmem:[#allocation6 + $0x680] sm:$0xff]
    %v6089 = vld [vmem:[#allocation6 + $0x688] sm:$0xff]
    %v6090 = vld [vmem:[#allocation6 + $0x690] sm:$0xff]
    %v6091 = vld [vmem:[#allocation6 + $0x698] sm:$0xff]
    %v6092 = vld [vmem:[#allocation6 + $0x6a0] sm:$0xff]
    %v6093 = vld [vmem:[#allocation6 + $0x6a8] sm:$0xff]
    %v6094 = vld [vmem:[#allocation6 + $0x6b0] sm:$0xff]
    %v6095 = vld [vmem:[#allocation6 + $0x6b8] sm:$0xff]
    %v6096 = vld [vmem:[#allocation6 + $0x6c0] sm:$0xff]
    %v6097 = vld [vmem:[#allocation6 + $0x6c8] sm:$0xff]
    %v6098 = vld [vmem:[#allocation6 + $0x6d0] sm:$0xff]
    %v6099 = vld [vmem:[#allocation6 + $0x6d8] sm:$0xff]
    %v6100 = vld [vmem:[#allocation6 + $0x6e0] sm:$0xff]
    %v6101 = vld [vmem:[#allocation6 + $0x6e8] sm:$0xff]
    %v6102 = vld [vmem:[#allocation6 + $0x6f0] sm:$0xff]
    %v6103 = vld [vmem:[#allocation6 + $0x6f8] sm:$0xff]
    %v6104 = vld [vmem:[#allocation6 + $0x700] sm:$0xff]
    %v6105 = vld [vmem:[#allocation6 + $0x708] sm:$0xff]
    %v6106 = vld [vmem:[#allocation6 + $0x710] sm:$0xff]
    %v6107 = vld [vmem:[#allocation6 + $0x718] sm:$0xff]
    %v6108 = vld [vmem:[#allocation6 + $0x720] sm:$0xff]
    %v6109 = vld [vmem:[#allocation6 + $0x728] sm:$0xff]
    %v6110 = vld [vmem:[#allocation6 + $0x730] sm:$0xff]
    %v6111 = vld [vmem:[#allocation6 + $0x738] sm:$0xff]
    %v6112 = vld [vmem:[#allocation6 + $0x740] sm:$0xff]
    %v6113 = vld [vmem:[#allocation6 + $0x748] sm:$0xff]
    %v6114 = vld [vmem:[#allocation6 + $0x750] sm:$0xff]
    %v6115 = vld [vmem:[#allocation6 + $0x758] sm:$0xff]
    %v6116 = vld [vmem:[#allocation6 + $0x760] sm:$0xff]
    %v6117 = vld [vmem:[#allocation6 + $0x768] sm:$0xff]
    %v6118 = vld [vmem:[#allocation6 + $0x770] sm:$0xff]
    %v6119 = vld [vmem:[#allocation6 + $0x778] sm:$0xff]
    %v6120 = vld [vmem:[#allocation6 + $0x780] sm:$0xff]
    %v6121 = vld [vmem:[#allocation6 + $0x788] sm:$0xff]
    %v6122 = vld [vmem:[#allocation6 + $0x790] sm:$0xff]
    %v6123 = vld [vmem:[#allocation6 + $0x798] sm:$0xff]
    %v6124 = vld [vmem:[#allocation6 + $0x7a0] sm:$0xff]
    %v6125 = vld [vmem:[#allocation6 + $0x7a8] sm:$0xff]
    %v6126 = vld [vmem:[#allocation6 + $0x7b0] sm:$0xff]
    %v6127 = vld [vmem:[#allocation6 + $0x7b8] sm:$0xff]
    %v6128 = vld [vmem:[#allocation6 + $0x7c0] sm:$0xff]
    %v6129 = vld [vmem:[#allocation6 + $0x7c8] sm:$0xff]
    %v6130 = vld [vmem:[#allocation6 + $0x7d0] sm:$0xff]
    %v6131 = vld [vmem:[#allocation6 + $0x7d8] sm:$0xff]
    %v6132 = vld [vmem:[#allocation6 + $0x7e0] sm:$0xff]
    %v6133 = vld [vmem:[#allocation6 + $0x7e8] sm:$0xff]
    %v6134 = vld [vmem:[#allocation6 + $0x7f0] sm:$0xff]
    %v6135 = vld [vmem:[#allocation6 + $0x7f8] sm:$0xff]
    %v6136 = vld [vmem:[#allocation7] sm:$0xff]
    %v6138 = vlaneseq
    %v6139 = vshrl.u32 %v6138, 7
    %v6140 = vsub.s32 0, %v6139
    %v6141 = vrot.slane %v6136, %v6140
    %v6142 = vlaneseq
    %v6143 = vshrl.u32 %v6142, 7
    %v6144 = vsub.s32 1, %v6143
    %v6145 = vrot.slane %v6136, %v6144
    %v6146 = vlaneseq
    %v6147 = vshrl.u32 %v6146, 7
    %v6148 = vsub.s32 2, %v6147
    %v6149 = vrot.slane %v6136, %v6148
    %v6150 = vlaneseq
    %v6151 = vshrl.u32 %v6150, 7
    %v6152 = vsub.s32 3, %v6151
    %v6153 = vrot.slane %v6136, %v6152
    %v6154 = vlaneseq
    %v6155 = vshrl.u32 %v6154, 7
    %v6156 = vsub.s32 4, %v6155
    %v6157 = vrot.slane %v6136, %v6156
    %v6158 = vlaneseq
    %v6159 = vshrl.u32 %v6158, 7
    %v6160 = vsub.s32 5, %v6159
    %v6161 = vrot.slane %v6136, %v6160
    %v6162 = vlaneseq
    %v6163 = vshrl.u32 %v6162, 7
    %v6164 = vsub.s32 6, %v6163
    %v6165 = vrot.slane %v6136, %v6164
    %v6166 = vlaneseq
    %v6167 = vshrl.u32 %v6166, 7
    %v6168 = vsub.s32 7, %v6167
    %v6169 = vrot.slane %v6136, %v6168
    %v6434 = vunpack.c.l.b16 %v5880
    %v6435 = vunpack.c.h.b16 %v5880
    %v6436 = vunpack.c.l.b16 %v5881
    %v6437 = vunpack.c.h.b16 %v5881
    %v6438 = vunpack.c.l.b16 %v5882
    %v6439 = vunpack.c.h.b16 %v5882
    %v6440 = vunpack.c.l.b16 %v5883
    %v6441 = vunpack.c.h.b16 %v5883
    %v6442 = vunpack.c.l.b16 %v5884
    %v6443 = vunpack.c.h.b16 %v5884
    %v6444 = vunpack.c.l.b16 %v5885
    %v6445 = vunpack.c.h.b16 %v5885
    %v6446 = vunpack.c.l.b16 %v5886
    %v6447 = vunpack.c.h.b16 %v5886
    %v6448 = vunpack.c.l.b16 %v5887
    %v6449 = vunpack.c.h.b16 %v5887
    %v6450 = vunpack.c.l.b16 %v5888
    %v6451 = vunpack.c.h.b16 %v5888
    %v6452 = vunpack.c.l.b16 %v5889
    %v6453 = vunpack.c.h.b16 %v5889
    %v6454 = vunpack.c.l.b16 %v5890
    %v6455 = vunpack.c.h.b16 %v5890
    %v6456 = vunpack.c.l.b16 %v5891
    %v6457 = vunpack.c.h.b16 %v5891
    %v6458 = vunpack.c.l.b16 %v5892
    %v6459 = vunpack.c.h.b16 %v5892
    %v6460 = vunpack.c.l.b16 %v5893
    %v6461 = vunpack.c.h.b16 %v5893
    %v6462 = vunpack.c.l.b16 %v5894
    %v6463 = vunpack.c.h.b16 %v5894
    %v6464 = vunpack.c.l.b16 %v5895
    %v6465 = vunpack.c.h.b16 %v5895
    %v6466 = vunpack.c.l.b16 %v5896
    %v6467 = vunpack.c.h.b16 %v5896
    %v6468 = vunpack.c.l.b16 %v5897
    %v6469 = vunpack.c.h.b16 %v5897
    %v6470 = vunpack.c.l.b16 %v5898
    %v6471 = vunpack.c.h.b16 %v5898
    %v6472 = vunpack.c.l.b16 %v5899
    %v6473 = vunpack.c.h.b16 %v5899
    %v6474 = vunpack.c.l.b16 %v5900
    %v6475 = vunpack.c.h.b16 %v5900
    %v6476 = vunpack.c.l.b16 %v5901
    %v6477 = vunpack.c.h.b16 %v5901
    %v6478 = vunpack.c.l.b16 %v5902
    %v6479 = vunpack.c.h.b16 %v5902
    %v6480 = vunpack.c.l.b16 %v5903
    %v6481 = vunpack.c.h.b16 %v5903
    %v6482 = vunpack.c.l.b16 %v5904
    %v6483 = vunpack.c.h.b16 %v5904
    %v6484 = vunpack.c.l.b16 %v5905
    %v6485 = vunpack.c.h.b16 %v5905
    %v6486 = vunpack.c.l.b16 %v5906
    %v6487 = vunpack.c.h.b16 %v5906
    %v6488 = vunpack.c.l.b16 %v5907
    %v6489 = vunpack.c.h.b16 %v5907
    %v6490 = vunpack.c.l.b16 %v5908
    %v6491 = vunpack.c.h.b16 %v5908
    %v6492 = vunpack.c.l.b16 %v5909
    %v6493 = vunpack.c.h.b16 %v5909
    %v6494 = vunpack.c.l.b16 %v5910
    %v6495 = vunpack.c.h.b16 %v5910
    %v6496 = vunpack.c.l.b16 %v5911
    %v6497 = vunpack.c.h.b16 %v5911
    %v6498 = vunpack.c.l.b16 %v5912
    %v6499 = vunpack.c.h.b16 %v5912
    %v6500 = vunpack.c.l.b16 %v5913
    %v6501 = vunpack.c.h.b16 %v5913
    %v6502 = vunpack.c.l.b16 %v5914
    %v6503 = vunpack.c.h.b16 %v5914
    %v6504 = vunpack.c.l.b16 %v5915
    %v6505 = vunpack.c.h.b16 %v5915
    %v6506 = vunpack.c.l.b16 %v5916
    %v6507 = vunpack.c.h.b16 %v5916
    %v6508 = vunpack.c.l.b16 %v5917
    %v6509 = vunpack.c.h.b16 %v5917
    %v6510 = vunpack.c.l.b16 %v5918
    %v6511 = vunpack.c.h.b16 %v5918
    %v6512 = vunpack.c.l.b16 %v5919
    %v6513 = vunpack.c.h.b16 %v5919
    %v6514 = vunpack.c.l.b16 %v5920
    %v6515 = vunpack.c.h.b16 %v5920
    %v6516 = vunpack.c.l.b16 %v5921
    %v6517 = vunpack.c.h.b16 %v5921
    %v6518 = vunpack.c.l.b16 %v5922
    %v6519 = vunpack.c.h.b16 %v5922
    %v6520 = vunpack.c.l.b16 %v5923
    %v6521 = vunpack.c.h.b16 %v5923
    %v6522 = vunpack.c.l.b16 %v5924
    %v6523 = vunpack.c.h.b16 %v5924
    %v6524 = vunpack.c.l.b16 %v5925
    %v6525 = vunpack.c.h.b16 %v5925
    %v6526 = vunpack.c.l.b16 %v5926
    %v6527 = vunpack.c.h.b16 %v5926
    %v6528 = vunpack.c.l.b16 %v5927
    %v6529 = vunpack.c.h.b16 %v5927
    %v6530 = vunpack.c.l.b16 %v5928
    %v6531 = vunpack.c.h.b16 %v5928
    %v6532 = vunpack.c.l.b16 %v5929
    %v6533 = vunpack.c.h.b16 %v5929
    %v6534 = vunpack.c.l.b16 %v5930
    %v6535 = vunpack.c.h.b16 %v5930
    %v6536 = vunpack.c.l.b16 %v5931
    %v6537 = vunpack.c.h.b16 %v5931
    %v6538 = vunpack.c.l.b16 %v5932
    %v6539 = vunpack.c.h.b16 %v5932
    %v6540 = vunpack.c.l.b16 %v5933
    %v6541 = vunpack.c.h.b16 %v5933
    %v6542 = vunpack.c.l.b16 %v5934
    %v6543 = vunpack.c.h.b16 %v5934
    %v6544 = vunpack.c.l.b16 %v5935
    %v6545 = vunpack.c.h.b16 %v5935
    %v6546 = vunpack.c.l.b16 %v5936
    %v6547 = vunpack.c.h.b16 %v5936
    %v6548 = vunpack.c.l.b16 %v5937
    %v6549 = vunpack.c.h.b16 %v5937
    %v6550 = vunpack.c.l.b16 %v5938
    %v6551 = vunpack.c.h.b16 %v5938
    %v6552 = vunpack.c.l.b16 %v5939
    %v6553 = vunpack.c.h.b16 %v5939
    %v6554 = vunpack.c.l.b16 %v5940
    %v6555 = vunpack.c.h.b16 %v5940
    %v6556 = vunpack.c.l.b16 %v5941
    %v6557 = vunpack.c.h.b16 %v5941
    %v6558 = vunpack.c.l.b16 %v5942
    %v6559 = vunpack.c.h.b16 %v5942
    %v6560 = vunpack.c.l.b16 %v5943
    %v6561 = vunpack.c.h.b16 %v5943
    %v6562 = vunpack.c.l.b16 %v5944
    %v6563 = vunpack.c.h.b16 %v5944
    %v6564 = vunpack.c.l.b16 %v5945
    %v6565 = vunpack.c.h.b16 %v5945
    %v6566 = vunpack.c.l.b16 %v5946
    %v6567 = vunpack.c.h.b16 %v5946
    %v6568 = vunpack.c.l.b16 %v5947
    %v6569 = vunpack.c.h.b16 %v5947
    %v6570 = vunpack.c.l.b16 %v5948
    %v6571 = vunpack.c.h.b16 %v5948
    %v6572 = vunpack.c.l.b16 %v5949
    %v6573 = vunpack.c.h.b16 %v5949
    %v6574 = vunpack.c.l.b16 %v5950
    %v6575 = vunpack.c.h.b16 %v5950
    %v6576 = vunpack.c.l.b16 %v5951
    %v6577 = vunpack.c.h.b16 %v5951
    %v6578 = vunpack.c.l.b16 %v5952
    %v6579 = vunpack.c.h.b16 %v5952
    %v6580 = vunpack.c.l.b16 %v5953
    %v6581 = vunpack.c.h.b16 %v5953
    %v6582 = vunpack.c.l.b16 %v5954
    %v6583 = vunpack.c.h.b16 %v5954
    %v6584 = vunpack.c.l.b16 %v5955
    %v6585 = vunpack.c.h.b16 %v5955
    %v6586 = vunpack.c.l.b16 %v5956
    %v6587 = vunpack.c.h.b16 %v5956
    %v6588 = vunpack.c.l.b16 %v5957
    %v6589 = vunpack.c.h.b16 %v5957
    %v6590 = vunpack.c.l.b16 %v5958
    %v6591 = vunpack.c.h.b16 %v5958
    %v6592 = vunpack.c.l.b16 %v5959
    %v6593 = vunpack.c.h.b16 %v5959
    %v6594 = vunpack.c.l.b16 %v5960
    %v6595 = vunpack.c.h.b16 %v5960
    %v6596 = vunpack.c.l.b16 %v5961
    %v6597 = vunpack.c.h.b16 %v5961
    %v6598 = vunpack.c.l.b16 %v5962
    %v6599 = vunpack.c.h.b16 %v5962
    %v6600 = vunpack.c.l.b16 %v5963
    %v6601 = vunpack.c.h.b16 %v5963
    %v6602 = vunpack.c.l.b16 %v5964
    %v6603 = vunpack.c.h.b16 %v5964
    %v6604 = vunpack.c.l.b16 %v5965
    %v6605 = vunpack.c.h.b16 %v5965
    %v6606 = vunpack.c.l.b16 %v5966
    %v6607 = vunpack.c.h.b16 %v5966
    %v6608 = vunpack.c.l.b16 %v5967
    %v6609 = vunpack.c.h.b16 %v5967
    %v6610 = vunpack.c.l.b16 %v5968
    %v6611 = vunpack.c.h.b16 %v5968
    %v6612 = vunpack.c.l.b16 %v5969
    %v6613 = vunpack.c.h.b16 %v5969
    %v6614 = vunpack.c.l.b16 %v5970
    %v6615 = vunpack.c.h.b16 %v5970
    %v6616 = vunpack.c.l.b16 %v5971
    %v6617 = vunpack.c.h.b16 %v5971
    %v6618 = vunpack.c.l.b16 %v5972
    %v6619 = vunpack.c.h.b16 %v5972
    %v6620 = vunpack.c.l.b16 %v5973
    %v6621 = vunpack.c.h.b16 %v5973
    %v6622 = vunpack.c.l.b16 %v5974
    %v6623 = vunpack.c.h.b16 %v5974
    %v6624 = vunpack.c.l.b16 %v5975
    %v6625 = vunpack.c.h.b16 %v5975
    %v6626 = vunpack.c.l.b16 %v5976
    %v6627 = vunpack.c.h.b16 %v5976
    %v6628 = vunpack.c.l.b16 %v5977
    %v6629 = vunpack.c.h.b16 %v5977
    %v6630 = vunpack.c.l.b16 %v5978
    %v6631 = vunpack.c.h.b16 %v5978
    %v6632 = vunpack.c.l.b16 %v5979
    %v6633 = vunpack.c.h.b16 %v5979
    %v6634 = vunpack.c.l.b16 %v5980
    %v6635 = vunpack.c.h.b16 %v5980
    %v6636 = vunpack.c.l.b16 %v5981
    %v6637 = vunpack.c.h.b16 %v5981
    %v6638 = vunpack.c.l.b16 %v5982
    %v6639 = vunpack.c.h.b16 %v5982
    %v6640 = vunpack.c.l.b16 %v5983
    %v6641 = vunpack.c.h.b16 %v5983
    %v6642 = vunpack.c.l.b16 %v5984
    %v6643 = vunpack.c.h.b16 %v5984
    %v6644 = vunpack.c.l.b16 %v5985
    %v6645 = vunpack.c.h.b16 %v5985
    %v6646 = vunpack.c.l.b16 %v5986
    %v6647 = vunpack.c.h.b16 %v5986
    %v6648 = vunpack.c.l.b16 %v5987
    %v6649 = vunpack.c.h.b16 %v5987
    %v6650 = vunpack.c.l.b16 %v5988
    %v6651 = vunpack.c.h.b16 %v5988
    %v6652 = vunpack.c.l.b16 %v5989
    %v6653 = vunpack.c.h.b16 %v5989
    %v6654 = vunpack.c.l.b16 %v5990
    %v6655 = vunpack.c.h.b16 %v5990
    %v6656 = vunpack.c.l.b16 %v5991
    %v6657 = vunpack.c.h.b16 %v5991
    %v6658 = vunpack.c.l.b16 %v5992
    %v6659 = vunpack.c.h.b16 %v5992
    %v6660 = vunpack.c.l.b16 %v5993
    %v6661 = vunpack.c.h.b16 %v5993
    %v6662 = vunpack.c.l.b16 %v5994
    %v6663 = vunpack.c.h.b16 %v5994
    %v6664 = vunpack.c.l.b16 %v5995
    %v6665 = vunpack.c.h.b16 %v5995
    %v6666 = vunpack.c.l.b16 %v5996
    %v6667 = vunpack.c.h.b16 %v5996
    %v6668 = vunpack.c.l.b16 %v5997
    %v6669 = vunpack.c.h.b16 %v5997
    %v6670 = vunpack.c.l.b16 %v5998
    %v6671 = vunpack.c.h.b16 %v5998
    %v6672 = vunpack.c.l.b16 %v5999
    %v6673 = vunpack.c.h.b16 %v5999
    %v6674 = vunpack.c.l.b16 %v6000
    %v6675 = vunpack.c.h.b16 %v6000
    %v6676 = vunpack.c.l.b16 %v6001
    %v6677 = vunpack.c.h.b16 %v6001
    %v6678 = vunpack.c.l.b16 %v6002
    %v6679 = vunpack.c.h.b16 %v6002
    %v6680 = vunpack.c.l.b16 %v6003
    %v6681 = vunpack.c.h.b16 %v6003
    %v6682 = vunpack.c.l.b16 %v6004
    %v6683 = vunpack.c.h.b16 %v6004
    %v6684 = vunpack.c.l.b16 %v6005
    %v6685 = vunpack.c.h.b16 %v6005
    %v6686 = vunpack.c.l.b16 %v6006
    %v6687 = vunpack.c.h.b16 %v6006
    %v6688 = vunpack.c.l.b16 %v6007
    %v6689 = vunpack.c.h.b16 %v6007
    %v6690 = vunpack.c.l.b16 %v6008
    %v6691 = vunpack.c.h.b16 %v6008
    %v6692 = vunpack.c.l.b16 %v6009
    %v6693 = vunpack.c.h.b16 %v6009
    %v6694 = vunpack.c.l.b16 %v6010
    %v6695 = vunpack.c.h.b16 %v6010
    %v6696 = vunpack.c.l.b16 %v6011
    %v6697 = vunpack.c.h.b16 %v6011
    %v6698 = vunpack.c.l.b16 %v6012
    %v6699 = vunpack.c.h.b16 %v6012
    %v6700 = vunpack.c.l.b16 %v6013
    %v6701 = vunpack.c.h.b16 %v6013
    %v6702 = vunpack.c.l.b16 %v6014
    %v6703 = vunpack.c.h.b16 %v6014
    %v6704 = vunpack.c.l.b16 %v6015
    %v6705 = vunpack.c.h.b16 %v6015
    %v6706 = vunpack.c.l.b16 %v6016
    %v6707 = vunpack.c.h.b16 %v6016
    %v6708 = vunpack.c.l.b16 %v6017
    %v6709 = vunpack.c.h.b16 %v6017
    %v6710 = vunpack.c.l.b16 %v6018
    %v6711 = vunpack.c.h.b16 %v6018
    %v6712 = vunpack.c.l.b16 %v6019
    %v6713 = vunpack.c.h.b16 %v6019
    %v6714 = vunpack.c.l.b16 %v6020
    %v6715 = vunpack.c.h.b16 %v6020
    %v6716 = vunpack.c.l.b16 %v6021
    %v6717 = vunpack.c.h.b16 %v6021
    %v6718 = vunpack.c.l.b16 %v6022
    %v6719 = vunpack.c.h.b16 %v6022
    %v6720 = vunpack.c.l.b16 %v6023
    %v6721 = vunpack.c.h.b16 %v6023
    %v6722 = vunpack.c.l.b16 %v6024
    %v6723 = vunpack.c.h.b16 %v6024
    %v6724 = vunpack.c.l.b16 %v6025
    %v6725 = vunpack.c.h.b16 %v6025
    %v6726 = vunpack.c.l.b16 %v6026
    %v6727 = vunpack.c.h.b16 %v6026
    %v6728 = vunpack.c.l.b16 %v6027
    %v6729 = vunpack.c.h.b16 %v6027
    %v6730 = vunpack.c.l.b16 %v6028
    %v6731 = vunpack.c.h.b16 %v6028
    %v6732 = vunpack.c.l.b16 %v6029
    %v6733 = vunpack.c.h.b16 %v6029
    %v6734 = vunpack.c.l.b16 %v6030
    %v6735 = vunpack.c.h.b16 %v6030
    %v6736 = vunpack.c.l.b16 %v6031
    %v6737 = vunpack.c.h.b16 %v6031
    %v6738 = vunpack.c.l.b16 %v6032
    %v6739 = vunpack.c.h.b16 %v6032
    %v6740 = vunpack.c.l.b16 %v6033
    %v6741 = vunpack.c.h.b16 %v6033
    %v6742 = vunpack.c.l.b16 %v6034
    %v6743 = vunpack.c.h.b16 %v6034
    %v6744 = vunpack.c.l.b16 %v6035
    %v6745 = vunpack.c.h.b16 %v6035
    %v6746 = vunpack.c.l.b16 %v6036
    %v6747 = vunpack.c.h.b16 %v6036
    %v6748 = vunpack.c.l.b16 %v6037
    %v6749 = vunpack.c.h.b16 %v6037
    %v6750 = vunpack.c.l.b16 %v6038
    %v6751 = vunpack.c.h.b16 %v6038
    %v6752 = vunpack.c.l.b16 %v6039
    %v6753 = vunpack.c.h.b16 %v6039
    %v6754 = vunpack.c.l.b16 %v6040
    %v6755 = vunpack.c.h.b16 %v6040
    %v6756 = vunpack.c.l.b16 %v6041
    %v6757 = vunpack.c.h.b16 %v6041
    %v6758 = vunpack.c.l.b16 %v6042
    %v6759 = vunpack.c.h.b16 %v6042
    %v6760 = vunpack.c.l.b16 %v6043
    %v6761 = vunpack.c.h.b16 %v6043
    %v6762 = vunpack.c.l.b16 %v6044
    %v6763 = vunpack.c.h.b16 %v6044
    %v6764 = vunpack.c.l.b16 %v6045
    %v6765 = vunpack.c.h.b16 %v6045
    %v6766 = vunpack.c.l.b16 %v6046
    %v6767 = vunpack.c.h.b16 %v6046
    %v6768 = vunpack.c.l.b16 %v6047
    %v6769 = vunpack.c.h.b16 %v6047
    %v6770 = vunpack.c.l.b16 %v6048
    %v6771 = vunpack.c.h.b16 %v6048
    %v6772 = vunpack.c.l.b16 %v6049
    %v6773 = vunpack.c.h.b16 %v6049
    %v6774 = vunpack.c.l.b16 %v6050
    %v6775 = vunpack.c.h.b16 %v6050
    %v6776 = vunpack.c.l.b16 %v6051
    %v6777 = vunpack.c.h.b16 %v6051
    %v6778 = vunpack.c.l.b16 %v6052
    %v6779 = vunpack.c.h.b16 %v6052
    %v6780 = vunpack.c.l.b16 %v6053
    %v6781 = vunpack.c.h.b16 %v6053
    %v6782 = vunpack.c.l.b16 %v6054
    %v6783 = vunpack.c.h.b16 %v6054
    %v6784 = vunpack.c.l.b16 %v6055
    %v6785 = vunpack.c.h.b16 %v6055
    %v6786 = vunpack.c.l.b16 %v6056
    %v6787 = vunpack.c.h.b16 %v6056
    %v6788 = vunpack.c.l.b16 %v6057
    %v6789 = vunpack.c.h.b16 %v6057
    %v6790 = vunpack.c.l.b16 %v6058
    %v6791 = vunpack.c.h.b16 %v6058
    %v6792 = vunpack.c.l.b16 %v6059
    %v6793 = vunpack.c.h.b16 %v6059
    %v6794 = vunpack.c.l.b16 %v6060
    %v6795 = vunpack.c.h.b16 %v6060
    %v6796 = vunpack.c.l.b16 %v6061
    %v6797 = vunpack.c.h.b16 %v6061
    %v6798 = vunpack.c.l.b16 %v6062
    %v6799 = vunpack.c.h.b16 %v6062
    %v6800 = vunpack.c.l.b16 %v6063
    %v6801 = vunpack.c.h.b16 %v6063
    %v6802 = vunpack.c.l.b16 %v6064
    %v6803 = vunpack.c.h.b16 %v6064
    %v6804 = vunpack.c.l.b16 %v6065
    %v6805 = vunpack.c.h.b16 %v6065
    %v6806 = vunpack.c.l.b16 %v6066
    %v6807 = vunpack.c.h.b16 %v6066
    %v6808 = vunpack.c.l.b16 %v6067
    %v6809 = vunpack.c.h.b16 %v6067
    %v6810 = vunpack.c.l.b16 %v6068
    %v6811 = vunpack.c.h.b16 %v6068
    %v6812 = vunpack.c.l.b16 %v6069
    %v6813 = vunpack.c.h.b16 %v6069
    %v6814 = vunpack.c.l.b16 %v6070
    %v6815 = vunpack.c.h.b16 %v6070
    %v6816 = vunpack.c.l.b16 %v6071
    %v6817 = vunpack.c.h.b16 %v6071
    %v6818 = vunpack.c.l.b16 %v6072
    %v6819 = vunpack.c.h.b16 %v6072
    %v6820 = vunpack.c.l.b16 %v6073
    %v6821 = vunpack.c.h.b16 %v6073
    %v6822 = vunpack.c.l.b16 %v6074
    %v6823 = vunpack.c.h.b16 %v6074
    %v6824 = vunpack.c.l.b16 %v6075
    %v6825 = vunpack.c.h.b16 %v6075
    %v6826 = vunpack.c.l.b16 %v6076
    %v6827 = vunpack.c.h.b16 %v6076
    %v6828 = vunpack.c.l.b16 %v6077
    %v6829 = vunpack.c.h.b16 %v6077
    %v6830 = vunpack.c.l.b16 %v6078
    %v6831 = vunpack.c.h.b16 %v6078
    %v6832 = vunpack.c.l.b16 %v6079
    %v6833 = vunpack.c.h.b16 %v6079
    %v6834 = vunpack.c.l.b16 %v6080
    %v6835 = vunpack.c.h.b16 %v6080
    %v6836 = vunpack.c.l.b16 %v6081
    %v6837 = vunpack.c.h.b16 %v6081
    %v6838 = vunpack.c.l.b16 %v6082
    %v6839 = vunpack.c.h.b16 %v6082
    %v6840 = vunpack.c.l.b16 %v6083
    %v6841 = vunpack.c.h.b16 %v6083
    %v6842 = vunpack.c.l.b16 %v6084
    %v6843 = vunpack.c.h.b16 %v6084
    %v6844 = vunpack.c.l.b16 %v6085
    %v6845 = vunpack.c.h.b16 %v6085
    %v6846 = vunpack.c.l.b16 %v6086
    %v6847 = vunpack.c.h.b16 %v6086
    %v6848 = vunpack.c.l.b16 %v6087
    %v6849 = vunpack.c.h.b16 %v6087
    %v6850 = vunpack.c.l.b16 %v6088
    %v6851 = vunpack.c.h.b16 %v6088
    %v6852 = vunpack.c.l.b16 %v6089
    %v6853 = vunpack.c.h.b16 %v6089
    %v6854 = vunpack.c.l.b16 %v6090
    %v6855 = vunpack.c.h.b16 %v6090
    %v6856 = vunpack.c.l.b16 %v6091
    %v6857 = vunpack.c.h.b16 %v6091
    %v6858 = vunpack.c.l.b16 %v6092
    %v6859 = vunpack.c.h.b16 %v6092
    %v6860 = vunpack.c.l.b16 %v6093
    %v6861 = vunpack.c.h.b16 %v6093
    %v6862 = vunpack.c.l.b16 %v6094
    %v6863 = vunpack.c.h.b16 %v6094
    %v6864 = vunpack.c.l.b16 %v6095
    %v6865 = vunpack.c.h.b16 %v6095
    %v6866 = vunpack.c.l.b16 %v6096
    %v6867 = vunpack.c.h.b16 %v6096
    %v6868 = vunpack.c.l.b16 %v6097
    %v6869 = vunpack.c.h.b16 %v6097
    %v6870 = vunpack.c.l.b16 %v6098
    %v6871 = vunpack.c.h.b16 %v6098
    %v6872 = vunpack.c.l.b16 %v6099
    %v6873 = vunpack.c.h.b16 %v6099
    %v6874 = vunpack.c.l.b16 %v6100
    %v6875 = vunpack.c.h.b16 %v6100
    %v6876 = vunpack.c.l.b16 %v6101
    %v6877 = vunpack.c.h.b16 %v6101
    %v6878 = vunpack.c.l.b16 %v6102
    %v6879 = vunpack.c.h.b16 %v6102
    %v6880 = vunpack.c.l.b16 %v6103
    %v6881 = vunpack.c.h.b16 %v6103
    %v6882 = vunpack.c.l.b16 %v6104
    %v6883 = vunpack.c.h.b16 %v6104
    %v6884 = vunpack.c.l.b16 %v6105
    %v6885 = vunpack.c.h.b16 %v6105
    %v6886 = vunpack.c.l.b16 %v6106
    %v6887 = vunpack.c.h.b16 %v6106
    %v6888 = vunpack.c.l.b16 %v6107
    %v6889 = vunpack.c.h.b16 %v6107
    %v6890 = vunpack.c.l.b16 %v6108
    %v6891 = vunpack.c.h.b16 %v6108
    %v6892 = vunpack.c.l.b16 %v6109
    %v6893 = vunpack.c.h.b16 %v6109
    %v6894 = vunpack.c.l.b16 %v6110
    %v6895 = vunpack.c.h.b16 %v6110
    %v6896 = vunpack.c.l.b16 %v6111
    %v6897 = vunpack.c.h.b16 %v6111
    %v6898 = vunpack.c.l.b16 %v6112
    %v6899 = vunpack.c.h.b16 %v6112
    %v6900 = vunpack.c.l.b16 %v6113
    %v6901 = vunpack.c.h.b16 %v6113
    %v6902 = vunpack.c.l.b16 %v6114
    %v6903 = vunpack.c.h.b16 %v6114
    %v6904 = vunpack.c.l.b16 %v6115
    %v6905 = vunpack.c.h.b16 %v6115
    %v6906 = vunpack.c.l.b16 %v6116
    %v6907 = vunpack.c.h.b16 %v6116
    %v6908 = vunpack.c.l.b16 %v6117
    %v6909 = vunpack.c.h.b16 %v6117
    %v6910 = vunpack.c.l.b16 %v6118
    %v6911 = vunpack.c.h.b16 %v6118
    %v6912 = vunpack.c.l.b16 %v6119
    %v6913 = vunpack.c.h.b16 %v6119
    %v6914 = vunpack.c.l.b16 %v6120
    %v6915 = vunpack.c.h.b16 %v6120
    %v6916 = vunpack.c.l.b16 %v6121
    %v6917 = vunpack.c.h.b16 %v6121
    %v6918 = vunpack.c.l.b16 %v6122
    %v6919 = vunpack.c.h.b16 %v6122
    %v6920 = vunpack.c.l.b16 %v6123
    %v6921 = vunpack.c.h.b16 %v6123
    %v6922 = vunpack.c.l.b16 %v6124
    %v6923 = vunpack.c.h.b16 %v6124
    %v6924 = vunpack.c.l.b16 %v6125
    %v6925 = vunpack.c.h.b16 %v6125
    %v6926 = vunpack.c.l.b16 %v6126
    %v6927 = vunpack.c.h.b16 %v6126
    %v6928 = vunpack.c.l.b16 %v6127
    %v6929 = vunpack.c.h.b16 %v6127
    %v6930 = vunpack.c.l.b16 %v6128
    %v6931 = vunpack.c.h.b16 %v6128
    %v6932 = vunpack.c.l.b16 %v6129
    %v6933 = vunpack.c.h.b16 %v6129
    %v6934 = vunpack.c.l.b16 %v6130
    %v6935 = vunpack.c.h.b16 %v6130
    %v6936 = vunpack.c.l.b16 %v6131
    %v6937 = vunpack.c.h.b16 %v6131
    %v6938 = vunpack.c.l.b16 %v6132
    %v6939 = vunpack.c.h.b16 %v6132
    %v6940 = vunpack.c.l.b16 %v6133
    %v6941 = vunpack.c.h.b16 %v6133
    %v6942 = vunpack.c.l.b16 %v6134
    %v6943 = vunpack.c.h.b16 %v6134
    %v6944 = vunpack.c.l.b16 %v6135
    %v6945 = vunpack.c.h.b16 %v6135
    %v6946 = vpack.c.b16 %v6442, %v6434
    %v6947 = vpack.c.b16 %v6443, %v6435
    %v6948 = vpack.c.b16 %v6444, %v6436
    %v6949 = vpack.c.b16 %v6445, %v6437
    %v6950 = vpack.c.b16 %v6446, %v6438
    %v6951 = vpack.c.b16 %v6447, %v6439
    %v6952 = vpack.c.b16 %v6448, %v6440
    %v6953 = vpack.c.b16 %v6449, %v6441
    %v6954 = vpack.c.b16 %v6458, %v6450
    %v6955 = vpack.c.b16 %v6459, %v6451
    %v6956 = vpack.c.b16 %v6460, %v6452
    %v6957 = vpack.c.b16 %v6461, %v6453
    %v6958 = vpack.c.b16 %v6462, %v6454
    %v6959 = vpack.c.b16 %v6463, %v6455
    %v6960 = vpack.c.b16 %v6464, %v6456
    %v6961 = vpack.c.b16 %v6465, %v6457
    %v6962 = vpack.c.b16 %v6474, %v6466
    %v6963 = vpack.c.b16 %v6475, %v6467
    %v6964 = vpack.c.b16 %v6476, %v6468
    %v6965 = vpack.c.b16 %v6477, %v6469
    %v6966 = vpack.c.b16 %v6478, %v6470
    %v6967 = vpack.c.b16 %v6479, %v6471
    %v6968 = vpack.c.b16 %v6480, %v6472
    %v6969 = vpack.c.b16 %v6481, %v6473
    %v6970 = vpack.c.b16 %v6490, %v6482
    %v6971 = vpack.c.b16 %v6491, %v6483
    %v6972 = vpack.c.b16 %v6492, %v6484
    %v6973 = vpack.c.b16 %v6493, %v6485
    %v6974 = vpack.c.b16 %v6494, %v6486
    %v6975 = vpack.c.b16 %v6495, %v6487
    %v6976 = vpack.c.b16 %v6496, %v6488
    %v6977 = vpack.c.b16 %v6497, %v6489
    %v6978 = vpack.c.b16 %v6506, %v6498
    %v6979 = vpack.c.b16 %v6507, %v6499
    %v6980 = vpack.c.b16 %v6508, %v6500
    %v6981 = vpack.c.b16 %v6509, %v6501
    %v6982 = vpack.c.b16 %v6510, %v6502
    %v6983 = vpack.c.b16 %v6511, %v6503
    %v6984 = vpack.c.b16 %v6512, %v6504
    %v6985 = vpack.c.b16 %v6513, %v6505
    %v6986 = vpack.c.b16 %v6522, %v6514
    %v6987 = vpack.c.b16 %v6523, %v6515
    %v6988 = vpack.c.b16 %v6524, %v6516
    %v6989 = vpack.c.b16 %v6525, %v6517
    %v6990 = vpack.c.b16 %v6526, %v6518
    %v6991 = vpack.c.b16 %v6527, %v6519
    %v6992 = vpack.c.b16 %v6528, %v6520
    %v6993 = vpack.c.b16 %v6529, %v6521
    %v6994 = vpack.c.b16 %v6538, %v6530
    %v6995 = vpack.c.b16 %v6539, %v6531
    %v6996 = vpack.c.b16 %v6540, %v6532
    %v6997 = vpack.c.b16 %v6541, %v6533
    %v6998 = vpack.c.b16 %v6542, %v6534
    %v6999 = vpack.c.b16 %v6543, %v6535
    %v7000 = vpack.c.b16 %v6544, %v6536
    %v7001 = vpack.c.b16 %v6545, %v6537
    %v7002 = vpack.c.b16 %v6554, %v6546
    %v7003 = vpack.c.b16 %v6555, %v6547
    %v7004 = vpack.c.b16 %v6556, %v6548
    %v7005 = vpack.c.b16 %v6557, %v6549
    %v7006 = vpack.c.b16 %v6558, %v6550
    %v7007 = vpack.c.b16 %v6559, %v6551
    %v7008 = vpack.c.b16 %v6560, %v6552
    %v7009 = vpack.c.b16 %v6561, %v6553
    %v7010 = vpack.c.b16 %v6570, %v6562
    %v7011 = vpack.c.b16 %v6571, %v6563
    %v7012 = vpack.c.b16 %v6572, %v6564
    %v7013 = vpack.c.b16 %v6573, %v6565
    %v7014 = vpack.c.b16 %v6574, %v6566
    %v7015 = vpack.c.b16 %v6575, %v6567
    %v7016 = vpack.c.b16 %v6576, %v6568
    %v7017 = vpack.c.b16 %v6577, %v6569
    %v7018 = vpack.c.b16 %v6586, %v6578
    %v7019 = vpack.c.b16 %v6587, %v6579
    %v7020 = vpack.c.b16 %v6588, %v6580
    %v7021 = vpack.c.b16 %v6589, %v6581
    %v7022 = vpack.c.b16 %v6590, %v6582
    %v7023 = vpack.c.b16 %v6591, %v6583
    %v7024 = vpack.c.b16 %v6592, %v6584
    %v7025 = vpack.c.b16 %v6593, %v6585
    %v7026 = vpack.c.b16 %v6602, %v6594
    %v7027 = vpack.c.b16 %v6603, %v6595
    %v7028 = vpack.c.b16 %v6604, %v6596
    %v7029 = vpack.c.b16 %v6605, %v6597
    %v7030 = vpack.c.b16 %v6606, %v6598
    %v7031 = vpack.c.b16 %v6607, %v6599
    %v7032 = vpack.c.b16 %v6608, %v6600
    %v7033 = vpack.c.b16 %v6609, %v6601
    %v7034 = vpack.c.b16 %v6618, %v6610
    %v7035 = vpack.c.b16 %v6619, %v6611
    %v7036 = vpack.c.b16 %v6620, %v6612
    %v7037 = vpack.c.b16 %v6621, %v6613
    %v7038 = vpack.c.b16 %v6622, %v6614
    %v7039 = vpack.c.b16 %v6623, %v6615
    %v7040 = vpack.c.b16 %v6624, %v6616
    %v7041 = vpack.c.b16 %v6625, %v6617
    %v7042 = vpack.c.b16 %v6634, %v6626
    %v7043 = vpack.c.b16 %v6635, %v6627
    %v7044 = vpack.c.b16 %v6636, %v6628
    %v7045 = vpack.c.b16 %v6637, %v6629
    %v7046 = vpack.c.b16 %v6638, %v6630
    %v7047 = vpack.c.b16 %v6639, %v6631
    %v7048 = vpack.c.b16 %v6640, %v6632
    %v7049 = vpack.c.b16 %v6641, %v6633
    %v7050 = vpack.c.b16 %v6650, %v6642
    %v7051 = vpack.c.b16 %v6651, %v6643
    %v7052 = vpack.c.b16 %v6652, %v6644
    %v7053 = vpack.c.b16 %v6653, %v6645
    %v7054 = vpack.c.b16 %v6654, %v6646
    %v7055 = vpack.c.b16 %v6655, %v6647
    %v7056 = vpack.c.b16 %v6656, %v6648
    %v7057 = vpack.c.b16 %v6657, %v6649
    %v7058 = vpack.c.b16 %v6666, %v6658
    %v7059 = vpack.c.b16 %v6667, %v6659
    %v7060 = vpack.c.b16 %v6668, %v6660
    %v7061 = vpack.c.b16 %v6669, %v6661
    %v7062 = vpack.c.b16 %v6670, %v6662
    %v7063 = vpack.c.b16 %v6671, %v6663
    %v7064 = vpack.c.b16 %v6672, %v6664
    %v7065 = vpack.c.b16 %v6673, %v6665
    %v7066 = vpack.c.b16 %v6682, %v6674
    %v7067 = vpack.c.b16 %v6683, %v6675
    %v7068 = vpack.c.b16 %v6684, %v6676
    %v7069 = vpack.c.b16 %v6685, %v6677
    %v7070 = vpack.c.b16 %v6686, %v6678
    %v7071 = vpack.c.b16 %v6687, %v6679
    %v7072 = vpack.c.b16 %v6688, %v6680
    %v7073 = vpack.c.b16 %v6689, %v6681
    %v7074 = vpack.c.b16 %v6698, %v6690
    %v7075 = vpack.c.b16 %v6699, %v6691
    %v7076 = vpack.c.b16 %v6700, %v6692
    %v7077 = vpack.c.b16 %v6701, %v6693
    %v7078 = vpack.c.b16 %v6702, %v6694
    %v7079 = vpack.c.b16 %v6703, %v6695
    %v7080 = vpack.c.b16 %v6704, %v6696
    %v7081 = vpack.c.b16 %v6705, %v6697
    %v7082 = vpack.c.b16 %v6714, %v6706
    %v7083 = vpack.c.b16 %v6715, %v6707
    %v7084 = vpack.c.b16 %v6716, %v6708
    %v7085 = vpack.c.b16 %v6717, %v6709
    %v7086 = vpack.c.b16 %v6718, %v6710
    %v7087 = vpack.c.b16 %v6719, %v6711
    %v7088 = vpack.c.b16 %v6720, %v6712
    %v7089 = vpack.c.b16 %v6721, %v6713
    %v7090 = vpack.c.b16 %v6730, %v6722
    %v7091 = vpack.c.b16 %v6731, %v6723
    %v7092 = vpack.c.b16 %v6732, %v6724
    %v7093 = vpack.c.b16 %v6733, %v6725
    %v7094 = vpack.c.b16 %v6734, %v6726
    %v7095 = vpack.c.b16 %v6735, %v6727
    %v7096 = vpack.c.b16 %v6736, %v6728
    %v7097 = vpack.c.b16 %v6737, %v6729
    %v7098 = vpack.c.b16 %v6746, %v6738
    %v7099 = vpack.c.b16 %v6747, %v6739
    %v7100 = vpack.c.b16 %v6748, %v6740
    %v7101 = vpack.c.b16 %v6749, %v6741
    %v7102 = vpack.c.b16 %v6750, %v6742
    %v7103 = vpack.c.b16 %v6751, %v6743
    %v7104 = vpack.c.b16 %v6752, %v6744
    %v7105 = vpack.c.b16 %v6753, %v6745
    %v7106 = vpack.c.b16 %v6762, %v6754
    %v7107 = vpack.c.b16 %v6763, %v6755
    %v7108 = vpack.c.b16 %v6764, %v6756
    %v7109 = vpack.c.b16 %v6765, %v6757
    %v7110 = vpack.c.b16 %v6766, %v6758
    %v7111 = vpack.c.b16 %v6767, %v6759
    %v7112 = vpack.c.b16 %v6768, %v6760
    %v7113 = vpack.c.b16 %v6769, %v6761
    %v7114 = vpack.c.b16 %v6778, %v6770
    %v7115 = vpack.c.b16 %v6779, %v6771
    %v7116 = vpack.c.b16 %v6780, %v6772
    %v7117 = vpack.c.b16 %v6781, %v6773
    %v7118 = vpack.c.b16 %v6782, %v6774
    %v7119 = vpack.c.b16 %v6783, %v6775
    %v7120 = vpack.c.b16 %v6784, %v6776
    %v7121 = vpack.c.b16 %v6785, %v6777
    %v7122 = vpack.c.b16 %v6794, %v6786
    %v7123 = vpack.c.b16 %v6795, %v6787
    %v7124 = vpack.c.b16 %v6796, %v6788
    %v7125 = vpack.c.b16 %v6797, %v6789
    %v7126 = vpack.c.b16 %v6798, %v6790
    %v7127 = vpack.c.b16 %v6799, %v6791
    %v7128 = vpack.c.b16 %v6800, %v6792
    %v7129 = vpack.c.b16 %v6801, %v6793
    %v7130 = vpack.c.b16 %v6810, %v6802
    %v7131 = vpack.c.b16 %v6811, %v6803
    %v7132 = vpack.c.b16 %v6812, %v6804
    %v7133 = vpack.c.b16 %v6813, %v6805
    %v7134 = vpack.c.b16 %v6814, %v6806
    %v7135 = vpack.c.b16 %v6815, %v6807
    %v7136 = vpack.c.b16 %v6816, %v6808
    %v7137 = vpack.c.b16 %v6817, %v6809
    %v7138 = vpack.c.b16 %v6826, %v6818
    %v7139 = vpack.c.b16 %v6827, %v6819
    %v7140 = vpack.c.b16 %v6828, %v6820
    %v7141 = vpack.c.b16 %v6829, %v6821
    %v7142 = vpack.c.b16 %v6830, %v6822
    %v7143 = vpack.c.b16 %v6831, %v6823
    %v7144 = vpack.c.b16 %v6832, %v6824
    %v7145 = vpack.c.b16 %v6833, %v6825
    %v7146 = vpack.c.b16 %v6842, %v6834
    %v7147 = vpack.c.b16 %v6843, %v6835
    %v7148 = vpack.c.b16 %v6844, %v6836
    %v7149 = vpack.c.b16 %v6845, %v6837
    %v7150 = vpack.c.b16 %v6846, %v6838
    %v7151 = vpack.c.b16 %v6847, %v6839
    %v7152 = vpack.c.b16 %v6848, %v6840
    %v7153 = vpack.c.b16 %v6849, %v6841
    %v7154 = vpack.c.b16 %v6858, %v6850
    %v7155 = vpack.c.b16 %v6859, %v6851
    %v7156 = vpack.c.b16 %v6860, %v6852
    %v7157 = vpack.c.b16 %v6861, %v6853
    %v7158 = vpack.c.b16 %v6862, %v6854
    %v7159 = vpack.c.b16 %v6863, %v6855
    %v7160 = vpack.c.b16 %v6864, %v6856
    %v7161 = vpack.c.b16 %v6865, %v6857
    %v7162 = vpack.c.b16 %v6874, %v6866
    %v7163 = vpack.c.b16 %v6875, %v6867
    %v7164 = vpack.c.b16 %v6876, %v6868
    %v7165 = vpack.c.b16 %v6877, %v6869
    %v7166 = vpack.c.b16 %v6878, %v6870
    %v7167 = vpack.c.b16 %v6879, %v6871
    %v7168 = vpack.c.b16 %v6880, %v6872
    %v7169 = vpack.c.b16 %v6881, %v6873
    %v7170 = vpack.c.b16 %v6890, %v6882
    %v7171 = vpack.c.b16 %v6891, %v6883
    %v7172 = vpack.c.b16 %v6892, %v6884
    %v7173 = vpack.c.b16 %v6893, %v6885
    %v7174 = vpack.c.b16 %v6894, %v6886
    %v7175 = vpack.c.b16 %v6895, %v6887
    %v7176 = vpack.c.b16 %v6896, %v6888
    %v7177 = vpack.c.b16 %v6897, %v6889
    %v7178 = vpack.c.b16 %v6906, %v6898
    %v7179 = vpack.c.b16 %v6907, %v6899
    %v7180 = vpack.c.b16 %v6908, %v6900
    %v7181 = vpack.c.b16 %v6909, %v6901
    %v7182 = vpack.c.b16 %v6910, %v6902
    %v7183 = vpack.c.b16 %v6911, %v6903
    %v7184 = vpack.c.b16 %v6912, %v6904
    %v7185 = vpack.c.b16 %v6913, %v6905
    %v7186 = vpack.c.b16 %v6922, %v6914
    %v7187 = vpack.c.b16 %v6923, %v6915
    %v7188 = vpack.c.b16 %v6924, %v6916
    %v7189 = vpack.c.b16 %v6925, %v6917
    %v7190 = vpack.c.b16 %v6926, %v6918
    %v7191 = vpack.c.b16 %v6927, %v6919
    %v7192 = vpack.c.b16 %v6928, %v6920
    %v7193 = vpack.c.b16 %v6929, %v6921
    %v7194 = vpack.c.b16 %v6938, %v6930
    %v7195 = vpack.c.b16 %v6939, %v6931
    %v7196 = vpack.c.b16 %v6940, %v6932
    %v7197 = vpack.c.b16 %v6941, %v6933
    %v7198 = vpack.c.b16 %v6942, %v6934
    %v7199 = vpack.c.b16 %v6943, %v6935
    %v7200 = vpack.c.b16 %v6944, %v6936
    %v7201 = vpack.c.b16 %v6945, %v6937
    %7458 = vmatprep.subr.bf16.mxu0 %v6947
    %7459 = vmatpush1.bf16.msra.mxu0 %v6946
    %7460 = vmatprep.subr.bf16.mxu0 %v6955
    %7461 = vmatpush1.bf16.msra.mxu0 %v6954
    %7462 = vmatprep.subr.bf16.mxu0 %v6963
    %7463 = vmatpush1.bf16.msra.mxu0 %v6962
    %7464 = vmatprep.subr.bf16.mxu0 %v6971
    %7465 = vmatpush1.bf16.msra.mxu0 %v6970
    %7466 = vmatprep.subr.bf16.mxu0 %v6979
    %7467 = vmatpush1.bf16.msra.mxu0 %v6978
    %7468 = vmatprep.subr.bf16.mxu0 %v6987
    %7469 = vmatpush1.bf16.msra.mxu0 %v6986
    %7470 = vmatprep.subr.bf16.mxu0 %v6995
    %7471 = vmatpush1.bf16.msra.mxu0 %v6994
    %7472 = vmatprep.subr.bf16.mxu0 %v7003
    %7473 = vmatpush1.bf16.msra.mxu0 %v7002
    %7474 = vmatprep.subr.bf16.mxu0 %v7011
    %7475 = vmatpush1.bf16.msra.mxu0 %v7010
    %7476 = vmatprep.subr.bf16.mxu0 %v7019
    %7477 = vmatpush1.bf16.msra.mxu0 %v7018
    %7478 = vmatprep.subr.bf16.mxu0 %v7027
    %7479 = vmatpush1.bf16.msra.mxu0 %v7026
    %7480 = vmatprep.subr.bf16.mxu0 %v7035
    %7481 = vmatpush1.bf16.msra.mxu0 %v7034
    %7482 = vmatprep.subr.bf16.mxu0 %v7043
    %7483 = vmatpush1.bf16.msra.mxu0 %v7042
    %7484 = vmatprep.subr.bf16.mxu0 %v7051
    %7485 = vmatpush1.bf16.msra.mxu0 %v7050
    %7486 = vmatprep.subr.bf16.mxu0 %v7059
    %7487 = vmatpush1.bf16.msra.mxu0 %v7058
    %7488 = vmatprep.subr.bf16.mxu0 %v7067
    %7489 = vmatpush1.bf16.msra.mxu0 %v7066
    %7490 = vmatprep.mubr.bf16.mxu0 %v5877
    %7491 = vmatmul.mubr.bf16.gmra.mrb[0].mxu0 %v5876
    %v7492 = vpop.f32.mrb[0].mxu0
    %v7493 = vadd.f32 %v6141, %v7492
    %v7494 = vpop.f32.mrb[0].mxu0
    %v7495 = vadd.f32 %v6145, %v7494
    %v7496 = vpop.f32.mrb[0].mxu0
    %v7497 = vadd.f32 %v6141, %v7496
    %v7498 = vpop.f32.mrb[0].mxu0
    %v7499 = vadd.f32 %v6145, %v7498
    %7500 = vdwg.mxu0
    %7501 = vmatprep.subr.bf16.mxu0 %v7075
    %7502 = vmatpush1.bf16.msra.mxu0 %v7074
    %7503 = vmatprep.subr.bf16.mxu0 %v7083
    %7504 = vmatpush1.bf16.msra.mxu0 %v7082
    %7505 = vmatprep.subr.bf16.mxu0 %v7091
    %7506 = vmatpush1.bf16.msra.mxu0 %v7090
    %7507 = vmatprep.subr.bf16.mxu0 %v7099
    %7508 = vmatpush1.bf16.msra.mxu0 %v7098
    %7509 = vmatprep.subr.bf16.mxu0 %v7107
    %7510 = vmatpush1.bf16.msra.mxu0 %v7106
    %7511 = vmatprep.subr.bf16.mxu0 %v7115
    %7512 = vmatpush1.bf16.msra.mxu0 %v7114
    %7513 = vmatprep.subr.bf16.mxu0 %v7123
    %7514 = vmatpush1.bf16.msra.mxu0 %v7122
    %7515 = vmatprep.subr.bf16.mxu0 %v7131
    %7516 = vmatpush1.bf16.msra.mxu0 %v7130
    %7517 = vmatprep.subr.bf16.mxu0 %v7139
    %7518 = vmatpush1.bf16.msra.mxu0 %v7138
    %7519 = vmatprep.subr.bf16.mxu0 %v7147
    %7520 = vmatpush1.bf16.msra.mxu0 %v7146
    %7521 = vmatprep.subr.bf16.mxu0 %v7155
    %7522 = vmatpush1.bf16.msra.mxu0 %v7154
    %7523 = vmatprep.subr.bf16.mxu0 %v7163
    %7524 = vmatpush1.bf16.msra.mxu0 %v7162
    %7525 = vmatprep.subr.bf16.mxu0 %v7171
    %7526 = vmatpush1.bf16.msra.mxu0 %v7170
    %7527 = vmatprep.subr.bf16.mxu0 %v7179
    %7528 = vmatpush1.bf16.msra.mxu0 %v7178
    %7529 = vmatprep.subr.bf16.mxu0 %v7187
    %7530 = vmatpush1.bf16.msra.mxu0 %v7186
    %7531 = vmatprep.subr.bf16.mxu0 %v7195
    %7532 = vmatpush1.bf16.msra.mxu0 %v7194
    %7533 = vmatprep.mubr.bf16.mxu0 %v5879
    %7534 = vmatmul.mubr.bf16.gmra.mrb[0].mxu0 %v5878
    %v7535 = vpop.f32.mrb[0].mxu0
    %v7536 = vadd.f32 %v7493, %v7535
    %v7537 = vpop.f32.mrb[0].mxu0
    %v7538 = vadd.f32 %v7495, %v7537
    %v7539 = vpop.f32.mrb[0].mxu0
    %v7540 = vadd.f32 %v7497, %v7539
    %v7541 = vpop.f32.mrb[0].mxu0
    %v7542 = vadd.f32 %v7499, %v7541
    %7543 = vdwg.mxu0
    %7544 = vmatprep.subr.bf16.mxu0 %v6949
    %7545 = vmatpush1.bf16.msra.mxu0 %v6948
    %7546 = vmatprep.subr.bf16.mxu0 %v6957
    %7547 = vmatpush1.bf16.msra.mxu0 %v6956
    %7548 = vmatprep.subr.bf16.mxu0 %v6965
    %7549 = vmatpush1.bf16.msra.mxu0 %v6964
    %7550 = vmatprep.subr.bf16.mxu0 %v6973
    %7551 = vmatpush1.bf16.msra.mxu0 %v6972
    %7552 = vmatprep.subr.bf16.mxu0 %v6981
    %7553 = vmatpush1.bf16.msra.mxu0 %v6980
    %7554 = vmatprep.subr.bf16.mxu0 %v6989
    %7555 = vmatpush1.bf16.msra.mxu0 %v6988
    %7556 = vmatprep.subr.bf16.mxu0 %v6997
    %7557 = vmatpush1.bf16.msra.mxu0 %v6996
    %7558 = vmatprep.subr.bf16.mxu0 %v7005
    %7559 = vmatpush1.bf16.msra.mxu0 %v7004
    %7560 = vmatprep.subr.bf16.mxu0 %v7013
    %7561 = vmatpush1.bf16.msra.mxu0 %v7012
    %7562 = vmatprep.subr.bf16.mxu0 %v7021
    %7563 = vmatpush1.bf16.msra.mxu0 %v7020
    %7564 = vmatprep.subr.bf16.mxu0 %v7029
    %7565 = vmatpush1.bf16.msra.mxu0 %v7028
    %7566 = vmatprep.subr.bf16.mxu0 %v7037
    %7567 = vmatpush1.bf16.msra.mxu0 %v7036
    %7568 = vmatprep.subr.bf16.mxu0 %v7045
    %7569 = vmatpush1.bf16.msra.mxu0 %v7044
    %7570 = vmatprep.subr.bf16.mxu0 %v7053
    %7571 = vmatpush1.bf16.msra.mxu0 %v7052
    %7572 = vmatprep.subr.bf16.mxu0 %v7061
    %7573 = vmatpush1.bf16.msra.mxu0 %v7060
    %7574 = vmatprep.subr.bf16.mxu0 %v7069
    %7575 = vmatpush1.bf16.msra.mxu0 %v7068
    %7576 = vmatprep.mubr.bf16.mxu0 %v5877
    %7577 = vmatmul.mubr.bf16.gmra.mrb[0].mxu0 %v5876
    %v7578 = vpop.f32.mrb[0].mxu0
    %v7579 = vadd.f32 %v6149, %v7578
    %v7580 = vpop.f32.mrb[0].mxu0
    %v7581 = vadd.f32 %v6153, %v7580
    %v7582 = vpop.f32.mrb[0].mxu0
    %v7583 = vadd.f32 %v6149, %v7582
    %v7584 = vpop.f32.mrb[0].mxu0
    %v7585 = vadd.f32 %v6153, %v7584
    %7586 = vdwg.mxu0
    %7587 = vmatprep.subr.bf16.mxu0 %v7077
    %7588 = vmatpush1.bf16.msra.mxu0 %v7076
    %7589 = vmatprep.subr.bf16.mxu0 %v7085
    %7590 = vmatpush1.bf16.msra.mxu0 %v7084
    %7591 = vmatprep.subr.bf16.mxu0 %v7093
    %7592 = vmatpush1.bf16.msra.mxu0 %v7092
    %7593 = vmatprep.subr.bf16.mxu0 %v7101
    %7594 = vmatpush1.bf16.msra.mxu0 %v7100
    %7595 = vmatprep.subr.bf16.mxu0 %v7109
    %7596 = vmatpush1.bf16.msra.mxu0 %v7108
    %7597 = vmatprep.subr.bf16.mxu0 %v7117
    %7598 = vmatpush1.bf16.msra.mxu0 %v7116
    %7599 = vmatprep.subr.bf16.mxu0 %v7125
    %7600 = vmatpush1.bf16.msra.mxu0 %v7124
    %7601 = vmatprep.subr.bf16.mxu0 %v7133
    %7602 = vmatpush1.bf16.msra.mxu0 %v7132
    %7603 = vmatprep.subr.bf16.mxu0 %v7141
    %7604 = vmatpush1.bf16.msra.mxu0 %v7140
    %7605 = vmatprep.subr.bf16.mxu0 %v7149
    %7606 = vmatpush1.bf16.msra.mxu0 %v7148
    %7607 = vmatprep.subr.bf16.mxu0 %v7157
    %7608 = vmatpush1.bf16.msra.mxu0 %v7156
    %7609 = vmatprep.subr.bf16.mxu0 %v7165
    %7610 = vmatpush1.bf16.msra.mxu0 %v7164
    %7611 = vmatprep.subr.bf16.mxu0 %v7173
    %7612 = vmatpush1.bf16.msra.mxu0 %v7172
    %7613 = vmatprep.subr.bf16.mxu0 %v7181
    %7614 = vmatpush1.bf16.msra.mxu0 %v7180
    %7615 = vmatprep.subr.bf16.mxu0 %v7189
    %7616 = vmatpush1.bf16.msra.mxu0 %v7188
    %7617 = vmatprep.subr.bf16.mxu0 %v7197
    %7618 = vmatpush1.bf16.msra.mxu0 %v7196
    %7619 = vmatprep.mubr.bf16.mxu0 %v5879
    %7620 = vmatmul.mubr.bf16.gmra.mrb[0].mxu0 %v5878
    %v7621 = vpop.f32.mrb[0].mxu0
    %v7622 = vadd.f32 %v7579, %v7621
    %v7623 = vpop.f32.mrb[0].mxu0
    %v7624 = vadd.f32 %v7581, %v7623
    %v7625 = vpop.f32.mrb[0].mxu0
    %v7626 = vadd.f32 %v7583, %v7625
    %v7627 = vpop.f32.mrb[0].mxu0
    %v7628 = vadd.f32 %v7585, %v7627
    %7629 = vdwg.mxu0
    %7630 = vmatprep.subr.bf16.mxu0 %v6951
    %7631 = vmatpush1.bf16.msra.mxu0 %v6950
    %7632 = vmatprep.subr.bf16.mxu0 %v6959
    %7633 = vmatpush1.bf16.msra.mxu0 %v6958
    %7634 = vmatprep.subr.bf16.mxu0 %v6967
    %7635 = vmatpush1.bf16.msra.mxu0 %v6966
    %7636 = vmatprep.subr.bf16.mxu0 %v6975
    %7637 = vmatpush1.bf16.msra.mxu0 %v6974
    %7638 = vmatprep.subr.bf16.mxu0 %v6983
    %7639 = vmatpush1.bf16.msra.mxu0 %v6982
    %7640 = vmatprep.subr.bf16.mxu0 %v6991
    %7641 = vmatpush1.bf16.msra.mxu0 %v6990
    %7642 = vmatprep.subr.bf16.mxu0 %v6999
    %7643 = vmatpush1.bf16.msra.mxu0 %v6998
    %7644 = vmatprep.subr.bf16.mxu0 %v7007
    %7645 = vmatpush1.bf16.msra.mxu0 %v7006
    %7646 = vmatprep.subr.bf16.mxu0 %v7015
    %7647 = vmatpush1.bf16.msra.mxu0 %v7014
    %7648 = vmatprep.subr.bf16.mxu0 %v7023
    %7649 = vmatpush1.bf16.msra.mxu0 %v7022
    %7650 = vmatprep.subr.bf16.mxu0 %v7031
    %7651 = vmatpush1.bf16.msra.mxu0 %v7030
    %7652 = vmatprep.subr.bf16.mxu0 %v7039
    %7653 = vmatpush1.bf16.msra.mxu0 %v7038
    %7654 = vmatprep.subr.bf16.mxu0 %v7047
    %7655 = vmatpush1.bf16.msra.mxu0 %v7046
    %7656 = vmatprep.subr.bf16.mxu0 %v7055
    %7657 = vmatpush1.bf16.msra.mxu0 %v7054
    %7658 = vmatprep.subr.bf16.mxu0 %v7063
    %7659 = vmatpush1.bf16.msra.mxu0 %v7062
    %7660 = vmatprep.subr.bf16.mxu0 %v7071
    %7661 = vmatpush1.bf16.msra.mxu0 %v7070
    %7662 = vmatprep.mubr.bf16.mxu0 %v5877
    %7663 = vmatmul.mubr.bf16.gmra.mrb[0].mxu0 %v5876
    %v7664 = vpop.f32.mrb[0].mxu0
    %v7665 = vadd.f32 %v6157, %v7664
    %v7666 = vpop.f32.mrb[0].mxu0
    %v7667 = vadd.f32 %v6161, %v7666
    %v7668 = vpop.f32.mrb[0].mxu0
    %v7669 = vadd.f32 %v6157, %v7668
    %v7670 = vpop.f32.mrb[0].mxu0
    %v7671 = vadd.f32 %v6161, %v7670
    %7672 = vdwg.mxu0
    %7673 = vmatprep.subr.bf16.mxu0 %v7079
    %7674 = vmatpush1.bf16.msra.mxu0 %v7078
    %7675 = vmatprep.subr.bf16.mxu0 %v7087
    %7676 = vmatpush1.bf16.msra.mxu0 %v7086
    %7677 = vmatprep.subr.bf16.mxu0 %v7095
    %7678 = vmatpush1.bf16.msra.mxu0 %v7094
    %7679 = vmatprep.subr.bf16.mxu0 %v7103
    %7680 = vmatpush1.bf16.msra.mxu0 %v7102
    %7681 = vmatprep.subr.bf16.mxu0 %v7111
    %7682 = vmatpush1.bf16.msra.mxu0 %v7110
    %7683 = vmatprep.subr.bf16.mxu0 %v7119
    %7684 = vmatpush1.bf16.msra.mxu0 %v7118
    %7685 = vmatprep.subr.bf16.mxu0 %v7127
    %7686 = vmatpush1.bf16.msra.mxu0 %v7126
    %7687 = vmatprep.subr.bf16.mxu0 %v7135
    %7688 = vmatpush1.bf16.msra.mxu0 %v7134
    %7689 = vmatprep.subr.bf16.mxu0 %v7143
    %7690 = vmatpush1.bf16.msra.mxu0 %v7142
    %7691 = vmatprep.subr.bf16.mxu0 %v7151
    %7692 = vmatpush1.bf16.msra.mxu0 %v7150
    %7693 = vmatprep.subr.bf16.mxu0 %v7159
    %7694 = vmatpush1.bf16.msra.mxu0 %v7158
    %7695 = vmatprep.subr.bf16.mxu0 %v7167
    %7696 = vmatpush1.bf16.msra.mxu0 %v7166
    %7697 = vmatprep.subr.bf16.mxu0 %v7175
    %7698 = vmatpush1.bf16.msra.mxu0 %v7174
    %7699 = vmatprep.subr.bf16.mxu0 %v7183
    %7700 = vmatpush1.bf16.msra.mxu0 %v7182
    %7701 = vmatprep.subr.bf16.mxu0 %v7191
    %7702 = vmatpush1.bf16.msra.mxu0 %v7190
    %7703 = vmatprep.subr.bf16.mxu0 %v7199
    %7704 = vmatpush1.bf16.msra.mxu0 %v7198
    %7705 = vmatprep.mubr.bf16.mxu0 %v5879
    %7706 = vmatmul.mubr.bf16.gmra.mrb[0].mxu0 %v5878
    %v7707 = vpop.f32.mrb[0].mxu0
    %v7708 = vadd.f32 %v7665, %v7707
    %v7709 = vpop.f32.mrb[0].mxu0
    %v7710 = vadd.f32 %v7667, %v7709
    %v7711 = vpop.f32.mrb[0].mxu0
    %v7712 = vadd.f32 %v7669, %v7711
    %v7713 = vpop.f32.mrb[0].mxu0
    %v7714 = vadd.f32 %v7671, %v7713
    %7715 = vdwg.mxu0
    %7716 = vmatprep.subr.bf16.mxu0 %v6953
    %7717 = vmatpush1.bf16.msra.mxu0 %v6952
    %7718 = vmatprep.subr.bf16.mxu0 %v6961
    %7719 = vmatpush1.bf16.msra.mxu0 %v6960
    %7720 = vmatprep.subr.bf16.mxu0 %v6969
    %7721 = vmatpush1.bf16.msra.mxu0 %v6968
    %7722 = vmatprep.subr.bf16.mxu0 %v6977
    %7723 = vmatpush1.bf16.msra.mxu0 %v6976
    %7724 = vmatprep.subr.bf16.mxu0 %v6985
    %7725 = vmatpush1.bf16.msra.mxu0 %v6984
    %7726 = vmatprep.subr.bf16.mxu0 %v6993
    %7727 = vmatpush1.bf16.msra.mxu0 %v6992
    %7728 = vmatprep.subr.bf16.mxu0 %v7001
    %7729 = vmatpush1.bf16.msra.mxu0 %v7000
    %7730 = vmatprep.subr.bf16.mxu0 %v7009
    %7731 = vmatpush1.bf16.msra.mxu0 %v7008
    %7732 = vmatprep.subr.bf16.mxu0 %v7017
    %7733 = vmatpush1.bf16.msra.mxu0 %v7016
    %7734 = vmatprep.subr.bf16.mxu0 %v7025
    %7735 = vmatpush1.bf16.msra.mxu0 %v7024
    %7736 = vmatprep.subr.bf16.mxu0 %v7033
    %7737 = vmatpush1.bf16.msra.mxu0 %v7032
    %7738 = vmatprep.subr.bf16.mxu0 %v7041
    %7739 = vmatpush1.bf16.msra.mxu0 %v7040
    %7740 = vmatprep.subr.bf16.mxu0 %v7049
    %7741 = vmatpush1.bf16.msra.mxu0 %v7048
    %7742 = vmatprep.subr.bf16.mxu0 %v7057
    %7743 = vmatpush1.bf16.msra.mxu0 %v7056
    %7744 = vmatprep.subr.bf16.mxu0 %v7065
    %7745 = vmatpush1.bf16.msra.mxu0 %v7064
    %7746 = vmatprep.subr.bf16.mxu0 %v7073
    %7747 = vmatpush1.bf16.msra.mxu0 %v7072
    %7748 = vmatprep.mubr.bf16.mxu0 %v5877
    %7749 = vmatmul.mubr.bf16.gmra.mrb[0].mxu0 %v5876
    %v7750 = vpop.f32.mrb[0].mxu0
    %v7751 = vadd.f32 %v6165, %v7750
    %v7752 = vpop.f32.mrb[0].mxu0
    %v7753 = vadd.f32 %v6169, %v7752
    %v7754 = vpop.f32.mrb[0].mxu0
    %v7755 = vadd.f32 %v6165, %v7754
    %v7756 = vpop.f32.mrb[0].mxu0
    %v7757 = vadd.f32 %v6169, %v7756
    %7758 = vdwg.mxu0
    %7759 = vmatprep.subr.bf16.mxu0 %v7081
    %7760 = vmatpush1.bf16.msra.mxu0 %v7080
    %7761 = vmatprep.subr.bf16.mxu0 %v7089
    %7762 = vmatpush1.bf16.msra.mxu0 %v7088
    %7763 = vmatprep.subr.bf16.mxu0 %v7097
    %7764 = vmatpush1.bf16.msra.mxu0 %v7096
    %7765 = vmatprep.subr.bf16.mxu0 %v7105
    %7766 = vmatpush1.bf16.msra.mxu0 %v7104
    %7767 = vmatprep.subr.bf16.mxu0 %v7113
    %7768 = vmatpush1.bf16.msra.mxu0 %v7112
    %7769 = vmatprep.subr.bf16.mxu0 %v7121
    %7770 = vmatpush1.bf16.msra.mxu0 %v7120
    %7771 = vmatprep.subr.bf16.mxu0 %v7129
    %7772 = vmatpush1.bf16.msra.mxu0 %v7128
    %7773 = vmatprep.subr.bf16.mxu0 %v7137
    %7774 = vmatpush1.bf16.msra.mxu0 %v7136
    %7775 = vmatprep.subr.bf16.mxu0 %v7145
    %7776 = vmatpush1.bf16.msra.mxu0 %v7144
    %7777 = vmatprep.subr.bf16.mxu0 %v7153
    %7778 = vmatpush1.bf16.msra.mxu0 %v7152
    %7779 = vmatprep.subr.bf16.mxu0 %v7161
    %7780 = vmatpush1.bf16.msra.mxu0 %v7160
    %7781 = vmatprep.subr.bf16.mxu0 %v7169
    %7782 = vmatpush1.bf16.msra.mxu0 %v7168
    %7783 = vmatprep.subr.bf16.mxu0 %v7177
    %7784 = vmatpush1.bf16.msra.mxu0 %v7176
    %7785 = vmatprep.subr.bf16.mxu0 %v7185
    %7786 = vmatpush1.bf16.msra.mxu0 %v7184
    %7787 = vmatprep.subr.bf16.mxu0 %v7193
    %7788 = vmatpush1.bf16.msra.mxu0 %v7192
    %7789 = vmatprep.subr.bf16.mxu0 %v7201
    %7790 = vmatpush1.bf16.msra.mxu0 %v7200
    %7791 = vmatprep.mubr.bf16.mxu0 %v5879
    %7792 = vmatmul.mubr.bf16.gmra.mrb[0].mxu0 %v5878
    %v7793 = vpop.f32.mrb[0].mxu0
    %v7794 = vadd.f32 %v7751, %v7793
    %v7795 = vpop.f32.mrb[0].mxu0
    %v7796 = vadd.f32 %v7753, %v7795
    %v7797 = vpop.f32.mrb[0].mxu0
    %v7798 = vadd.f32 %v7755, %v7797
    %v7799 = vpop.f32.mrb[0].mxu0
    %v7800 = vadd.f32 %v7757, %v7799
    %7801 = vdwg.mxu0
    %v7802 = vmax.f32 %v7536, 0.0
    %v7803 = vmax.f32 %v7538, 0.0
    %v7804 = vmax.f32 %v7622, 0.0
    %v7805 = vmax.f32 %v7624, 0.0
    %v7806 = vmax.f32 %v7708, 0.0
    %v7807 = vmax.f32 %v7710, 0.0
    %v7808 = vmax.f32 %v7794, 0.0
    %v7809 = vmax.f32 %v7796, 0.0
    %v7810 = vmax.f32 %v7540, 0.0
    %v7811 = vmax.f32 %v7542, 0.0
    %v7812 = vmax.f32 %v7626, 0.0
    %v7813 = vmax.f32 %v7628, 0.0
    %v7814 = vmax.f32 %v7712, 0.0
    %v7815 = vmax.f32 %v7714, 0.0
    %v7816 = vmax.f32 %v7798, 0.0
    %v7817 = vmax.f32 %v7800, 0.0
    %v7818 = vpack.c.bf16 %v7810, %v7802
    %v7819 = vpack.c.bf16 %v7811, %v7803
    %v7820 = vpack.c.bf16 %v7812, %v7804
    %v7821 = vpack.c.bf16 %v7813, %v7805
    %v7822 = vpack.c.bf16 %v7814, %v7806
    %v7823 = vpack.c.bf16 %v7815, %v7807
    %v7824 = vpack.c.bf16 %v7816, %v7808
    %v7825 = vpack.c.bf16 %v7817, %v7809
    %v7826 = vld [vmem:[#allocation9] sm:$0xff]
    %v7827 = vld [vmem:[#allocation9 + $0x8] sm:$0xff]
    %v7828 = vld [vmem:[#allocation9 + $0x10] sm:$0xff]
    %v7829 = vld [vmem:[#allocation9 + $0x18] sm:$0xff]
    %v7830 = vld [vmem:[#allocation9 + $0x20] sm:$0xff]
    %v7831 = vld [vmem:[#allocation9 + $0x28] sm:$0xff]
    %v7832 = vld [vmem:[#allocation9 + $0x30] sm:$0xff]
    %v7833 = vld [vmem:[#allocation9 + $0x38] sm:$0xff]
    %v7834 = vld [vmem:[#allocation9 + $0x40] sm:$0xff]
    %v7835 = vld [vmem:[#allocation9 + $0x48] sm:$0xff]
    %v7836 = vld [vmem:[#allocation9 + $0x50] sm:$0xff]
    %v7837 = vld [vmem:[#allocation9 + $0x58] sm:$0xff]
    %v7838 = vld [vmem:[#allocation9 + $0x60] sm:$0xff]
    %v7839 = vld [vmem:[#allocation9 + $0x68] sm:$0xff]
    %v7840 = vld [vmem:[#allocation9 + $0x70] sm:$0xff]
    %v7841 = vld [vmem:[#allocation9 + $0x78] sm:$0xff]
    %v7842 = vld [vmem:[#allocation9 + $0x80] sm:$0xff]
    %v7843 = vld [vmem:[#allocation9 + $0x88] sm:$0xff]
    %v7844 = vld [vmem:[#allocation9 + $0x90] sm:$0xff]
    %v7845 = vld [vmem:[#allocation9 + $0x98] sm:$0xff]
    %v7846 = vld [vmem:[#allocation9 + $0xa0] sm:$0xff]
    %v7847 = vld [vmem:[#allocation9 + $0xa8] sm:$0xff]
    %v7848 = vld [vmem:[#allocation9 + $0xb0] sm:$0xff]
    %v7849 = vld [vmem:[#allocation9 + $0xb8] sm:$0xff]
    %v7850 = vld [vmem:[#allocation9 + $0xc0] sm:$0xff]
    %v7851 = vld [vmem:[#allocation9 + $0xc8] sm:$0xff]
    %v7852 = vld [vmem:[#allocation9 + $0xd0] sm:$0xff]
    %v7853 = vld [vmem:[#allocation9 + $0xd8] sm:$0xff]
    %v7854 = vld [vmem:[#allocation9 + $0xe0] sm:$0xff]
    %v7855 = vld [vmem:[#allocation9 + $0xe8] sm:$0xff]
    %v7856 = vld [vmem:[#allocation9 + $0xf0] sm:$0xff]
    %v7857 = vld [vmem:[#allocation9 + $0xf8] sm:$0xff]
    %v7858 = vld [vmem:[#allocation9 + $0x100] sm:$0xff]
    %v7859 = vld [vmem:[#allocation9 + $0x108] sm:$0xff]
    %v7860 = vld [vmem:[#allocation9 + $0x110] sm:$0xff]
    %v7861 = vld [vmem:[#allocation9 + $0x118] sm:$0xff]
    %v7862 = vld [vmem:[#allocation9 + $0x120] sm:$0xff]
    %v7863 = vld [vmem:[#allocation9 + $0x128] sm:$0xff]
    %v7864 = vld [vmem:[#allocation9 + $0x130] sm:$0xff]
    %v7865 = vld [vmem:[#allocation9 + $0x138] sm:$0xff]
    %v7866 = vld [vmem:[#allocation9 + $0x140] sm:$0xff]
    %v7867 = vld [vmem:[#allocation9 + $0x148] sm:$0xff]
    %v7868 = vld [vmem:[#allocation9 + $0x150] sm:$0xff]
    %v7869 = vld [vmem:[#allocation9 + $0x158] sm:$0xff]
    %v7870 = vld [vmem:[#allocation9 + $0x160] sm:$0xff]
    %v7871 = vld [vmem:[#allocation9 + $0x168] sm:$0xff]
    %v7872 = vld [vmem:[#allocation9 + $0x170] sm:$0xff]
    %v7873 = vld [vmem:[#allocation9 + $0x178] sm:$0xff]
    %v7874 = vld [vmem:[#allocation9 + $0x180] sm:$0xff]
    %v7875 = vld [vmem:[#allocation9 + $0x188] sm:$0xff]
    %v7876 = vld [vmem:[#allocation9 + $0x190] sm:$0xff]
    %v7877 = vld [vmem:[#allocation9 + $0x198] sm:$0xff]
    %v7878 = vld [vmem:[#allocation9 + $0x1a0] sm:$0xff]
    %v7879 = vld [vmem:[#allocation9 + $0x1a8] sm:$0xff]
    %v7880 = vld [vmem:[#allocation9 + $0x1b0] sm:$0xff]
    %v7881 = vld [vmem:[#allocation9 + $0x1b8] sm:$0xff]
    %v7882 = vld [vmem:[#allocation9 + $0x1c0] sm:$0xff]
    %v7883 = vld [vmem:[#allocation9 + $0x1c8] sm:$0xff]
    %v7884 = vld [vmem:[#allocation9 + $0x1d0] sm:$0xff]
    %v7885 = vld [vmem:[#allocation9 + $0x1d8] sm:$0xff]
    %v7886 = vld [vmem:[#allocation9 + $0x1e0] sm:$0xff]
    %v7887 = vld [vmem:[#allocation9 + $0x1e8] sm:$0xff]
    %v7888 = vld [vmem:[#allocation9 + $0x1f0] sm:$0xff]
    %v7889 = vld [vmem:[#allocation9 + $0x1f8] sm:$0xff]
    %v7890 = vld [vmem:[#allocation9 + $0x200] sm:$0xff]
    %v7891 = vld [vmem:[#allocation9 + $0x208] sm:$0xff]
    %v7892 = vld [vmem:[#allocation9 + $0x210] sm:$0xff]
    %v7893 = vld [vmem:[#allocation9 + $0x218] sm:$0xff]
    %v7894 = vld [vmem:[#allocation9 + $0x220] sm:$0xff]
    %v7895 = vld [vmem:[#allocation9 + $0x228] sm:$0xff]
    %v7896 = vld [vmem:[#allocation9 + $0x230] sm:$0xff]
    %v7897 = vld [vmem:[#allocation9 + $0x238] sm:$0xff]
    %v7898 = vld [vmem:[#allocation9 + $0x240] sm:$0xff]
    %v7899 = vld [vmem:[#allocation9 + $0x248] sm:$0xff]
    %v7900 = vld [vmem:[#allocation9 + $0x250] sm:$0xff]
    %v7901 = vld [vmem:[#allocation9 + $0x258] sm:$0xff]
    %v7902 = vld [vmem:[#allocation9 + $0x260] sm:$0xff]
    %v7903 = vld [vmem:[#allocation9 + $0x268] sm:$0xff]
    %v7904 = vld [vmem:[#allocation9 + $0x270] sm:$0xff]
    %v7905 = vld [vmem:[#allocation9 + $0x278] sm:$0xff]
    %v7906 = vld [vmem:[#allocation9 + $0x280] sm:$0xff]
    %v7907 = vld [vmem:[#allocation9 + $0x288] sm:$0xff]
    %v7908 = vld [vmem:[#allocation9 + $0x290] sm:$0xff]
    %v7909 = vld [vmem:[#allocation9 + $0x298] sm:$0xff]
    %v7910 = vld [vmem:[#allocation9 + $0x2a0] sm:$0xff]
    %v7911 = vld [vmem:[#allocation9 + $0x2a8] sm:$0xff]
    %v7912 = vld [vmem:[#allocation9 + $0x2b0] sm:$0xff]
    %v7913 = vld [vmem:[#allocation9 + $0x2b8] sm:$0xff]
    %v7914 = vld [vmem:[#allocation9 + $0x2c0] sm:$0xff]
    %v7915 = vld [vmem:[#allocation9 + $0x2c8] sm:$0xff]
    %v7916 = vld [vmem:[#allocation9 + $0x2d0] sm:$0xff]
    %v7917 = vld [vmem:[#allocation9 + $0x2d8] sm:$0xff]
    %v7918 = vld [vmem:[#allocation9 + $0x2e0] sm:$0xff]
    %v7919 = vld [vmem:[#allocation9 + $0x2e8] sm:$0xff]
    %v7920 = vld [vmem:[#allocation9 + $0x2f0] sm:$0xff]
    %v7921 = vld [vmem:[#allocation9 + $0x2f8] sm:$0xff]
    %v7922 = vld [vmem:[#allocation9 + $0x300] sm:$0xff]
    %v7923 = vld [vmem:[#allocation9 + $0x308] sm:$0xff]
    %v7924 = vld [vmem:[#allocation9 + $0x310] sm:$0xff]
    %v7925 = vld [vmem:[#allocation9 + $0x318] sm:$0xff]
    %v7926 = vld [vmem:[#allocation9 + $0x320] sm:$0xff]
    %v7927 = vld [vmem:[#allocation9 + $0x328] sm:$0xff]
    %v7928 = vld [vmem:[#allocation9 + $0x330] sm:$0xff]
    %v7929 = vld [vmem:[#allocation9 + $0x338] sm:$0xff]
    %v7930 = vld [vmem:[#allocation9 + $0x340] sm:$0xff]
    %v7931 = vld [vmem:[#allocation9 + $0x348] sm:$0xff]
    %v7932 = vld [vmem:[#allocation9 + $0x350] sm:$0xff]
    %v7933 = vld [vmem:[#allocation9 + $0x358] sm:$0xff]
    %v7934 = vld [vmem:[#allocation9 + $0x360] sm:$0xff]
    %v7935 = vld [vmem:[#allocation9 + $0x368] sm:$0xff]
    %v7936 = vld [vmem:[#allocation9 + $0x370] sm:$0xff]
    %v7937 = vld [vmem:[#allocation9 + $0x378] sm:$0xff]
    %v7938 = vld [vmem:[#allocation9 + $0x380] sm:$0xff]
    %v7939 = vld [vmem:[#allocation9 + $0x388] sm:$0xff]
    %v7940 = vld [vmem:[#allocation9 + $0x390] sm:$0xff]
    %v7941 = vld [vmem:[#allocation9 + $0x398] sm:$0xff]
    %v7942 = vld [vmem:[#allocation9 + $0x3a0] sm:$0xff]
    %v7943 = vld [vmem:[#allocation9 + $0x3a8] sm:$0xff]
    %v7944 = vld [vmem:[#allocation9 + $0x3b0] sm:$0xff]
    %v7945 = vld [vmem:[#allocation9 + $0x3b8] sm:$0xff]
    %v7946 = vld [vmem:[#allocation9 + $0x3c0] sm:$0xff]
    %v7947 = vld [vmem:[#allocation9 + $0x3c8] sm:$0xff]
    %v7948 = vld [vmem:[#allocation9 + $0x3d0] sm:$0xff]
    %v7949 = vld [vmem:[#allocation9 + $0x3d8] sm:$0xff]
    %v7950 = vld [vmem:[#allocation9 + $0x3e0] sm:$0xff]
    %v7951 = vld [vmem:[#allocation9 + $0x3e8] sm:$0xff]
    %v7952 = vld [vmem:[#allocation9 + $0x3f0] sm:$0xff]
    %v7953 = vld [vmem:[#allocation9 + $0x3f8] sm:$0xff]
    %v7954 = vld [vmem:[#allocation9 + $0x400] sm:$0xff]
    %v7955 = vld [vmem:[#allocation9 + $0x408] sm:$0xff]
    %v7956 = vld [vmem:[#allocation9 + $0x410] sm:$0xff]
    %v7957 = vld [vmem:[#allocation9 + $0x418] sm:$0xff]
    %v7958 = vld [vmem:[#allocation9 + $0x420] sm:$0xff]
    %v7959 = vld [vmem:[#allocation9 + $0x428] sm:$0xff]
    %v7960 = vld [vmem:[#allocation9 + $0x430] sm:$0xff]
    %v7961 = vld [vmem:[#allocation9 + $0x438] sm:$0xff]
    %v7962 = vld [vmem:[#allocation9 + $0x440] sm:$0xff]
    %v7963 = vld [vmem:[#allocation9 + $0x448] sm:$0xff]
    %v7964 = vld [vmem:[#allocation9 + $0x450] sm:$0xff]
    %v7965 = vld [vmem:[#allocation9 + $0x458] sm:$0xff]
    %v7966 = vld [vmem:[#allocation9 + $0x460] sm:$0xff]
    %v7967 = vld [vmem:[#allocation9 + $0x468] sm:$0xff]
    %v7968 = vld [vmem:[#allocation9 + $0x470] sm:$0xff]
    %v7969 = vld [vmem:[#allocation9 + $0x478] sm:$0xff]
    %v7970 = vld [vmem:[#allocation9 + $0x480] sm:$0xff]
    %v7971 = vld [vmem:[#allocation9 + $0x488] sm:$0xff]
    %v7972 = vld [vmem:[#allocation9 + $0x490] sm:$0xff]
    %v7973 = vld [vmem:[#allocation9 + $0x498] sm:$0xff]
    %v7974 = vld [vmem:[#allocation9 + $0x4a0] sm:$0xff]
    %v7975 = vld [vmem:[#allocation9 + $0x4a8] sm:$0xff]
    %v7976 = vld [vmem:[#allocation9 + $0x4b0] sm:$0xff]
    %v7977 = vld [vmem:[#allocation9 + $0x4b8] sm:$0xff]
    %v7978 = vld [vmem:[#allocation9 + $0x4c0] sm:$0xff]
    %v7979 = vld [vmem:[#allocation9 + $0x4c8] sm:$0xff]
    %v7980 = vld [vmem:[#allocation9 + $0x4d0] sm:$0xff]
    %v7981 = vld [vmem:[#allocation9 + $0x4d8] sm:$0xff]
    %v7982 = vld [vmem:[#allocation9 + $0x4e0] sm:$0xff]
    %v7983 = vld [vmem:[#allocation9 + $0x4e8] sm:$0xff]
    %v7984 = vld [vmem:[#allocation9 + $0x4f0] sm:$0xff]
    %v7985 = vld [vmem:[#allocation9 + $0x4f8] sm:$0xff]
    %v7986 = vld [vmem:[#allocation9 + $0x500] sm:$0xff]
    %v7987 = vld [vmem:[#allocation9 + $0x508] sm:$0xff]
    %v7988 = vld [vmem:[#allocation9 + $0x510] sm:$0xff]
    %v7989 = vld [vmem:[#allocation9 + $0x518] sm:$0xff]
    %v7990 = vld [vmem:[#allocation9 + $0x520] sm:$0xff]
    %v7991 = vld [vmem:[#allocation9 + $0x528] sm:$0xff]
    %v7992 = vld [vmem:[#allocation9 + $0x530] sm:$0xff]
    %v7993 = vld [vmem:[#allocation9 + $0x538] sm:$0xff]
    %v7994 = vld [vmem:[#allocation9 + $0x540] sm:$0xff]
    %v7995 = vld [vmem:[#allocation9 + $0x548] sm:$0xff]
    %v7996 = vld [vmem:[#allocation9 + $0x550] sm:$0xff]
    %v7997 = vld [vmem:[#allocation9 + $0x558] sm:$0xff]
    %v7998 = vld [vmem:[#allocation9 + $0x560] sm:$0xff]
    %v7999 = vld [vmem:[#allocation9 + $0x568] sm:$0xff]
    %v8000 = vld [vmem:[#allocation9 + $0x570] sm:$0xff]
    %v8001 = vld [vmem:[#allocation9 + $0x578] sm:$0xff]
    %v8002 = vld [vmem:[#allocation9 + $0x580] sm:$0xff]
    %v8003 = vld [vmem:[#allocation9 + $0x588] sm:$0xff]
    %v8004 = vld [vmem:[#allocation9 + $0x590] sm:$0xff]
    %v8005 = vld [vmem:[#allocation9 + $0x598] sm:$0xff]
    %v8006 = vld [vmem:[#allocation9 + $0x5a0] sm:$0xff]
    %v8007 = vld [vmem:[#allocation9 + $0x5a8] sm:$0xff]
    %v8008 = vld [vmem:[#allocation9 + $0x5b0] sm:$0xff]
    %v8009 = vld [vmem:[#allocation9 + $0x5b8] sm:$0xff]
    %v8010 = vld [vmem:[#allocation9 + $0x5c0] sm:$0xff]
    %v8011 = vld [vmem:[#allocation9 + $0x5c8] sm:$0xff]
    %v8012 = vld [vmem:[#allocation9 + $0x5d0] sm:$0xff]
    %v8013 = vld [vmem:[#allocation9 + $0x5d8] sm:$0xff]
    %v8014 = vld [vmem:[#allocation9 + $0x5e0] sm:$0xff]
    %v8015 = vld [vmem:[#allocation9 + $0x5e8] sm:$0xff]
    %v8016 = vld [vmem:[#allocation9 + $0x5f0] sm:$0xff]
    %v8017 = vld [vmem:[#allocation9 + $0x5f8] sm:$0xff]
    %v8018 = vld [vmem:[#allocation9 + $0x600] sm:$0xff]
    %v8019 = vld [vmem:[#allocation9 + $0x608] sm:$0xff]
    %v8020 = vld [vmem:[#allocation9 + $0x610] sm:$0xff]
    %v8021 = vld [vmem:[#allocation9 + $0x618] sm:$0xff]
    %v8022 = vld [vmem:[#allocation9 + $0x620] sm:$0xff]
    %v8023 = vld [vmem:[#allocation9 + $0x628] sm:$0xff]
    %v8024 = vld [vmem:[#allocation9 + $0x630] sm:$0xff]
    %v8025 = vld [vmem:[#allocation9 + $0x638] sm:$0xff]
    %v8026 = vld [vmem:[#allocation9 + $0x640] sm:$0xff]
    %v8027 = vld [vmem:[#allocation9 + $0x648] sm:$0xff]
    %v8028 = vld [vmem:[#allocation9 + $0x650] sm:$0xff]
    %v8029 = vld [vmem:[#allocation9 + $0x658] sm:$0xff]
    %v8030 = vld [vmem:[#allocation9 + $0x660] sm:$0xff]
    %v8031 = vld [vmem:[#allocation9 + $0x668] sm:$0xff]
    %v8032 = vld [vmem:[#allocation9 + $0x670] sm:$0xff]
    %v8033 = vld [vmem:[#allocation9 + $0x678] sm:$0xff]
    %v8034 = vld [vmem:[#allocation9 + $0x680] sm:$0xff]
    %v8035 = vld [vmem:[#allocation9 + $0x688] sm:$0xff]
    %v8036 = vld [vmem:[#allocation9 + $0x690] sm:$0xff]
    %v8037 = vld [vmem:[#allocation9 + $0x698] sm:$0xff]
    %v8038 = vld [vmem:[#allocation9 + $0x6a0] sm:$0xff]
    %v8039 = vld [vmem:[#allocation9 + $0x6a8] sm:$0xff]
    %v8040 = vld [vmem:[#allocation9 + $0x6b0] sm:$0xff]
    %v8041 = vld [vmem:[#allocation9 + $0x6b8] sm:$0xff]
    %v8042 = vld [vmem:[#allocation9 + $0x6c0] sm:$0xff]
    %v8043 = vld [vmem:[#allocation9 + $0x6c8] sm:$0xff]
    %v8044 = vld [vmem:[#allocation9 + $0x6d0] sm:$0xff]
    %v8045 = vld [vmem:[#allocation9 + $0x6d8] sm:$0xff]
    %v8046 = vld [vmem:[#allocation9 + $0x6e0] sm:$0xff]
    %v8047 = vld [vmem:[#allocation9 + $0x6e8] sm:$0xff]
    %v8048 = vld [vmem:[#allocation9 + $0x6f0] sm:$0xff]
    %v8049 = vld [vmem:[#allocation9 + $0x6f8] sm:$0xff]
    %v8050 = vld [vmem:[#allocation9 + $0x700] sm:$0xff]
    %v8051 = vld [vmem:[#allocation9 + $0x708] sm:$0xff]
    %v8052 = vld [vmem:[#allocation9 + $0x710] sm:$0xff]
    %v8053 = vld [vmem:[#allocation9 + $0x718] sm:$0xff]
    %v8054 = vld [vmem:[#allocation9 + $0x720] sm:$0xff]
    %v8055 = vld [vmem:[#allocation9 + $0x728] sm:$0xff]
    %v8056 = vld [vmem:[#allocation9 + $0x730] sm:$0xff]
    %v8057 = vld [vmem:[#allocation9 + $0x738] sm:$0xff]
    %v8058 = vld [vmem:[#allocation9 + $0x740] sm:$0xff]
    %v8059 = vld [vmem:[#allocation9 + $0x748] sm:$0xff]
    %v8060 = vld [vmem:[#allocation9 + $0x750] sm:$0xff]
    %v8061 = vld [vmem:[#allocation9 + $0x758] sm:$0xff]
    %v8062 = vld [vmem:[#allocation9 + $0x760] sm:$0xff]
    %v8063 = vld [vmem:[#allocation9 + $0x768] sm:$0xff]
    %v8064 = vld [vmem:[#allocation9 + $0x770] sm:$0xff]
    %v8065 = vld [vmem:[#allocation9 + $0x778] sm:$0xff]
    %v8066 = vld [vmem:[#allocation9 + $0x780] sm:$0xff]
    %v8067 = vld [vmem:[#allocation9 + $0x788] sm:$0xff]
    %v8068 = vld [vmem:[#allocation9 + $0x790] sm:$0xff]
    %v8069 = vld [vmem:[#allocation9 + $0x798] sm:$0xff]
    %v8070 = vld [vmem:[#allocation9 + $0x7a0] sm:$0xff]
    %v8071 = vld [vmem:[#allocation9 + $0x7a8] sm:$0xff]
    %v8072 = vld [vmem:[#allocation9 + $0x7b0] sm:$0xff]
    %v8073 = vld [vmem:[#allocation9 + $0x7b8] sm:$0xff]
    %v8074 = vld [vmem:[#allocation9 + $0x7c0] sm:$0xff]
    %v8075 = vld [vmem:[#allocation9 + $0x7c8] sm:$0xff]
    %v8076 = vld [vmem:[#allocation9 + $0x7d0] sm:$0xff]
    %v8077 = vld [vmem:[#allocation9 + $0x7d8] sm:$0xff]
    %v8078 = vld [vmem:[#allocation9 + $0x7e0] sm:$0xff]
    %v8079 = vld [vmem:[#allocation9 + $0x7e8] sm:$0xff]
    %v8080 = vld [vmem:[#allocation9 + $0x7f0] sm:$0xff]
    %v8081 = vld [vmem:[#allocation9 + $0x7f8] sm:$0xff]
    %v8082 = vld [vmem:[#allocation10] sm:$0xf]
    %v8084 = vlaneseq
    %v8085 = vshrl.u32 %v8084, 7
    %v8086 = vsub.s32 0, %v8085
    %v8087 = vrot.slane %v8082, %v8086
    %v8088 = vlaneseq
    %v8089 = vshrl.u32 %v8088, 7
    %v8090 = vsub.s32 1, %v8089
    %v8091 = vrot.slane %v8082, %v8090
    %v8092 = vlaneseq
    %v8093 = vshrl.u32 %v8092, 7
    %v8094 = vsub.s32 2, %v8093
    %v8095 = vrot.slane %v8082, %v8094
    %v8096 = vlaneseq
    %v8097 = vshrl.u32 %v8096, 7
    %v8098 = vsub.s32 3, %v8097
    %v8099 = vrot.slane %v8082, %v8098
    %v8360 = vunpack.c.l.b16 %v7826
    %v8361 = vunpack.c.h.b16 %v7826
    %v8362 = vunpack.c.l.b16 %v7827
    %v8363 = vunpack.c.h.b16 %v7827
    %v8364 = vunpack.c.l.b16 %v7828
    %v8365 = vunpack.c.h.b16 %v7828
    %v8366 = vunpack.c.l.b16 %v7829
    %v8367 = vunpack.c.h.b16 %v7829
    %v8368 = vunpack.c.l.b16 %v7830
    %v8369 = vunpack.c.h.b16 %v7830
    %v8370 = vunpack.c.l.b16 %v7831
    %v8371 = vunpack.c.h.b16 %v7831
    %v8372 = vunpack.c.l.b16 %v7832
    %v8373 = vunpack.c.h.b16 %v7832
    %v8374 = vunpack.c.l.b16 %v7833
    %v8375 = vunpack.c.h.b16 %v7833
    %v8376 = vunpack.c.l.b16 %v7834
    %v8377 = vunpack.c.h.b16 %v7834
    %v8378 = vunpack.c.l.b16 %v7835
    %v8379 = vunpack.c.h.b16 %v7835
    %v8380 = vunpack.c.l.b16 %v7836
    %v8381 = vunpack.c.h.b16 %v7836
    %v8382 = vunpack.c.l.b16 %v7837
    %v8383 = vunpack.c.h.b16 %v7837
    %v8384 = vunpack.c.l.b16 %v7838
    %v8385 = vunpack.c.h.b16 %v7838
    %v8386 = vunpack.c.l.b16 %v7839
    %v8387 = vunpack.c.h.b16 %v7839
    %v8388 = vunpack.c.l.b16 %v7840
    %v8389 = vunpack.c.h.b16 %v7840
    %v8390 = vunpack.c.l.b16 %v7841
    %v8391 = vunpack.c.h.b16 %v7841
    %v8392 = vunpack.c.l.b16 %v7842
    %v8393 = vunpack.c.h.b16 %v7842
    %v8394 = vunpack.c.l.b16 %v7843
    %v8395 = vunpack.c.h.b16 %v7843
    %v8396 = vunpack.c.l.b16 %v7844
    %v8397 = vunpack.c.h.b16 %v7844
    %v8398 = vunpack.c.l.b16 %v7845
    %v8399 = vunpack.c.h.b16 %v7845
    %v8400 = vunpack.c.l.b16 %v7846
    %v8401 = vunpack.c.h.b16 %v7846
    %v8402 = vunpack.c.l.b16 %v7847
    %v8403 = vunpack.c.h.b16 %v7847
    %v8404 = vunpack.c.l.b16 %v7848
    %v8405 = vunpack.c.h.b16 %v7848
    %v8406 = vunpack.c.l.b16 %v7849
    %v8407 = vunpack.c.h.b16 %v7849
    %v8408 = vunpack.c.l.b16 %v7850
    %v8409 = vunpack.c.h.b16 %v7850
    %v8410 = vunpack.c.l.b16 %v7851
    %v8411 = vunpack.c.h.b16 %v7851
    %v8412 = vunpack.c.l.b16 %v7852
    %v8413 = vunpack.c.h.b16 %v7852
    %v8414 = vunpack.c.l.b16 %v7853
    %v8415 = vunpack.c.h.b16 %v7853
    %v8416 = vunpack.c.l.b16 %v7854
    %v8417 = vunpack.c.h.b16 %v7854
    %v8418 = vunpack.c.l.b16 %v7855
    %v8419 = vunpack.c.h.b16 %v7855
    %v8420 = vunpack.c.l.b16 %v7856
    %v8421 = vunpack.c.h.b16 %v7856
    %v8422 = vunpack.c.l.b16 %v7857
    %v8423 = vunpack.c.h.b16 %v7857
    %v8424 = vunpack.c.l.b16 %v7858
    %v8425 = vunpack.c.h.b16 %v7858
    %v8426 = vunpack.c.l.b16 %v7859
    %v8427 = vunpack.c.h.b16 %v7859
    %v8428 = vunpack.c.l.b16 %v7860
    %v8429 = vunpack.c.h.b16 %v7860
    %v8430 = vunpack.c.l.b16 %v7861
    %v8431 = vunpack.c.h.b16 %v7861
    %v8432 = vunpack.c.l.b16 %v7862
    %v8433 = vunpack.c.h.b16 %v7862
    %v8434 = vunpack.c.l.b16 %v7863
    %v8435 = vunpack.c.h.b16 %v7863
    %v8436 = vunpack.c.l.b16 %v7864
    %v8437 = vunpack.c.h.b16 %v7864
    %v8438 = vunpack.c.l.b16 %v7865
    %v8439 = vunpack.c.h.b16 %v7865
    %v8440 = vunpack.c.l.b16 %v7866
    %v8441 = vunpack.c.h.b16 %v7866
    %v8442 = vunpack.c.l.b16 %v7867
    %v8443 = vunpack.c.h.b16 %v7867
    %v8444 = vunpack.c.l.b16 %v7868
    %v8445 = vunpack.c.h.b16 %v7868
    %v8446 = vunpack.c.l.b16 %v7869
    %v8447 = vunpack.c.h.b16 %v7869
    %v8448 = vunpack.c.l.b16 %v7870
    %v8449 = vunpack.c.h.b16 %v7870
    %v8450 = vunpack.c.l.b16 %v7871
    %v8451 = vunpack.c.h.b16 %v7871
    %v8452 = vunpack.c.l.b16 %v7872
    %v8453 = vunpack.c.h.b16 %v7872
    %v8454 = vunpack.c.l.b16 %v7873
    %v8455 = vunpack.c.h.b16 %v7873
    %v8456 = vunpack.c.l.b16 %v7874
    %v8457 = vunpack.c.h.b16 %v7874
    %v8458 = vunpack.c.l.b16 %v7875
    %v8459 = vunpack.c.h.b16 %v7875
    %v8460 = vunpack.c.l.b16 %v7876
    %v8461 = vunpack.c.h.b16 %v7876
    %v8462 = vunpack.c.l.b16 %v7877
    %v8463 = vunpack.c.h.b16 %v7877
    %v8464 = vunpack.c.l.b16 %v7878
    %v8465 = vunpack.c.h.b16 %v7878
    %v8466 = vunpack.c.l.b16 %v7879
    %v8467 = vunpack.c.h.b16 %v7879
    %v8468 = vunpack.c.l.b16 %v7880
    %v8469 = vunpack.c.h.b16 %v7880
    %v8470 = vunpack.c.l.b16 %v7881
    %v8471 = vunpack.c.h.b16 %v7881
    %v8472 = vunpack.c.l.b16 %v7882
    %v8473 = vunpack.c.h.b16 %v7882
    %v8474 = vunpack.c.l.b16 %v7883
    %v8475 = vunpack.c.h.b16 %v7883
    %v8476 = vunpack.c.l.b16 %v7884
    %v8477 = vunpack.c.h.b16 %v7884
    %v8478 = vunpack.c.l.b16 %v7885
    %v8479 = vunpack.c.h.b16 %v7885
    %v8480 = vunpack.c.l.b16 %v7886
    %v8481 = vunpack.c.h.b16 %v7886
    %v8482 = vunpack.c.l.b16 %v7887
    %v8483 = vunpack.c.h.b16 %v7887
    %v8484 = vunpack.c.l.b16 %v7888
    %v8485 = vunpack.c.h.b16 %v7888
    %v8486 = vunpack.c.l.b16 %v7889
    %v8487 = vunpack.c.h.b16 %v7889
    %v8488 = vunpack.c.l.b16 %v7890
    %v8489 = vunpack.c.h.b16 %v7890
    %v8490 = vunpack.c.l.b16 %v7891
    %v8491 = vunpack.c.h.b16 %v7891
    %v8492 = vunpack.c.l.b16 %v7892
    %v8493 = vunpack.c.h.b16 %v7892
    %v8494 = vunpack.c.l.b16 %v7893
    %v8495 = vunpack.c.h.b16 %v7893
    %v8496 = vunpack.c.l.b16 %v7894
    %v8497 = vunpack.c.h.b16 %v7894
    %v8498 = vunpack.c.l.b16 %v7895
    %v8499 = vunpack.c.h.b16 %v7895
    %v8500 = vunpack.c.l.b16 %v7896
    %v8501 = vunpack.c.h.b16 %v7896
    %v8502 = vunpack.c.l.b16 %v7897
    %v8503 = vunpack.c.h.b16 %v7897
    %v8504 = vunpack.c.l.b16 %v7898
    %v8505 = vunpack.c.h.b16 %v7898
    %v8506 = vunpack.c.l.b16 %v7899
    %v8507 = vunpack.c.h.b16 %v7899
    %v8508 = vunpack.c.l.b16 %v7900
    %v8509 = vunpack.c.h.b16 %v7900
    %v8510 = vunpack.c.l.b16 %v7901
    %v8511 = vunpack.c.h.b16 %v7901
    %v8512 = vunpack.c.l.b16 %v7902
    %v8513 = vunpack.c.h.b16 %v7902
    %v8514 = vunpack.c.l.b16 %v7903
    %v8515 = vunpack.c.h.b16 %v7903
    %v8516 = vunpack.c.l.b16 %v7904
    %v8517 = vunpack.c.h.b16 %v7904
    %v8518 = vunpack.c.l.b16 %v7905
    %v8519 = vunpack.c.h.b16 %v7905
    %v8520 = vunpack.c.l.b16 %v7906
    %v8521 = vunpack.c.h.b16 %v7906
    %v8522 = vunpack.c.l.b16 %v7907
    %v8523 = vunpack.c.h.b16 %v7907
    %v8524 = vunpack.c.l.b16 %v7908
    %v8525 = vunpack.c.h.b16 %v7908
    %v8526 = vunpack.c.l.b16 %v7909
    %v8527 = vunpack.c.h.b16 %v7909
    %v8528 = vunpack.c.l.b16 %v7910
    %v8529 = vunpack.c.h.b16 %v7910
    %v8530 = vunpack.c.l.b16 %v7911
    %v8531 = vunpack.c.h.b16 %v7911
    %v8532 = vunpack.c.l.b16 %v7912
    %v8533 = vunpack.c.h.b16 %v7912
    %v8534 = vunpack.c.l.b16 %v7913
    %v8535 = vunpack.c.h.b16 %v7913
    %v8536 = vunpack.c.l.b16 %v7914
    %v8537 = vunpack.c.h.b16 %v7914
    %v8538 = vunpack.c.l.b16 %v7915
    %v8539 = vunpack.c.h.b16 %v7915
    %v8540 = vunpack.c.l.b16 %v7916
    %v8541 = vunpack.c.h.b16 %v7916
    %v8542 = vunpack.c.l.b16 %v7917
    %v8543 = vunpack.c.h.b16 %v7917
    %v8544 = vunpack.c.l.b16 %v7918
    %v8545 = vunpack.c.h.b16 %v7918
    %v8546 = vunpack.c.l.b16 %v7919
    %v8547 = vunpack.c.h.b16 %v7919
    %v8548 = vunpack.c.l.b16 %v7920
    %v8549 = vunpack.c.h.b16 %v7920
    %v8550 = vunpack.c.l.b16 %v7921
    %v8551 = vunpack.c.h.b16 %v7921
    %v8552 = vunpack.c.l.b16 %v7922
    %v8553 = vunpack.c.h.b16 %v7922
    %v8554 = vunpack.c.l.b16 %v7923
    %v8555 = vunpack.c.h.b16 %v7923
    %v8556 = vunpack.c.l.b16 %v7924
    %v8557 = vunpack.c.h.b16 %v7924
    %v8558 = vunpack.c.l.b16 %v7925
    %v8559 = vunpack.c.h.b16 %v7925
    %v8560 = vunpack.c.l.b16 %v7926
    %v8561 = vunpack.c.h.b16 %v7926
    %v8562 = vunpack.c.l.b16 %v7927
    %v8563 = vunpack.c.h.b16 %v7927
    %v8564 = vunpack.c.l.b16 %v7928
    %v8565 = vunpack.c.h.b16 %v7928
    %v8566 = vunpack.c.l.b16 %v7929
    %v8567 = vunpack.c.h.b16 %v7929
    %v8568 = vunpack.c.l.b16 %v7930
    %v8569 = vunpack.c.h.b16 %v7930
    %v8570 = vunpack.c.l.b16 %v7931
    %v8571 = vunpack.c.h.b16 %v7931
    %v8572 = vunpack.c.l.b16 %v7932
    %v8573 = vunpack.c.h.b16 %v7932
    %v8574 = vunpack.c.l.b16 %v7933
    %v8575 = vunpack.c.h.b16 %v7933
    %v8576 = vunpack.c.l.b16 %v7934
    %v8577 = vunpack.c.h.b16 %v7934
    %v8578 = vunpack.c.l.b16 %v7935
    %v8579 = vunpack.c.h.b16 %v7935
    %v8580 = vunpack.c.l.b16 %v7936
    %v8581 = vunpack.c.h.b16 %v7936
    %v8582 = vunpack.c.l.b16 %v7937
    %v8583 = vunpack.c.h.b16 %v7937
    %v8584 = vunpack.c.l.b16 %v7938
    %v8585 = vunpack.c.h.b16 %v7938
    %v8586 = vunpack.c.l.b16 %v7939
    %v8587 = vunpack.c.h.b16 %v7939
    %v8588 = vunpack.c.l.b16 %v7940
    %v8589 = vunpack.c.h.b16 %v7940
    %v8590 = vunpack.c.l.b16 %v7941
    %v8591 = vunpack.c.h.b16 %v7941
    %v8592 = vunpack.c.l.b16 %v7942
    %v8593 = vunpack.c.h.b16 %v7942
    %v8594 = vunpack.c.l.b16 %v7943
    %v8595 = vunpack.c.h.b16 %v7943
    %v8596 = vunpack.c.l.b16 %v7944
    %v8597 = vunpack.c.h.b16 %v7944
    %v8598 = vunpack.c.l.b16 %v7945
    %v8599 = vunpack.c.h.b16 %v7945
    %v8600 = vunpack.c.l.b16 %v7946
    %v8601 = vunpack.c.h.b16 %v7946
    %v8602 = vunpack.c.l.b16 %v7947
    %v8603 = vunpack.c.h.b16 %v7947
    %v8604 = vunpack.c.l.b16 %v7948
    %v8605 = vunpack.c.h.b16 %v7948
    %v8606 = vunpack.c.l.b16 %v7949
    %v8607 = vunpack.c.h.b16 %v7949
    %v8608 = vunpack.c.l.b16 %v7950
    %v8609 = vunpack.c.h.b16 %v7950
    %v8610 = vunpack.c.l.b16 %v7951
    %v8611 = vunpack.c.h.b16 %v7951
    %v8612 = vunpack.c.l.b16 %v7952
    %v8613 = vunpack.c.h.b16 %v7952
    %v8614 = vunpack.c.l.b16 %v7953
    %v8615 = vunpack.c.h.b16 %v7953
    %v8616 = vunpack.c.l.b16 %v7954
    %v8617 = vunpack.c.h.b16 %v7954
    %v8618 = vunpack.c.l.b16 %v7955
    %v8619 = vunpack.c.h.b16 %v7955
    %v8620 = vunpack.c.l.b16 %v7956
    %v8621 = vunpack.c.h.b16 %v7956
    %v8622 = vunpack.c.l.b16 %v7957
    %v8623 = vunpack.c.h.b16 %v7957
    %v8624 = vunpack.c.l.b16 %v7958
    %v8625 = vunpack.c.h.b16 %v7958
    %v8626 = vunpack.c.l.b16 %v7959
    %v8627 = vunpack.c.h.b16 %v7959
    %v8628 = vunpack.c.l.b16 %v7960
    %v8629 = vunpack.c.h.b16 %v7960
    %v8630 = vunpack.c.l.b16 %v7961
    %v8631 = vunpack.c.h.b16 %v7961
    %v8632 = vunpack.c.l.b16 %v7962
    %v8633 = vunpack.c.h.b16 %v7962
    %v8634 = vunpack.c.l.b16 %v7963
    %v8635 = vunpack.c.h.b16 %v7963
    %v8636 = vunpack.c.l.b16 %v7964
    %v8637 = vunpack.c.h.b16 %v7964
    %v8638 = vunpack.c.l.b16 %v7965
    %v8639 = vunpack.c.h.b16 %v7965
    %v8640 = vunpack.c.l.b16 %v7966
    %v8641 = vunpack.c.h.b16 %v7966
    %v8642 = vunpack.c.l.b16 %v7967
    %v8643 = vunpack.c.h.b16 %v7967
    %v8644 = vunpack.c.l.b16 %v7968
    %v8645 = vunpack.c.h.b16 %v7968
    %v8646 = vunpack.c.l.b16 %v7969
    %v8647 = vunpack.c.h.b16 %v7969
    %v8648 = vunpack.c.l.b16 %v7970
    %v8649 = vunpack.c.h.b16 %v7970
    %v8650 = vunpack.c.l.b16 %v7971
    %v8651 = vunpack.c.h.b16 %v7971
    %v8652 = vunpack.c.l.b16 %v7972
    %v8653 = vunpack.c.h.b16 %v7972
    %v8654 = vunpack.c.l.b16 %v7973
    %v8655 = vunpack.c.h.b16 %v7973
    %v8656 = vunpack.c.l.b16 %v7974
    %v8657 = vunpack.c.h.b16 %v7974
    %v8658 = vunpack.c.l.b16 %v7975
    %v8659 = vunpack.c.h.b16 %v7975
    %v8660 = vunpack.c.l.b16 %v7976
    %v8661 = vunpack.c.h.b16 %v7976
    %v8662 = vunpack.c.l.b16 %v7977
    %v8663 = vunpack.c.h.b16 %v7977
    %v8664 = vunpack.c.l.b16 %v7978
    %v8665 = vunpack.c.h.b16 %v7978
    %v8666 = vunpack.c.l.b16 %v7979
    %v8667 = vunpack.c.h.b16 %v7979
    %v8668 = vunpack.c.l.b16 %v7980
    %v8669 = vunpack.c.h.b16 %v7980
    %v8670 = vunpack.c.l.b16 %v7981
    %v8671 = vunpack.c.h.b16 %v7981
    %v8672 = vunpack.c.l.b16 %v7982
    %v8673 = vunpack.c.h.b16 %v7982
    %v8674 = vunpack.c.l.b16 %v7983
    %v8675 = vunpack.c.h.b16 %v7983
    %v8676 = vunpack.c.l.b16 %v7984
    %v8677 = vunpack.c.h.b16 %v7984
    %v8678 = vunpack.c.l.b16 %v7985
    %v8679 = vunpack.c.h.b16 %v7985
    %v8680 = vunpack.c.l.b16 %v7986
    %v8681 = vunpack.c.h.b16 %v7986
    %v8682 = vunpack.c.l.b16 %v7987
    %v8683 = vunpack.c.h.b16 %v7987
    %v8684 = vunpack.c.l.b16 %v7988
    %v8685 = vunpack.c.h.b16 %v7988
    %v8686 = vunpack.c.l.b16 %v7989
    %v8687 = vunpack.c.h.b16 %v7989
    %v8688 = vunpack.c.l.b16 %v7990
    %v8689 = vunpack.c.h.b16 %v7990
    %v8690 = vunpack.c.l.b16 %v7991
    %v8691 = vunpack.c.h.b16 %v7991
    %v8692 = vunpack.c.l.b16 %v7992
    %v8693 = vunpack.c.h.b16 %v7992
    %v8694 = vunpack.c.l.b16 %v7993
    %v8695 = vunpack.c.h.b16 %v7993
    %v8696 = vunpack.c.l.b16 %v7994
    %v8697 = vunpack.c.h.b16 %v7994
    %v8698 = vunpack.c.l.b16 %v7995
    %v8699 = vunpack.c.h.b16 %v7995
    %v8700 = vunpack.c.l.b16 %v7996
    %v8701 = vunpack.c.h.b16 %v7996
    %v8702 = vunpack.c.l.b16 %v7997
    %v8703 = vunpack.c.h.b16 %v7997
    %v8704 = vunpack.c.l.b16 %v7998
    %v8705 = vunpack.c.h.b16 %v7998
    %v8706 = vunpack.c.l.b16 %v7999
    %v8707 = vunpack.c.h.b16 %v7999
    %v8708 = vunpack.c.l.b16 %v8000
    %v8709 = vunpack.c.h.b16 %v8000
    %v8710 = vunpack.c.l.b16 %v8001
    %v8711 = vunpack.c.h.b16 %v8001
    %v8712 = vunpack.c.l.b16 %v8002
    %v8713 = vunpack.c.h.b16 %v8002
    %v8714 = vunpack.c.l.b16 %v8003
    %v8715 = vunpack.c.h.b16 %v8003
    %v8716 = vunpack.c.l.b16 %v8004
    %v8717 = vunpack.c.h.b16 %v8004
    %v8718 = vunpack.c.l.b16 %v8005
    %v8719 = vunpack.c.h.b16 %v8005
    %v8720 = vunpack.c.l.b16 %v8006
    %v8721 = vunpack.c.h.b16 %v8006
    %v8722 = vunpack.c.l.b16 %v8007
    %v8723 = vunpack.c.h.b16 %v8007
    %v8724 = vunpack.c.l.b16 %v8008
    %v8725 = vunpack.c.h.b16 %v8008
    %v8726 = vunpack.c.l.b16 %v8009
    %v8727 = vunpack.c.h.b16 %v8009
    %v8728 = vunpack.c.l.b16 %v8010
    %v8729 = vunpack.c.h.b16 %v8010
    %v8730 = vunpack.c.l.b16 %v8011
    %v8731 = vunpack.c.h.b16 %v8011
    %v8732 = vunpack.c.l.b16 %v8012
    %v8733 = vunpack.c.h.b16 %v8012
    %v8734 = vunpack.c.l.b16 %v8013
    %v8735 = vunpack.c.h.b16 %v8013
    %v8736 = vunpack.c.l.b16 %v8014
    %v8737 = vunpack.c.h.b16 %v8014
    %v8738 = vunpack.c.l.b16 %v8015
    %v8739 = vunpack.c.h.b16 %v8015
    %v8740 = vunpack.c.l.b16 %v8016
    %v8741 = vunpack.c.h.b16 %v8016
    %v8742 = vunpack.c.l.b16 %v8017
    %v8743 = vunpack.c.h.b16 %v8017
    %v8744 = vunpack.c.l.b16 %v8018
    %v8745 = vunpack.c.h.b16 %v8018
    %v8746 = vunpack.c.l.b16 %v8019
    %v8747 = vunpack.c.h.b16 %v8019
    %v8748 = vunpack.c.l.b16 %v8020
    %v8749 = vunpack.c.h.b16 %v8020
    %v8750 = vunpack.c.l.b16 %v8021
    %v8751 = vunpack.c.h.b16 %v8021
    %v8752 = vunpack.c.l.b16 %v8022
    %v8753 = vunpack.c.h.b16 %v8022
    %v8754 = vunpack.c.l.b16 %v8023
    %v8755 = vunpack.c.h.b16 %v8023
    %v8756 = vunpack.c.l.b16 %v8024
    %v8757 = vunpack.c.h.b16 %v8024
    %v8758 = vunpack.c.l.b16 %v8025
    %v8759 = vunpack.c.h.b16 %v8025
    %v8760 = vunpack.c.l.b16 %v8026
    %v8761 = vunpack.c.h.b16 %v8026
    %v8762 = vunpack.c.l.b16 %v8027
    %v8763 = vunpack.c.h.b16 %v8027
    %v8764 = vunpack.c.l.b16 %v8028
    %v8765 = vunpack.c.h.b16 %v8028
    %v8766 = vunpack.c.l.b16 %v8029
    %v8767 = vunpack.c.h.b16 %v8029
    %v8768 = vunpack.c.l.b16 %v8030
    %v8769 = vunpack.c.h.b16 %v8030
    %v8770 = vunpack.c.l.b16 %v8031
    %v8771 = vunpack.c.h.b16 %v8031
    %v8772 = vunpack.c.l.b16 %v8032
    %v8773 = vunpack.c.h.b16 %v8032
    %v8774 = vunpack.c.l.b16 %v8033
    %v8775 = vunpack.c.h.b16 %v8033
    %v8776 = vunpack.c.l.b16 %v8034
    %v8777 = vunpack.c.h.b16 %v8034
    %v8778 = vunpack.c.l.b16 %v8035
    %v8779 = vunpack.c.h.b16 %v8035
    %v8780 = vunpack.c.l.b16 %v8036
    %v8781 = vunpack.c.h.b16 %v8036
    %v8782 = vunpack.c.l.b16 %v8037
    %v8783 = vunpack.c.h.b16 %v8037
    %v8784 = vunpack.c.l.b16 %v8038
    %v8785 = vunpack.c.h.b16 %v8038
    %v8786 = vunpack.c.l.b16 %v8039
    %v8787 = vunpack.c.h.b16 %v8039
    %v8788 = vunpack.c.l.b16 %v8040
    %v8789 = vunpack.c.h.b16 %v8040
    %v8790 = vunpack.c.l.b16 %v8041
    %v8791 = vunpack.c.h.b16 %v8041
    %v8792 = vunpack.c.l.b16 %v8042
    %v8793 = vunpack.c.h.b16 %v8042
    %v8794 = vunpack.c.l.b16 %v8043
    %v8795 = vunpack.c.h.b16 %v8043
    %v8796 = vunpack.c.l.b16 %v8044
    %v8797 = vunpack.c.h.b16 %v8044
    %v8798 = vunpack.c.l.b16 %v8045
    %v8799 = vunpack.c.h.b16 %v8045
    %v8800 = vunpack.c.l.b16 %v8046
    %v8801 = vunpack.c.h.b16 %v8046
    %v8802 = vunpack.c.l.b16 %v8047
    %v8803 = vunpack.c.h.b16 %v8047
    %v8804 = vunpack.c.l.b16 %v8048
    %v8805 = vunpack.c.h.b16 %v8048
    %v8806 = vunpack.c.l.b16 %v8049
    %v8807 = vunpack.c.h.b16 %v8049
    %v8808 = vunpack.c.l.b16 %v8050
    %v8809 = vunpack.c.h.b16 %v8050
    %v8810 = vunpack.c.l.b16 %v8051
    %v8811 = vunpack.c.h.b16 %v8051
    %v8812 = vunpack.c.l.b16 %v8052
    %v8813 = vunpack.c.h.b16 %v8052
    %v8814 = vunpack.c.l.b16 %v8053
    %v8815 = vunpack.c.h.b16 %v8053
    %v8816 = vunpack.c.l.b16 %v8054
    %v8817 = vunpack.c.h.b16 %v8054
    %v8818 = vunpack.c.l.b16 %v8055
    %v8819 = vunpack.c.h.b16 %v8055
    %v8820 = vunpack.c.l.b16 %v8056
    %v8821 = vunpack.c.h.b16 %v8056
    %v8822 = vunpack.c.l.b16 %v8057
    %v8823 = vunpack.c.h.b16 %v8057
    %v8824 = vunpack.c.l.b16 %v8058
    %v8825 = vunpack.c.h.b16 %v8058
    %v8826 = vunpack.c.l.b16 %v8059
    %v8827 = vunpack.c.h.b16 %v8059
    %v8828 = vunpack.c.l.b16 %v8060
    %v8829 = vunpack.c.h.b16 %v8060
    %v8830 = vunpack.c.l.b16 %v8061
    %v8831 = vunpack.c.h.b16 %v8061
    %v8832 = vunpack.c.l.b16 %v8062
    %v8833 = vunpack.c.h.b16 %v8062
    %v8834 = vunpack.c.l.b16 %v8063
    %v8835 = vunpack.c.h.b16 %v8063
    %v8836 = vunpack.c.l.b16 %v8064
    %v8837 = vunpack.c.h.b16 %v8064
    %v8838 = vunpack.c.l.b16 %v8065
    %v8839 = vunpack.c.h.b16 %v8065
    %v8840 = vunpack.c.l.b16 %v8066
    %v8841 = vunpack.c.h.b16 %v8066
    %v8842 = vunpack.c.l.b16 %v8067
    %v8843 = vunpack.c.h.b16 %v8067
    %v8844 = vunpack.c.l.b16 %v8068
    %v8845 = vunpack.c.h.b16 %v8068
    %v8846 = vunpack.c.l.b16 %v8069
    %v8847 = vunpack.c.h.b16 %v8069
    %v8848 = vunpack.c.l.b16 %v8070
    %v8849 = vunpack.c.h.b16 %v8070
    %v8850 = vunpack.c.l.b16 %v8071
    %v8851 = vunpack.c.h.b16 %v8071
    %v8852 = vunpack.c.l.b16 %v8072
    %v8853 = vunpack.c.h.b16 %v8072
    %v8854 = vunpack.c.l.b16 %v8073
    %v8855 = vunpack.c.h.b16 %v8073
    %v8856 = vunpack.c.l.b16 %v8074
    %v8857 = vunpack.c.h.b16 %v8074
    %v8858 = vunpack.c.l.b16 %v8075
    %v8859 = vunpack.c.h.b16 %v8075
    %v8860 = vunpack.c.l.b16 %v8076
    %v8861 = vunpack.c.h.b16 %v8076
    %v8862 = vunpack.c.l.b16 %v8077
    %v8863 = vunpack.c.h.b16 %v8077
    %v8864 = vunpack.c.l.b16 %v8078
    %v8865 = vunpack.c.h.b16 %v8078
    %v8866 = vunpack.c.l.b16 %v8079
    %v8867 = vunpack.c.h.b16 %v8079
    %v8868 = vunpack.c.l.b16 %v8080
    %v8869 = vunpack.c.h.b16 %v8080
    %v8870 = vunpack.c.l.b16 %v8081
    %v8871 = vunpack.c.h.b16 %v8081
    %v8872 = vpack.c.b16 %v8364, %v8360
    %v8873 = vpack.c.b16 %v8365, %v8361
    %v8874 = vpack.c.b16 %v8366, %v8362
    %v8875 = vpack.c.b16 %v8367, %v8363
    %v8876 = vpack.c.b16 %v8372, %v8368
    %v8877 = vpack.c.b16 %v8373, %v8369
    %v8878 = vpack.c.b16 %v8374, %v8370
    %v8879 = vpack.c.b16 %v8375, %v8371
    %v8880 = vpack.c.b16 %v8380, %v8376
    %v8881 = vpack.c.b16 %v8381, %v8377
    %v8882 = vpack.c.b16 %v8382, %v8378
    %v8883 = vpack.c.b16 %v8383, %v8379
    %v8884 = vpack.c.b16 %v8388, %v8384
    %v8885 = vpack.c.b16 %v8389, %v8385
    %v8886 = vpack.c.b16 %v8390, %v8386
    %v8887 = vpack.c.b16 %v8391, %v8387
    %v8888 = vpack.c.b16 %v8396, %v8392
    %v8889 = vpack.c.b16 %v8397, %v8393
    %v8890 = vpack.c.b16 %v8398, %v8394
    %v8891 = vpack.c.b16 %v8399, %v8395
    %v8892 = vpack.c.b16 %v8404, %v8400
    %v8893 = vpack.c.b16 %v8405, %v8401
    %v8894 = vpack.c.b16 %v8406, %v8402
    %v8895 = vpack.c.b16 %v8407, %v8403
    %v8896 = vpack.c.b16 %v8412, %v8408
    %v8897 = vpack.c.b16 %v8413, %v8409
    %v8898 = vpack.c.b16 %v8414, %v8410
    %v8899 = vpack.c.b16 %v8415, %v8411
    %v8900 = vpack.c.b16 %v8420, %v8416
    %v8901 = vpack.c.b16 %v8421, %v8417
    %v8902 = vpack.c.b16 %v8422, %v8418
    %v8903 = vpack.c.b16 %v8423, %v8419
    %v8904 = vpack.c.b16 %v8428, %v8424
    %v8905 = vpack.c.b16 %v8429, %v8425
    %v8906 = vpack.c.b16 %v8430, %v8426
    %v8907 = vpack.c.b16 %v8431, %v8427
    %v8908 = vpack.c.b16 %v8436, %v8432
    %v8909 = vpack.c.b16 %v8437, %v8433
    %v8910 = vpack.c.b16 %v8438, %v8434
    %v8911 = vpack.c.b16 %v8439, %v8435
    %v8912 = vpack.c.b16 %v8444, %v8440
    %v8913 = vpack.c.b16 %v8445, %v8441
    %v8914 = vpack.c.b16 %v8446, %v8442
    %v8915 = vpack.c.b16 %v8447, %v8443
    %v8916 = vpack.c.b16 %v8452, %v8448
    %v8917 = vpack.c.b16 %v8453, %v8449
    %v8918 = vpack.c.b16 %v8454, %v8450
    %v8919 = vpack.c.b16 %v8455, %v8451
    %v8920 = vpack.c.b16 %v8460, %v8456
    %v8921 = vpack.c.b16 %v8461, %v8457
    %v8922 = vpack.c.b16 %v8462, %v8458
    %v8923 = vpack.c.b16 %v8463, %v8459
    %v8924 = vpack.c.b16 %v8468, %v8464
    %v8925 = vpack.c.b16 %v8469, %v8465
    %v8926 = vpack.c.b16 %v8470, %v8466
    %v8927 = vpack.c.b16 %v8471, %v8467
    %v8928 = vpack.c.b16 %v8476, %v8472
    %v8929 = vpack.c.b16 %v8477, %v8473
    %v8930 = vpack.c.b16 %v8478, %v8474
    %v8931 = vpack.c.b16 %v8479, %v8475
    %v8932 = vpack.c.b16 %v8484, %v8480
    %v8933 = vpack.c.b16 %v8485, %v8481
    %v8934 = vpack.c.b16 %v8486, %v8482
    %v8935 = vpack.c.b16 %v8487, %v8483
    %v8936 = vpack.c.b16 %v8492, %v8488
    %v8937 = vpack.c.b16 %v8493, %v8489
    %v8938 = vpack.c.b16 %v8494, %v8490
    %v8939 = vpack.c.b16 %v8495, %v8491
    %v8940 = vpack.c.b16 %v8500, %v8496
    %v8941 = vpack.c.b16 %v8501, %v8497
    %v8942 = vpack.c.b16 %v8502, %v8498
    %v8943 = vpack.c.b16 %v8503, %v8499
    %v8944 = vpack.c.b16 %v8508, %v8504
    %v8945 = vpack.c.b16 %v8509, %v8505
    %v8946 = vpack.c.b16 %v8510, %v8506
    %v8947 = vpack.c.b16 %v8511, %v8507
    %v8948 = vpack.c.b16 %v8516, %v8512
    %v8949 = vpack.c.b16 %v8517, %v8513
    %v8950 = vpack.c.b16 %v8518, %v8514
    %v8951 = vpack.c.b16 %v8519, %v8515
    %v8952 = vpack.c.b16 %v8524, %v8520
    %v8953 = vpack.c.b16 %v8525, %v8521
    %v8954 = vpack.c.b16 %v8526, %v8522
    %v8955 = vpack.c.b16 %v8527, %v8523
    %v8956 = vpack.c.b16 %v8532, %v8528
    %v8957 = vpack.c.b16 %v8533, %v8529
    %v8958 = vpack.c.b16 %v8534, %v8530
    %v8959 = vpack.c.b16 %v8535, %v8531
    %v8960 = vpack.c.b16 %v8540, %v8536
    %v8961 = vpack.c.b16 %v8541, %v8537
    %v8962 = vpack.c.b16 %v8542, %v8538
    %v8963 = vpack.c.b16 %v8543, %v8539
    %v8964 = vpack.c.b16 %v8548, %v8544
    %v8965 = vpack.c.b16 %v8549, %v8545
    %v8966 = vpack.c.b16 %v8550, %v8546
    %v8967 = vpack.c.b16 %v8551, %v8547
    %v8968 = vpack.c.b16 %v8556, %v8552
    %v8969 = vpack.c.b16 %v8557, %v8553
    %v8970 = vpack.c.b16 %v8558, %v8554
    %v8971 = vpack.c.b16 %v8559, %v8555
    %v8972 = vpack.c.b16 %v8564, %v8560
    %v8973 = vpack.c.b16 %v8565, %v8561
    %v8974 = vpack.c.b16 %v8566, %v8562
    %v8975 = vpack.c.b16 %v8567, %v8563
    %v8976 = vpack.c.b16 %v8572, %v8568
    %v8977 = vpack.c.b16 %v8573, %v8569
    %v8978 = vpack.c.b16 %v8574, %v8570
    %v8979 = vpack.c.b16 %v8575, %v8571
    %v8980 = vpack.c.b16 %v8580, %v8576
    %v8981 = vpack.c.b16 %v8581, %v8577
    %v8982 = vpack.c.b16 %v8582, %v8578
    %v8983 = vpack.c.b16 %v8583, %v8579
    %v8984 = vpack.c.b16 %v8588, %v8584
    %v8985 = vpack.c.b16 %v8589, %v8585
    %v8986 = vpack.c.b16 %v8590, %v8586
    %v8987 = vpack.c.b16 %v8591, %v8587
    %v8988 = vpack.c.b16 %v8596, %v8592
    %v8989 = vpack.c.b16 %v8597, %v8593
    %v8990 = vpack.c.b16 %v8598, %v8594
    %v8991 = vpack.c.b16 %v8599, %v8595
    %v8992 = vpack.c.b16 %v8604, %v8600
    %v8993 = vpack.c.b16 %v8605, %v8601
    %v8994 = vpack.c.b16 %v8606, %v8602
    %v8995 = vpack.c.b16 %v8607, %v8603
    %v8996 = vpack.c.b16 %v8612, %v8608
    %v8997 = vpack.c.b16 %v8613, %v8609
    %v8998 = vpack.c.b16 %v8614, %v8610
    %v8999 = vpack.c.b16 %v8615, %v8611
    %v9000 = vpack.c.b16 %v8620, %v8616
    %v9001 = vpack.c.b16 %v8621, %v8617
    %v9002 = vpack.c.b16 %v8622, %v8618
    %v9003 = vpack.c.b16 %v8623, %v8619
    %v9004 = vpack.c.b16 %v8628, %v8624
    %v9005 = vpack.c.b16 %v8629, %v8625
    %v9006 = vpack.c.b16 %v8630, %v8626
    %v9007 = vpack.c.b16 %v8631, %v8627
    %v9008 = vpack.c.b16 %v8636, %v8632
    %v9009 = vpack.c.b16 %v8637, %v8633
    %v9010 = vpack.c.b16 %v8638, %v8634
    %v9011 = vpack.c.b16 %v8639, %v8635
    %v9012 = vpack.c.b16 %v8644, %v8640
    %v9013 = vpack.c.b16 %v8645, %v8641
    %v9014 = vpack.c.b16 %v8646, %v8642
    %v9015 = vpack.c.b16 %v8647, %v8643
    %v9016 = vpack.c.b16 %v8652, %v8648
    %v9017 = vpack.c.b16 %v8653, %v8649
    %v9018 = vpack.c.b16 %v8654, %v8650
    %v9019 = vpack.c.b16 %v8655, %v8651
    %v9020 = vpack.c.b16 %v8660, %v8656
    %v9021 = vpack.c.b16 %v8661, %v8657
    %v9022 = vpack.c.b16 %v8662, %v8658
    %v9023 = vpack.c.b16 %v8663, %v8659
    %v9024 = vpack.c.b16 %v8668, %v8664
    %v9025 = vpack.c.b16 %v8669, %v8665
    %v9026 = vpack.c.b16 %v8670, %v8666
    %v9027 = vpack.c.b16 %v8671, %v8667
    %v9028 = vpack.c.b16 %v8676, %v8672
    %v9029 = vpack.c.b16 %v8677, %v8673
    %v9030 = vpack.c.b16 %v8678, %v8674
    %v9031 = vpack.c.b16 %v8679, %v8675
    %v9032 = vpack.c.b16 %v8684, %v8680
    %v9033 = vpack.c.b16 %v8685, %v8681
    %v9034 = vpack.c.b16 %v8686, %v8682
    %v9035 = vpack.c.b16 %v8687, %v8683
    %v9036 = vpack.c.b16 %v8692, %v8688
    %v9037 = vpack.c.b16 %v8693, %v8689
    %v9038 = vpack.c.b16 %v8694, %v8690
    %v9039 = vpack.c.b16 %v8695, %v8691
    %v9040 = vpack.c.b16 %v8700, %v8696
    %v9041 = vpack.c.b16 %v8701, %v8697
    %v9042 = vpack.c.b16 %v8702, %v8698
    %v9043 = vpack.c.b16 %v8703, %v8699
    %v9044 = vpack.c.b16 %v8708, %v8704
    %v9045 = vpack.c.b16 %v8709, %v8705
    %v9046 = vpack.c.b16 %v8710, %v8706
    %v9047 = vpack.c.b16 %v8711, %v8707
    %v9048 = vpack.c.b16 %v8716, %v8712
    %v9049 = vpack.c.b16 %v8717, %v8713
    %v9050 = vpack.c.b16 %v8718, %v8714
    %v9051 = vpack.c.b16 %v8719, %v8715
    %v9052 = vpack.c.b16 %v8724, %v8720
    %v9053 = vpack.c.b16 %v8725, %v8721
    %v9054 = vpack.c.b16 %v8726, %v8722
    %v9055 = vpack.c.b16 %v8727, %v8723
    %v9056 = vpack.c.b16 %v8732, %v8728
    %v9057 = vpack.c.b16 %v8733, %v8729
    %v9058 = vpack.c.b16 %v8734, %v8730
    %v9059 = vpack.c.b16 %v8735, %v8731
    %v9060 = vpack.c.b16 %v8740, %v8736
    %v9061 = vpack.c.b16 %v8741, %v8737
    %v9062 = vpack.c.b16 %v8742, %v8738
    %v9063 = vpack.c.b16 %v8743, %v8739
    %v9064 = vpack.c.b16 %v8748, %v8744
    %v9065 = vpack.c.b16 %v8749, %v8745
    %v9066 = vpack.c.b16 %v8750, %v8746
    %v9067 = vpack.c.b16 %v8751, %v8747
    %v9068 = vpack.c.b16 %v8756, %v8752
    %v9069 = vpack.c.b16 %v8757, %v8753
    %v9070 = vpack.c.b16 %v8758, %v8754
    %v9071 = vpack.c.b16 %v8759, %v8755
    %v9072 = vpack.c.b16 %v8764, %v8760
    %v9073 = vpack.c.b16 %v8765, %v8761
    %v9074 = vpack.c.b16 %v8766, %v8762
    %v9075 = vpack.c.b16 %v8767, %v8763
    %v9076 = vpack.c.b16 %v8772, %v8768
    %v9077 = vpack.c.b16 %v8773, %v8769
    %v9078 = vpack.c.b16 %v8774, %v8770
    %v9079 = vpack.c.b16 %v8775, %v8771
    %v9080 = vpack.c.b16 %v8780, %v8776
    %v9081 = vpack.c.b16 %v8781, %v8777
    %v9082 = vpack.c.b16 %v8782, %v8778
    %v9083 = vpack.c.b16 %v8783, %v8779
    %v9084 = vpack.c.b16 %v8788, %v8784
    %v9085 = vpack.c.b16 %v8789, %v8785
    %v9086 = vpack.c.b16 %v8790, %v8786
    %v9087 = vpack.c.b16 %v8791, %v8787
    %v9088 = vpack.c.b16 %v8796, %v8792
    %v9089 = vpack.c.b16 %v8797, %v8793
    %v9090 = vpack.c.b16 %v8798, %v8794
    %v9091 = vpack.c.b16 %v8799, %v8795
    %v9092 = vpack.c.b16 %v8804, %v8800
    %v9093 = vpack.c.b16 %v8805, %v8801
    %v9094 = vpack.c.b16 %v8806, %v8802
    %v9095 = vpack.c.b16 %v8807, %v8803
    %v9096 = vpack.c.b16 %v8812, %v8808
    %v9097 = vpack.c.b16 %v8813, %v8809
    %v9098 = vpack.c.b16 %v8814, %v8810
    %v9099 = vpack.c.b16 %v8815, %v8811
    %v9100 = vpack.c.b16 %v8820, %v8816
    %v9101 = vpack.c.b16 %v8821, %v8817
    %v9102 = vpack.c.b16 %v8822, %v8818
    %v9103 = vpack.c.b16 %v8823, %v8819
    %v9104 = vpack.c.b16 %v8828, %v8824
    %v9105 = vpack.c.b16 %v8829, %v8825
    %v9106 = vpack.c.b16 %v8830, %v8826
    %v9107 = vpack.c.b16 %v8831, %v8827
    %v9108 = vpack.c.b16 %v8836, %v8832
    %v9109 = vpack.c.b16 %v8837, %v8833
    %v9110 = vpack.c.b16 %v8838, %v8834
    %v9111 = vpack.c.b16 %v8839, %v8835
    %v9112 = vpack.c.b16 %v8844, %v8840
    %v9113 = vpack.c.b16 %v8845, %v8841
    %v9114 = vpack.c.b16 %v8846, %v8842
    %v9115 = vpack.c.b16 %v8847, %v8843
    %v9116 = vpack.c.b16 %v8852, %v8848
    %v9117 = vpack.c.b16 %v8853, %v8849
    %v9118 = vpack.c.b16 %v8854, %v8850
    %v9119 = vpack.c.b16 %v8855, %v8851
    %v9120 = vpack.c.b16 %v8860, %v8856
    %v9121 = vpack.c.b16 %v8861, %v8857
    %v9122 = vpack.c.b16 %v8862, %v8858
    %v9123 = vpack.c.b16 %v8863, %v8859
    %v9124 = vpack.c.b16 %v8868, %v8864
    %v9125 = vpack.c.b16 %v8869, %v8865
    %v9126 = vpack.c.b16 %v8870, %v8866
    %v9127 = vpack.c.b16 %v8871, %v8867
    %9384 = vmatprep.subr.bf16.mxu0 %v8873
    %9385 = vmatpush1.bf16.msra.mxu0 %v8872
    %9386 = vmatprep.subr.bf16.mxu0 %v8877
    %9387 = vmatpush1.bf16.msra.mxu0 %v8876
    %9388 = vmatprep.subr.bf16.mxu0 %v8881
    %9389 = vmatpush1.bf16.msra.mxu0 %v8880
    %9390 = vmatprep.subr.bf16.mxu0 %v8885
    %9391 = vmatpush1.bf16.msra.mxu0 %v8884
    %9392 = vmatprep.subr.bf16.mxu0 %v8889
    %9393 = vmatpush1.bf16.msra.mxu0 %v8888
    %9394 = vmatprep.subr.bf16.mxu0 %v8893
    %9395 = vmatpush1.bf16.msra.mxu0 %v8892
    %9396 = vmatprep.subr.bf16.mxu0 %v8897
    %9397 = vmatpush1.bf16.msra.mxu0 %v8896
    %9398 = vmatprep.subr.bf16.mxu0 %v8901
    %9399 = vmatpush1.bf16.msra.mxu0 %v8900
    %9400 = vmatprep.subr.bf16.mxu0 %v8905
    %9401 = vmatpush1.bf16.msra.mxu0 %v8904
    %9402 = vmatprep.subr.bf16.mxu0 %v8909
    %9403 = vmatpush1.bf16.msra.mxu0 %v8908
    %9404 = vmatprep.subr.bf16.mxu0 %v8913
    %9405 = vmatpush1.bf16.msra.mxu0 %v8912
    %9406 = vmatprep.subr.bf16.mxu0 %v8917
    %9407 = vmatpush1.bf16.msra.mxu0 %v8916
    %9408 = vmatprep.subr.bf16.mxu0 %v8921
    %9409 = vmatpush1.bf16.msra.mxu0 %v8920
    %9410 = vmatprep.subr.bf16.mxu0 %v8925
    %9411 = vmatpush1.bf16.msra.mxu0 %v8924
    %9412 = vmatprep.subr.bf16.mxu0 %v8929
    %9413 = vmatpush1.bf16.msra.mxu0 %v8928
    %9414 = vmatprep.subr.bf16.mxu0 %v8933
    %9415 = vmatpush1.bf16.msra.mxu0 %v8932
    %9416 = vmatprep.mubr.bf16.mxu0 %v7819
    %9417 = vmatmul.mubr.bf16.gmra.mrb[0].mxu0 %v7818
    %v9418 = vpop.f32.mrb[0].mxu0
    %v9419 = vadd.f32 %v8087, %v9418
    %v9420 = vpop.f32.mrb[0].mxu0
    %v9421 = vadd.f32 %v8091, %v9420
    %v9422 = vpop.f32.mrb[0].mxu0
    %v9423 = vadd.f32 %v8087, %v9422
    %v9424 = vpop.f32.mrb[0].mxu0
    %v9425 = vadd.f32 %v8091, %v9424
    %9426 = vdwg.mxu0
    %9427 = vmatprep.subr.bf16.mxu0 %v8937
    %9428 = vmatpush1.bf16.msra.mxu0 %v8936
    %9429 = vmatprep.subr.bf16.mxu0 %v8941
    %9430 = vmatpush1.bf16.msra.mxu0 %v8940
    %9431 = vmatprep.subr.bf16.mxu0 %v8945
    %9432 = vmatpush1.bf16.msra.mxu0 %v8944
    %9433 = vmatprep.subr.bf16.mxu0 %v8949
    %9434 = vmatpush1.bf16.msra.mxu0 %v8948
    %9435 = vmatprep.subr.bf16.mxu0 %v8953
    %9436 = vmatpush1.bf16.msra.mxu0 %v8952
    %9437 = vmatprep.subr.bf16.mxu0 %v8957
    %9438 = vmatpush1.bf16.msra.mxu0 %v8956
    %9439 = vmatprep.subr.bf16.mxu0 %v8961
    %9440 = vmatpush1.bf16.msra.mxu0 %v8960
    %9441 = vmatprep.subr.bf16.mxu0 %v8965
    %9442 = vmatpush1.bf16.msra.mxu0 %v8964
    %9443 = vmatprep.subr.bf16.mxu0 %v8969
    %9444 = vmatpush1.bf16.msra.mxu0 %v8968
    %9445 = vmatprep.subr.bf16.mxu0 %v8973
    %9446 = vmatpush1.bf16.msra.mxu0 %v8972
    %9447 = vmatprep.subr.bf16.mxu0 %v8977
    %9448 = vmatpush1.bf16.msra.mxu0 %v8976
    %9449 = vmatprep.subr.bf16.mxu0 %v8981
    %9450 = vmatpush1.bf16.msra.mxu0 %v8980
    %9451 = vmatprep.subr.bf16.mxu0 %v8985
    %9452 = vmatpush1.bf16.msra.mxu0 %v8984
    %9453 = vmatprep.subr.bf16.mxu0 %v8989
    %9454 = vmatpush1.bf16.msra.mxu0 %v8988
    %9455 = vmatprep.subr.bf16.mxu0 %v8993
    %9456 = vmatpush1.bf16.msra.mxu0 %v8992
    %9457 = vmatprep.subr.bf16.mxu0 %v8997
    %9458 = vmatpush1.bf16.msra.mxu0 %v8996
    %9459 = vmatprep.mubr.bf16.mxu0 %v7821
    %9460 = vmatmul.mubr.bf16.gmra.mrb[0].mxu0 %v7820
    %v9461 = vpop.f32.mrb[0].mxu0
    %v9462 = vadd.f32 %v9419, %v9461
    %v9463 = vpop.f32.mrb[0].mxu0
    %v9464 = vadd.f32 %v9421, %v9463
    %v9465 = vpop.f32.mrb[0].mxu0
    %v9466 = vadd.f32 %v9423, %v9465
    %v9467 = vpop.f32.mrb[0].mxu0
    %v9468 = vadd.f32 %v9425, %v9467
    %9469 = vdwg.mxu0
    %9470 = vmatprep.subr.bf16.mxu0 %v9001
    %9471 = vmatpush1.bf16.msra.mxu0 %v9000
    %9472 = vmatprep.subr.bf16.mxu0 %v9005
    %9473 = vmatpush1.bf16.msra.mxu0 %v9004
    %9474 = vmatprep.subr.bf16.mxu0 %v9009
    %9475 = vmatpush1.bf16.msra.mxu0 %v9008
    %9476 = vmatprep.subr.bf16.mxu0 %v9013
    %9477 = vmatpush1.bf16.msra.mxu0 %v9012
    %9478 = vmatprep.subr.bf16.mxu0 %v9017
    %9479 = vmatpush1.bf16.msra.mxu0 %v9016
    %9480 = vmatprep.subr.bf16.mxu0 %v9021
    %9481 = vmatpush1.bf16.msra.mxu0 %v9020
    %9482 = vmatprep.subr.bf16.mxu0 %v9025
    %9483 = vmatpush1.bf16.msra.mxu0 %v9024
    %9484 = vmatprep.subr.bf16.mxu0 %v9029
    %9485 = vmatpush1.bf16.msra.mxu0 %v9028
    %9486 = vmatprep.subr.bf16.mxu0 %v9033
    %9487 = vmatpush1.bf16.msra.mxu0 %v9032
    %9488 = vmatprep.subr.bf16.mxu0 %v9037
    %9489 = vmatpush1.bf16.msra.mxu0 %v9036
    %9490 = vmatprep.subr.bf16.mxu0 %v9041
    %9491 = vmatpush1.bf16.msra.mxu0 %v9040
    %9492 = vmatprep.subr.bf16.mxu0 %v9045
    %9493 = vmatpush1.bf16.msra.mxu0 %v9044
    %9494 = vmatprep.subr.bf16.mxu0 %v9049
    %9495 = vmatpush1.bf16.msra.mxu0 %v9048
    %9496 = vmatprep.subr.bf16.mxu0 %v9053
    %9497 = vmatpush1.bf16.msra.mxu0 %v9052
    %9498 = vmatprep.subr.bf16.mxu0 %v9057
    %9499 = vmatpush1.bf16.msra.mxu0 %v9056
    %9500 = vmatprep.subr.bf16.mxu0 %v9061
    %9501 = vmatpush1.bf16.msra.mxu0 %v9060
    %9502 = vmatprep.mubr.bf16.mxu0 %v7823
    %9503 = vmatmul.mubr.bf16.gmra.mrb[0].mxu0 %v7822
    %v9504 = vpop.f32.mrb[0].mxu0
    %v9505 = vadd.f32 %v9462, %v9504
    %v9506 = vpop.f32.mrb[0].mxu0
    %v9507 = vadd.f32 %v9464, %v9506
    %v9508 = vpop.f32.mrb[0].mxu0
    %v9509 = vadd.f32 %v9466, %v9508
    %v9510 = vpop.f32.mrb[0].mxu0
    %v9511 = vadd.f32 %v9468, %v9510
    %9512 = vdwg.mxu0
    %9513 = vmatprep.subr.bf16.mxu0 %v9065
    %9514 = vmatpush1.bf16.msra.mxu0 %v9064
    %9515 = vmatprep.subr.bf16.mxu0 %v9069
    %9516 = vmatpush1.bf16.msra.mxu0 %v9068
    %9517 = vmatprep.subr.bf16.mxu0 %v9073
    %9518 = vmatpush1.bf16.msra.mxu0 %v9072
    %9519 = vmatprep.subr.bf16.mxu0 %v9077
    %9520 = vmatpush1.bf16.msra.mxu0 %v9076
    %9521 = vmatprep.subr.bf16.mxu0 %v9081
    %9522 = vmatpush1.bf16.msra.mxu0 %v9080
    %9523 = vmatprep.subr.bf16.mxu0 %v9085
    %9524 = vmatpush1.bf16.msra.mxu0 %v9084
    %9525 = vmatprep.subr.bf16.mxu0 %v9089
    %9526 = vmatpush1.bf16.msra.mxu0 %v9088
    %9527 = vmatprep.subr.bf16.mxu0 %v9093
    %9528 = vmatpush1.bf16.msra.mxu0 %v9092
    %9529 = vmatprep.subr.bf16.mxu0 %v9097
    %9530 = vmatpush1.bf16.msra.mxu0 %v9096
    %9531 = vmatprep.subr.bf16.mxu0 %v9101
    %9532 = vmatpush1.bf16.msra.mxu0 %v9100
    %9533 = vmatprep.subr.bf16.mxu0 %v9105
    %9534 = vmatpush1.bf16.msra.mxu0 %v9104
    %9535 = vmatprep.subr.bf16.mxu0 %v9109
    %9536 = vmatpush1.bf16.msra.mxu0 %v9108
    %9537 = vmatprep.subr.bf16.mxu0 %v9113
    %9538 = vmatpush1.bf16.msra.mxu0 %v9112
    %9539 = vmatprep.subr.bf16.mxu0 %v9117
    %9540 = vmatpush1.bf16.msra.mxu0 %v9116
    %9541 = vmatprep.subr.bf16.mxu0 %v9121
    %9542 = vmatpush1.bf16.msra.mxu0 %v9120
    %9543 = vmatprep.subr.bf16.mxu0 %v9125
    %9544 = vmatpush1.bf16.msra.mxu0 %v9124
    %9545 = vmatprep.mubr.bf16.mxu0 %v7825
    %9546 = vmatmul.mubr.bf16.gmra.mrb[0].mxu0 %v7824
    %v9547 = vpop.f32.mrb[0].mxu0
    %v9548 = vadd.f32 %v9505, %v9547
    %v9549 = vpop.f32.mrb[0].mxu0
    %v9550 = vadd.f32 %v9507, %v9549
    %v9551 = vpop.f32.mrb[0].mxu0
    %v9552 = vadd.f32 %v9509, %v9551
    %v9553 = vpop.f32.mrb[0].mxu0
    %v9554 = vadd.f32 %v9511, %v9553
    %9555 = vdwg.mxu0
    %9556 = vmatprep.subr.bf16.mxu0 %v8875
    %9557 = vmatpush1.bf16.msra.mxu0 %v8874
    %9558 = vmatprep.subr.bf16.mxu0 %v8879
    %9559 = vmatpush1.bf16.msra.mxu0 %v8878
    %9560 = vmatprep.subr.bf16.mxu0 %v8883
    %9561 = vmatpush1.bf16.msra.mxu0 %v8882
    %9562 = vmatprep.subr.bf16.mxu0 %v8887
    %9563 = vmatpush1.bf16.msra.mxu0 %v8886
    %9564 = vmatprep.subr.bf16.mxu0 %v8891
    %9565 = vmatpush1.bf16.msra.mxu0 %v8890
    %9566 = vmatprep.subr.bf16.mxu0 %v8895
    %9567 = vmatpush1.bf16.msra.mxu0 %v8894
    %9568 = vmatprep.subr.bf16.mxu0 %v8899
    %9569 = vmatpush1.bf16.msra.mxu0 %v8898
    %9570 = vmatprep.subr.bf16.mxu0 %v8903
    %9571 = vmatpush1.bf16.msra.mxu0 %v8902
    %9572 = vmatprep.subr.bf16.mxu0 %v8907
    %9573 = vmatpush1.bf16.msra.mxu0 %v8906
    %9574 = vmatprep.subr.bf16.mxu0 %v8911
    %9575 = vmatpush1.bf16.msra.mxu0 %v8910
    %9576 = vmatprep.subr.bf16.mxu0 %v8915
    %9577 = vmatpush1.bf16.msra.mxu0 %v8914
    %9578 = vmatprep.subr.bf16.mxu0 %v8919
    %9579 = vmatpush1.bf16.msra.mxu0 %v8918
    %9580 = vmatprep.subr.bf16.mxu0 %v8923
    %9581 = vmatpush1.bf16.msra.mxu0 %v8922
    %9582 = vmatprep.subr.bf16.mxu0 %v8927
    %9583 = vmatpush1.bf16.msra.mxu0 %v8926
    %9584 = vmatprep.subr.bf16.mxu0 %v8931
    %9585 = vmatpush1.bf16.msra.mxu0 %v8930
    %9586 = vmatprep.subr.bf16.mxu0 %v8935
    %9587 = vmatpush1.bf16.msra.mxu0 %v8934
    %9588 = vmatprep.mubr.bf16.mxu0 %v7819
    %9589 = vmatmul.mubr.bf16.gmra.mrb[0].mxu0 %v7818
    %v9590 = vpop.f32.mrb[0].mxu0
    %v9591 = vadd.f32 %v8095, %v9590
    %v9592 = vpop.f32.mrb[0].mxu0
    %v9593 = vadd.f32 %v8099, %v9592
    %v9594 = vpop.f32.mrb[0].mxu0
    %v9595 = vadd.f32 %v8095, %v9594
    %v9596 = vpop.f32.mrb[0].mxu0
    %v9597 = vadd.f32 %v8099, %v9596
    %9598 = vdwg.mxu0
    %9599 = vmatprep.subr.bf16.mxu0 %v8939
    %9600 = vmatpush1.bf16.msra.mxu0 %v8938
    %9601 = vmatprep.subr.bf16.mxu0 %v8943
    %9602 = vmatpush1.bf16.msra.mxu0 %v8942
    %9603 = vmatprep.subr.bf16.mxu0 %v8947
    %9604 = vmatpush1.bf16.msra.mxu0 %v8946
    %9605 = vmatprep.subr.bf16.mxu0 %v8951
    %9606 = vmatpush1.bf16.msra.mxu0 %v8950
    %9607 = vmatprep.subr.bf16.mxu0 %v8955
    %9608 = vmatpush1.bf16.msra.mxu0 %v8954
    %9609 = vmatprep.subr.bf16.mxu0 %v8959
    %9610 = vmatpush1.bf16.msra.mxu0 %v8958
    %9611 = vmatprep.subr.bf16.mxu0 %v8963
    %9612 = vmatpush1.bf16.msra.mxu0 %v8962
    %9613 = vmatprep.subr.bf16.mxu0 %v8967
    %9614 = vmatpush1.bf16.msra.mxu0 %v8966
    %9615 = vmatprep.subr.bf16.mxu0 %v8971
    %9616 = vmatpush1.bf16.msra.mxu0 %v8970
    %9617 = vmatprep.subr.bf16.mxu0 %v8975
    %9618 = vmatpush1.bf16.msra.mxu0 %v8974
    %9619 = vmatprep.subr.bf16.mxu0 %v8979
    %9620 = vmatpush1.bf16.msra.mxu0 %v8978
    %9621 = vmatprep.subr.bf16.mxu0 %v8983
    %9622 = vmatpush1.bf16.msra.mxu0 %v8982
    %9623 = vmatprep.subr.bf16.mxu0 %v8987
    %9624 = vmatpush1.bf16.msra.mxu0 %v8986
    %9625 = vmatprep.subr.bf16.mxu0 %v8991
    %9626 = vmatpush1.bf16.msra.mxu0 %v8990
    %9627 = vmatprep.subr.bf16.mxu0 %v8995
    %9628 = vmatpush1.bf16.msra.mxu0 %v8994
    %9629 = vmatprep.subr.bf16.mxu0 %v8999
    %9630 = vmatpush1.bf16.msra.mxu0 %v8998
    %9631 = vmatprep.mubr.bf16.mxu0 %v7821
    %9632 = vmatmul.mubr.bf16.gmra.mrb[0].mxu0 %v7820
    %v9633 = vpop.f32.mrb[0].mxu0
    %v9634 = vadd.f32 %v9591, %v9633
    %v9635 = vpop.f32.mrb[0].mxu0
    %v9636 = vadd.f32 %v9593, %v9635
    %v9637 = vpop.f32.mrb[0].mxu0
    %v9638 = vadd.f32 %v9595, %v9637
    %v9639 = vpop.f32.mrb[0].mxu0
    %v9640 = vadd.f32 %v9597, %v9639
    %9641 = vdwg.mxu0
    %9642 = vmatprep.subr.bf16.mxu0 %v9003
    %9643 = vmatpush1.bf16.msra.mxu0 %v9002
    %9644 = vmatprep.subr.bf16.mxu0 %v9007
    %9645 = vmatpush1.bf16.msra.mxu0 %v9006
    %9646 = vmatprep.subr.bf16.mxu0 %v9011
    %9647 = vmatpush1.bf16.msra.mxu0 %v9010
    %9648 = vmatprep.subr.bf16.mxu0 %v9015
    %9649 = vmatpush1.bf16.msra.mxu0 %v9014
    %9650 = vmatprep.subr.bf16.mxu0 %v9019
    %9651 = vmatpush1.bf16.msra.mxu0 %v9018
    %9652 = vmatprep.subr.bf16.mxu0 %v9023
    %9653 = vmatpush1.bf16.msra.mxu0 %v9022
    %9654 = vmatprep.subr.bf16.mxu0 %v9027
    %9655 = vmatpush1.bf16.msra.mxu0 %v9026
    %9656 = vmatprep.subr.bf16.mxu0 %v9031
    %9657 = vmatpush1.bf16.msra.mxu0 %v9030
    %9658 = vmatprep.subr.bf16.mxu0 %v9035
    %9659 = vmatpush1.bf16.msra.mxu0 %v9034
    %9660 = vmatprep.subr.bf16.mxu0 %v9039
    %9661 = vmatpush1.bf16.msra.mxu0 %v9038
    %9662 = vmatprep.subr.bf16.mxu0 %v9043
    %9663 = vmatpush1.bf16.msra.mxu0 %v9042
    %9664 = vmatprep.subr.bf16.mxu0 %v9047
    %9665 = vmatpush1.bf16.msra.mxu0 %v9046
    %9666 = vmatprep.subr.bf16.mxu0 %v9051
    %9667 = vmatpush1.bf16.msra.mxu0 %v9050
    %9668 = vmatprep.subr.bf16.mxu0 %v9055
    %9669 = vmatpush1.bf16.msra.mxu0 %v9054
    %9670 = vmatprep.subr.bf16.mxu0 %v9059
    %9671 = vmatpush1.bf16.msra.mxu0 %v9058
    %9672 = vmatprep.subr.bf16.mxu0 %v9063
    %9673 = vmatpush1.bf16.msra.mxu0 %v9062
    %9674 = vmatprep.mubr.bf16.mxu0 %v7823
    %9675 = vmatmul.mubr.bf16.gmra.mrb[0].mxu0 %v7822
    %v9676 = vpop.f32.mrb[0].mxu0
    %v9677 = vadd.f32 %v9634, %v9676
    %v9678 = vpop.f32.mrb[0].mxu0
    %v9679 = vadd.f32 %v9636, %v9678
    %v9680 = vpop.f32.mrb[0].mxu0
    %v9681 = vadd.f32 %v9638, %v9680
    %v9682 = vpop.f32.mrb[0].mxu0
    %v9683 = vadd.f32 %v9640, %v9682
    %9684 = vdwg.mxu0
    %9685 = vmatprep.subr.bf16.mxu0 %v9067
    %9686 = vmatpush1.bf16.msra.mxu0 %v9066
    %9687 = vmatprep.subr.bf16.mxu0 %v9071
    %9688 = vmatpush1.bf16.msra.mxu0 %v9070
    %9689 = vmatprep.subr.bf16.mxu0 %v9075
    %9690 = vmatpush1.bf16.msra.mxu0 %v9074
    %9691 = vmatprep.subr.bf16.mxu0 %v9079
    %9692 = vmatpush1.bf16.msra.mxu0 %v9078
    %9693 = vmatprep.subr.bf16.mxu0 %v9083
    %9694 = vmatpush1.bf16.msra.mxu0 %v9082
    %9695 = vmatprep.subr.bf16.mxu0 %v9087
    %9696 = vmatpush1.bf16.msra.mxu0 %v9086
    %9697 = vmatprep.subr.bf16.mxu0 %v9091
    %9698 = vmatpush1.bf16.msra.mxu0 %v9090
    %9699 = vmatprep.subr.bf16.mxu0 %v9095
    %9700 = vmatpush1.bf16.msra.mxu0 %v9094
    %9701 = vmatprep.subr.bf16.mxu0 %v9099
    %9702 = vmatpush1.bf16.msra.mxu0 %v9098
    %9703 = vmatprep.subr.bf16.mxu0 %v9103
    %9704 = vmatpush1.bf16.msra.mxu0 %v9102
    %9705 = vmatprep.subr.bf16.mxu0 %v9107
    %9706 = vmatpush1.bf16.msra.mxu0 %v9106
    %9707 = vmatprep.subr.bf16.mxu0 %v9111
    %9708 = vmatpush1.bf16.msra.mxu0 %v9110
    %9709 = vmatprep.subr.bf16.mxu0 %v9115
    %9710 = vmatpush1.bf16.msra.mxu0 %v9114
    %9711 = vmatprep.subr.bf16.mxu0 %v9119
    %9712 = vmatpush1.bf16.msra.mxu0 %v9118
    %9713 = vmatprep.subr.bf16.mxu0 %v9123
    %9714 = vmatpush1.bf16.msra.mxu0 %v9122
    %9715 = vmatprep.subr.bf16.mxu0 %v9127
    %9716 = vmatpush1.bf16.msra.mxu0 %v9126
    %9717 = vmatprep.mubr.bf16.mxu0 %v7825
    %9718 = vmatmul.mubr.bf16.gmra.mrb[0].mxu0 %v7824
    %v9719 = vpop.f32.mrb[0].mxu0
    %v9720 = vadd.f32 %v9677, %v9719
    %v9721 = vpop.f32.mrb[0].mxu0
    %v9722 = vadd.f32 %v9679, %v9721
    %v9723 = vpop.f32.mrb[0].mxu0
    %v9724 = vadd.f32 %v9681, %v9723
    %v9725 = vpop.f32.mrb[0].mxu0
    %v9726 = vadd.f32 %v9683, %v9725
    %9727 = vdwg.mxu0
    %v9728 = vmax.f32 %v9548, 0.0
    %v9729 = vmax.f32 %v9550, 0.0
    %v9730 = vmax.f32 %v9720, 0.0
    %v9731 = vmax.f32 %v9722, 0.0
    %v9732 = vmax.f32 %v9552, 0.0
    %v9733 = vmax.f32 %v9554, 0.0
    %v9734 = vmax.f32 %v9724, 0.0
    %v9735 = vmax.f32 %v9726, 0.0
    %v9736 = vpack.c.bf16 %v9732, %v9728
    %v9737 = vpack.c.bf16 %v9733, %v9729
    %v9738 = vpack.c.bf16 %v9734, %v9730
    %v9739 = vpack.c.bf16 %v9735, %v9731
    %v9740 = vld [vmem:[#allocation12] sm:$0xf]
    %v9741 = vld [vmem:[#allocation12 + $0x4] sm:$0xf]
    %v9742 = vld [vmem:[#allocation12 + $0x8] sm:$0xf]
    %v9743 = vld [vmem:[#allocation12 + $0xc] sm:$0xf]
    %v9744 = vld [vmem:[#allocation12 + $0x10] sm:$0xf]
    %v9745 = vld [vmem:[#allocation12 + $0x14] sm:$0xf]
    %v9746 = vld [vmem:[#allocation12 + $0x18] sm:$0xf]
    %v9747 = vld [vmem:[#allocation12 + $0x1c] sm:$0xf]
    %v9748 = vld [vmem:[#allocation12 + $0x20] sm:$0xf]
    %v9749 = vld [vmem:[#allocation12 + $0x24] sm:$0xf]
    %v9750 = vld [vmem:[#allocation12 + $0x28] sm:$0xf]
    %v9751 = vld [vmem:[#allocation12 + $0x2c] sm:$0xf]
    %v9752 = vld [vmem:[#allocation12 + $0x30] sm:$0xf]
    %v9753 = vld [vmem:[#allocation12 + $0x34] sm:$0xf]
    %v9754 = vld [vmem:[#allocation12 + $0x38] sm:$0xf]
    %v9755 = vld [vmem:[#allocation12 + $0x3c] sm:$0xf]
    %v9756 = vld [vmem:[#allocation12 + $0x40] sm:$0xf]
    %v9757 = vld [vmem:[#allocation12 + $0x44] sm:$0xf]
    %v9758 = vld [vmem:[#allocation12 + $0x48] sm:$0xf]
    %v9759 = vld [vmem:[#allocation12 + $0x4c] sm:$0xf]
    %v9760 = vld [vmem:[#allocation12 + $0x50] sm:$0xf]
    %v9761 = vld [vmem:[#allocation12 + $0x54] sm:$0xf]
    %v9762 = vld [vmem:[#allocation12 + $0x58] sm:$0xf]
    %v9763 = vld [vmem:[#allocation12 + $0x5c] sm:$0xf]
    %v9764 = vld [vmem:[#allocation12 + $0x60] sm:$0xf]
    %v9765 = vld [vmem:[#allocation12 + $0x64] sm:$0xf]
    %v9766 = vld [vmem:[#allocation12 + $0x68] sm:$0xf]
    %v9767 = vld [vmem:[#allocation12 + $0x6c] sm:$0xf]
    %v9768 = vld [vmem:[#allocation12 + $0x70] sm:$0xf]
    %v9769 = vld [vmem:[#allocation12 + $0x74] sm:$0xf]
    %v9770 = vld [vmem:[#allocation12 + $0x78] sm:$0xf]
    %v9771 = vld [vmem:[#allocation12 + $0x7c] sm:$0xf]
    %v9772 = vld [vmem:[#allocation12 + $0x80] sm:$0xf]
    %v9773 = vld [vmem:[#allocation12 + $0x84] sm:$0xf]
    %v9774 = vld [vmem:[#allocation12 + $0x88] sm:$0xf]
    %v9775 = vld [vmem:[#allocation12 + $0x8c] sm:$0xf]
    %v9776 = vld [vmem:[#allocation12 + $0x90] sm:$0xf]
    %v9777 = vld [vmem:[#allocation12 + $0x94] sm:$0xf]
    %v9778 = vld [vmem:[#allocation12 + $0x98] sm:$0xf]
    %v9779 = vld [vmem:[#allocation12 + $0x9c] sm:$0xf]
    %v9780 = vld [vmem:[#allocation12 + $0xa0] sm:$0xf]
    %v9781 = vld [vmem:[#allocation12 + $0xa4] sm:$0xf]
    %v9782 = vld [vmem:[#allocation12 + $0xa8] sm:$0xf]
    %v9783 = vld [vmem:[#allocation12 + $0xac] sm:$0xf]
    %v9784 = vld [vmem:[#allocation12 + $0xb0] sm:$0xf]
    %v9785 = vld [vmem:[#allocation12 + $0xb4] sm:$0xf]
    %v9786 = vld [vmem:[#allocation12 + $0xb8] sm:$0xf]
    %v9787 = vld [vmem:[#allocation12 + $0xbc] sm:$0xf]
    %v9788 = vld [vmem:[#allocation12 + $0xc0] sm:$0xf]
    %v9789 = vld [vmem:[#allocation12 + $0xc4] sm:$0xf]
    %v9790 = vld [vmem:[#allocation12 + $0xc8] sm:$0xf]
    %v9791 = vld [vmem:[#allocation12 + $0xcc] sm:$0xf]
    %v9792 = vld [vmem:[#allocation12 + $0xd0] sm:$0xf]
    %v9793 = vld [vmem:[#allocation12 + $0xd4] sm:$0xf]
    %v9794 = vld [vmem:[#allocation12 + $0xd8] sm:$0xf]
    %v9795 = vld [vmem:[#allocation12 + $0xdc] sm:$0xf]
    %v9796 = vld [vmem:[#allocation12 + $0xe0] sm:$0xf]
    %v9797 = vld [vmem:[#allocation12 + $0xe4] sm:$0xf]
    %v9798 = vld [vmem:[#allocation12 + $0xe8] sm:$0xf]
    %v9799 = vld [vmem:[#allocation12 + $0xec] sm:$0xf]
    %v9800 = vld [vmem:[#allocation12 + $0xf0] sm:$0xf]
    %v9801 = vld [vmem:[#allocation12 + $0xf4] sm:$0xf]
    %v9802 = vld [vmem:[#allocation12 + $0xf8] sm:$0xf]
    %v9803 = vld [vmem:[#allocation12 + $0xfc] sm:$0xf]
    %v9804 = vld [vmem:[#allocation13] sm:$0x1]
    %v9806 = vlaneseq
    %v9807 = vshrl.u32 %v9806, 7
    %v9808 = vsub.s32 0, %v9807
    %v9809 = vrot.slane %v9804, %v9808
    %v9875 = vunpack.c.l.b16 %v9740
    %v9876 = vunpack.c.l.b16 %v9741
    %v9877 = vunpack.c.l.b16 %v9742
    %v9878 = vunpack.c.l.b16 %v9743
    %v9879 = vunpack.c.l.b16 %v9744
    %v9880 = vunpack.c.l.b16 %v9745
    %v9881 = vunpack.c.l.b16 %v9746
    %v9882 = vunpack.c.l.b16 %v9747
    %v9883 = vunpack.c.l.b16 %v9748
    %v9884 = vunpack.c.l.b16 %v9749
    %v9885 = vunpack.c.l.b16 %v9750
    %v9886 = vunpack.c.l.b16 %v9751
    %v9887 = vunpack.c.l.b16 %v9752
    %v9888 = vunpack.c.l.b16 %v9753
    %v9889 = vunpack.c.l.b16 %v9754
    %v9890 = vunpack.c.l.b16 %v9755
    %v9891 = vunpack.c.l.b16 %v9756
    %v9892 = vunpack.c.l.b16 %v9757
    %v9893 = vunpack.c.l.b16 %v9758
    %v9894 = vunpack.c.l.b16 %v9759
    %v9895 = vunpack.c.l.b16 %v9760
    %v9896 = vunpack.c.l.b16 %v9761
    %v9897 = vunpack.c.l.b16 %v9762
    %v9898 = vunpack.c.l.b16 %v9763
    %v9899 = vunpack.c.l.b16 %v9764
    %v9900 = vunpack.c.l.b16 %v9765
    %v9901 = vunpack.c.l.b16 %v9766
    %v9902 = vunpack.c.l.b16 %v9767
    %v9903 = vunpack.c.l.b16 %v9768
    %v9904 = vunpack.c.l.b16 %v9769
    %v9905 = vunpack.c.l.b16 %v9770
    %v9906 = vunpack.c.l.b16 %v9771
    %v9907 = vunpack.c.l.b16 %v9772
    %v9908 = vunpack.c.l.b16 %v9773
    %v9909 = vunpack.c.l.b16 %v9774
    %v9910 = vunpack.c.l.b16 %v9775
    %v9911 = vunpack.c.l.b16 %v9776
    %v9912 = vunpack.c.l.b16 %v9777
    %v9913 = vunpack.c.l.b16 %v9778
    %v9914 = vunpack.c.l.b16 %v9779
    %v9915 = vunpack.c.l.b16 %v9780
    %v9916 = vunpack.c.l.b16 %v9781
    %v9917 = vunpack.c.l.b16 %v9782
    %v9918 = vunpack.c.l.b16 %v9783
    %v9919 = vunpack.c.l.b16 %v9784
    %v9920 = vunpack.c.l.b16 %v9785
    %v9921 = vunpack.c.l.b16 %v9786
    %v9922 = vunpack.c.l.b16 %v9787
    %v9923 = vunpack.c.l.b16 %v9788
    %v9924 = vunpack.c.l.b16 %v9789
    %v9925 = vunpack.c.l.b16 %v9790
    %v9926 = vunpack.c.l.b16 %v9791
    %v9927 = vunpack.c.l.b16 %v9792
    %v9928 = vunpack.c.l.b16 %v9793
    %v9929 = vunpack.c.l.b16 %v9794
    %v9930 = vunpack.c.l.b16 %v9795
    %v9931 = vunpack.c.l.b16 %v9796
    %v9932 = vunpack.c.l.b16 %v9797
    %v9933 = vunpack.c.l.b16 %v9798
    %v9934 = vunpack.c.l.b16 %v9799
    %v9935 = vunpack.c.l.b16 %v9800
    %v9936 = vunpack.c.l.b16 %v9801
    %v9937 = vunpack.c.l.b16 %v9802
    %v9938 = vunpack.c.l.b16 %v9803
    %v9939 = vpack.c.b16 %v9876, %v9875
    %v9940 = vpack.c.b16 %v9878, %v9877
    %v9941 = vpack.c.b16 %v9880, %v9879
    %v9942 = vpack.c.b16 %v9882, %v9881
    %v9943 = vpack.c.b16 %v9884, %v9883
    %v9944 = vpack.c.b16 %v9886, %v9885
    %v9945 = vpack.c.b16 %v9888, %v9887
    %v9946 = vpack.c.b16 %v9890, %v9889
    %v9947 = vpack.c.b16 %v9892, %v9891
    %v9948 = vpack.c.b16 %v9894, %v9893
    %v9949 = vpack.c.b16 %v9896, %v9895
    %v9950 = vpack.c.b16 %v9898, %v9897
    %v9951 = vpack.c.b16 %v9900, %v9899
    %v9952 = vpack.c.b16 %v9902, %v9901
    %v9953 = vpack.c.b16 %v9904, %v9903
    %v9954 = vpack.c.b16 %v9906, %v9905
    %v9955 = vpack.c.b16 %v9908, %v9907
    %v9956 = vpack.c.b16 %v9910, %v9909
    %v9957 = vpack.c.b16 %v9912, %v9911
    %v9958 = vpack.c.b16 %v9914, %v9913
    %v9959 = vpack.c.b16 %v9916, %v9915
    %v9960 = vpack.c.b16 %v9918, %v9917
    %v9961 = vpack.c.b16 %v9920, %v9919
    %v9962 = vpack.c.b16 %v9922, %v9921
    %v9963 = vpack.c.b16 %v9924, %v9923
    %v9964 = vpack.c.b16 %v9926, %v9925
    %v9965 = vpack.c.b16 %v9928, %v9927
    %v9966 = vpack.c.b16 %v9930, %v9929
    %v9967 = vpack.c.b16 %v9932, %v9931
    %v9968 = vpack.c.b16 %v9934, %v9933
    %v9969 = vpack.c.b16 %v9936, %v9935
    %v9970 = vpack.c.b16 %v9938, %v9937
    %10003 = vmatprep.subr.bf16.mxu0 0
    %10004 = vmatpush1.bf16.msra.mxu0 %v9939
    %10005 = vmatprep.subr.bf16.mxu0 0
    %10006 = vmatpush1.bf16.msra.mxu0 %v9940
    %10007 = vmatprep.subr.bf16.mxu0 0
    %10008 = vmatpush1.bf16.msra.mxu0 %v9941
    %10009 = vmatprep.subr.bf16.mxu0 0
    %10010 = vmatpush1.bf16.msra.mxu0 %v9942
    %10011 = vmatprep.subr.bf16.mxu0 0
    %10012 = vmatpush1.bf16.msra.mxu0 %v9943
    %10013 = vmatprep.subr.bf16.mxu0 0
    %10014 = vmatpush1.bf16.msra.mxu0 %v9944
    %10015 = vmatprep.subr.bf16.mxu0 0
    %10016 = vmatpush1.bf16.msra.mxu0 %v9945
    %10017 = vmatprep.subr.bf16.mxu0 0
    %10018 = vmatpush1.bf16.msra.mxu0 %v9946
    %10019 = vmatprep.subr.bf16.mxu0 0
    %10020 = vmatpush1.bf16.msra.mxu0 %v9947
    %10021 = vmatprep.subr.bf16.mxu0 0
    %10022 = vmatpush1.bf16.msra.mxu0 %v9948
    %10023 = vmatprep.subr.bf16.mxu0 0
    %10024 = vmatpush1.bf16.msra.mxu0 %v9949
    %10025 = vmatprep.subr.bf16.mxu0 0
    %10026 = vmatpush1.bf16.msra.mxu0 %v9950
    %10027 = vmatprep.subr.bf16.mxu0 0
    %10028 = vmatpush1.bf16.msra.mxu0 %v9951
    %10029 = vmatprep.subr.bf16.mxu0 0
    %10030 = vmatpush1.bf16.msra.mxu0 %v9952
    %10031 = vmatprep.subr.bf16.mxu0 0
    %10032 = vmatpush1.bf16.msra.mxu0 %v9953
    %10033 = vmatprep.subr.bf16.mxu0 0
    %10034 = vmatpush1.bf16.msra.mxu0 %v9954
    %10035 = vmatprep.mubr.bf16.mxu0 %v9737
    %10036 = vmatmul.mubr.bf16.gmra.mrb[0].mxu0 %v9736
    %v10037 = vpop.f32.mrb[0].mxu0
    %v10038 = vadd.f32 %v9809, %v10037
    %v10039 = vpop.f32.mrb[0].mxu0
    %v10040 = vpop.f32.mrb[0].mxu0
    %v10041 = vadd.f32 %v9809, %v10040
    %v10042 = vpop.f32.mrb[0].mxu0
    %10043 = vdwg.mxu0
    %10044 = vmatprep.subr.bf16.mxu0 0
    %10045 = vmatpush1.bf16.msra.mxu0 %v9955
    %10046 = vmatprep.subr.bf16.mxu0 0
    %10047 = vmatpush1.bf16.msra.mxu0 %v9956
    %10048 = vmatprep.subr.bf16.mxu0 0
    %10049 = vmatpush1.bf16.msra.mxu0 %v9957
    %10050 = vmatprep.subr.bf16.mxu0 0
    %10051 = vmatpush1.bf16.msra.mxu0 %v9958
    %10052 = vmatprep.subr.bf16.mxu0 0
    %10053 = vmatpush1.bf16.msra.mxu0 %v9959
    %10054 = vmatprep.subr.bf16.mxu0 0
    %10055 = vmatpush1.bf16.msra.mxu0 %v9960
    %10056 = vmatprep.subr.bf16.mxu0 0
    %10057 = vmatpush1.bf16.msra.mxu0 %v9961
    %10058 = vmatprep.subr.bf16.mxu0 0
    %10059 = vmatpush1.bf16.msra.mxu0 %v9962
    %10060 = vmatprep.subr.bf16.mxu0 0
    %10061 = vmatpush1.bf16.msra.mxu0 %v9963
    %10062 = vmatprep.subr.bf16.mxu0 0
    %10063 = vmatpush1.bf16.msra.mxu0 %v9964
    %10064 = vmatprep.subr.bf16.mxu0 0
    %10065 = vmatpush1.bf16.msra.mxu0 %v9965
    %10066 = vmatprep.subr.bf16.mxu0 0
    %10067 = vmatpush1.bf16.msra.mxu0 %v9966
    %10068 = vmatprep.subr.bf16.mxu0 0
    %10069 = vmatpush1.bf16.msra.mxu0 %v9967
    %10070 = vmatprep.subr.bf16.mxu0 0
    %10071 = vmatpush1.bf16.msra.mxu0 %v9968
    %10072 = vmatprep.subr.bf16.mxu0 0
    %10073 = vmatpush1.bf16.msra.mxu0 %v9969
    %10074 = vmatprep.subr.bf16.mxu0 0
    %10075 = vmatpush1.bf16.msra.mxu0 %v9970
    %10076 = vmatprep.mubr.bf16.mxu0 %v9739
    %10077 = vmatmul.mubr.bf16.gmra.mrb[0].mxu0 %v9738
    %v10078 = vpop.f32.mrb[0].mxu0
    %v10079 = vadd.f32 %v10038, %v10078
    %v10080 = vpop.f32.mrb[0].mxu0
    %v10081 = vpop.f32.mrb[0].mxu0
    %v10082 = vadd.f32 %v10041, %v10081
    %v10083 = vpop.f32.mrb[0].mxu0
    %10084 = vdwg.mxu0
    %10085 = vst [vmem:[%s9] sm:$0xff] %v10079
    %10086 = vst [vmem:[%s9 + $0x8] sm:$0xff] %v10082
    // Predicated region
    $region70: #{mmlp_forward.1} parent=1 // pred_check
      _
    $region71: #{mmlp_forward.1} parent=1 // pred_check_branch
      %10088 = sbr.rel (0) target = $region73
    $region72: #{mmlp_forward.1} parent=1 // pred_region
      _
    $region73: #{mmlp_forward.1} parent=1 // pred_fallthru
      _
    // Predicated region
    $region74: #{mmlp_forward.1} parent=1 // pred_check
      _
    $region75: #{mmlp_forward.1} parent=1 // pred_check_branch
      %10090 = sbr.rel (0) target = $region77
    $region76: #{mmlp_forward.1} parent=1 // pred_region
      _
    $region77: #{mmlp_forward.1} parent=1 // pred_fallthru
      _
    %10091 = vsyncpa [#allocation3], 1
    %10092 = vsyncpa [#allocation5], 1
    %10093 = vsyncpa [#allocation8], 1
    %10094 = vsyncpa [#allocation11], 1
    %10095 = vsyncpa [#allocation14], 1

</llo_original>
